<compile_context>
chip_gen: v7x
topology: tpu7x:2x2x1
jax: 0.10.0
libtpu: 0.0.40
codegen_flags: <defaults>
</compile_context>

<pallas_src>
import functools

import jax
import jax.numpy as jnp
from jax.experimental import pallas as pl
from jax.experimental.pallas import tpu as pltpu


# --------------------------------------------------------------------------
# Kernel 1: fused pointwise-conv stack.  Writes pointfeat (channels 0:384 of
# the final buffer) per point tile and a per-split partial pool sum.
# --------------------------------------------------------------------------
def _feat_kernel(xe_ref, wa_ref, ba_ref, wb_ref, bb_ref, w5_ref, b5_ref,
                 w6_ref, b6_ref, feat_ref, ap_ref, acc_ref, *,
                 n_valid, n_per_split, needs_mask):
    # xe_ref  : (1, 35, TN)     bf16  [x ; emb], channel-major (NCW)
    # feat_ref: (1, 384, TN)    f32   channels 0:384 of the final (1408, N) buf
    # ap_ref  : (1, 1, 1024, 1) f32   partial (unscaled) pool sum for this split
    # acc_ref : (1024, 128)     f32   lane-dense running pool sum (VMEM scratch)
    n = pl.program_id(2)
    xe = xe_ref[0]                                            # (35, TN) bf16

    def layer(w_ref, b_ref, act_bf16):
        y = jnp.dot(w_ref[...], act_bf16,
                    preferred_element_type=jnp.float32)       # MXU, f32 acc
        return jnp.maximum(y + b_ref[...], 0.0)               # bias+ReLU in f32

    h1 = layer(wa_ref, ba_ref, xe)                            # (128, TN) [x1;e1]
    h2 = layer(wb_ref, bb_ref, h1.astype(jnp.bfloat16))       # (256, TN) [x2;e2]
    x5 = layer(w5_ref, b5_ref, h2.astype(jnp.bfloat16))       # (512, TN)
    x6 = layer(w6_ref, b6_ref, x5.astype(jnp.bfloat16))       # (1024, TN)

    # pointfeat_1 ++ pointfeat_2: two sublane-aligned direct stores (no concat
    # temp), written straight into the final output buffer.
    feat_ref[0, 0:128, :] = h1
    feat_ref[0, 128:384, :] = h2

    @pl.when(n == 0)
    def _():
        acc_ref[...] = jnp.zeros_like(acc_ref)

    tn = x6.shape[1]
    if needs_mask:
        # Ragged last tile: exclude zero-padded points from the pool sum.
        tile = pl.program_id(1) * n_per_split + n
        lane = jax.lax.broadcasted_iota(jnp.int32, (1, tn), 1)
        x6 = jnp.where(tile * tn + lane < n_valid, x6, 0.0)

    # Lane-dense partial pool sum: fold TN lanes into 128 with VPU adds; the
    # single cross-lane XLU reduce is deferred to the end of the epoch.
    part = x6[:, 0:128]
    for j in range(1, tn // 128):
        part = part + x6[:, j * 128:(j + 1) * 128]
    acc_ref[...] += part

    @pl.when(n == n_per_split - 1)
    def _():
        ap_ref[0, 0] = acc_ref[...].sum(axis=-1, keepdims=True)   # unscaled sum


# --------------------------------------------------------------------------
# Kernel 2: epilogue.  The final buffer is aliased (channels 0:384 already
# hold pointfeat from kernel 1); only channels 384:1408 are written here, one
# 128-channel slab per grid step, from the folded + scaled pool sums.
# --------------------------------------------------------------------------
def _epilogue_kernel(feat_hbm_ref, ap_ref, out_ref, *, inv_window, splits):
    del feat_hbm_ref          # aliased output buffer; never read or DMA'd here
    pooled = ap_ref[0, 0]                                     # (128, 1)
    for s in range(1, splits):
        pooled = pooled + ap_ref[0, s]
    pooled = pooled * inv_window
    out_ref[0] = jnp.broadcast_to(pooled, out_ref.shape[1:])  # (128, TN)


def _pick_tile(n, preferred=None):
    """Lane tile: multiple of 128, <= preferred, never larger than the
    128-rounded point count (cdiv gridding + pool mask handle ragged N)."""
    if preferred is None:
        try:    # 1024-lane tiles on 128-MiB-VMEM chips (v5e/v6e), 512 on v7x.
            big = pltpu.get_tpu_info().vmem_capacity_bytes >= (100 << 20)
            preferred = 1024 if big else 512
        except Exception:
            preferred = 512
    preferred = max(128, (int(preferred) // 128) * 128)
    n_round = ((n + 127) // 128) * 128
    return min(preferred, n_round)


def posenet_feat(x, emb, params, num_points, dense_points=False, tile_n=None):
    """Pallas implementation of PoseNetFeat.forward.

    x: (B, 3, N) f32, emb: (B, 32, N) f32  ->  (B, 1408, N) f32 (PyTorch NCW).
    params: torch-style Conv1d weights [(w(Cout, Cin), b(Cout,)), ...] for
            conv1, e_conv1, conv2, e_conv2, conv5, conv6.
    """
    (w1, b1), (we1, be1), (w2, b2), (we2, be2), (w5, b5), (w6, b6) = params
    B, cx, N = x.shape
    assert cx == 3 and emb.shape == (B, 32, N)

    # AvgPool1d(window).view(-1, 1024, 1) in the original module only
    # type-checks when the pool window covers the whole point axis.
    if dense_points:
        assert N == 2000, "dense_points path requires N == 2000 (ap2 = AvgPool1d(2000))"
        window = 2000
    else:
        assert N == num_points, "non-dense path requires N == num_points (ap1 = AvgPool1d(num_points))"
        window = num_points

    f32, bf16 = jnp.float32, jnp.bfloat16

    tn = _pick_tile(N, tile_n)
    n_tiles = -(-N // tn)                       # cdiv
    # Split the point-tile range across two "parallel" grid slots when the
    # tile count is even -> fills v7x's second TensorCore even at B == 1.
    splits = 2 if (n_tiles % 2 == 0) else 1
    n_per_split = n_tiles // splits
    n_pad = n_tiles * tn
    needs_mask = (n_pad != N)

    # Block-diagonal fusion: one matmul for conv1+e_conv1, one for
    # conv2+e_conv2 (pointfeat_1 / pointfeat_2 fall out as sublane blocks).
    wa = jnp.zeros((128, 35), f32).at[:64, :3].set(w1).at[64:, 3:].set(we1)
    ba = jnp.concatenate([b1, be1]).reshape(128, 1)
    wb = jnp.zeros((256, 128), f32).at[:128, :64].set(w2).at[128:, 64:].set(we2)
    bb = jnp.concatenate([b2, be2]).reshape(256, 1)
    b5c = b5.reshape(512, 1)
    b6c = b6.reshape(1024, 1)

    # bf16 matmul operands (accumulation stays f32 inside the kernel).
    # TODO(synk): optional fp8 quantization of w5/w6 (per-channel scales) for
    # the v7x MXU fp8 path.
    xe = jnp.concatenate([x, emb], axis=1)                     # (B, 35, N)
    if n_pad != N:
        xe = jnp.pad(xe, ((0, 0), (0, 0), (0, n_pad - N)))     # zero-pad points
    xe = xe.astype(bf16)
    wa, wb, w5b, w6b = (w.astype(bf16) for w in (wa, wb, w5, w6))

    # Weight/bias blocks: constant index_map + single buffer (DMA'd once).
    def const(shape):
        return pl.BlockSpec(shape, lambda b, s, n: (0,) * len(shape),
                            pipeline_mode=pl.Buffered(1))

    grid_spec = pltpu.PrefetchScalarGridSpec(
        num_scalar_prefetch=0,
        grid=(B, splits, n_per_split),
        in_specs=[
            pl.BlockSpec((1, 35, tn), lambda b, s, n: (b, 0, s * n_per_split + n)),
            const((128, 35)), const((128, 1)),
            const((256, 128)), const((256, 1)),
            const((512, 256)), const((512, 1)),
            const((1024, 512)), const((1024, 1)),
        ],
        out_specs=[
            pl.BlockSpec((1, 384, tn), lambda b, s, n: (b, 0, s * n_per_split + n)),
            pl.BlockSpec((1, 1, 1024, 1), lambda b, s, n: (b, s, 0, 0)),
        ],
        scratch_shapes=[pltpu.VMEM((1024, 128), jnp.float32)],
    )

    feat, ap = pl.pallas_call(
        functools.partial(_feat_kernel, n_valid=N, n_per_split=n_per_split,
                          needs_mask=needs_mask),
        out_shape=[
            jax.ShapeDtypeStruct((B, 1408, N), f32),   # channels 0:384 filled here
            jax.ShapeDtypeStruct((B, splits, 1024, 1), f32),
        ],
        grid_spec=grid_spec,
        compiler_params=pltpu.CompilerParams(
            dimension_semantics=("parallel", "parallel", "arbitrary"),
            vmem_limit_bytes=48 * 1024 * 1024),
    )(xe, wa, ba, wb, bb, w5b, b5c, w6b, b6c)

    # Fused epilogue: alias the final buffer (pointfeat channels preserved by
    # the alias) and fill only channels 384:1408 with the broadcast pooled
    # vector.  Channel blocks 3..10 x all point tiles fully cover 384:1408.
    out = pl.pallas_call(
        functools.partial(_epilogue_kernel,
                          inv_window=1.0 / float(window), splits=splits),
        out_shape=jax.ShapeDtypeStruct((B, 1408, N), f32),
        grid=(B, 1024 // 128, n_tiles),
        in_specs=[
            pl.BlockSpec(memory_space=pl.ANY),                 # aliased, never read
            pl.BlockSpec((1, splits, 128, 1), lambda b, c, n: (b, 0, c, 0)),
        ],
        out_specs=pl.BlockSpec((1, 128, tn), lambda b, c, n: (b, c + 3, n)),
        input_output_aliases={0: 0},
        compiler_params=pltpu.CompilerParams(
            dimension_semantics=("parallel", "parallel", "parallel")),
    )(feat, ap)
    return out


# --------------------------------------------------------------------------
# Reference / test scaffolding.
# --------------------------------------------------------------------------
def init_params(key):
    """Deterministic synthetic torch-style Conv1d weights: w (Cout, Cin), b (Cout,)."""
    shapes = [(64, 3), (64, 32), (128, 64), (128, 64), (512, 256), (1024, 512)]
    params = []
    for cout, cin in shapes:
        key, kw, kb = jax.random.split(key, 3)
        w = jax.random.normal(kw, (cout, cin), jnp.float32) * (2.0 / cin) ** 0.5 * 0.5
        b = jax.random.normal(kb, (cout,), jnp.float32) * 0.1
        params.append((w, b))
    return params


def ref_forward(x, emb, params, num_points, dense_points=False):
    """Pure-JAX f32 reference mirroring the PyTorch forward (N == pool window)."""
    (w1, b1), (we1, be1), (w2, b2), (we2, be2), (w5, b5), (w6, b6) = params
    conv = lambda v, w, b: jnp.maximum(
        jnp.einsum("oc,bcn->bon", w, v) + b[None, :, None], 0.0)
    x1 = conv(x, w1, b1)
    e1 = conv(emb, we1, be1)
    pf1 = jnp.concatenate([x1, e1], axis=1)
    x2 = conv(x1, w2, b2)
    e2 = conv(e1, we2, be2)
    pf2 = jnp.concatenate([x2, e2], axis=1)
    x5 = conv(pf2, w5, b5)
    x6 = conv(x5, w6, b6)
    ap = jnp.mean(x6, axis=2, keepdims=True)             # AvgPool1d over all N
    ap = jnp.broadcast_to(ap, x6.shape)
    return jnp.concatenate([pf1, pf2, ap], axis=1)


if __name__ == "__main__":
    key = jax.random.PRNGKey(0)
    kx, ke, kp = jax.random.split(key, 3)
    params = init_params(kp)

    fwd = jax.jit(posenet_feat,
                  static_argnames=("num_points", "dense_points", "tile_n"))

    B = 2
    # (N=200, tn=128): ragged last tile -> pool mask + 2-way point split.
    # (N=384, tn=128): 3 full tiles   -> multi-step pool accumulation, 1 split.
    for N in (200, 384):
        x = jax.random.normal(kx, (B, 3, N), jnp.float32)      # PyTorch NCW inputs
        emb = jax.random.normal(ke, (B, 32, N), jnp.float32)
        out = jax.block_until_ready(
            fwd(x, emb, params, num_points=N, dense_points=False, tile_n=128))
        assert out.shape == (B, 1408, N), out.shape

        ref = jax.block_until_ready(ref_forward(x, emb, params, num_points=N))
        max_err = float(jnp.max(jnp.abs(out - ref)))
        # bf16 matmul operands (f32 accumulation) vs a pure-f32 reference.
        assert jnp.allclose(out, ref, atol=7e-2, rtol=3e-2), (N, max_err)

    print("KERNEL_OK")
</pallas_src>

<mosaic_0001>
module attributes {stable_mosaic.version = 11 : i64} {
  func.func @_feat_kernel(%arg0: i32, %arg1: i32, %arg2: i32, %arg3: memref<1x35x128xbf16, #tpu.memory_space<vmem>>, %arg4: memref<128x35xbf16, #tpu.memory_space<vmem>>, %arg5: memref<128x1xf32, #tpu.memory_space<vmem>>, %arg6: memref<256x128xbf16, #tpu.memory_space<vmem>>, %arg7: memref<256x1xf32, #tpu.memory_space<vmem>>, %arg8: memref<512x256xbf16, #tpu.memory_space<vmem>>, %arg9: memref<512x1xf32, #tpu.memory_space<vmem>>, %arg10: memref<1024x512xbf16, #tpu.memory_space<vmem>>, %arg11: memref<1024x1xf32, #tpu.memory_space<vmem>>, %arg12: memref<1x384x128xf32, #tpu.memory_space<vmem>>, %arg13: memref<1x1x1024x1xf32, #tpu.memory_space<vmem>>, %arg14: memref<1024x128xf32, #tpu.memory_space<vmem>>) attributes {dimension_semantics = [#tpu.dimension_semantics<parallel>, #tpu.dimension_semantics<parallel>, #tpu.dimension_semantics<arbitrary>], iteration_bounds = array<i64: 2, 2, 1>, scalar_prefetch = 0 : i64, scratch_operands = 1 : i64, tpu.core_type = #tpu.core_type<tc>, window_params = [{transform_indices = @transform_0, window_bounds = array<i64: 1, 35, 128>}, {pipeline_mode = #tpu.pipeline_mode<synchronous>, transform_indices = @transform_1, window_bounds = array<i64: 128, 35>}, {pipeline_mode = #tpu.pipeline_mode<synchronous>, transform_indices = @transform_2, window_bounds = array<i64: 128, 1>}, {pipeline_mode = #tpu.pipeline_mode<synchronous>, transform_indices = @transform_3, window_bounds = array<i64: 256, 128>}, {pipeline_mode = #tpu.pipeline_mode<synchronous>, transform_indices = @transform_4, window_bounds = array<i64: 256, 1>}, {pipeline_mode = #tpu.pipeline_mode<synchronous>, transform_indices = @transform_5, window_bounds = array<i64: 512, 256>}, {pipeline_mode = #tpu.pipeline_mode<synchronous>, transform_indices = @transform_6, window_bounds = array<i64: 512, 1>}, {pipeline_mode = #tpu.pipeline_mode<synchronous>, transform_indices = @transform_7, window_bounds = array<i64: 1024, 512>}, {pipeline_mode = #tpu.pipeline_mode<synchronous>, transform_indices = @transform_8, window_bounds = array<i64: 1024, 1>}, {transform_indices = @transform_9, window_bounds = array<i64: 1, 384, 128>}, {transform_indices = @transform_10, window_bounds = array<i64: 1, 1, 1024, 1>}]} {
    %c0 = arith.constant 0 : index
    %c0_0 = arith.constant 0 : index
    %c0_1 = arith.constant 0 : index
    %0 = vector.load %arg3[%c0, %c0_0, %c0_1] : memref<1x35x128xbf16, #tpu.memory_space<vmem>>, vector<1x35x128xbf16>
    %1 = vector.shape_cast %0 : vector<1x35x128xbf16> to vector<35x128xbf16>
    %c0_2 = arith.constant 0 : index
    %c0_3 = arith.constant 0 : index
    %2 = vector.load %arg4[%c0_2, %c0_3] : memref<128x35xbf16, #tpu.memory_space<vmem>>, vector<128x35xbf16>
    %cst = arith.constant dense<0.000000e+00> : vector<128x128xf32>
    %3 = tpu.matmul %2, %1, %cst {dimension_numbers = #tpu.dot_dimension_numbers<[1], [0], [0], [1], [0, 0, 1, 1], [], []>} : vector<128x35xbf16>, vector<35x128xbf16>, vector<128x128xf32> -> vector<128x128xf32>
    %c0_4 = arith.constant 0 : index
    %c0_5 = arith.constant 0 : index
    %4 = vector.load %arg5[%c0_4, %c0_5] : memref<128x1xf32, #tpu.memory_space<vmem>>, vector<128x1xf32>
    %5 = vector.broadcast %4 : vector<128x1xf32> to vector<128x128xf32>
    %6 = arith.addf %3, %5 : vector<128x128xf32>
    %cst_6 = arith.constant 0.000000e+00 : f32
    %7 = vector.broadcast %cst_6 : f32 to vector<128x128xf32>
    %8 = arith.maximumf %6, %7 : vector<128x128xf32>
    %9 = arith.truncf %8 : vector<128x128xf32> to vector<128x128xbf16>
    %c0_7 = arith.constant 0 : index
    %c0_8 = arith.constant 0 : index
    %10 = vector.load %arg6[%c0_7, %c0_8] : memref<256x128xbf16, #tpu.memory_space<vmem>>, vector<256x128xbf16>
    %cst_9 = arith.constant dense<0.000000e+00> : vector<256x128xf32>
    %11 = tpu.matmul %10, %9, %cst_9 {dimension_numbers = #tpu.dot_dimension_numbers<[1], [0], [0], [1], [0, 0, 1, 1], [], []>} : vector<256x128xbf16>, vector<128x128xbf16>, vector<256x128xf32> -> vector<256x128xf32>
    %c0_10 = arith.constant 0 : index
    %c0_11 = arith.constant 0 : index
    %12 = vector.load %arg7[%c0_10, %c0_11] : memref<256x1xf32, #tpu.memory_space<vmem>>, vector<256x1xf32>
    %13 = vector.broadcast %12 : vector<256x1xf32> to vector<256x128xf32>
    %14 = arith.addf %11, %13 : vector<256x128xf32>
    %cst_12 = arith.constant 0.000000e+00 : f32
    %15 = vector.broadcast %cst_12 : f32 to vector<256x128xf32>
    %16 = arith.maximumf %14, %15 : vector<256x128xf32>
    %17 = arith.truncf %16 : vector<256x128xf32> to vector<256x128xbf16>
    %c0_13 = arith.constant 0 : index
    %c0_14 = arith.constant 0 : index
    %18 = vector.load %arg8[%c0_13, %c0_14] : memref<512x256xbf16, #tpu.memory_space<vmem>>, vector<512x256xbf16>
    %cst_15 = arith.constant dense<0.000000e+00> : vector<512x128xf32>
    %19 = tpu.matmul %18, %17, %cst_15 {dimension_numbers = #tpu.dot_dimension_numbers<[1], [0], [0], [1], [0, 0, 1, 1], [], []>} : vector<512x256xbf16>, vector<256x128xbf16>, vector<512x128xf32> -> vector<512x128xf32>
    %c0_16 = arith.constant 0 : index
    %c0_17 = arith.constant 0 : index
    %20 = vector.load %arg9[%c0_16, %c0_17] : memref<512x1xf32, #tpu.memory_space<vmem>>, vector<512x1xf32>
    %21 = vector.broadcast %20 : vector<512x1xf32> to vector<512x128xf32>
    %22 = arith.addf %19, %21 : vector<512x128xf32>
    %cst_18 = arith.constant 0.000000e+00 : f32
    %23 = vector.broadcast %cst_18 : f32 to vector<512x128xf32>
    %24 = arith.maximumf %22, %23 : vector<512x128xf32>
    %25 = arith.truncf %24 : vector<512x128xf32> to vector<512x128xbf16>
    %c0_19 = arith.constant 0 : index
    %c0_20 = arith.constant 0 : index
    %26 = vector.load %arg10[%c0_19, %c0_20] : memref<1024x512xbf16, #tpu.memory_space<vmem>>, vector<1024x512xbf16>
    %cst_21 = arith.constant dense<0.000000e+00> : vector<1024x128xf32>
    %27 = tpu.matmul %26, %25, %cst_21 {dimension_numbers = #tpu.dot_dimension_numbers<[1], [0], [0], [1], [0, 0, 1, 1], [], []>} : vector<1024x512xbf16>, vector<512x128xbf16>, vector<1024x128xf32> -> vector<1024x128xf32>
    %c0_22 = arith.constant 0 : index
    %c0_23 = arith.constant 0 : index
    %28 = vector.load %arg11[%c0_22, %c0_23] : memref<1024x1xf32, #tpu.memory_space<vmem>>, vector<1024x1xf32>
    %29 = vector.broadcast %28 : vector<1024x1xf32> to vector<1024x128xf32>
    %30 = arith.addf %27, %29 : vector<1024x128xf32>
    %cst_24 = arith.constant 0.000000e+00 : f32
    %31 = vector.broadcast %cst_24 : f32 to vector<1024x128xf32>
    %32 = arith.maximumf %30, %31 : vector<1024x128xf32>
    %c0_25 = arith.constant 0 : index
    %c0_26 = arith.constant 0 : index
    %c0_27 = arith.constant 0 : index
    %33 = vector.load %arg12[%c0_25, %c0_26, %c0_27] : memref<1x384x128xf32, #tpu.memory_space<vmem>>, vector<1x128x128xf32>
    %34 = vector.shape_cast %33 : vector<1x128x128xf32> to vector<128x128xf32>
    %35 = vector.shape_cast %8 : vector<128x128xf32> to vector<1x128x128xf32>
    tpu.vector_store %arg12[%c0_25, %c0_26, %c0_27], %35 {strides = array<i32>} : memref<1x384x128xf32, #tpu.memory_space<vmem>>, vector<1x128x128xf32>,
    %c0_28 = arith.constant 0 : index
    %c128 = arith.constant 128 : index
    %c0_29 = arith.constant 0 : index
    %36 = vector.load %arg12[%c0_28, %c128, %c0_29] : memref<1x384x128xf32, #tpu.memory_space<vmem>>, vector<1x256x128xf32>
    %37 = vector.shape_cast %36 : vector<1x256x128xf32> to vector<256x128xf32>
    %38 = vector.shape_cast %16 : vector<256x128xf32> to vector<1x256x128xf32>
    tpu.vector_store %arg12[%c0_28, %c128, %c0_29], %38 {strides = array<i32>} : memref<1x384x128xf32, #tpu.memory_space<vmem>>, vector<1x256x128xf32>,
    %c0_i32 = arith.constant 0 : i32
    %39 = arith.cmpi eq, %arg2, %c0_i32 : i32
    %40 = arith.extui %39 : i1 to i32
    %c0_i32_30 = arith.constant 0 : i32
    %41 = arith.cmpi ne, %40, %c0_i32_30 : i32
    scf.if %41 {
      %cst_38 = arith.constant 0.000000e+00 : f32
      %60 = vector.broadcast %cst_38 : f32 to vector<1024x128xf32>
      %c0_39 = arith.constant 0 : index
      %c0_40 = arith.constant 0 : index
      %61 = vector.load %arg14[%c0_39, %c0_40] : memref<1024x128xf32, #tpu.memory_space<vmem>>, vector<1024x128xf32>
      tpu.vector_store %arg14[%c0_39, %c0_40], %60 {strides = array<i32>} : memref<1024x128xf32, #tpu.memory_space<vmem>>, vector<1024x128xf32>,
    } else {
    }
    %c1_i32 = arith.constant 1 : i32
    %42 = arith.muli %arg1, %c1_i32 : i32
    %43 = arith.addi %42, %arg2 : i32
    %44 = tpu.iota {dimensions = array<i32: 1>} : vector<1x128xi32>
    %c128_i32 = arith.constant 128 : i32
    %45 = arith.muli %43, %c128_i32 : i32
    %46 = vector.broadcast %45 : i32 to vector<1x128xi32>
    %47 = arith.addi %46, %44 : vector<1x128xi32>
    %c200_i32 = arith.constant 200 : i32
    %48 = vector.broadcast %c200_i32 : i32 to vector<1x128xi32>
    %49 = arith.cmpi slt, %47, %48 : vector<1x128xi32>
    %cst_31 = arith.constant 0.000000e+00 : f32
    %50 = vector.shape_cast %49 : vector<1x128xi1> to vector<1x128xi1>
    %51 = vector.broadcast %50 : vector<1x128xi1> to vector<1024x128xi1>
    %52 = vector.broadcast %cst_31 : f32 to vector<1024x128xf32>
    %53 = arith.select %51, %32, %52 : vector<1024x128xi1>, vector<1024x128xf32>
    %c0_32 = arith.constant 0 : index
    %c0_33 = arith.constant 0 : index
    %54 = vector.load %arg14[%c0_32, %c0_33] : memref<1024x128xf32, #tpu.memory_space<vmem>>, vector<1024x128xf32>
    %55 = arith.addf %54, %53 : vector<1024x128xf32>
    %c0_34 = arith.constant 0 : index
    %c0_35 = arith.constant 0 : index
    %56 = vector.load %arg14[%c0_34, %c0_35] : memref<1024x128xf32, #tpu.memory_space<vmem>>, vector<1024x128xf32>
    tpu.vector_store %arg14[%c0_34, %c0_35], %55 {strides = array<i32>} : memref<1024x128xf32, #tpu.memory_space<vmem>>, vector<1024x128xf32>,
    %c0_i32_36 = arith.constant 0 : i32
    %57 = arith.cmpi eq, %arg2, %c0_i32_36 : i32
    %58 = arith.extui %57 : i1 to i32
    %c0_i32_37 = arith.constant 0 : i32
    %59 = arith.cmpi ne, %58, %c0_i32_37 : i32
    scf.if %59 {
      %c0_38 = arith.constant 0 : index
      %c0_39 = arith.constant 0 : index
      %60 = vector.load %arg14[%c0_38, %c0_39] : memref<1024x128xf32, #tpu.memory_space<vmem>>, vector<1024x128xf32>
      %cst_40 = arith.constant dense<0.000000e+00> : vector<1024xf32>
      %61 = vector.multi_reduction <add>, %60, %cst_40 [1] : vector<1024x128xf32> to vector<1024xf32>
      %62 = vector.shape_cast %61 : vector<1024xf32> to vector<1024x1xf32>
      %c0_41 = arith.constant 0 : index
      %c0_42 = arith.constant 0 : index
      %c0_43 = arith.constant 0 : index
      %c0_44 = arith.constant 0 : index
      %63 = vector.load %arg13[%c0_41, %c0_42, %c0_43, %c0_44] : memref<1x1x1024x1xf32, #tpu.memory_space<vmem>>, vector<1x1x1024x1xf32>
      %64 = vector.shape_cast %63 : vector<1x1x1024x1xf32> to vector<1024x1xf32>
      %65 = vector.shape_cast %62 : vector<1024x1xf32> to vector<1x1x1024x1xf32>
      tpu.vector_store %arg13[%c0_41, %c0_42, %c0_43, %c0_44], %65 {strides = array<i32>} : memref<1x1x1024x1xf32, #tpu.memory_space<vmem>>, vector<1x1x1024x1xf32>,
    } else {
    }
    return
  }
  func.func @transform_0(%arg0: i32, %arg1: i32, %arg2: i32) -> (i32, i32, i32) {
    %c1_i32 = arith.constant 1 : i32
    %0 = arith.muli %arg1, %c1_i32 : i32
    %1 = arith.addi %0, %arg2 : i32
    %c0_i32 = arith.constant 0 : i32
    %c0_i32_0 = arith.constant 0 : i32
    return %arg0, %c0_i32, %1 : i32, i32, i32
  }
  func.func @transform_1(%arg0: i32, %arg1: i32, %arg2: i32) -> (i32, i32) {
    %c0_i32 = arith.constant 0 : i32
    %c0_i32_0 = arith.constant 0 : i32
    %c0_i32_1 = arith.constant 0 : i32
    return %c0_i32, %c0_i32_0 : i32, i32
  }
  func.func @transform_2(%arg0: i32, %arg1: i32, %arg2: i32) -> (i32, i32) {
    %c0_i32 = arith.constant 0 : i32
    %c0_i32_0 = arith.constant 0 : i32
    %c0_i32_1 = arith.constant 0 : i32
    return %c0_i32, %c0_i32_0 : i32, i32
  }
  func.func @transform_3(%arg0: i32, %arg1: i32, %arg2: i32) -> (i32, i32) {
    %c0_i32 = arith.constant 0 : i32
    %c0_i32_0 = arith.constant 0 : i32
    %c0_i32_1 = arith.constant 0 : i32
    return %c0_i32, %c0_i32_0 : i32, i32
  }
  func.func @transform_4(%arg0: i32, %arg1: i32, %arg2: i32) -> (i32, i32) {
    %c0_i32 = arith.constant 0 : i32
    %c0_i32_0 = arith.constant 0 : i32
    %c0_i32_1 = arith.constant 0 : i32
    return %c0_i32, %c0_i32_0 : i32, i32
  }
  func.func @transform_5(%arg0: i32, %arg1: i32, %arg2: i32) -> (i32, i32) {
    %c0_i32 = arith.constant 0 : i32
    %c0_i32_0 = arith.constant 0 : i32
    %c0_i32_1 = arith.constant 0 : i32
    return %c0_i32, %c0_i32_0 : i32, i32
  }
  func.func @transform_6(%arg0: i32, %arg1: i32, %arg2: i32) -> (i32, i32) {
    %c0_i32 = arith.constant 0 : i32
    %c0_i32_0 = arith.constant 0 : i32
    %c0_i32_1 = arith.constant 0 : i32
    return %c0_i32, %c0_i32_0 : i32, i32
  }
  func.func @transform_7(%arg0: i32, %arg1: i32, %arg2: i32) -> (i32, i32) {
    %c0_i32 = arith.constant 0 : i32
    %c0_i32_0 = arith.constant 0 : i32
    %c0_i32_1 = arith.constant 0 : i32
    return %c0_i32, %c0_i32_0 : i32, i32
  }
  func.func @transform_8(%arg0: i32, %arg1: i32, %arg2: i32) -> (i32, i32) {
    %c0_i32 = arith.constant 0 : i32
    %c0_i32_0 = arith.constant 0 : i32
    %c0_i32_1 = arith.constant 0 : i32
    return %c0_i32, %c0_i32_0 : i32, i32
  }
  func.func @transform_9(%arg0: i32, %arg1: i32, %arg2: i32) -> (i32, i32, i32) {
    %c1_i32 = arith.constant 1 : i32
    %0 = arith.muli %arg1, %c1_i32 : i32
    %1 = arith.addi %0, %arg2 : i32
    %c0_i32 = arith.constant 0 : i32
    %c0_i32_0 = arith.constant 0 : i32
    return %arg0, %c0_i32, %1 : i32, i32, i32
  }
  func.func @transform_10(%arg0: i32, %arg1: i32, %arg2: i32) -> (i32, i32, i32, i32) {
    %c0_i32 = arith.constant 0 : i32
    %c0_i32_0 = arith.constant 0 : i32
    %c0_i32_1 = arith.constant 0 : i32
    return %arg0, %arg1, %c0_i32, %c0_i32_0 : i32, i32, i32, i32
  }
}

module attributes {stable_mosaic.version = 11 : i64} {
  func.func @_epilogue_kernel(%arg0: i32, %arg1: i32, %arg2: i32, %arg3: memref<2x1408x200xf32, #tpu.memory_space<any>>, %arg4: memref<1x2x128x1xf32, #tpu.memory_space<vmem>>, %arg5: memref<1x128x128xf32, #tpu.memory_space<vmem>>) attributes {dimension_semantics = [#tpu.dimension_semantics<parallel>, #tpu.dimension_semantics<parallel>, #tpu.dimension_semantics<parallel>], iteration_bounds = array<i64: 2, 8, 2>, scalar_prefetch = 0 : i64, scratch_operands = 0 : i64, tpu.core_type = #tpu.core_type<tc>, window_params = [{}, {transform_indices = @transform_1, window_bounds = array<i64: 1, 2, 128, 1>}, {transform_indices = @transform_2, window_bounds = array<i64: 1, 128, 128>}]} {
    %c0 = arith.constant 0 : index
    %c0_0 = arith.constant 0 : index
    %c0_1 = arith.constant 0 : index
    %c0_2 = arith.constant 0 : index
    %0 = vector.load %arg4[%c0, %c0_0, %c0_1, %c0_2] : memref<1x2x128x1xf32, #tpu.memory_space<vmem>>, vector<1x1x128x1xf32>
    %1 = vector.shape_cast %0 : vector<1x1x128x1xf32> to vector<128x1xf32>
    %c0_3 = arith.constant 0 : index
    %c1 = arith.constant 1 : index
    %c0_4 = arith.constant 0 : index
    %c0_5 = arith.constant 0 : index
    %2 = vector.load %arg4[%c0_3, %c1, %c0_4, %c0_5] : memref<1x2x128x1xf32, #tpu.memory_space<vmem>>, vector<1x1x128x1xf32>
    %3 = vector.shape_cast %2 : vector<1x1x128x1xf32> to vector<128x1xf32>
    %4 = arith.addf %1, %3 : vector<128x1xf32>
    %cst = arith.constant 5.000000e-03 : f32
    %5 = vector.broadcast %cst : f32 to vector<128x1xf32>
    %6 = arith.mulf %4, %5 : vector<128x1xf32>
    %7 = vector.shape_cast %6 : vector<128x1xf32> to vector<128x1xf32>
    %8 = vector.broadcast %7 : vector<128x1xf32> to vector<128x128xf32>
    %c0_6 = arith.constant 0 : index
    %c0_7 = arith.constant 0 : index
    %c0_8 = arith.constant 0 : index
    %9 = vector.load %arg5[%c0_6, %c0_7, %c0_8] : memref<1x128x128xf32, #tpu.memory_space<vmem>>, vector<1x128x128xf32>
    %10 = vector.shape_cast %9 : vector<1x128x128xf32> to vector<128x128xf32>
    %11 = vector.shape_cast %8 : vector<128x128xf32> to vector<1x128x128xf32>
    tpu.vector_store %arg5[%c0_6, %c0_7, %c0_8], %11 {strides = array<i32>} : memref<1x128x128xf32, #tpu.memory_space<vmem>>, vector<1x128x128xf32>,
    return
  }
  func.func @transform_1(%arg0: i32, %arg1: i32, %arg2: i32) -> (i32, i32, i32, i32) {
    %c0_i32 = arith.constant 0 : i32
    %c0_i32_0 = arith.constant 0 : i32
    %c0_i32_1 = arith.constant 0 : i32
    return %arg0, %c0_i32, %arg1, %c0_i32_0 : i32, i32, i32, i32
  }
  func.func @transform_2(%arg0: i32, %arg1: i32, %arg2: i32) -> (i32, i32, i32) {
    %c3_i32 = arith.constant 3 : i32
    %0 = arith.addi %arg1, %c3_i32 : i32
    %c0_i32 = arith.constant 0 : i32
    return %arg0, %0, %arg2 : i32, i32, i32
  }
}

</mosaic_0001>

<llo_original>
// kernel: posenet_feat.3
$region0: #{posenet_feat.3}
  #allocation0 [shape = 'u32[]', space=smem, size = 0x4, offset = 0x4, fixed_abs, tag = 'smem constant byte address 0x4 - core index']
  #allocation1 [shape = 'u32[144,128]{1,0:T(1,128)}', space=vmem, size = 0x12000, scoped, tag = 'internal scratch']
  %s0 = inlined_call_operand.vmem [shape: f32[2,1408,200], index: 0, kind: input, shape index: {}, may-alias: {0,2}]
  %s1 = inlined_call_operand.vmem [shape: f32[2,2,1024,1], index: 1, kind: input, shape index: {}]
  %s2 = inlined_call_operand.vmem [shape: f32[2,1408,200], index: 2, kind: output, shape index: {}, may-alias: {0,2}]
  %s3 = sld [smem:[#allocation0]]
  $region109: #{posenet_feat.3} parent=0
    _
  %s5 = ssub.s32 1, %s3
  %s6 = scalar_select 0, %s5, %s3
  $region1: #{posenet_feat.3} parent=0
    #allocation2 [shape = 'u8[262144]{0}', space=vmem, size = 0x40000, scoped, tag = 'input window, operand 1']
    #allocation3 [shape = 'u8[131072]{0}', space=vmem, size = 0x20000, scoped, tag = 'output window, operand 0']
    loop: start=0, step=1, limit=34
    $region2: #{posenet_feat.3} parent=1 // loop_pre_header
      _
    $region3: #{posenet_feat.3} parent=1 // loop_header
      %s8 = sphi 0, %s12
      %p9 = scmp.ge.s32.totalorder %s8, 34
      %s15 = sphi 0, %s34
      %s16 = sphi 0, %s30
      %s17 = sphi 0, %s26
      %s18 = sphi 0, %s15
      %s19 = sphi 0, %s16
      %s20 = sphi 0, %s17
      %s21 = sphi 0, %s18
      %s22 = sphi 0, %s19
      %s23 = sphi 0, %s20
      %s39 = sphi 0, %s41
      %s42 = sphi 0, %s39
      %s43 = sphi 0, %s42
      %s59 = sphi 0, %s43
      %s71 = sphi 0, %s73
      %s74 = sphi 0, %s71
      %s75 = sphi 0, %s74
      %s91 = sphi 0, %s75
    $region4: #{posenet_feat.3} parent=1 // loop_header_branch
      %11 = sbr.rel (%p9) target = $region8
    $region5: #{posenet_feat.3} parent=1 // loop_body
      %s13 = ssub.s32 %s8, 1
      %s14 = ssub.s32 %s8, 2
      %s24 = sadd.s32 1, %s17
      %p25 = scmp.ge.s32.totalorder %s24, 2
      %s26 = scalar_select %p25, 0, %s24
      %s27 = sadd.s32 1, %s16
      %s28 = scalar_select %p25, %s27, %s16
      %p29 = scmp.ge.s32.totalorder %s28, 8
      %s30 = scalar_select %p29, 0, %s28
      %s31 = sadd.s32 1, %s15
      %s32 = scalar_select %p29, %s31, %s15
      %p33 = scmp.ge.s32.totalorder %s32, 2
      %s34 = scalar_select %p33, 0, %s32
      %s35 = ssub.s32 %s15, %s34
      %s36 = ssub.s32 %s16, %s30
      %s37 = sor.u32 %s35, %s36
      %p38 = scmp.eq.s32.totalorder %s37, 0
      %s40 = sadd.s32 %s39, 1
      %s41 = scalar_select %p38, %s39, %s40
      %p44 = pneg %p38
      %p45 = scmp.eq.s32.totalorder %s8, 31
      %p46 = por %p44, %p45
      %p47 = scmp.ne.s32.totalorder %s39, %s42
      %p48 = scmp.eq.s32.totalorder %s8, 0
      %p49 = por %p47, %p48
      %p50 = scmp.ne.s32.totalorder %s39, %s42
      %p51 = scmp.eq.s32.totalorder %s13, 31
      %p52 = por %p50, %p51
      %p53 = scmp.ne.s32.totalorder %s42, %s43
      %p54 = scmp.eq.s32.totalorder %s13, 0
      %p55 = por %p53, %p54
      %p56 = scmp.ne.s32.totalorder %s42, %s43
      %p57 = scmp.eq.s32.totalorder %s14, 31
      %p58 = por %p56, %p57
      %p60 = scmp.ne.s32.totalorder %s43, %s59
      %p61 = scmp.eq.s32.totalorder %s14, 0
      %p62 = por %p60, %p61
      %s63 = sadd.s32 %s16, 3
      %s64 = sadd.s32 %s30, 3
      %s65 = ssub.s32 %s15, %s34
      %s66 = ssub.s32 %s63, %s64
      %s67 = sor.u32 %s65, %s66
      %s68 = ssub.s32 %s17, %s26
      %s69 = sor.u32 %s67, %s68
      %p70 = scmp.eq.s32.totalorder %s69, 0
      %s72 = sadd.s32 %s71, 1
      %s73 = scalar_select %p70, %s71, %s72
      %p76 = pneg %p70
      %p77 = scmp.eq.s32.totalorder %s8, 31
      %p78 = por %p76, %p77
      %p79 = scmp.ne.s32.totalorder %s71, %s74
      %p80 = scmp.eq.s32.totalorder %s8, 0
      %p81 = por %p79, %p80
      %p82 = scmp.ne.s32.totalorder %s71, %s74
      %p83 = scmp.eq.s32.totalorder %s13, 31
      %p84 = por %p82, %p83
      %p85 = scmp.ne.s32.totalorder %s74, %s75
      %p86 = scmp.eq.s32.totalorder %s13, 0
      %p87 = por %p85, %p86
      %p88 = scmp.ne.s32.totalorder %s74, %s75
      %p89 = scmp.eq.s32.totalorder %s14, 31
      %p90 = por %p88, %p89
      %p92 = scmp.ne.s32.totalorder %s75, %s91
      %p93 = scmp.eq.s32.totalorder %s14, 0
      %p94 = por %p92, %p93
      %p95 = scmp.le.s32.totalorder 1, %s8
      %p96 = scmp.lt.s32.totalorder %s8, 33
      %p97 = pnand %p95, %p96
      %p98 = pneg %p97
      // Predicated region
      $region9: #{posenet_feat.3} parent=5 // pred_check
        _
      $region10: #{posenet_feat.3} parent=5 // pred_check_branch
        %100 = sbr.rel (%p97) target = $region12
      $region11: #{posenet_feat.3} parent=5 // pred_region
        %s101 = ssub.s32 %s8, 1
      $region12: #{posenet_feat.3} parent=5 // pred_fallthru
        _
      %p102 = scmp.lt.s32.totalorder %s8, 32
      // Predicated region
      $region13: #{posenet_feat.3} parent=5 // pred_check
        %p103 = pneg %p102
      $region14: #{posenet_feat.3} parent=5 // pred_check_branch
        %105 = sbr.rel (%p103) target = $region16
      $region15: #{posenet_feat.3} parent=5 // pred_region
        // Predicated region
        $region17: #{posenet_feat.3} parent=15 // pred_check
          %p106 = pneg %p49
        $region18: #{posenet_feat.3} parent=15 // pred_check_branch
          %108 = sbr.rel (%p106) target = $region20
        $region19: #{posenet_feat.3} parent=15 // pred_region
          %s109 = sand.u32 %s39, 1
          %s110 = sand.u32 %s39, 1
          %s111 = smul.addr %s110, 256
          %s112 = scalar_lea.vmem [#allocation2], %s111
          %s113 = smul.u32 16, %s16
          %s114 = smul.addr %s15, 256
          %s115 = sadd.s32 %s113, %s114
          %s116 = smul.addr %s115, 8
          %s117 = scalar_lea.vmem %s1, %s116
          // Predicated region
          $region21: #{posenet_feat.3} parent=19 // pred_check
            _
          $region22: #{posenet_feat.3} parent=19 // pred_check_branch
            %119 = sbr.rel (0) target = $region24
          $region23: #{posenet_feat.3} parent=19 // pred_region
            // Predicated region
            $region25: #{posenet_feat.3} parent=23 // pred_check
              _
            $region26: #{posenet_feat.3} parent=23 // pred_check_branch
              %121 = sbr.rel (0) target = $region28
            $region27: #{posenet_feat.3} parent=23 // pred_region
              // Predicated region
              $region40: #{posenet_feat.3} parent=27 // pred_check
                _
              $region41: #{posenet_feat.3} parent=27 // pred_check_branch
                %198 = sbr.rel (0) target = $region43
              $region42: #{posenet_feat.3} parent=27 // pred_region
                loop: start=0, step=1, limit=1
                $region44: #{posenet_feat.3} parent=42 // loop_pre_header
                  _
                $region45: #{posenet_feat.3} parent=42 // loop_header
                  %s200 = sphi 0, %s204
                  %p201 = scmp.ge.s32.totalorder %s200, 1
                  %s205 = sphi %s117, %s117
                  %s206 = sphi %s112, %s112
                $region46: #{posenet_feat.3} parent=42 // loop_header_branch
                  %203 = sbr.rel (%p201) target = $region50
                $region47: #{posenet_feat.3} parent=42 // loop_body
                  %v207 = vld [vmem:[%s205] sm:$0xff]
                  %208 = vst [vmem:[%s206] sm:$0xff] %v207
                  %v209 = vld [vmem:[%s205 + $0x8] sm:$0xff]
                  %210 = vst [vmem:[%s206 + $0x8] sm:$0xff] %v209
                  %v211 = vld [vmem:[%s205 + $0x10] sm:$0xff]
                  %212 = vst [vmem:[%s206 + $0x10] sm:$0xff] %v211
                  %v213 = vld [vmem:[%s205 + $0x18] sm:$0xff]
                  %214 = vst [vmem:[%s206 + $0x18] sm:$0xff] %v213
                  %v215 = vld [vmem:[%s205 + $0x20] sm:$0xff]
                  %216 = vst [vmem:[%s206 + $0x20] sm:$0xff] %v215
                  %v217 = vld [vmem:[%s205 + $0x28] sm:$0xff]
                  %218 = vst [vmem:[%s206 + $0x28] sm:$0xff] %v217
                  %v219 = vld [vmem:[%s205 + $0x30] sm:$0xff]
                  %220 = vst [vmem:[%s206 + $0x30] sm:$0xff] %v219
                  %v221 = vld [vmem:[%s205 + $0x38] sm:$0xff]
                  %222 = vst [vmem:[%s206 + $0x38] sm:$0xff] %v221
                  %v223 = vld [vmem:[%s205 + $0x40] sm:$0xff]
                  %224 = vst [vmem:[%s206 + $0x40] sm:$0xff] %v223
                  %v225 = vld [vmem:[%s205 + $0x48] sm:$0xff]
                  %226 = vst [vmem:[%s206 + $0x48] sm:$0xff] %v225
                  %v227 = vld [vmem:[%s205 + $0x50] sm:$0xff]
                  %228 = vst [vmem:[%s206 + $0x50] sm:$0xff] %v227
                  %v229 = vld [vmem:[%s205 + $0x58] sm:$0xff]
                  %230 = vst [vmem:[%s206 + $0x58] sm:$0xff] %v229
                  %v231 = vld [vmem:[%s205 + $0x60] sm:$0xff]
                  %232 = vst [vmem:[%s206 + $0x60] sm:$0xff] %v231
                  %v233 = vld [vmem:[%s205 + $0x68] sm:$0xff]
                  %234 = vst [vmem:[%s206 + $0x68] sm:$0xff] %v233
                  %v235 = vld [vmem:[%s205 + $0x70] sm:$0xff]
                  %236 = vst [vmem:[%s206 + $0x70] sm:$0xff] %v235
                  %v237 = vld [vmem:[%s205 + $0x78] sm:$0xff]
                  %238 = vst [vmem:[%s206 + $0x78] sm:$0xff] %v237
                  %v239 = vld [vmem:[%s205 + $0x400] sm:$0xff]
                  %240 = vst [vmem:[%s206 + $0x80] sm:$0xff] %v239
                  %v241 = vld [vmem:[%s205 + $0x408] sm:$0xff]
                  %242 = vst [vmem:[%s206 + $0x88] sm:$0xff] %v241
                  %v243 = vld [vmem:[%s205 + $0x410] sm:$0xff]
                  %244 = vst [vmem:[%s206 + $0x90] sm:$0xff] %v243
                  %v245 = vld [vmem:[%s205 + $0x418] sm:$0xff]
                  %246 = vst [vmem:[%s206 + $0x98] sm:$0xff] %v245
                  %v247 = vld [vmem:[%s205 + $0x420] sm:$0xff]
                  %248 = vst [vmem:[%s206 + $0xa0] sm:$0xff] %v247
                  %v249 = vld [vmem:[%s205 + $0x428] sm:$0xff]
                  %250 = vst [vmem:[%s206 + $0xa8] sm:$0xff] %v249
                  %v251 = vld [vmem:[%s205 + $0x430] sm:$0xff]
                  %252 = vst [vmem:[%s206 + $0xb0] sm:$0xff] %v251
                  %v253 = vld [vmem:[%s205 + $0x438] sm:$0xff]
                  %254 = vst [vmem:[%s206 + $0xb8] sm:$0xff] %v253
                  %v255 = vld [vmem:[%s205 + $0x440] sm:$0xff]
                  %256 = vst [vmem:[%s206 + $0xc0] sm:$0xff] %v255
                  %v257 = vld [vmem:[%s205 + $0x448] sm:$0xff]
                  %258 = vst [vmem:[%s206 + $0xc8] sm:$0xff] %v257
                  %v259 = vld [vmem:[%s205 + $0x450] sm:$0xff]
                  %260 = vst [vmem:[%s206 + $0xd0] sm:$0xff] %v259
                  %v261 = vld [vmem:[%s205 + $0x458] sm:$0xff]
                  %262 = vst [vmem:[%s206 + $0xd8] sm:$0xff] %v261
                  %v263 = vld [vmem:[%s205 + $0x460] sm:$0xff]
                  %264 = vst [vmem:[%s206 + $0xe0] sm:$0xff] %v263
                  %v265 = vld [vmem:[%s205 + $0x468] sm:$0xff]
                  %266 = vst [vmem:[%s206 + $0xe8] sm:$0xff] %v265
                  %v267 = vld [vmem:[%s205 + $0x470] sm:$0xff]
                  %268 = vst [vmem:[%s206 + $0xf0] sm:$0xff] %v267
                  %v269 = vld [vmem:[%s205 + $0x478] sm:$0xff]
                  %270 = vst [vmem:[%s206 + $0xf8] sm:$0xff] %v269
                $region48: #{posenet_feat.3} parent=42 // loop_footer
                  %s204 = sadd.s32 1, %s200
                $region49: #{posenet_feat.3} parent=42 // loop_footer_branch
                  %199 = sbr.rel target = $region45
                $region50: #{posenet_feat.3} parent=42 // loop_exit
                  _
              $region43: #{posenet_feat.3} parent=27 // pred_fallthru
                _
              // Predicated region
              $region51: #{posenet_feat.3} parent=27 // pred_check
                _
              $region52: #{posenet_feat.3} parent=27 // pred_check_branch
                %272 = sbr.rel target = $region54
              $region53: #{posenet_feat.3} parent=27 // pred_region
                _
              $region54: #{posenet_feat.3} parent=27 // pred_fallthru
                _
            $region28: #{posenet_feat.3} parent=23 // pred_fallthru
              _
            // Predicated region
            $region29: #{posenet_feat.3} parent=23 // pred_check
              _
            $region30: #{posenet_feat.3} parent=23 // pred_check_branch
              %123 = sbr.rel target = $region32
            $region31: #{posenet_feat.3} parent=23 // pred_region
              loop: start=0, step=1, limit=1
              $region33: #{posenet_feat.3} parent=31 // loop_pre_header
                _
              $region34: #{posenet_feat.3} parent=31 // loop_header
                %s126 = sphi 0, %s130
                %p127 = scmp.ge.s32.totalorder %s126, 1
                %s131 = sphi %s117, %s117
                %s132 = sphi %s112, %s112
              $region35: #{posenet_feat.3} parent=31 // loop_header_branch
                %129 = sbr.rel (%p127) target = $region39
              $region36: #{posenet_feat.3} parent=31 // loop_body
                %v133 = vld [vmem:[%s131] sm:$0xff]
                %134 = vst [vmem:[%s132] sm:$0xff] %v133
                %v135 = vld [vmem:[%s131 + $0x8] sm:$0xff]
                %136 = vst [vmem:[%s132 + $0x8] sm:$0xff] %v135
                %v137 = vld [vmem:[%s131 + $0x10] sm:$0xff]
                %138 = vst [vmem:[%s132 + $0x10] sm:$0xff] %v137
                %v139 = vld [vmem:[%s131 + $0x18] sm:$0xff]
                %140 = vst [vmem:[%s132 + $0x18] sm:$0xff] %v139
                %v141 = vld [vmem:[%s131 + $0x20] sm:$0xff]
                %142 = vst [vmem:[%s132 + $0x20] sm:$0xff] %v141
                %v143 = vld [vmem:[%s131 + $0x28] sm:$0xff]
                %144 = vst [vmem:[%s132 + $0x28] sm:$0xff] %v143
                %v145 = vld [vmem:[%s131 + $0x30] sm:$0xff]
                %146 = vst [vmem:[%s132 + $0x30] sm:$0xff] %v145
                %v147 = vld [vmem:[%s131 + $0x38] sm:$0xff]
                %148 = vst [vmem:[%s132 + $0x38] sm:$0xff] %v147
                %v149 = vld [vmem:[%s131 + $0x40] sm:$0xff]
                %150 = vst [vmem:[%s132 + $0x40] sm:$0xff] %v149
                %v151 = vld [vmem:[%s131 + $0x48] sm:$0xff]
                %152 = vst [vmem:[%s132 + $0x48] sm:$0xff] %v151
                %v153 = vld [vmem:[%s131 + $0x50] sm:$0xff]
                %154 = vst [vmem:[%s132 + $0x50] sm:$0xff] %v153
                %v155 = vld [vmem:[%s131 + $0x58] sm:$0xff]
                %156 = vst [vmem:[%s132 + $0x58] sm:$0xff] %v155
                %v157 = vld [vmem:[%s131 + $0x60] sm:$0xff]
                %158 = vst [vmem:[%s132 + $0x60] sm:$0xff] %v157
                %v159 = vld [vmem:[%s131 + $0x68] sm:$0xff]
                %160 = vst [vmem:[%s132 + $0x68] sm:$0xff] %v159
                %v161 = vld [vmem:[%s131 + $0x70] sm:$0xff]
                %162 = vst [vmem:[%s132 + $0x70] sm:$0xff] %v161
                %v163 = vld [vmem:[%s131 + $0x78] sm:$0xff]
                %164 = vst [vmem:[%s132 + $0x78] sm:$0xff] %v163
                %v165 = vld [vmem:[%s131 + $0x400] sm:$0xff]
                %166 = vst [vmem:[%s132 + $0x80] sm:$0xff] %v165
                %v167 = vld [vmem:[%s131 + $0x408] sm:$0xff]
                %168 = vst [vmem:[%s132 + $0x88] sm:$0xff] %v167
                %v169 = vld [vmem:[%s131 + $0x410] sm:$0xff]
                %170 = vst [vmem:[%s132 + $0x90] sm:$0xff] %v169
                %v171 = vld [vmem:[%s131 + $0x418] sm:$0xff]
                %172 = vst [vmem:[%s132 + $0x98] sm:$0xff] %v171
                %v173 = vld [vmem:[%s131 + $0x420] sm:$0xff]
                %174 = vst [vmem:[%s132 + $0xa0] sm:$0xff] %v173
                %v175 = vld [vmem:[%s131 + $0x428] sm:$0xff]
                %176 = vst [vmem:[%s132 + $0xa8] sm:$0xff] %v175
                %v177 = vld [vmem:[%s131 + $0x430] sm:$0xff]
                %178 = vst [vmem:[%s132 + $0xb0] sm:$0xff] %v177
                %v179 = vld [vmem:[%s131 + $0x438] sm:$0xff]
                %180 = vst [vmem:[%s132 + $0xb8] sm:$0xff] %v179
                %v181 = vld [vmem:[%s131 + $0x440] sm:$0xff]
                %182 = vst [vmem:[%s132 + $0xc0] sm:$0xff] %v181
                %v183 = vld [vmem:[%s131 + $0x448] sm:$0xff]
                %184 = vst [vmem:[%s132 + $0xc8] sm:$0xff] %v183
                %v185 = vld [vmem:[%s131 + $0x450] sm:$0xff]
                %186 = vst [vmem:[%s132 + $0xd0] sm:$0xff] %v185
                %v187 = vld [vmem:[%s131 + $0x458] sm:$0xff]
                %188 = vst [vmem:[%s132 + $0xd8] sm:$0xff] %v187
                %v189 = vld [vmem:[%s131 + $0x460] sm:$0xff]
                %190 = vst [vmem:[%s132 + $0xe0] sm:$0xff] %v189
                %v191 = vld [vmem:[%s131 + $0x468] sm:$0xff]
                %192 = vst [vmem:[%s132 + $0xe8] sm:$0xff] %v191
                %v193 = vld [vmem:[%s131 + $0x470] sm:$0xff]
                %194 = vst [vmem:[%s132 + $0xf0] sm:$0xff] %v193
                %v195 = vld [vmem:[%s131 + $0x478] sm:$0xff]
                %196 = vst [vmem:[%s132 + $0xf8] sm:$0xff] %v195
              $region37: #{posenet_feat.3} parent=31 // loop_footer
                %s130 = sadd.s32 1, %s126
              $region38: #{posenet_feat.3} parent=31 // loop_footer_branch
                %125 = sbr.rel target = $region34
              $region39: #{posenet_feat.3} parent=31 // loop_exit
                _
            $region32: #{posenet_feat.3} parent=23 // pred_fallthru
              _
          $region24: #{posenet_feat.3} parent=19 // pred_fallthru
            _
          %273 = vnop
        $region20: #{posenet_feat.3} parent=15 // pred_fallthru
          _
      $region16: #{posenet_feat.3} parent=5 // pred_fallthru
        _
      %p274 = scmp.le.s32.totalorder 1, %s8
      %p275 = scmp.lt.s32.totalorder %s8, 33
      %p276 = pnand %p274, %p275
      %p277 = pneg %p276
      // Predicated region
      $region55: #{posenet_feat.3} parent=5 // pred_check
        _
      $region56: #{posenet_feat.3} parent=5 // pred_check_branch
        %279 = sbr.rel (%p276) target = $region58
      $region57: #{posenet_feat.3} parent=5 // pred_region
        %s280 = ssub.s32 %s8, 1
        %s281 = sand.u32 %s42, 1
        %s282 = sand.u32 %s42, 1
        %s283 = smul.addr %s282, 256
        %s284 = scalar_lea.vmem [#allocation2], %s283
        // Predicated region
        $region59: #{posenet_feat.3} parent=57 // pred_check
          %p285 = pneg %p55
        $region60: #{posenet_feat.3} parent=57 // pred_check_branch
          %287 = sbr.rel (%p285) target = $region62
        $region61: #{posenet_feat.3} parent=57 // pred_region
          _
        $region62: #{posenet_feat.3} parent=57 // pred_fallthru
          _
        %s288 = sand.u32 %s42, 1
        %s289 = sand.u32 %s42, 1
        %s290 = smul.addr %s289, 256
        %s291 = scalar_lea.vmem [#allocation2], %s290
        %p292 = pneg %p55
        %p293 = pneg %p52
        %p294 = pneg %p87
        %p295 = pneg %p84
        %s296 = sand.u32 %s74, 1
        %s297 = sand.u32 %s74, 1
        %s298 = smul.addr %s297, 128
        %s299 = scalar_lea.vmem [#allocation3], %s298
        %s300 = smul.u32 16, %s19
        %s301 = sadd.s32 %s19, 3
        %s302 = smul.u32 16, %s301
        %v303 = vld [vmem:[%s284] sm:$0xff]
        %v304 = vld [vmem:[%s284 + $0x8] sm:$0xff]
        %v305 = vld [vmem:[%s284 + $0x10] sm:$0xff]
        %v306 = vld [vmem:[%s284 + $0x18] sm:$0xff]
        %v307 = vld [vmem:[%s284 + $0x20] sm:$0xff]
        %v308 = vld [vmem:[%s284 + $0x28] sm:$0xff]
        %v309 = vld [vmem:[%s284 + $0x30] sm:$0xff]
        %v310 = vld [vmem:[%s284 + $0x38] sm:$0xff]
        %v311 = vld [vmem:[%s284 + $0x40] sm:$0xff]
        %v312 = vld [vmem:[%s284 + $0x48] sm:$0xff]
        %v313 = vld [vmem:[%s284 + $0x50] sm:$0xff]
        %v314 = vld [vmem:[%s284 + $0x58] sm:$0xff]
        %v315 = vld [vmem:[%s284 + $0x60] sm:$0xff]
        %v316 = vld [vmem:[%s284 + $0x68] sm:$0xff]
        %v317 = vld [vmem:[%s284 + $0x70] sm:$0xff]
        %v318 = vld [vmem:[%s284 + $0x78] sm:$0xff]
        %s319 = scalar_lea.vmem %s284, 128 [#allocation2]
        %v320 = vld [vmem:[%s319] sm:$0xff]
        %v321 = vld [vmem:[%s319 + $0x8] sm:$0xff]
        %v322 = vld [vmem:[%s319 + $0x10] sm:$0xff]
        %v323 = vld [vmem:[%s319 + $0x18] sm:$0xff]
        %v324 = vld [vmem:[%s319 + $0x20] sm:$0xff]
        %v325 = vld [vmem:[%s319 + $0x28] sm:$0xff]
        %v326 = vld [vmem:[%s319 + $0x30] sm:$0xff]
        %v327 = vld [vmem:[%s319 + $0x38] sm:$0xff]
        %v328 = vld [vmem:[%s319 + $0x40] sm:$0xff]
        %v329 = vld [vmem:[%s319 + $0x48] sm:$0xff]
        %v330 = vld [vmem:[%s319 + $0x50] sm:$0xff]
        %v331 = vld [vmem:[%s319 + $0x58] sm:$0xff]
        %v332 = vld [vmem:[%s319 + $0x60] sm:$0xff]
        %v333 = vld [vmem:[%s319 + $0x68] sm:$0xff]
        %v334 = vld [vmem:[%s319 + $0x70] sm:$0xff]
        %v335 = vld [vmem:[%s319 + $0x78] sm:$0xff]
        %v336 = vadd.f32 %v303, %v320
        %v337 = vadd.f32 %v304, %v321
        %v338 = vadd.f32 %v305, %v322
        %v339 = vadd.f32 %v306, %v323
        %v340 = vadd.f32 %v307, %v324
        %v341 = vadd.f32 %v308, %v325
        %v342 = vadd.f32 %v309, %v326
        %v343 = vadd.f32 %v310, %v327
        %v344 = vadd.f32 %v311, %v328
        %v345 = vadd.f32 %v312, %v329
        %v346 = vadd.f32 %v313, %v330
        %v347 = vadd.f32 %v314, %v331
        %v348 = vadd.f32 %v315, %v332
        %v349 = vadd.f32 %v316, %v333
        %v350 = vadd.f32 %v317, %v334
        %v351 = vadd.f32 %v318, %v335
        %v352 = vmul.f32 %v336, 0.005
        %v353 = vmul.f32 %v337, 0.005
        %v354 = vmul.f32 %v338, 0.005
        %v355 = vmul.f32 %v339, 0.005
        %v356 = vmul.f32 %v340, 0.005
        %v357 = vmul.f32 %v341, 0.005
        %v358 = vmul.f32 %v342, 0.005
        %v359 = vmul.f32 %v343, 0.005
        %v360 = vmul.f32 %v344, 0.005
        %v361 = vmul.f32 %v345, 0.005
        %v362 = vmul.f32 %v346, 0.005
        %v363 = vmul.f32 %v347, 0.005
        %v364 = vmul.f32 %v348, 0.005
        %v365 = vmul.f32 %v349, 0.005
        %v366 = vmul.f32 %v350, 0.005
        %v367 = vmul.f32 %v351, 0.005
        %369 = vset.pattern.permute.xlu0 0
        %370 = vperm.xlu0 %369, %v352
        %v371 = vpop.permute.xlu0 %370
        %374 = vset.pattern.permute.xlu0 0
        %375 = vperm.xlu0 %374, %v353
        %v376 = vpop.permute.xlu0 %375
        %379 = vset.pattern.permute.xlu0 0
        %380 = vperm.xlu0 %379, %v354
        %v381 = vpop.permute.xlu0 %380
        %384 = vset.pattern.permute.xlu0 0
        %385 = vperm.xlu0 %384, %v355
        %v386 = vpop.permute.xlu0 %385
        %389 = vset.pattern.permute.xlu0 0
        %390 = vperm.xlu0 %389, %v356
        %v391 = vpop.permute.xlu0 %390
        %394 = vset.pattern.permute.xlu0 0
        %395 = vperm.xlu0 %394, %v357
        %v396 = vpop.permute.xlu0 %395
        %399 = vset.pattern.permute.xlu0 0
        %400 = vperm.xlu0 %399, %v358
        %v401 = vpop.permute.xlu0 %400
        %404 = vset.pattern.permute.xlu0 0
        %405 = vperm.xlu0 %404, %v359
        %v406 = vpop.permute.xlu0 %405
        %409 = vset.pattern.permute.xlu0 0
        %410 = vperm.xlu0 %409, %v360
        %v411 = vpop.permute.xlu0 %410
        %414 = vset.pattern.permute.xlu0 0
        %415 = vperm.xlu0 %414, %v361
        %v416 = vpop.permute.xlu0 %415
        %419 = vset.pattern.permute.xlu0 0
        %420 = vperm.xlu0 %419, %v362
        %v421 = vpop.permute.xlu0 %420
        %424 = vset.pattern.permute.xlu0 0
        %425 = vperm.xlu0 %424, %v363
        %v426 = vpop.permute.xlu0 %425
        %429 = vset.pattern.permute.xlu0 0
        %430 = vperm.xlu0 %429, %v364
        %v431 = vpop.permute.xlu0 %430
        %434 = vset.pattern.permute.xlu0 0
        %435 = vperm.xlu0 %434, %v365
        %v436 = vpop.permute.xlu0 %435
        %439 = vset.pattern.permute.xlu0 0
        %440 = vperm.xlu0 %439, %v366
        %v441 = vpop.permute.xlu0 %440
        %444 = vset.pattern.permute.xlu0 0
        %445 = vperm.xlu0 %444, %v367
        %v446 = vpop.permute.xlu0 %445
        %448 = vst [vmem:[%s299] sm:$0xff] %v371
        %449 = vst [vmem:[%s299 + $0x8] sm:$0xff] %v376
        %450 = vst [vmem:[%s299 + $0x10] sm:$0xff] %v381
        %451 = vst [vmem:[%s299 + $0x18] sm:$0xff] %v386
        %452 = vst [vmem:[%s299 + $0x20] sm:$0xff] %v391
        %453 = vst [vmem:[%s299 + $0x28] sm:$0xff] %v396
        %454 = vst [vmem:[%s299 + $0x30] sm:$0xff] %v401
        %455 = vst [vmem:[%s299 + $0x38] sm:$0xff] %v406
        %456 = vst [vmem:[%s299 + $0x40] sm:$0xff] %v411
        %457 = vst [vmem:[%s299 + $0x48] sm:$0xff] %v416
        %458 = vst [vmem:[%s299 + $0x50] sm:$0xff] %v421
        %459 = vst [vmem:[%s299 + $0x58] sm:$0xff] %v426
        %460 = vst [vmem:[%s299 + $0x60] sm:$0xff] %v431
        %461 = vst [vmem:[%s299 + $0x68] sm:$0xff] %v436
        %462 = vst [vmem:[%s299 + $0x70] sm:$0xff] %v441
        %463 = vst [vmem:[%s299 + $0x78] sm:$0xff] %v446
        %s464 = sand.u32 %s74, 1
        %s465 = sand.u32 %s74, 1
        %s466 = smul.addr %s465, 128
        %s467 = scalar_lea.vmem [#allocation3], %s466
        // Predicated region
        $region63: #{posenet_feat.3} parent=57 // pred_check
          %p468 = pneg %p84
        $region64: #{posenet_feat.3} parent=57 // pred_check_branch
          %470 = sbr.rel (%p468) target = $region66
        $region65: #{posenet_feat.3} parent=57 // pred_region
          %s471 = sadd.s32 %s19, 3
          %s472 = smul.u32 16, %s471
          %s473 = smul.addr %s472, 2
          %s474 = sadd.s32 %s20, %s473
          %s475 = smul.addr %s18, 352
          %s476 = sadd.s32 %s474, %s475
          %s477 = smul.addr %s476, 8
          %s478 = scalar_lea.vmem %s2, %s477
          // Predicated region
          $region67: #{posenet_feat.3} parent=65 // pred_check
            _
          $region68: #{posenet_feat.3} parent=65 // pred_check_branch
            %480 = sbr.rel (0) target = $region70
          $region69: #{posenet_feat.3} parent=65 // pred_region
            // Predicated region
            $region71: #{posenet_feat.3} parent=69 // pred_check
              _
            $region72: #{posenet_feat.3} parent=69 // pred_check_branch
              %482 = sbr.rel (0) target = $region74
            $region73: #{posenet_feat.3} parent=69 // pred_region
              // Predicated region
              $region86: #{posenet_feat.3} parent=73 // pred_check
                _
              $region87: #{posenet_feat.3} parent=73 // pred_check_branch
                %527 = sbr.rel (0) target = $region89
              $region88: #{posenet_feat.3} parent=73 // pred_region
                loop: start=0, step=1, limit=1
                $region90: #{posenet_feat.3} parent=88 // loop_pre_header
                  _
                $region91: #{posenet_feat.3} parent=88 // loop_header
                  %s529 = sphi 0, %s533
                  %p530 = scmp.ge.s32.totalorder %s529, 1
                  %s534 = sphi %s467, %s467
                  %s535 = sphi %s478, %s478
                $region92: #{posenet_feat.3} parent=88 // loop_header_branch
                  %532 = sbr.rel (%p530) target = $region96
                $region93: #{posenet_feat.3} parent=88 // loop_body
                  %v536 = vld [vmem:[%s534] sm:$0xff]
                  %537 = vst [vmem:[%s535] sm:$0xff] %v536
                  %v538 = vld [vmem:[%s534 + $0x8] sm:$0xff]
                  %539 = vst [vmem:[%s535 + $0x10] sm:$0xff] %v538
                  %v540 = vld [vmem:[%s534 + $0x10] sm:$0xff]
                  %541 = vst [vmem:[%s535 + $0x20] sm:$0xff] %v540
                  %v542 = vld [vmem:[%s534 + $0x18] sm:$0xff]
                  %543 = vst [vmem:[%s535 + $0x30] sm:$0xff] %v542
                  %v544 = vld [vmem:[%s534 + $0x20] sm:$0xff]
                  %545 = vst [vmem:[%s535 + $0x40] sm:$0xff] %v544
                  %v546 = vld [vmem:[%s534 + $0x28] sm:$0xff]
                  %547 = vst [vmem:[%s535 + $0x50] sm:$0xff] %v546
                  %v548 = vld [vmem:[%s534 + $0x30] sm:$0xff]
                  %549 = vst [vmem:[%s535 + $0x60] sm:$0xff] %v548
                  %v550 = vld [vmem:[%s534 + $0x38] sm:$0xff]
                  %551 = vst [vmem:[%s535 + $0x70] sm:$0xff] %v550
                  %v552 = vld [vmem:[%s534 + $0x40] sm:$0xff]
                  %553 = vst [vmem:[%s535 + $0x80] sm:$0xff] %v552
                  %v554 = vld [vmem:[%s534 + $0x48] sm:$0xff]
                  %555 = vst [vmem:[%s535 + $0x90] sm:$0xff] %v554
                  %v556 = vld [vmem:[%s534 + $0x50] sm:$0xff]
                  %557 = vst [vmem:[%s535 + $0xa0] sm:$0xff] %v556
                  %v558 = vld [vmem:[%s534 + $0x58] sm:$0xff]
                  %559 = vst [vmem:[%s535 + $0xb0] sm:$0xff] %v558
                  %v560 = vld [vmem:[%s534 + $0x60] sm:$0xff]
                  %561 = vst [vmem:[%s535 + $0xc0] sm:$0xff] %v560
                  %v562 = vld [vmem:[%s534 + $0x68] sm:$0xff]
                  %563 = vst [vmem:[%s535 + $0xd0] sm:$0xff] %v562
                  %v564 = vld [vmem:[%s534 + $0x70] sm:$0xff]
                  %565 = vst [vmem:[%s535 + $0xe0] sm:$0xff] %v564
                  %v566 = vld [vmem:[%s534 + $0x78] sm:$0xff]
                  %567 = vst [vmem:[%s535 + $0xf0] sm:$0xff] %v566
                $region94: #{posenet_feat.3} parent=88 // loop_footer
                  %s533 = sadd.s32 1, %s529
                $region95: #{posenet_feat.3} parent=88 // loop_footer_branch
                  %528 = sbr.rel target = $region91
                $region96: #{posenet_feat.3} parent=88 // loop_exit
                  _
              $region89: #{posenet_feat.3} parent=73 // pred_fallthru
                _
              // Predicated region
              $region97: #{posenet_feat.3} parent=73 // pred_check
                _
              $region98: #{posenet_feat.3} parent=73 // pred_check_branch
                %569 = sbr.rel target = $region100
              $region99: #{posenet_feat.3} parent=73 // pred_region
                _
              $region100: #{posenet_feat.3} parent=73 // pred_fallthru
                _
            $region74: #{posenet_feat.3} parent=69 // pred_fallthru
              _
            // Predicated region
            $region75: #{posenet_feat.3} parent=69 // pred_check
              _
            $region76: #{posenet_feat.3} parent=69 // pred_check_branch
              %484 = sbr.rel target = $region78
            $region77: #{posenet_feat.3} parent=69 // pred_region
              loop: start=0, step=1, limit=1
              $region79: #{posenet_feat.3} parent=77 // loop_pre_header
                _
              $region80: #{posenet_feat.3} parent=77 // loop_header
                %s487 = sphi 0, %s491
                %p488 = scmp.ge.s32.totalorder %s487, 1
                %s492 = sphi %s467, %s467
                %s493 = sphi %s478, %s478
              $region81: #{posenet_feat.3} parent=77 // loop_header_branch
                %490 = sbr.rel (%p488) target = $region85
              $region82: #{posenet_feat.3} parent=77 // loop_body
                %v494 = vld [vmem:[%s492] sm:$0xff]
                %495 = vst [vmem:[%s493] sm:$0xff] %v494
                %v496 = vld [vmem:[%s492 + $0x8] sm:$0xff]
                %497 = vst [vmem:[%s493 + $0x10] sm:$0xff] %v496
                %v498 = vld [vmem:[%s492 + $0x10] sm:$0xff]
                %499 = vst [vmem:[%s493 + $0x20] sm:$0xff] %v498
                %v500 = vld [vmem:[%s492 + $0x18] sm:$0xff]
                %501 = vst [vmem:[%s493 + $0x30] sm:$0xff] %v500
                %v502 = vld [vmem:[%s492 + $0x20] sm:$0xff]
                %503 = vst [vmem:[%s493 + $0x40] sm:$0xff] %v502
                %v504 = vld [vmem:[%s492 + $0x28] sm:$0xff]
                %505 = vst [vmem:[%s493 + $0x50] sm:$0xff] %v504
                %v506 = vld [vmem:[%s492 + $0x30] sm:$0xff]
                %507 = vst [vmem:[%s493 + $0x60] sm:$0xff] %v506
                %v508 = vld [vmem:[%s492 + $0x38] sm:$0xff]
                %509 = vst [vmem:[%s493 + $0x70] sm:$0xff] %v508
                %v510 = vld [vmem:[%s492 + $0x40] sm:$0xff]
                %511 = vst [vmem:[%s493 + $0x80] sm:$0xff] %v510
                %v512 = vld [vmem:[%s492 + $0x48] sm:$0xff]
                %513 = vst [vmem:[%s493 + $0x90] sm:$0xff] %v512
                %v514 = vld [vmem:[%s492 + $0x50] sm:$0xff]
                %515 = vst [vmem:[%s493 + $0xa0] sm:$0xff] %v514
                %v516 = vld [vmem:[%s492 + $0x58] sm:$0xff]
                %517 = vst [vmem:[%s493 + $0xb0] sm:$0xff] %v516
                %v518 = vld [vmem:[%s492 + $0x60] sm:$0xff]
                %519 = vst [vmem:[%s493 + $0xc0] sm:$0xff] %v518
                %v520 = vld [vmem:[%s492 + $0x68] sm:$0xff]
                %521 = vst [vmem:[%s493 + $0xd0] sm:$0xff] %v520
                %v522 = vld [vmem:[%s492 + $0x70] sm:$0xff]
                %523 = vst [vmem:[%s493 + $0xe0] sm:$0xff] %v522
                %v524 = vld [vmem:[%s492 + $0x78] sm:$0xff]
                %525 = vst [vmem:[%s493 + $0xf0] sm:$0xff] %v524
              $region83: #{posenet_feat.3} parent=77 // loop_footer
                %s491 = sadd.s32 1, %s487
              $region84: #{posenet_feat.3} parent=77 // loop_footer_branch
                %486 = sbr.rel target = $region80
              $region85: #{posenet_feat.3} parent=77 // loop_exit
                _
            $region78: #{posenet_feat.3} parent=69 // pred_fallthru
              _
          $region70: #{posenet_feat.3} parent=65 // pred_fallthru
            _
          %570 = vnop
        $region66: #{posenet_feat.3} parent=57 // pred_fallthru
          _
      $region58: #{posenet_feat.3} parent=5 // pred_fallthru
        _
      %p571 = scmp.le.s32.totalorder 2, %s8
      // Predicated region
      $region101: #{posenet_feat.3} parent=5 // pred_check
        %p572 = pneg %p571
      $region102: #{posenet_feat.3} parent=5 // pred_check_branch
        %574 = sbr.rel (%p572) target = $region104
      $region103: #{posenet_feat.3} parent=5 // pred_region
        %s575 = ssub.s32 %s8, 2
        // Predicated region
        $region105: #{posenet_feat.3} parent=103 // pred_check
          %p576 = pneg %p90
        $region106: #{posenet_feat.3} parent=103 // pred_check_branch
          %578 = sbr.rel (%p576) target = $region108
        $region107: #{posenet_feat.3} parent=103 // pred_region
          %s579 = sand.u32 %s75, 1
          %s580 = sand.u32 %s75, 1
          %s581 = smul.addr %s580, 128
          %s582 = scalar_lea.vmem [#allocation3], %s581
        $region108: #{posenet_feat.3} parent=103 // pred_fallthru
          _
      $region104: #{posenet_feat.3} parent=5 // pred_fallthru
        _
    $region6: #{posenet_feat.3} parent=1 // loop_footer
      %s12 = sadd.s32 1, %s8
    $region7: #{posenet_feat.3} parent=1 // loop_footer_branch
      %7 = sbr.rel target = $region3
    $region8: #{posenet_feat.3} parent=1 // loop_exit
      _

// kernel: posenet_feat.2
$region0: #{posenet_feat.2}
  #allocation0 [shape = 'u32[]', space=smem, size = 0x4, offset = 0x4, fixed_abs, tag = 'smem constant byte address 0x4 - core index']
  #allocation1 [shape = 'u32[144,128]{1,0:T(1,128)}', space=vmem, size = 0x12000, scoped, tag = 'internal scratch']
  #allocation2 [shape = 'f32[1024,128]{1,0:T(8,128)}', space=vmem, size = 0x80000, scoped, tag = 'scratch operand']
  %s0 = inlined_call_operand.vmem [shape: bf16[2,35,256], index: 0, kind: input, shape index: {}]
  %s1 = inlined_call_operand.vmem [shape: bf16[128,35], index: 1, kind: input, shape index: {}]
  %s2 = inlined_call_operand.vmem [shape: f32[128,1], index: 2, kind: input, shape index: {}]
  %s3 = inlined_call_operand.vmem [shape: bf16[256,128], index: 3, kind: input, shape index: {}]
  %s4 = inlined_call_operand.vmem [shape: f32[256,1], index: 4, kind: input, shape index: {}]
  %s5 = inlined_call_operand.vmem [shape: bf16[512,256], index: 5, kind: input, shape index: {}]
  %s6 = inlined_call_operand.vmem [shape: f32[512,1], index: 6, kind: input, shape index: {}]
  %s7 = inlined_call_operand.vmem [shape: bf16[1024,512], index: 7, kind: input, shape index: {}]
  %s8 = inlined_call_operand.vmem [shape: f32[1024,1], index: 8, kind: input, shape index: {}]
  %s9 = inlined_call_operand.vmem [shape: f32[2,1408,200], index: 9, kind: output, shape index: {0}]
  %s10 = inlined_call_operand.vmem [shape: f32[2,2,1024,1], index: 10, kind: output, shape index: {1}]
  %11 = xla_tuple %s9, %s10
  %s12 = sld [smem:[#allocation0]]
  $region160: #{posenet_feat.2} parent=0
    _
  %s14 = ssub.s32 1, %s12
  %s15 = scalar_select 0, %s14, %s12
  $region1: #{posenet_feat.2} parent=0
    #allocation3 [shape = 'u8[20480]{0}', space=vmem, size = 0x5000, scoped, tag = 'input window, operand 0']
    #allocation4 [shape = 'u8[393216]{0}', space=vmem, size = 0x60000, scoped, tag = 'output window, operand 0']
    loop: start=0, step=1, limit=6
    $region2: #{posenet_feat.2} parent=1 // loop_pre_header
      _
    $region3: #{posenet_feat.2} parent=1 // loop_header
      %s17 = sphi 0, %s21
      %p18 = scmp.ge.s32.totalorder %s17, 6
      %s24 = sphi 0, %s43
      %s25 = sphi 0, %s39
      %s26 = sphi 0, %s35
      %s27 = sphi 0, %s24
      %s28 = sphi 0, %s25
      %s29 = sphi 0, %s26
      %s30 = sphi 0, %s27
      %s31 = sphi 0, %s28
      %s32 = sphi 0, %s29
      %s50 = sphi 0, %s52
      %s53 = sphi 0, %s50
      %s54 = sphi 0, %s53
      %s70 = sphi 0, %s54
      %s74 = sphi 0, %s74
      %s76 = sphi 0, %s74
      %s77 = sphi 0, %s76
      %s91 = sphi 0, %s77
      %s95 = sphi 0, %s95
      %s97 = sphi 0, %s95
      %s98 = sphi 0, %s97
      %s112 = sphi 0, %s98
      %s116 = sphi 0, %s116
      %s118 = sphi 0, %s116
      %s119 = sphi 0, %s118
      %s133 = sphi 0, %s119
      %s137 = sphi 0, %s137
      %s139 = sphi 0, %s137
      %s140 = sphi 0, %s139
      %s154 = sphi 0, %s140
      %s158 = sphi 0, %s158
      %s160 = sphi 0, %s158
      %s161 = sphi 0, %s160
      %s175 = sphi 0, %s161
      %s179 = sphi 0, %s179
      %s181 = sphi 0, %s179
      %s182 = sphi 0, %s181
      %s196 = sphi 0, %s182
      %s200 = sphi 0, %s200
      %s202 = sphi 0, %s200
      %s203 = sphi 0, %s202
      %s217 = sphi 0, %s203
      %s221 = sphi 0, %s221
      %s223 = sphi 0, %s221
      %s224 = sphi 0, %s223
      %s238 = sphi 0, %s224
      %s248 = sphi 0, %s250
      %s251 = sphi 0, %s248
      %s252 = sphi 0, %s251
      %s268 = sphi 0, %s252
      %s276 = sphi 0, %s278
      %s279 = sphi 0, %s276
      %s280 = sphi 0, %s279
      %s296 = sphi 0, %s280
    $region4: #{posenet_feat.2} parent=1 // loop_header_branch
      %20 = sbr.rel (%p18) target = $region8
    $region5: #{posenet_feat.2} parent=1 // loop_body
      %s22 = ssub.s32 %s17, 1
      %s23 = ssub.s32 %s17, 2
      %s33 = sadd.s32 1, %s26
      %p34 = scmp.ge.s32.totalorder %s33, 1
      %s35 = scalar_select %p34, 0, %s33
      %s36 = sadd.s32 1, %s25
      %s37 = scalar_select %p34, %s36, %s25
      %p38 = scmp.ge.s32.totalorder %s37, 2
      %s39 = scalar_select %p38, 0, %s37
      %s40 = sadd.s32 1, %s24
      %s41 = scalar_select %p38, %s40, %s24
      %p42 = scmp.ge.s32.totalorder %s41, 2
      %s43 = scalar_select %p42, 0, %s41
      %s44 = sadd.s32 %s25, %s26
      %s45 = sadd.s32 %s39, %s35
      %s46 = ssub.s32 %s24, %s43
      %s47 = ssub.s32 %s44, %s45
      %s48 = sor.u32 %s46, %s47
      %p49 = scmp.eq.s32.totalorder %s48, 0
      %s51 = sadd.s32 %s50, 1
      %s52 = scalar_select %p49, %s50, %s51
      %p55 = pneg %p49
      %p56 = scmp.eq.s32.totalorder %s17, 3
      %p57 = por %p55, %p56
      %p58 = scmp.ne.s32.totalorder %s50, %s53
      %p59 = scmp.eq.s32.totalorder %s17, 0
      %p60 = por %p58, %p59
      %p61 = scmp.ne.s32.totalorder %s50, %s53
      %p62 = scmp.eq.s32.totalorder %s22, 3
      %p63 = por %p61, %p62
      %p64 = scmp.ne.s32.totalorder %s53, %s54
      %p65 = scmp.eq.s32.totalorder %s22, 0
      %p66 = por %p64, %p65
      %p67 = scmp.ne.s32.totalorder %s53, %s54
      %p68 = scmp.eq.s32.totalorder %s23, 3
      %p69 = por %p67, %p68
      %p71 = scmp.ne.s32.totalorder %s54, %s70
      %p72 = scmp.eq.s32.totalorder %s23, 0
      %p73 = por %p71, %p72
      %s75 = sadd.s32 %s74, 1
      %p78 = scmp.eq.s32.totalorder %s17, 3
      %p79 = scmp.ne.s32.totalorder %s74, %s76
      %p80 = scmp.eq.s32.totalorder %s17, 0
      %p81 = por %p79, %p80
      %p82 = scmp.ne.s32.totalorder %s74, %s76
      %p83 = scmp.eq.s32.totalorder %s22, 3
      %p84 = por %p82, %p83
      %p85 = scmp.ne.s32.totalorder %s76, %s77
      %p86 = scmp.eq.s32.totalorder %s22, 0
      %p87 = por %p85, %p86
      %p88 = scmp.ne.s32.totalorder %s76, %s77
      %p89 = scmp.eq.s32.totalorder %s23, 3
      %p90 = por %p88, %p89
      %p92 = scmp.ne.s32.totalorder %s77, %s91
      %p93 = scmp.eq.s32.totalorder %s23, 0
      %p94 = por %p92, %p93
      %s96 = sadd.s32 %s95, 1
      %p99 = scmp.eq.s32.totalorder %s17, 3
      %p100 = scmp.ne.s32.totalorder %s95, %s97
      %p101 = scmp.eq.s32.totalorder %s17, 0
      %p102 = por %p100, %p101
      %p103 = scmp.ne.s32.totalorder %s95, %s97
      %p104 = scmp.eq.s32.totalorder %s22, 3
      %p105 = por %p103, %p104
      %p106 = scmp.ne.s32.totalorder %s97, %s98
      %p107 = scmp.eq.s32.totalorder %s22, 0
      %p108 = por %p106, %p107
      %p109 = scmp.ne.s32.totalorder %s97, %s98
      %p110 = scmp.eq.s32.totalorder %s23, 3
      %p111 = por %p109, %p110
      %p113 = scmp.ne.s32.totalorder %s98, %s112
      %p114 = scmp.eq.s32.totalorder %s23, 0
      %p115 = por %p113, %p114
      %s117 = sadd.s32 %s116, 1
      %p120 = scmp.eq.s32.totalorder %s17, 3
      %p121 = scmp.ne.s32.totalorder %s116, %s118
      %p122 = scmp.eq.s32.totalorder %s17, 0
      %p123 = por %p121, %p122
      %p124 = scmp.ne.s32.totalorder %s116, %s118
      %p125 = scmp.eq.s32.totalorder %s22, 3
      %p126 = por %p124, %p125
      %p127 = scmp.ne.s32.totalorder %s118, %s119
      %p128 = scmp.eq.s32.totalorder %s22, 0
      %p129 = por %p127, %p128
      %p130 = scmp.ne.s32.totalorder %s118, %s119
      %p131 = scmp.eq.s32.totalorder %s23, 3
      %p132 = por %p130, %p131
      %p134 = scmp.ne.s32.totalorder %s119, %s133
      %p135 = scmp.eq.s32.totalorder %s23, 0
      %p136 = por %p134, %p135
      %s138 = sadd.s32 %s137, 1
      %p141 = scmp.eq.s32.totalorder %s17, 3
      %p142 = scmp.ne.s32.totalorder %s137, %s139
      %p143 = scmp.eq.s32.totalorder %s17, 0
      %p144 = por %p142, %p143
      %p145 = scmp.ne.s32.totalorder %s137, %s139
      %p146 = scmp.eq.s32.totalorder %s22, 3
      %p147 = por %p145, %p146
      %p148 = scmp.ne.s32.totalorder %s139, %s140
      %p149 = scmp.eq.s32.totalorder %s22, 0
      %p150 = por %p148, %p149
      %p151 = scmp.ne.s32.totalorder %s139, %s140
      %p152 = scmp.eq.s32.totalorder %s23, 3
      %p153 = por %p151, %p152
      %p155 = scmp.ne.s32.totalorder %s140, %s154
      %p156 = scmp.eq.s32.totalorder %s23, 0
      %p157 = por %p155, %p156
      %s159 = sadd.s32 %s158, 1
      %p162 = scmp.eq.s32.totalorder %s17, 3
      %p163 = scmp.ne.s32.totalorder %s158, %s160
      %p164 = scmp.eq.s32.totalorder %s17, 0
      %p165 = por %p163, %p164
      %p166 = scmp.ne.s32.totalorder %s158, %s160
      %p167 = scmp.eq.s32.totalorder %s22, 3
      %p168 = por %p166, %p167
      %p169 = scmp.ne.s32.totalorder %s160, %s161
      %p170 = scmp.eq.s32.totalorder %s22, 0
      %p171 = por %p169, %p170
      %p172 = scmp.ne.s32.totalorder %s160, %s161
      %p173 = scmp.eq.s32.totalorder %s23, 3
      %p174 = por %p172, %p173
      %p176 = scmp.ne.s32.totalorder %s161, %s175
      %p177 = scmp.eq.s32.totalorder %s23, 0
      %p178 = por %p176, %p177
      %s180 = sadd.s32 %s179, 1
      %p183 = scmp.eq.s32.totalorder %s17, 3
      %p184 = scmp.ne.s32.totalorder %s179, %s181
      %p185 = scmp.eq.s32.totalorder %s17, 0
      %p186 = por %p184, %p185
      %p187 = scmp.ne.s32.totalorder %s179, %s181
      %p188 = scmp.eq.s32.totalorder %s22, 3
      %p189 = por %p187, %p188
      %p190 = scmp.ne.s32.totalorder %s181, %s182
      %p191 = scmp.eq.s32.totalorder %s22, 0
      %p192 = por %p190, %p191
      %p193 = scmp.ne.s32.totalorder %s181, %s182
      %p194 = scmp.eq.s32.totalorder %s23, 3
      %p195 = por %p193, %p194
      %p197 = scmp.ne.s32.totalorder %s182, %s196
      %p198 = scmp.eq.s32.totalorder %s23, 0
      %p199 = por %p197, %p198
      %s201 = sadd.s32 %s200, 1
      %p204 = scmp.eq.s32.totalorder %s17, 3
      %p205 = scmp.ne.s32.totalorder %s200, %s202
      %p206 = scmp.eq.s32.totalorder %s17, 0
      %p207 = por %p205, %p206
      %p208 = scmp.ne.s32.totalorder %s200, %s202
      %p209 = scmp.eq.s32.totalorder %s22, 3
      %p210 = por %p208, %p209
      %p211 = scmp.ne.s32.totalorder %s202, %s203
      %p212 = scmp.eq.s32.totalorder %s22, 0
      %p213 = por %p211, %p212
      %p214 = scmp.ne.s32.totalorder %s202, %s203
      %p215 = scmp.eq.s32.totalorder %s23, 3
      %p216 = por %p214, %p215
      %p218 = scmp.ne.s32.totalorder %s203, %s217
      %p219 = scmp.eq.s32.totalorder %s23, 0
      %p220 = por %p218, %p219
      %s222 = sadd.s32 %s221, 1
      %p225 = scmp.eq.s32.totalorder %s17, 3
      %p226 = scmp.ne.s32.totalorder %s221, %s223
      %p227 = scmp.eq.s32.totalorder %s17, 0
      %p228 = por %p226, %p227
      %p229 = scmp.ne.s32.totalorder %s221, %s223
      %p230 = scmp.eq.s32.totalorder %s22, 3
      %p231 = por %p229, %p230
      %p232 = scmp.ne.s32.totalorder %s223, %s224
      %p233 = scmp.eq.s32.totalorder %s22, 0
      %p234 = por %p232, %p233
      %p235 = scmp.ne.s32.totalorder %s223, %s224
      %p236 = scmp.eq.s32.totalorder %s23, 3
      %p237 = por %p235, %p236
      %p239 = scmp.ne.s32.totalorder %s224, %s238
      %p240 = scmp.eq.s32.totalorder %s23, 0
      %p241 = por %p239, %p240
      %s242 = sadd.s32 %s25, %s26
      %s243 = sadd.s32 %s39, %s35
      %s244 = ssub.s32 %s24, %s43
      %s245 = ssub.s32 %s242, %s243
      %s246 = sor.u32 %s244, %s245
      %p247 = scmp.eq.s32.totalorder %s246, 0
      %s249 = sadd.s32 %s248, 1
      %s250 = scalar_select %p247, %s248, %s249
      %p253 = pneg %p247
      %p254 = scmp.eq.s32.totalorder %s17, 3
      %p255 = por %p253, %p254
      %p256 = scmp.ne.s32.totalorder %s248, %s251
      %p257 = scmp.eq.s32.totalorder %s17, 0
      %p258 = por %p256, %p257
      %p259 = scmp.ne.s32.totalorder %s248, %s251
      %p260 = scmp.eq.s32.totalorder %s22, 3
      %p261 = por %p259, %p260
      %p262 = scmp.ne.s32.totalorder %s251, %s252
      %p263 = scmp.eq.s32.totalorder %s22, 0
      %p264 = por %p262, %p263
      %p265 = scmp.ne.s32.totalorder %s251, %s252
      %p266 = scmp.eq.s32.totalorder %s23, 3
      %p267 = por %p265, %p266
      %p269 = scmp.ne.s32.totalorder %s252, %s268
      %p270 = scmp.eq.s32.totalorder %s23, 0
      %p271 = por %p269, %p270
      %s272 = ssub.s32 %s24, %s43
      %s273 = ssub.s32 %s25, %s39
      %s274 = sor.u32 %s272, %s273
      %p275 = scmp.eq.s32.totalorder %s274, 0
      %s277 = sadd.s32 %s276, 1
      %s278 = scalar_select %p275, %s276, %s277
      %p281 = pneg %p275
      %p282 = scmp.eq.s32.totalorder %s17, 3
      %p283 = por %p281, %p282
      %p284 = scmp.ne.s32.totalorder %s276, %s279
      %p285 = scmp.eq.s32.totalorder %s17, 0
      %p286 = por %p284, %p285
      %p287 = scmp.ne.s32.totalorder %s276, %s279
      %p288 = scmp.eq.s32.totalorder %s22, 3
      %p289 = por %p287, %p288
      %p290 = scmp.ne.s32.totalorder %s279, %s280
      %p291 = scmp.eq.s32.totalorder %s22, 0
      %p292 = por %p290, %p291
      %p293 = scmp.ne.s32.totalorder %s279, %s280
      %p294 = scmp.eq.s32.totalorder %s23, 3
      %p295 = por %p293, %p294
      %p297 = scmp.ne.s32.totalorder %s280, %s296
      %p298 = scmp.eq.s32.totalorder %s23, 0
      %p299 = por %p297, %p298
      %p300 = scmp.le.s32.totalorder 1, %s17
      %p301 = scmp.lt.s32.totalorder %s17, 5
      %p302 = pnand %p300, %p301
      %p303 = pneg %p302
      // Predicated region
      $region9: #{posenet_feat.2} parent=5 // pred_check
        _
      $region10: #{posenet_feat.2} parent=5 // pred_check_branch
        %305 = sbr.rel (%p302) target = $region12
      $region11: #{posenet_feat.2} parent=5 // pred_region
        %s306 = ssub.s32 %s17, 1
        // Predicated region
        $region13: #{posenet_feat.2} parent=11 // pred_check
          %p307 = pneg %p87
        $region14: #{posenet_feat.2} parent=11 // pred_check_branch
          %309 = sbr.rel (%p307) target = $region16
        $region15: #{posenet_feat.2} parent=11 // pred_region
          _
        $region16: #{posenet_feat.2} parent=11 // pred_fallthru
          _
        // Predicated region
        $region17: #{posenet_feat.2} parent=11 // pred_check
          %p310 = pneg %p108
        $region18: #{posenet_feat.2} parent=11 // pred_check_branch
          %312 = sbr.rel (%p310) target = $region20
        $region19: #{posenet_feat.2} parent=11 // pred_region
          _
        $region20: #{posenet_feat.2} parent=11 // pred_fallthru
          _
        // Predicated region
        $region21: #{posenet_feat.2} parent=11 // pred_check
          %p313 = pneg %p129
        $region22: #{posenet_feat.2} parent=11 // pred_check_branch
          %315 = sbr.rel (%p313) target = $region24
        $region23: #{posenet_feat.2} parent=11 // pred_region
          _
        $region24: #{posenet_feat.2} parent=11 // pred_fallthru
          _
        // Predicated region
        $region25: #{posenet_feat.2} parent=11 // pred_check
          %p316 = pneg %p150
        $region26: #{posenet_feat.2} parent=11 // pred_check_branch
          %318 = sbr.rel (%p316) target = $region28
        $region27: #{posenet_feat.2} parent=11 // pred_region
          _
        $region28: #{posenet_feat.2} parent=11 // pred_fallthru
          _
        // Predicated region
        $region29: #{posenet_feat.2} parent=11 // pred_check
          %p319 = pneg %p171
        $region30: #{posenet_feat.2} parent=11 // pred_check_branch
          %321 = sbr.rel (%p319) target = $region32
        $region31: #{posenet_feat.2} parent=11 // pred_region
          _
        $region32: #{posenet_feat.2} parent=11 // pred_fallthru
          _
        // Predicated region
        $region33: #{posenet_feat.2} parent=11 // pred_check
          %p322 = pneg %p192
        $region34: #{posenet_feat.2} parent=11 // pred_check_branch
          %324 = sbr.rel (%p322) target = $region36
        $region35: #{posenet_feat.2} parent=11 // pred_region
          _
        $region36: #{posenet_feat.2} parent=11 // pred_fallthru
          _
        // Predicated region
        $region37: #{posenet_feat.2} parent=11 // pred_check
          %p325 = pneg %p213
        $region38: #{posenet_feat.2} parent=11 // pred_check_branch
          %327 = sbr.rel (%p325) target = $region40
        $region39: #{posenet_feat.2} parent=11 // pred_region
          _
        $region40: #{posenet_feat.2} parent=11 // pred_fallthru
          _
        // Predicated region
        $region41: #{posenet_feat.2} parent=11 // pred_check
          %p328 = pneg %p234
        $region42: #{posenet_feat.2} parent=11 // pred_check_branch
          %330 = sbr.rel (%p328) target = $region44
        $region43: #{posenet_feat.2} parent=11 // pred_region
          _
        $region44: #{posenet_feat.2} parent=11 // pred_fallthru
          _
      $region12: #{posenet_feat.2} parent=5 // pred_fallthru
        _
      %p331 = scmp.lt.s32.totalorder %s17, 4
      // Predicated region
      $region45: #{posenet_feat.2} parent=5 // pred_check
        %p332 = pneg %p331
      $region46: #{posenet_feat.2} parent=5 // pred_check_branch
        %334 = sbr.rel (%p332) target = $region48
      $region47: #{posenet_feat.2} parent=5 // pred_region
        // Predicated region
        $region49: #{posenet_feat.2} parent=47 // pred_check
          %p335 = pneg %p60
        $region50: #{posenet_feat.2} parent=47 // pred_check_branch
          %337 = sbr.rel (%p335) target = $region52
        $region51: #{posenet_feat.2} parent=47 // pred_region
          %s338 = sand.u32 %s50, 1
          %s339 = sand.u32 %s50, 1
          %s340 = smul.addr %s339, 20
          %s341 = scalar_lea.vmem [#allocation3], %s340
          %s342 = sadd.s32 %s25, %s26
          %s343 = smul.addr %s24, 10
          %s344 = sadd.s32 %s342, %s343
          %s345 = smul.addr %s344, 4
          %s346 = scalar_lea.vmem %s0, %s345
          // Predicated region
          $region53: #{posenet_feat.2} parent=51 // pred_check
            _
          $region54: #{posenet_feat.2} parent=51 // pred_check_branch
            %348 = sbr.rel (0) target = $region56
          $region55: #{posenet_feat.2} parent=51 // pred_region
            // Predicated region
            $region57: #{posenet_feat.2} parent=55 // pred_check
              _
            $region58: #{posenet_feat.2} parent=55 // pred_check_branch
              %350 = sbr.rel target = $region60
            $region59: #{posenet_feat.2} parent=55 // pred_region
              // Predicated region
              $region72: #{posenet_feat.2} parent=59 // pred_check
                _
              $region73: #{posenet_feat.2} parent=59 // pred_check_branch
                %373 = sbr.rel (0) target = $region75
              $region74: #{posenet_feat.2} parent=59 // pred_region
                loop: start=0, step=1, limit=1
                $region76: #{posenet_feat.2} parent=74 // loop_pre_header
                  _
                $region77: #{posenet_feat.2} parent=74 // loop_header
                  %s375 = sphi 0, %s379
                  %p376 = scmp.ge.s32.totalorder %s375, 1
                  %s380 = sphi %s346, %s346
                  %s381 = sphi %s341, %s341
                $region78: #{posenet_feat.2} parent=74 // loop_header_branch
                  %378 = sbr.rel (%p376) target = $region82
                $region79: #{posenet_feat.2} parent=74 // loop_body
                  _
                $region80: #{posenet_feat.2} parent=74 // loop_footer
                  %s379 = sadd.s32 1, %s375
                $region81: #{posenet_feat.2} parent=74 // loop_footer_branch
                  %374 = sbr.rel target = $region77
                $region82: #{posenet_feat.2} parent=74 // loop_exit
                  _
                loop: start=0, step=1, limit=1
                $region83: #{posenet_feat.2} parent=74 // loop_pre_header
                  _
                $region84: #{posenet_feat.2} parent=74 // loop_header
                  %s384 = sphi 0, %s388
                  %p385 = scmp.ge.s32.totalorder %s384, 1
                  %s389 = sphi %s346, %s346
                  %s390 = sphi %s341, %s341
                $region85: #{posenet_feat.2} parent=74 // loop_header_branch
                  %387 = sbr.rel (%p385) target = $region89
                $region86: #{posenet_feat.2} parent=74 // loop_body
                  %v391 = vld [vmem:[%s389] sm:$0xf]
                  %392 = vst [vmem:[%s390] sm:$0xf] %v391
                  %v393 = vld [vmem:[%s389 + $0x8] sm:$0xf]
                  %394 = vst [vmem:[%s390 + $0x4] sm:$0xf] %v393
                  %v395 = vld [vmem:[%s389 + $0x10] sm:$0xf]
                  %396 = vst [vmem:[%s390 + $0x8] sm:$0xf] %v395
                  %v397 = vld [vmem:[%s389 + $0x18] sm:$0xf]
                  %398 = vst [vmem:[%s390 + $0xc] sm:$0xf] %v397
                  %v399 = vld [vmem:[%s389 + $0x20] sm:$0xf]
                  %400 = vst [vmem:[%s390 + $0x10] sm:$0xf] %v399
                $region87: #{posenet_feat.2} parent=74 // loop_footer
                  %s388 = sadd.s32 1, %s384
                $region88: #{posenet_feat.2} parent=74 // loop_footer_branch
                  %383 = sbr.rel target = $region84
                $region89: #{posenet_feat.2} parent=74 // loop_exit
                  _
              $region75: #{posenet_feat.2} parent=59 // pred_fallthru
                _
            $region60: #{posenet_feat.2} parent=55 // pred_fallthru
              _
            // Predicated region
            $region61: #{posenet_feat.2} parent=55 // pred_check
              _
            $region62: #{posenet_feat.2} parent=55 // pred_check_branch
              %352 = sbr.rel (0) target = $region64
            $region63: #{posenet_feat.2} parent=55 // pred_region
              loop: start=0, step=1, limit=1
              $region65: #{posenet_feat.2} parent=63 // loop_pre_header
                _
              $region66: #{posenet_feat.2} parent=63 // loop_header
                %s355 = sphi 0, %s359
                %p356 = scmp.ge.s32.totalorder %s355, 1
                %s360 = sphi %s346, %s346
                %s361 = sphi %s341, %s341
              $region67: #{posenet_feat.2} parent=63 // loop_header_branch
                %358 = sbr.rel (%p356) target = $region71
              $region68: #{posenet_feat.2} parent=63 // loop_body
                %v362 = vld [vmem:[%s360] sm:$0xf]
                %363 = vst [vmem:[%s361] sm:$0xf] %v362
                %v364 = vld [vmem:[%s360 + $0x8] sm:$0xf]
                %365 = vst [vmem:[%s361 + $0x4] sm:$0xf] %v364
                %v366 = vld [vmem:[%s360 + $0x10] sm:$0xf]
                %367 = vst [vmem:[%s361 + $0x8] sm:$0xf] %v366
                %v368 = vld [vmem:[%s360 + $0x18] sm:$0xf]
                %369 = vst [vmem:[%s361 + $0xc] sm:$0xf] %v368
                %v370 = vld [vmem:[%s360 + $0x20] sm:$0xf]
                %371 = vst [vmem:[%s361 + $0x10] sm:$0xf] %v370
              $region69: #{posenet_feat.2} parent=63 // loop_footer
                %s359 = sadd.s32 1, %s355
              $region70: #{posenet_feat.2} parent=63 // loop_footer_branch
                %354 = sbr.rel target = $region66
              $region71: #{posenet_feat.2} parent=63 // loop_exit
                _
            $region64: #{posenet_feat.2} parent=55 // pred_fallthru
              _
          $region56: #{posenet_feat.2} parent=51 // pred_fallthru
            _
          %401 = vnop
        $region52: #{posenet_feat.2} parent=47 // pred_fallthru
          _
      $region48: #{posenet_feat.2} parent=5 // pred_fallthru
        _
      %p402 = scmp.le.s32.totalorder 1, %s17
      %p403 = scmp.lt.s32.totalorder %s17, 5
      %p404 = pnand %p402, %p403
      %p405 = pneg %p404
      // Predicated region
      $region90: #{posenet_feat.2} parent=5 // pred_check
        _
      $region91: #{posenet_feat.2} parent=5 // pred_check_branch
        %407 = sbr.rel (%p404) target = $region93
      $region92: #{posenet_feat.2} parent=5 // pred_region
        %s408 = ssub.s32 %s17, 1
        %s409 = sand.u32 %s53, 1
        %s410 = sand.u32 %s53, 1
        %s411 = smul.addr %s410, 20
        %s412 = scalar_lea.vmem [#allocation3], %s411
        // Predicated region
        $region94: #{posenet_feat.2} parent=92 // pred_check
          %p413 = pneg %p66
        $region95: #{posenet_feat.2} parent=92 // pred_check_branch
          %415 = sbr.rel (%p413) target = $region97
        $region96: #{posenet_feat.2} parent=92 // pred_region
          _
        $region97: #{posenet_feat.2} parent=92 // pred_fallthru
          _
        %s416 = sand.u32 %s53, 1
        %s417 = sand.u32 %s53, 1
        %s418 = smul.addr %s417, 20
        %s419 = scalar_lea.vmem [#allocation3], %s418
        %p420 = pneg %p66
        %p421 = pneg %p63
        %p422 = pneg %p87
        %p423 = pneg %p84
        %p424 = pneg %p108
        %p425 = pneg %p105
        %p426 = pneg %p129
        %p427 = pneg %p126
        %p428 = pneg %p150
        %p429 = pneg %p147
        %p430 = pneg %p171
        %p431 = pneg %p168
        %p432 = pneg %p192
        %p433 = pneg %p189
        %p434 = pneg %p213
        %p435 = pneg %p210
        %p436 = pneg %p234
        %p437 = pneg %p231
        %p438 = pneg %p264
        %p439 = pneg %p261
        %s440 = sand.u32 %s251, 1
        %s441 = sand.u32 %s251, 1
        %s442 = smul.addr %s441, 384
        %s443 = scalar_lea.vmem [#allocation4], %s442
        %p444 = pneg %p292
        %p445 = pneg %p289
        %p446 = scmp.lt.s32.totalorder %s27, 1
        %s447 = scalar_select %p446, %s27, 1
        %p448 = scmp.lt.s32.totalorder %s28, 1
        %s449 = scalar_select %p448, %s28, 1
        %s450 = smul.addr %s449, 128
        %s451 = smul.addr %s447, 256
        %s452 = sadd.s32 %s450, %s451
        %s453 = smul.addr %s452, 8
        %s454 = scalar_lea.vmem %s10, %s453
        %s455 = sadd.s32 %s28, %s29
        %s456 = sadd.s32 %s28, %s29
        %p457 = scmp.lt.s32.totalorder %s27, 1
        %s458 = scalar_select %p457, %s27, 1
        %p459 = scmp.lt.s32.totalorder %s28, 1
        %s460 = scalar_select %p459, %s28, 1
        %s461 = smul.addr %s460, 128
        %s462 = smul.addr %s458, 256
        %s463 = sadd.s32 %s461, %s462
        %s464 = smul.addr %s463, 8
        %s465 = scalar_lea.vmem %s10, %s464
        %v467 = vld [vmem:[%s412] sm:$0xf]
        %v468 = vld [vmem:[%s412 + $0x4] sm:$0xf]
        %v469 = vld [vmem:[%s412 + $0x8] sm:$0xf]
        %v470 = vld [vmem:[%s412 + $0xc] sm:$0xf]
        %v471 = vld [vmem:[%s412 + $0x10] sm:$0x3]
        %v472 = vld [vmem:[%s1] sm:$0xf]
        %v473 = vld [vmem:[%s1 + $0x4] sm:$0xf]
        %v474 = vld [vmem:[%s1 + $0x8] sm:$0xf]
        %v475 = vld [vmem:[%s1 + $0xc] sm:$0xf]
        %v476 = vld [vmem:[%s1 + $0x10] sm:$0xf]
        %v477 = vld [vmem:[%s1 + $0x14] sm:$0xf]
        %v478 = vld [vmem:[%s1 + $0x18] sm:$0xf]
        %v479 = vld [vmem:[%s1 + $0x1c] sm:$0xf]
        %v480 = vld [vmem:[%s1 + $0x20] sm:$0xf]
        %v481 = vld [vmem:[%s1 + $0x24] sm:$0xf]
        %v482 = vld [vmem:[%s1 + $0x28] sm:$0xf]
        %v483 = vld [vmem:[%s1 + $0x2c] sm:$0xf]
        %v484 = vld [vmem:[%s1 + $0x30] sm:$0xf]
        %v485 = vld [vmem:[%s1 + $0x34] sm:$0xf]
        %v486 = vld [vmem:[%s1 + $0x38] sm:$0xf]
        %v487 = vld [vmem:[%s1 + $0x3c] sm:$0xf]
        %v488 = vld [vmem:[%s2] sm:$0xff]
        %v489 = vld [vmem:[%s2 + $0x8] sm:$0xff]
        %v490 = vld [vmem:[%s2 + $0x10] sm:$0xff]
        %v491 = vld [vmem:[%s2 + $0x18] sm:$0xff]
        %v492 = vld [vmem:[%s2 + $0x20] sm:$0xff]
        %v493 = vld [vmem:[%s2 + $0x28] sm:$0xff]
        %v494 = vld [vmem:[%s2 + $0x30] sm:$0xff]
        %v495 = vld [vmem:[%s2 + $0x38] sm:$0xff]
        %v496 = vld [vmem:[%s2 + $0x40] sm:$0xff]
        %v497 = vld [vmem:[%s2 + $0x48] sm:$0xff]
        %v498 = vld [vmem:[%s2 + $0x50] sm:$0xff]
        %v499 = vld [vmem:[%s2 + $0x58] sm:$0xff]
        %v500 = vld [vmem:[%s2 + $0x60] sm:$0xff]
        %v501 = vld [vmem:[%s2 + $0x68] sm:$0xff]
        %v502 = vld [vmem:[%s2 + $0x70] sm:$0xff]
        %v503 = vld [vmem:[%s2 + $0x78] sm:$0xff]
        %505 = vset.pattern.permute.xlu0 0
        %506 = vperm.xlu0 %505, %v488
        %v507 = vpop.permute.xlu0 %506
        %510 = vset.pattern.permute.xlu0 0
        %511 = vperm.xlu0 %510, %v489
        %v512 = vpop.permute.xlu0 %511
        %515 = vset.pattern.permute.xlu0 0
        %516 = vperm.xlu0 %515, %v490
        %v517 = vpop.permute.xlu0 %516
        %520 = vset.pattern.permute.xlu0 0
        %521 = vperm.xlu0 %520, %v491
        %v522 = vpop.permute.xlu0 %521
        %525 = vset.pattern.permute.xlu0 0
        %526 = vperm.xlu0 %525, %v492
        %v527 = vpop.permute.xlu0 %526
        %530 = vset.pattern.permute.xlu0 0
        %531 = vperm.xlu0 %530, %v493
        %v532 = vpop.permute.xlu0 %531
        %535 = vset.pattern.permute.xlu0 0
        %536 = vperm.xlu0 %535, %v494
        %v537 = vpop.permute.xlu0 %536
        %540 = vset.pattern.permute.xlu0 0
        %541 = vperm.xlu0 %540, %v495
        %v542 = vpop.permute.xlu0 %541
        %545 = vset.pattern.permute.xlu0 0
        %546 = vperm.xlu0 %545, %v496
        %v547 = vpop.permute.xlu0 %546
        %550 = vset.pattern.permute.xlu0 0
        %551 = vperm.xlu0 %550, %v497
        %v552 = vpop.permute.xlu0 %551
        %555 = vset.pattern.permute.xlu0 0
        %556 = vperm.xlu0 %555, %v498
        %v557 = vpop.permute.xlu0 %556
        %560 = vset.pattern.permute.xlu0 0
        %561 = vperm.xlu0 %560, %v499
        %v562 = vpop.permute.xlu0 %561
        %565 = vset.pattern.permute.xlu0 0
        %566 = vperm.xlu0 %565, %v500
        %v567 = vpop.permute.xlu0 %566
        %570 = vset.pattern.permute.xlu0 0
        %571 = vperm.xlu0 %570, %v501
        %v572 = vpop.permute.xlu0 %571
        %575 = vset.pattern.permute.xlu0 0
        %576 = vperm.xlu0 %575, %v502
        %v577 = vpop.permute.xlu0 %576
        %580 = vset.pattern.permute.xlu0 0
        %581 = vperm.xlu0 %580, %v503
        %v582 = vpop.permute.xlu0 %581
        %v600 = vunpack.c.l.b16 %v472
        %v601 = vunpack.c.l.b16 %v473
        %v602 = vunpack.c.l.b16 %v474
        %v603 = vunpack.c.l.b16 %v475
        %v604 = vunpack.c.l.b16 %v476
        %v605 = vunpack.c.l.b16 %v477
        %v606 = vunpack.c.l.b16 %v478
        %v607 = vunpack.c.l.b16 %v479
        %v608 = vunpack.c.l.b16 %v480
        %v609 = vunpack.c.l.b16 %v481
        %v610 = vunpack.c.l.b16 %v482
        %v611 = vunpack.c.l.b16 %v483
        %v612 = vunpack.c.l.b16 %v484
        %v613 = vunpack.c.l.b16 %v485
        %v614 = vunpack.c.l.b16 %v486
        %v615 = vunpack.c.l.b16 %v487
        %v616 = vpack.c.b16 %v601, %v600
        %v617 = vpack.c.b16 %v603, %v602
        %v618 = vpack.c.b16 %v605, %v604
        %v619 = vpack.c.b16 %v607, %v606
        %v620 = vpack.c.b16 %v609, %v608
        %v621 = vpack.c.b16 %v611, %v610
        %v622 = vpack.c.b16 %v613, %v612
        %v623 = vpack.c.b16 %v615, %v614
        %v629 = vunpack.c.l.b16 %v467
        %v630 = vunpack.c.l.b16 %v468
        %v631 = vunpack.c.l.b16 %v469
        %v632 = vunpack.c.l.b16 %v470
        %v633 = vunpack.c.l.b16 %v471
        %v634 = vpack.c.b16 %v630, %v629
        %v635 = vpack.c.b16 %v632, %v631
        %v636 = vpack.c.b16 %v633, %v633
        %vm639 = vcmask 285696
        %v641 = vsel %vm639, %v616, 0
        %v644 = vsel %vm639, %v617, 0
        %v647 = vsel %vm639, %v618, 0
        %v650 = vsel %vm639, %v619, 0
        %v653 = vsel %vm639, %v620, 0
        %v656 = vsel %vm639, %v621, 0
        %v659 = vsel %vm639, %v622, 0
        %v662 = vsel %vm639, %v623, 0
        %vm664 = vcmask 1040384
        %vm665 = vcmask 1041408
        %v666 = vsel %vm664, 4294967295, 65535
        %v667 = vsel %vm665, %v666, 0
        %v669 = vand.u32 %v636, %v667
        %671 = vmatprep.subr.bf16.mxu0 0
        %672 = vmatpush1.bf16.msra.mxu0 %v634
        %673 = vmatprep.subr.bf16.mxu0 0
        %674 = vmatpush1.bf16.msra.mxu0 %v635
        %675 = vmatprep.subr.bf16.mxu0 0
        %676 = vmatpush1.bf16.msra.mxu0 %v669
        %677 = vmatprep.subr.bf16.mxu0 0
        %678 = vmatpush1.bf16.msra.mxu0 0
        %679 = vmatprep.subr.bf16.mxu0 0
        %680 = vmatpush1.bf16.msra.mxu0 0
        %681 = vmatprep.subr.bf16.mxu0 0
        %682 = vmatpush1.bf16.msra.mxu0 0
        %683 = vmatprep.subr.bf16.mxu0 0
        %684 = vmatpush1.bf16.msra.mxu0 0
        %685 = vmatprep.subr.bf16.mxu0 0
        %686 = vmatpush1.bf16.msra.mxu0 0
        %687 = vmatprep.subr.bf16.mxu0 0
        %688 = vmatpush1.bf16.msra.mxu0 0
        %689 = vmatprep.subr.bf16.mxu0 0
        %690 = vmatpush1.bf16.msra.mxu0 0
        %691 = vmatprep.subr.bf16.mxu0 0
        %692 = vmatpush1.bf16.msra.mxu0 0
        %693 = vmatprep.subr.bf16.mxu0 0
        %694 = vmatpush1.bf16.msra.mxu0 0
        %695 = vmatprep.subr.bf16.mxu0 0
        %696 = vmatpush1.bf16.msra.mxu0 0
        %697 = vmatprep.subr.bf16.mxu0 0
        %698 = vmatpush1.bf16.msra.mxu0 0
        %699 = vmatprep.subr.bf16.mxu0 0
        %700 = vmatpush1.bf16.msra.mxu0 0
        %701 = vmatprep.subr.bf16.mxu0 0
        %702 = vmatpush1.bf16.msra.mxu0 0
        %703 = vmatprep.mubr.bf16.mxu0 0
        %704 = vmatmul.mubr.bf16.gmra.mrb[0].mxu0 %v641
        %v705 = vpop.f32.mrb[0].mxu0
        %v706 = vadd.f32 %v507, %v705
        %v707 = vpop.f32.mrb[0].mxu0
        %v708 = vpop.f32.mrb[0].mxu0
        %v709 = vadd.f32 %v512, %v708
        %v710 = vpop.f32.mrb[0].mxu0
        %711 = vmatprep.mubr.bf16.mxu0 0
        %712 = vmatmul.mubr.bf16.gmra.mrb[0].mxu0 %v644
        %v713 = vpop.f32.mrb[0].mxu0
        %v714 = vadd.f32 %v517, %v713
        %v715 = vpop.f32.mrb[0].mxu0
        %v716 = vpop.f32.mrb[0].mxu0
        %v717 = vadd.f32 %v522, %v716
        %v718 = vpop.f32.mrb[0].mxu0
        %719 = vmatprep.mubr.bf16.mxu0 0
        %720 = vmatmul.mubr.bf16.gmra.mrb[0].mxu0 %v647
        %v721 = vpop.f32.mrb[0].mxu0
        %v722 = vadd.f32 %v527, %v721
        %v723 = vpop.f32.mrb[0].mxu0
        %v724 = vpop.f32.mrb[0].mxu0
        %v725 = vadd.f32 %v532, %v724
        %v726 = vpop.f32.mrb[0].mxu0
        %727 = vmatprep.mubr.bf16.mxu0 0
        %728 = vmatmul.mubr.bf16.gmra.mrb[0].mxu0 %v650
        %v729 = vpop.f32.mrb[0].mxu0
        %v730 = vadd.f32 %v537, %v729
        %v731 = vpop.f32.mrb[0].mxu0
        %v732 = vpop.f32.mrb[0].mxu0
        %v733 = vadd.f32 %v542, %v732
        %v734 = vpop.f32.mrb[0].mxu0
        %735 = vmatprep.mubr.bf16.mxu0 0
        %736 = vmatmul.mubr.bf16.gmra.mrb[0].mxu0 %v653
        %v737 = vpop.f32.mrb[0].mxu0
        %v738 = vadd.f32 %v547, %v737
        %v739 = vpop.f32.mrb[0].mxu0
        %v740 = vpop.f32.mrb[0].mxu0
        %v741 = vadd.f32 %v552, %v740
        %v742 = vpop.f32.mrb[0].mxu0
        %743 = vmatprep.mubr.bf16.mxu0 0
        %744 = vmatmul.mubr.bf16.gmra.mrb[0].mxu0 %v656
        %v745 = vpop.f32.mrb[0].mxu0
        %v746 = vadd.f32 %v557, %v745
        %v747 = vpop.f32.mrb[0].mxu0
        %v748 = vpop.f32.mrb[0].mxu0
        %v749 = vadd.f32 %v562, %v748
        %v750 = vpop.f32.mrb[0].mxu0
        %751 = vmatprep.mubr.bf16.mxu0 0
        %752 = vmatmul.mubr.bf16.gmra.mrb[0].mxu0 %v659
        %v753 = vpop.f32.mrb[0].mxu0
        %v754 = vadd.f32 %v567, %v753
        %v755 = vpop.f32.mrb[0].mxu0
        %v756 = vpop.f32.mrb[0].mxu0
        %v757 = vadd.f32 %v572, %v756
        %v758 = vpop.f32.mrb[0].mxu0
        %759 = vmatprep.mubr.bf16.mxu0 0
        %760 = vmatmul.mubr.bf16.gmra.mrb[0].mxu0 %v662
        %v761 = vpop.f32.mrb[0].mxu0
        %v762 = vadd.f32 %v577, %v761
        %v763 = vpop.f32.mrb[0].mxu0
        %v764 = vpop.f32.mrb[0].mxu0
        %v765 = vadd.f32 %v582, %v764
        %v766 = vpop.f32.mrb[0].mxu0
        %767 = vdwg.mxu0
        %v768 = vmax.f32 %v706, 0.0
        %v769 = vmax.f32 %v709, 0.0
        %v770 = vmax.f32 %v714, 0.0
        %v771 = vmax.f32 %v717, 0.0
        %v772 = vmax.f32 %v722, 0.0
        %v773 = vmax.f32 %v725, 0.0
        %v774 = vmax.f32 %v730, 0.0
        %v775 = vmax.f32 %v733, 0.0
        %v776 = vmax.f32 %v738, 0.0
        %v777 = vmax.f32 %v741, 0.0
        %v778 = vmax.f32 %v746, 0.0
        %v779 = vmax.f32 %v749, 0.0
        %v780 = vmax.f32 %v754, 0.0
        %v781 = vmax.f32 %v757, 0.0
        %v782 = vmax.f32 %v762, 0.0
        %v783 = vmax.f32 %v765, 0.0
        %v784 = vpack.c.bf16 %v769, %v768
        %v785 = vpack.c.bf16 %v771, %v770
        %v786 = vpack.c.bf16 %v773, %v772
        %v787 = vpack.c.bf16 %v775, %v774
        %v788 = vpack.c.bf16 %v777, %v776
        %v789 = vpack.c.bf16 %v779, %v778
        %v790 = vpack.c.bf16 %v781, %v780
        %v791 = vpack.c.bf16 %v783, %v782
        %v792 = vld [vmem:[%s3] sm:$0xf]
        %v793 = vld [vmem:[%s3 + $0x4] sm:$0xf]
        %v794 = vld [vmem:[%s3 + $0x8] sm:$0xf]
        %v795 = vld [vmem:[%s3 + $0xc] sm:$0xf]
        %v796 = vld [vmem:[%s3 + $0x10] sm:$0xf]
        %v797 = vld [vmem:[%s3 + $0x14] sm:$0xf]
        %v798 = vld [vmem:[%s3 + $0x18] sm:$0xf]
        %v799 = vld [vmem:[%s3 + $0x1c] sm:$0xf]
        %v800 = vld [vmem:[%s3 + $0x20] sm:$0xf]
        %v801 = vld [vmem:[%s3 + $0x24] sm:$0xf]
        %v802 = vld [vmem:[%s3 + $0x28] sm:$0xf]
        %v803 = vld [vmem:[%s3 + $0x2c] sm:$0xf]
        %v804 = vld [vmem:[%s3 + $0x30] sm:$0xf]
        %v805 = vld [vmem:[%s3 + $0x34] sm:$0xf]
        %v806 = vld [vmem:[%s3 + $0x38] sm:$0xf]
        %v807 = vld [vmem:[%s3 + $0x3c] sm:$0xf]
        %v808 = vld [vmem:[%s3 + $0x40] sm:$0xf]
        %v809 = vld [vmem:[%s3 + $0x44] sm:$0xf]
        %v810 = vld [vmem:[%s3 + $0x48] sm:$0xf]
        %v811 = vld [vmem:[%s3 + $0x4c] sm:$0xf]
        %v812 = vld [vmem:[%s3 + $0x50] sm:$0xf]
        %v813 = vld [vmem:[%s3 + $0x54] sm:$0xf]
        %v814 = vld [vmem:[%s3 + $0x58] sm:$0xf]
        %v815 = vld [vmem:[%s3 + $0x5c] sm:$0xf]
        %v816 = vld [vmem:[%s3 + $0x60] sm:$0xf]
        %v817 = vld [vmem:[%s3 + $0x64] sm:$0xf]
        %v818 = vld [vmem:[%s3 + $0x68] sm:$0xf]
        %v819 = vld [vmem:[%s3 + $0x6c] sm:$0xf]
        %v820 = vld [vmem:[%s3 + $0x70] sm:$0xf]
        %v821 = vld [vmem:[%s3 + $0x74] sm:$0xf]
        %v822 = vld [vmem:[%s3 + $0x78] sm:$0xf]
        %v823 = vld [vmem:[%s3 + $0x7c] sm:$0xf]
        %v824 = vld [vmem:[%s4] sm:$0xff]
        %v825 = vld [vmem:[%s4 + $0x8] sm:$0xff]
        %v826 = vld [vmem:[%s4 + $0x10] sm:$0xff]
        %v827 = vld [vmem:[%s4 + $0x18] sm:$0xff]
        %v828 = vld [vmem:[%s4 + $0x20] sm:$0xff]
        %v829 = vld [vmem:[%s4 + $0x28] sm:$0xff]
        %v830 = vld [vmem:[%s4 + $0x30] sm:$0xff]
        %v831 = vld [vmem:[%s4 + $0x38] sm:$0xff]
        %v832 = vld [vmem:[%s4 + $0x40] sm:$0xff]
        %v833 = vld [vmem:[%s4 + $0x48] sm:$0xff]
        %v834 = vld [vmem:[%s4 + $0x50] sm:$0xff]
        %v835 = vld [vmem:[%s4 + $0x58] sm:$0xff]
        %v836 = vld [vmem:[%s4 + $0x60] sm:$0xff]
        %v837 = vld [vmem:[%s4 + $0x68] sm:$0xff]
        %v838 = vld [vmem:[%s4 + $0x70] sm:$0xff]
        %v839 = vld [vmem:[%s4 + $0x78] sm:$0xff]
        %v840 = vld [vmem:[%s4 + $0x80] sm:$0xff]
        %v841 = vld [vmem:[%s4 + $0x88] sm:$0xff]
        %v842 = vld [vmem:[%s4 + $0x90] sm:$0xff]
        %v843 = vld [vmem:[%s4 + $0x98] sm:$0xff]
        %v844 = vld [vmem:[%s4 + $0xa0] sm:$0xff]
        %v845 = vld [vmem:[%s4 + $0xa8] sm:$0xff]
        %v846 = vld [vmem:[%s4 + $0xb0] sm:$0xff]
        %v847 = vld [vmem:[%s4 + $0xb8] sm:$0xff]
        %v848 = vld [vmem:[%s4 + $0xc0] sm:$0xff]
        %v849 = vld [vmem:[%s4 + $0xc8] sm:$0xff]
        %v850 = vld [vmem:[%s4 + $0xd0] sm:$0xff]
        %v851 = vld [vmem:[%s4 + $0xd8] sm:$0xff]
        %v852 = vld [vmem:[%s4 + $0xe0] sm:$0xff]
        %v853 = vld [vmem:[%s4 + $0xe8] sm:$0xff]
        %v854 = vld [vmem:[%s4 + $0xf0] sm:$0xff]
        %v855 = vld [vmem:[%s4 + $0xf8] sm:$0xff]
        %857 = vset.pattern.permute.xlu0 0
        %858 = vperm.xlu0 %857, %v824
        %v859 = vpop.permute.xlu0 %858
        %862 = vset.pattern.permute.xlu0 0
        %863 = vperm.xlu0 %862, %v825
        %v864 = vpop.permute.xlu0 %863
        %867 = vset.pattern.permute.xlu0 0
        %868 = vperm.xlu0 %867, %v826
        %v869 = vpop.permute.xlu0 %868
        %872 = vset.pattern.permute.xlu0 0
        %873 = vperm.xlu0 %872, %v827
        %v874 = vpop.permute.xlu0 %873
        %877 = vset.pattern.permute.xlu0 0
        %878 = vperm.xlu0 %877, %v828
        %v879 = vpop.permute.xlu0 %878
        %882 = vset.pattern.permute.xlu0 0
        %883 = vperm.xlu0 %882, %v829
        %v884 = vpop.permute.xlu0 %883
        %887 = vset.pattern.permute.xlu0 0
        %888 = vperm.xlu0 %887, %v830
        %v889 = vpop.permute.xlu0 %888
        %892 = vset.pattern.permute.xlu0 0
        %893 = vperm.xlu0 %892, %v831
        %v894 = vpop.permute.xlu0 %893
        %897 = vset.pattern.permute.xlu0 0
        %898 = vperm.xlu0 %897, %v832
        %v899 = vpop.permute.xlu0 %898
        %902 = vset.pattern.permute.xlu0 0
        %903 = vperm.xlu0 %902, %v833
        %v904 = vpop.permute.xlu0 %903
        %907 = vset.pattern.permute.xlu0 0
        %908 = vperm.xlu0 %907, %v834
        %v909 = vpop.permute.xlu0 %908
        %912 = vset.pattern.permute.xlu0 0
        %913 = vperm.xlu0 %912, %v835
        %v914 = vpop.permute.xlu0 %913
        %917 = vset.pattern.permute.xlu0 0
        %918 = vperm.xlu0 %917, %v836
        %v919 = vpop.permute.xlu0 %918
        %922 = vset.pattern.permute.xlu0 0
        %923 = vperm.xlu0 %922, %v837
        %v924 = vpop.permute.xlu0 %923
        %927 = vset.pattern.permute.xlu0 0
        %928 = vperm.xlu0 %927, %v838
        %v929 = vpop.permute.xlu0 %928
        %932 = vset.pattern.permute.xlu0 0
        %933 = vperm.xlu0 %932, %v839
        %v934 = vpop.permute.xlu0 %933
        %937 = vset.pattern.permute.xlu0 0
        %938 = vperm.xlu0 %937, %v840
        %v939 = vpop.permute.xlu0 %938
        %942 = vset.pattern.permute.xlu0 0
        %943 = vperm.xlu0 %942, %v841
        %v944 = vpop.permute.xlu0 %943
        %947 = vset.pattern.permute.xlu0 0
        %948 = vperm.xlu0 %947, %v842
        %v949 = vpop.permute.xlu0 %948
        %952 = vset.pattern.permute.xlu0 0
        %953 = vperm.xlu0 %952, %v843
        %v954 = vpop.permute.xlu0 %953
        %957 = vset.pattern.permute.xlu0 0
        %958 = vperm.xlu0 %957, %v844
        %v959 = vpop.permute.xlu0 %958
        %962 = vset.pattern.permute.xlu0 0
        %963 = vperm.xlu0 %962, %v845
        %v964 = vpop.permute.xlu0 %963
        %967 = vset.pattern.permute.xlu0 0
        %968 = vperm.xlu0 %967, %v846
        %v969 = vpop.permute.xlu0 %968
        %972 = vset.pattern.permute.xlu0 0
        %973 = vperm.xlu0 %972, %v847
        %v974 = vpop.permute.xlu0 %973
        %977 = vset.pattern.permute.xlu0 0
        %978 = vperm.xlu0 %977, %v848
        %v979 = vpop.permute.xlu0 %978
        %982 = vset.pattern.permute.xlu0 0
        %983 = vperm.xlu0 %982, %v849
        %v984 = vpop.permute.xlu0 %983
        %987 = vset.pattern.permute.xlu0 0
        %988 = vperm.xlu0 %987, %v850
        %v989 = vpop.permute.xlu0 %988
        %992 = vset.pattern.permute.xlu0 0
        %993 = vperm.xlu0 %992, %v851
        %v994 = vpop.permute.xlu0 %993
        %997 = vset.pattern.permute.xlu0 0
        %998 = vperm.xlu0 %997, %v852
        %v999 = vpop.permute.xlu0 %998
        %1002 = vset.pattern.permute.xlu0 0
        %1003 = vperm.xlu0 %1002, %v853
        %v1004 = vpop.permute.xlu0 %1003
        %1007 = vset.pattern.permute.xlu0 0
        %1008 = vperm.xlu0 %1007, %v854
        %v1009 = vpop.permute.xlu0 %1008
        %1012 = vset.pattern.permute.xlu0 0
        %1013 = vperm.xlu0 %1012, %v855
        %v1014 = vpop.permute.xlu0 %1013
        %v1048 = vunpack.c.l.b16 %v792
        %v1049 = vunpack.c.l.b16 %v793
        %v1050 = vunpack.c.l.b16 %v794
        %v1051 = vunpack.c.l.b16 %v795
        %v1052 = vunpack.c.l.b16 %v796
        %v1053 = vunpack.c.l.b16 %v797
        %v1054 = vunpack.c.l.b16 %v798
        %v1055 = vunpack.c.l.b16 %v799
        %v1056 = vunpack.c.l.b16 %v800
        %v1057 = vunpack.c.l.b16 %v801
        %v1058 = vunpack.c.l.b16 %v802
        %v1059 = vunpack.c.l.b16 %v803
        %v1060 = vunpack.c.l.b16 %v804
        %v1061 = vunpack.c.l.b16 %v805
        %v1062 = vunpack.c.l.b16 %v806
        %v1063 = vunpack.c.l.b16 %v807
        %v1064 = vunpack.c.l.b16 %v808
        %v1065 = vunpack.c.l.b16 %v809
        %v1066 = vunpack.c.l.b16 %v810
        %v1067 = vunpack.c.l.b16 %v811
        %v1068 = vunpack.c.l.b16 %v812
        %v1069 = vunpack.c.l.b16 %v813
        %v1070 = vunpack.c.l.b16 %v814
        %v1071 = vunpack.c.l.b16 %v815
        %v1072 = vunpack.c.l.b16 %v816
        %v1073 = vunpack.c.l.b16 %v817
        %v1074 = vunpack.c.l.b16 %v818
        %v1075 = vunpack.c.l.b16 %v819
        %v1076 = vunpack.c.l.b16 %v820
        %v1077 = vunpack.c.l.b16 %v821
        %v1078 = vunpack.c.l.b16 %v822
        %v1079 = vunpack.c.l.b16 %v823
        %v1080 = vpack.c.b16 %v1049, %v1048
        %v1081 = vpack.c.b16 %v1051, %v1050
        %v1082 = vpack.c.b16 %v1053, %v1052
        %v1083 = vpack.c.b16 %v1055, %v1054
        %v1084 = vpack.c.b16 %v1057, %v1056
        %v1085 = vpack.c.b16 %v1059, %v1058
        %v1086 = vpack.c.b16 %v1061, %v1060
        %v1087 = vpack.c.b16 %v1063, %v1062
        %v1088 = vpack.c.b16 %v1065, %v1064
        %v1089 = vpack.c.b16 %v1067, %v1066
        %v1090 = vpack.c.b16 %v1069, %v1068
        %v1091 = vpack.c.b16 %v1071, %v1070
        %v1092 = vpack.c.b16 %v1073, %v1072
        %v1093 = vpack.c.b16 %v1075, %v1074
        %v1094 = vpack.c.b16 %v1077, %v1076
        %v1095 = vpack.c.b16 %v1079, %v1078
        %1112 = vmatprep.subr.bf16.mxu0 0
        %1113 = vmatpush1.bf16.msra.mxu0 %v784
        %1114 = vmatprep.subr.bf16.mxu0 0
        %1115 = vmatpush1.bf16.msra.mxu0 %v785
        %1116 = vmatprep.subr.bf16.mxu0 0
        %1117 = vmatpush1.bf16.msra.mxu0 %v786
        %1118 = vmatprep.subr.bf16.mxu0 0
        %1119 = vmatpush1.bf16.msra.mxu0 %v787
        %1120 = vmatprep.subr.bf16.mxu0 0
        %1121 = vmatpush1.bf16.msra.mxu0 %v788
        %1122 = vmatprep.subr.bf16.mxu0 0
        %1123 = vmatpush1.bf16.msra.mxu0 %v789
        %1124 = vmatprep.subr.bf16.mxu0 0
        %1125 = vmatpush1.bf16.msra.mxu0 %v790
        %1126 = vmatprep.subr.bf16.mxu0 0
        %1127 = vmatpush1.bf16.msra.mxu0 %v791
        %1128 = vmatprep.subr.bf16.mxu0 0
        %1129 = vmatpush1.bf16.msra.mxu0 0
        %1130 = vmatprep.subr.bf16.mxu0 0
        %1131 = vmatpush1.bf16.msra.mxu0 0
        %1132 = vmatprep.subr.bf16.mxu0 0
        %1133 = vmatpush1.bf16.msra.mxu0 0
        %1134 = vmatprep.subr.bf16.mxu0 0
        %1135 = vmatpush1.bf16.msra.mxu0 0
        %1136 = vmatprep.subr.bf16.mxu0 0
        %1137 = vmatpush1.bf16.msra.mxu0 0
        %1138 = vmatprep.subr.bf16.mxu0 0
        %1139 = vmatpush1.bf16.msra.mxu0 0
        %1140 = vmatprep.subr.bf16.mxu0 0
        %1141 = vmatpush1.bf16.msra.mxu0 0
        %1142 = vmatprep.subr.bf16.mxu0 0
        %1143 = vmatpush1.bf16.msra.mxu0 0
        %1144 = vmatprep.mubr.bf16.mxu0 0
        %1145 = vmatmul.mubr.bf16.gmra.mrb[0].mxu0 %v1080
        %v1146 = vpop.f32.mrb[0].mxu0
        %v1147 = vadd.f32 %v859, %v1146
        %v1148 = vpop.f32.mrb[0].mxu0
        %v1149 = vpop.f32.mrb[0].mxu0
        %v1150 = vadd.f32 %v864, %v1149
        %v1151 = vpop.f32.mrb[0].mxu0
        %1152 = vmatprep.mubr.bf16.mxu0 0
        %1153 = vmatmul.mubr.bf16.gmra.mrb[0].mxu0 %v1081
        %v1154 = vpop.f32.mrb[0].mxu0
        %v1155 = vadd.f32 %v869, %v1154
        %v1156 = vpop.f32.mrb[0].mxu0
        %v1157 = vpop.f32.mrb[0].mxu0
        %v1158 = vadd.f32 %v874, %v1157
        %v1159 = vpop.f32.mrb[0].mxu0
        %1160 = vmatprep.mubr.bf16.mxu0 0
        %1161 = vmatmul.mubr.bf16.gmra.mrb[0].mxu0 %v1082
        %v1162 = vpop.f32.mrb[0].mxu0
        %v1163 = vadd.f32 %v879, %v1162
        %v1164 = vpop.f32.mrb[0].mxu0
        %v1165 = vpop.f32.mrb[0].mxu0
        %v1166 = vadd.f32 %v884, %v1165
        %v1167 = vpop.f32.mrb[0].mxu0
        %1168 = vmatprep.mubr.bf16.mxu0 0
        %1169 = vmatmul.mubr.bf16.gmra.mrb[0].mxu0 %v1083
        %v1170 = vpop.f32.mrb[0].mxu0
        %v1171 = vadd.f32 %v889, %v1170
        %v1172 = vpop.f32.mrb[0].mxu0
        %v1173 = vpop.f32.mrb[0].mxu0
        %v1174 = vadd.f32 %v894, %v1173
        %v1175 = vpop.f32.mrb[0].mxu0
        %1176 = vmatprep.mubr.bf16.mxu0 0
        %1177 = vmatmul.mubr.bf16.gmra.mrb[0].mxu0 %v1084
        %v1178 = vpop.f32.mrb[0].mxu0
        %v1179 = vadd.f32 %v899, %v1178
        %v1180 = vpop.f32.mrb[0].mxu0
        %v1181 = vpop.f32.mrb[0].mxu0
        %v1182 = vadd.f32 %v904, %v1181
        %v1183 = vpop.f32.mrb[0].mxu0
        %1184 = vmatprep.mubr.bf16.mxu0 0
        %1185 = vmatmul.mubr.bf16.gmra.mrb[0].mxu0 %v1085
        %v1186 = vpop.f32.mrb[0].mxu0
        %v1187 = vadd.f32 %v909, %v1186
        %v1188 = vpop.f32.mrb[0].mxu0
        %v1189 = vpop.f32.mrb[0].mxu0
        %v1190 = vadd.f32 %v914, %v1189
        %v1191 = vpop.f32.mrb[0].mxu0
        %1192 = vmatprep.mubr.bf16.mxu0 0
        %1193 = vmatmul.mubr.bf16.gmra.mrb[0].mxu0 %v1086
        %v1194 = vpop.f32.mrb[0].mxu0
        %v1195 = vadd.f32 %v919, %v1194
        %v1196 = vpop.f32.mrb[0].mxu0
        %v1197 = vpop.f32.mrb[0].mxu0
        %v1198 = vadd.f32 %v924, %v1197
        %v1199 = vpop.f32.mrb[0].mxu0
        %1200 = vmatprep.mubr.bf16.mxu0 0
        %1201 = vmatmul.mubr.bf16.gmra.mrb[0].mxu0 %v1087
        %v1202 = vpop.f32.mrb[0].mxu0
        %v1203 = vadd.f32 %v929, %v1202
        %v1204 = vpop.f32.mrb[0].mxu0
        %v1205 = vpop.f32.mrb[0].mxu0
        %v1206 = vadd.f32 %v934, %v1205
        %v1207 = vpop.f32.mrb[0].mxu0
        %1208 = vmatprep.mubr.bf16.mxu0 0
        %1209 = vmatmul.mubr.bf16.gmra.mrb[0].mxu0 %v1088
        %v1210 = vpop.f32.mrb[0].mxu0
        %v1211 = vadd.f32 %v939, %v1210
        %v1212 = vpop.f32.mrb[0].mxu0
        %v1213 = vpop.f32.mrb[0].mxu0
        %v1214 = vadd.f32 %v944, %v1213
        %v1215 = vpop.f32.mrb[0].mxu0
        %1216 = vmatprep.mubr.bf16.mxu0 0
        %1217 = vmatmul.mubr.bf16.gmra.mrb[0].mxu0 %v1089
        %v1218 = vpop.f32.mrb[0].mxu0
        %v1219 = vadd.f32 %v949, %v1218
        %v1220 = vpop.f32.mrb[0].mxu0
        %v1221 = vpop.f32.mrb[0].mxu0
        %v1222 = vadd.f32 %v954, %v1221
        %v1223 = vpop.f32.mrb[0].mxu0
        %1224 = vmatprep.mubr.bf16.mxu0 0
        %1225 = vmatmul.mubr.bf16.gmra.mrb[0].mxu0 %v1090
        %v1226 = vpop.f32.mrb[0].mxu0
        %v1227 = vadd.f32 %v959, %v1226
        %v1228 = vpop.f32.mrb[0].mxu0
        %v1229 = vpop.f32.mrb[0].mxu0
        %v1230 = vadd.f32 %v964, %v1229
        %v1231 = vpop.f32.mrb[0].mxu0
        %1232 = vmatprep.mubr.bf16.mxu0 0
        %1233 = vmatmul.mubr.bf16.gmra.mrb[0].mxu0 %v1091
        %v1234 = vpop.f32.mrb[0].mxu0
        %v1235 = vadd.f32 %v969, %v1234
        %v1236 = vpop.f32.mrb[0].mxu0
        %v1237 = vpop.f32.mrb[0].mxu0
        %v1238 = vadd.f32 %v974, %v1237
        %v1239 = vpop.f32.mrb[0].mxu0
        %1240 = vmatprep.mubr.bf16.mxu0 0
        %1241 = vmatmul.mubr.bf16.gmra.mrb[0].mxu0 %v1092
        %v1242 = vpop.f32.mrb[0].mxu0
        %v1243 = vadd.f32 %v979, %v1242
        %v1244 = vpop.f32.mrb[0].mxu0
        %v1245 = vpop.f32.mrb[0].mxu0
        %v1246 = vadd.f32 %v984, %v1245
        %v1247 = vpop.f32.mrb[0].mxu0
        %1248 = vmatprep.mubr.bf16.mxu0 0
        %1249 = vmatmul.mubr.bf16.gmra.mrb[0].mxu0 %v1093
        %v1250 = vpop.f32.mrb[0].mxu0
        %v1251 = vadd.f32 %v989, %v1250
        %v1252 = vpop.f32.mrb[0].mxu0
        %v1253 = vpop.f32.mrb[0].mxu0
        %v1254 = vadd.f32 %v994, %v1253
        %v1255 = vpop.f32.mrb[0].mxu0
        %1256 = vmatprep.mubr.bf16.mxu0 0
        %1257 = vmatmul.mubr.bf16.gmra.mrb[0].mxu0 %v1094
        %v1258 = vpop.f32.mrb[0].mxu0
        %v1259 = vadd.f32 %v999, %v1258
        %v1260 = vpop.f32.mrb[0].mxu0
        %v1261 = vpop.f32.mrb[0].mxu0
        %v1262 = vadd.f32 %v1004, %v1261
        %v1263 = vpop.f32.mrb[0].mxu0
        %1264 = vmatprep.mubr.bf16.mxu0 0
        %1265 = vmatmul.mubr.bf16.gmra.mrb[0].mxu0 %v1095
        %v1266 = vpop.f32.mrb[0].mxu0
        %v1267 = vadd.f32 %v1009, %v1266
        %v1268 = vpop.f32.mrb[0].mxu0
        %v1269 = vpop.f32.mrb[0].mxu0
        %v1270 = vadd.f32 %v1014, %v1269
        %v1271 = vpop.f32.mrb[0].mxu0
        %1272 = vdwg.mxu0
        %v1273 = vmax.f32 %v1147, 0.0
        %v1274 = vmax.f32 %v1150, 0.0
        %v1275 = vmax.f32 %v1155, 0.0
        %v1276 = vmax.f32 %v1158, 0.0
        %v1277 = vmax.f32 %v1163, 0.0
        %v1278 = vmax.f32 %v1166, 0.0
        %v1279 = vmax.f32 %v1171, 0.0
        %v1280 = vmax.f32 %v1174, 0.0
        %v1281 = vmax.f32 %v1179, 0.0
        %v1282 = vmax.f32 %v1182, 0.0
        %v1283 = vmax.f32 %v1187, 0.0
        %v1284 = vmax.f32 %v1190, 0.0
        %v1285 = vmax.f32 %v1195, 0.0
        %v1286 = vmax.f32 %v1198, 0.0
        %v1287 = vmax.f32 %v1203, 0.0
        %v1288 = vmax.f32 %v1206, 0.0
        %v1289 = vmax.f32 %v1211, 0.0
        %v1290 = vmax.f32 %v1214, 0.0
        %v1291 = vmax.f32 %v1219, 0.0
        %v1292 = vmax.f32 %v1222, 0.0
        %v1293 = vmax.f32 %v1227, 0.0
        %v1294 = vmax.f32 %v1230, 0.0
        %v1295 = vmax.f32 %v1235, 0.0
        %v1296 = vmax.f32 %v1238, 0.0
        %v1297 = vmax.f32 %v1243, 0.0
        %v1298 = vmax.f32 %v1246, 0.0
        %v1299 = vmax.f32 %v1251, 0.0
        %v1300 = vmax.f32 %v1254, 0.0
        %v1301 = vmax.f32 %v1259, 0.0
        %v1302 = vmax.f32 %v1262, 0.0
        %v1303 = vmax.f32 %v1267, 0.0
        %v1304 = vmax.f32 %v1270, 0.0
        %v1305 = vpack.c.bf16 %v1274, %v1273
        %v1306 = vpack.c.bf16 %v1276, %v1275
        %v1307 = vpack.c.bf16 %v1278, %v1277
        %v1308 = vpack.c.bf16 %v1280, %v1279
        %v1309 = vpack.c.bf16 %v1282, %v1281
        %v1310 = vpack.c.bf16 %v1284, %v1283
        %v1311 = vpack.c.bf16 %v1286, %v1285
        %v1312 = vpack.c.bf16 %v1288, %v1287
        %v1313 = vpack.c.bf16 %v1290, %v1289
        %v1314 = vpack.c.bf16 %v1292, %v1291
        %v1315 = vpack.c.bf16 %v1294, %v1293
        %v1316 = vpack.c.bf16 %v1296, %v1295
        %v1317 = vpack.c.bf16 %v1298, %v1297
        %v1318 = vpack.c.bf16 %v1300, %v1299
        %v1319 = vpack.c.bf16 %v1302, %v1301
        %v1320 = vpack.c.bf16 %v1304, %v1303
        %v1321 = vld [vmem:[%s5] sm:$0xff]
        %v1322 = vld [vmem:[%s5 + $0x8] sm:$0xff]
        %v1323 = vld [vmem:[%s5 + $0x10] sm:$0xff]
        %v1324 = vld [vmem:[%s5 + $0x18] sm:$0xff]
        %v1325 = vld [vmem:[%s5 + $0x20] sm:$0xff]
        %v1326 = vld [vmem:[%s5 + $0x28] sm:$0xff]
        %v1327 = vld [vmem:[%s5 + $0x30] sm:$0xff]
        %v1328 = vld [vmem:[%s5 + $0x38] sm:$0xff]
        %v1329 = vld [vmem:[%s5 + $0x40] sm:$0xff]
        %v1330 = vld [vmem:[%s5 + $0x48] sm:$0xff]
        %v1331 = vld [vmem:[%s5 + $0x50] sm:$0xff]
        %v1332 = vld [vmem:[%s5 + $0x58] sm:$0xff]
        %v1333 = vld [vmem:[%s5 + $0x60] sm:$0xff]
        %v1334 = vld [vmem:[%s5 + $0x68] sm:$0xff]
        %v1335 = vld [vmem:[%s5 + $0x70] sm:$0xff]
        %v1336 = vld [vmem:[%s5 + $0x78] sm:$0xff]
        %v1337 = vld [vmem:[%s5 + $0x80] sm:$0xff]
        %v1338 = vld [vmem:[%s5 + $0x88] sm:$0xff]
        %v1339 = vld [vmem:[%s5 + $0x90] sm:$0xff]
        %v1340 = vld [vmem:[%s5 + $0x98] sm:$0xff]
        %v1341 = vld [vmem:[%s5 + $0xa0] sm:$0xff]
        %v1342 = vld [vmem:[%s5 + $0xa8] sm:$0xff]
        %v1343 = vld [vmem:[%s5 + $0xb0] sm:$0xff]
        %v1344 = vld [vmem:[%s5 + $0xb8] sm:$0xff]
        %v1345 = vld [vmem:[%s5 + $0xc0] sm:$0xff]
        %v1346 = vld [vmem:[%s5 + $0xc8] sm:$0xff]
        %v1347 = vld [vmem:[%s5 + $0xd0] sm:$0xff]
        %v1348 = vld [vmem:[%s5 + $0xd8] sm:$0xff]
        %v1349 = vld [vmem:[%s5 + $0xe0] sm:$0xff]
        %v1350 = vld [vmem:[%s5 + $0xe8] sm:$0xff]
        %v1351 = vld [vmem:[%s5 + $0xf0] sm:$0xff]
        %v1352 = vld [vmem:[%s5 + $0xf8] sm:$0xff]
        %v1353 = vld [vmem:[%s5 + $0x100] sm:$0xff]
        %v1354 = vld [vmem:[%s5 + $0x108] sm:$0xff]
        %v1355 = vld [vmem:[%s5 + $0x110] sm:$0xff]
        %v1356 = vld [vmem:[%s5 + $0x118] sm:$0xff]
        %v1357 = vld [vmem:[%s5 + $0x120] sm:$0xff]
        %v1358 = vld [vmem:[%s5 + $0x128] sm:$0xff]
        %v1359 = vld [vmem:[%s5 + $0x130] sm:$0xff]
        %v1360 = vld [vmem:[%s5 + $0x138] sm:$0xff]
        %v1361 = vld [vmem:[%s5 + $0x140] sm:$0xff]
        %v1362 = vld [vmem:[%s5 + $0x148] sm:$0xff]
        %v1363 = vld [vmem:[%s5 + $0x150] sm:$0xff]
        %v1364 = vld [vmem:[%s5 + $0x158] sm:$0xff]
        %v1365 = vld [vmem:[%s5 + $0x160] sm:$0xff]
        %v1366 = vld [vmem:[%s5 + $0x168] sm:$0xff]
        %v1367 = vld [vmem:[%s5 + $0x170] sm:$0xff]
        %v1368 = vld [vmem:[%s5 + $0x178] sm:$0xff]
        %v1369 = vld [vmem:[%s5 + $0x180] sm:$0xff]
        %v1370 = vld [vmem:[%s5 + $0x188] sm:$0xff]
        %v1371 = vld [vmem:[%s5 + $0x190] sm:$0xff]
        %v1372 = vld [vmem:[%s5 + $0x198] sm:$0xff]
        %v1373 = vld [vmem:[%s5 + $0x1a0] sm:$0xff]
        %v1374 = vld [vmem:[%s5 + $0x1a8] sm:$0xff]
        %v1375 = vld [vmem:[%s5 + $0x1b0] sm:$0xff]
        %v1376 = vld [vmem:[%s5 + $0x1b8] sm:$0xff]
        %v1377 = vld [vmem:[%s5 + $0x1c0] sm:$0xff]
        %v1378 = vld [vmem:[%s5 + $0x1c8] sm:$0xff]
        %v1379 = vld [vmem:[%s5 + $0x1d0] sm:$0xff]
        %v1380 = vld [vmem:[%s5 + $0x1d8] sm:$0xff]
        %v1381 = vld [vmem:[%s5 + $0x1e0] sm:$0xff]
        %v1382 = vld [vmem:[%s5 + $0x1e8] sm:$0xff]
        %v1383 = vld [vmem:[%s5 + $0x1f0] sm:$0xff]
        %v1384 = vld [vmem:[%s5 + $0x1f8] sm:$0xff]
        %v1385 = vld [vmem:[%s6] sm:$0xff]
        %v1386 = vld [vmem:[%s6 + $0x8] sm:$0xff]
        %v1387 = vld [vmem:[%s6 + $0x10] sm:$0xff]
        %v1388 = vld [vmem:[%s6 + $0x18] sm:$0xff]
        %v1389 = vld [vmem:[%s6 + $0x20] sm:$0xff]
        %v1390 = vld [vmem:[%s6 + $0x28] sm:$0xff]
        %v1391 = vld [vmem:[%s6 + $0x30] sm:$0xff]
        %v1392 = vld [vmem:[%s6 + $0x38] sm:$0xff]
        %v1393 = vld [vmem:[%s6 + $0x40] sm:$0xff]
        %v1394 = vld [vmem:[%s6 + $0x48] sm:$0xff]
        %v1395 = vld [vmem:[%s6 + $0x50] sm:$0xff]
        %v1396 = vld [vmem:[%s6 + $0x58] sm:$0xff]
        %v1397 = vld [vmem:[%s6 + $0x60] sm:$0xff]
        %v1398 = vld [vmem:[%s6 + $0x68] sm:$0xff]
        %v1399 = vld [vmem:[%s6 + $0x70] sm:$0xff]
        %v1400 = vld [vmem:[%s6 + $0x78] sm:$0xff]
        %v1401 = vld [vmem:[%s6 + $0x80] sm:$0xff]
        %v1402 = vld [vmem:[%s6 + $0x88] sm:$0xff]
        %v1403 = vld [vmem:[%s6 + $0x90] sm:$0xff]
        %v1404 = vld [vmem:[%s6 + $0x98] sm:$0xff]
        %v1405 = vld [vmem:[%s6 + $0xa0] sm:$0xff]
        %v1406 = vld [vmem:[%s6 + $0xa8] sm:$0xff]
        %v1407 = vld [vmem:[%s6 + $0xb0] sm:$0xff]
        %v1408 = vld [vmem:[%s6 + $0xb8] sm:$0xff]
        %v1409 = vld [vmem:[%s6 + $0xc0] sm:$0xff]
        %v1410 = vld [vmem:[%s6 + $0xc8] sm:$0xff]
        %v1411 = vld [vmem:[%s6 + $0xd0] sm:$0xff]
        %v1412 = vld [vmem:[%s6 + $0xd8] sm:$0xff]
        %v1413 = vld [vmem:[%s6 + $0xe0] sm:$0xff]
        %v1414 = vld [vmem:[%s6 + $0xe8] sm:$0xff]
        %v1415 = vld [vmem:[%s6 + $0xf0] sm:$0xff]
        %v1416 = vld [vmem:[%s6 + $0xf8] sm:$0xff]
        %v1417 = vld [vmem:[%s6 + $0x100] sm:$0xff]
        %v1418 = vld [vmem:[%s6 + $0x108] sm:$0xff]
        %v1419 = vld [vmem:[%s6 + $0x110] sm:$0xff]
        %v1420 = vld [vmem:[%s6 + $0x118] sm:$0xff]
        %v1421 = vld [vmem:[%s6 + $0x120] sm:$0xff]
        %v1422 = vld [vmem:[%s6 + $0x128] sm:$0xff]
        %v1423 = vld [vmem:[%s6 + $0x130] sm:$0xff]
        %v1424 = vld [vmem:[%s6 + $0x138] sm:$0xff]
        %v1425 = vld [vmem:[%s6 + $0x140] sm:$0xff]
        %v1426 = vld [vmem:[%s6 + $0x148] sm:$0xff]
        %v1427 = vld [vmem:[%s6 + $0x150] sm:$0xff]
        %v1428 = vld [vmem:[%s6 + $0x158] sm:$0xff]
        %v1429 = vld [vmem:[%s6 + $0x160] sm:$0xff]
        %v1430 = vld [vmem:[%s6 + $0x168] sm:$0xff]
        %v1431 = vld [vmem:[%s6 + $0x170] sm:$0xff]
        %v1432 = vld [vmem:[%s6 + $0x178] sm:$0xff]
        %v1433 = vld [vmem:[%s6 + $0x180] sm:$0xff]
        %v1434 = vld [vmem:[%s6 + $0x188] sm:$0xff]
        %v1435 = vld [vmem:[%s6 + $0x190] sm:$0xff]
        %v1436 = vld [vmem:[%s6 + $0x198] sm:$0xff]
        %v1437 = vld [vmem:[%s6 + $0x1a0] sm:$0xff]
        %v1438 = vld [vmem:[%s6 + $0x1a8] sm:$0xff]
        %v1439 = vld [vmem:[%s6 + $0x1b0] sm:$0xff]
        %v1440 = vld [vmem:[%s6 + $0x1b8] sm:$0xff]
        %v1441 = vld [vmem:[%s6 + $0x1c0] sm:$0xff]
        %v1442 = vld [vmem:[%s6 + $0x1c8] sm:$0xff]
        %v1443 = vld [vmem:[%s6 + $0x1d0] sm:$0xff]
        %v1444 = vld [vmem:[%s6 + $0x1d8] sm:$0xff]
        %v1445 = vld [vmem:[%s6 + $0x1e0] sm:$0xff]
        %v1446 = vld [vmem:[%s6 + $0x1e8] sm:$0xff]
        %v1447 = vld [vmem:[%s6 + $0x1f0] sm:$0xff]
        %v1448 = vld [vmem:[%s6 + $0x1f8] sm:$0xff]
        %1450 = vset.pattern.permute.xlu0 0
        %1451 = vperm.xlu0 %1450, %v1385
        %v1452 = vpop.permute.xlu0 %1451
        %1455 = vset.pattern.permute.xlu0 0
        %1456 = vperm.xlu0 %1455, %v1386
        %v1457 = vpop.permute.xlu0 %1456
        %1460 = vset.pattern.permute.xlu0 0
        %1461 = vperm.xlu0 %1460, %v1387
        %v1462 = vpop.permute.xlu0 %1461
        %1465 = vset.pattern.permute.xlu0 0
        %1466 = vperm.xlu0 %1465, %v1388
        %v1467 = vpop.permute.xlu0 %1466
        %1470 = vset.pattern.permute.xlu0 0
        %1471 = vperm.xlu0 %1470, %v1389
        %v1472 = vpop.permute.xlu0 %1471
        %1475 = vset.pattern.permute.xlu0 0
        %1476 = vperm.xlu0 %1475, %v1390
        %v1477 = vpop.permute.xlu0 %1476
        %1480 = vset.pattern.permute.xlu0 0
        %1481 = vperm.xlu0 %1480, %v1391
        %v1482 = vpop.permute.xlu0 %1481
        %1485 = vset.pattern.permute.xlu0 0
        %1486 = vperm.xlu0 %1485, %v1392
        %v1487 = vpop.permute.xlu0 %1486
        %1490 = vset.pattern.permute.xlu0 0
        %1491 = vperm.xlu0 %1490, %v1393
        %v1492 = vpop.permute.xlu0 %1491
        %1495 = vset.pattern.permute.xlu0 0
        %1496 = vperm.xlu0 %1495, %v1394
        %v1497 = vpop.permute.xlu0 %1496
        %1500 = vset.pattern.permute.xlu0 0
        %1501 = vperm.xlu0 %1500, %v1395
        %v1502 = vpop.permute.xlu0 %1501
        %1505 = vset.pattern.permute.xlu0 0
        %1506 = vperm.xlu0 %1505, %v1396
        %v1507 = vpop.permute.xlu0 %1506
        %1510 = vset.pattern.permute.xlu0 0
        %1511 = vperm.xlu0 %1510, %v1397
        %v1512 = vpop.permute.xlu0 %1511
        %1515 = vset.pattern.permute.xlu0 0
        %1516 = vperm.xlu0 %1515, %v1398
        %v1517 = vpop.permute.xlu0 %1516
        %1520 = vset.pattern.permute.xlu0 0
        %1521 = vperm.xlu0 %1520, %v1399
        %v1522 = vpop.permute.xlu0 %1521
        %1525 = vset.pattern.permute.xlu0 0
        %1526 = vperm.xlu0 %1525, %v1400
        %v1527 = vpop.permute.xlu0 %1526
        %1530 = vset.pattern.permute.xlu0 0
        %1531 = vperm.xlu0 %1530, %v1401
        %v1532 = vpop.permute.xlu0 %1531
        %1535 = vset.pattern.permute.xlu0 0
        %1536 = vperm.xlu0 %1535, %v1402
        %v1537 = vpop.permute.xlu0 %1536
        %1540 = vset.pattern.permute.xlu0 0
        %1541 = vperm.xlu0 %1540, %v1403
        %v1542 = vpop.permute.xlu0 %1541
        %1545 = vset.pattern.permute.xlu0 0
        %1546 = vperm.xlu0 %1545, %v1404
        %v1547 = vpop.permute.xlu0 %1546
        %1550 = vset.pattern.permute.xlu0 0
        %1551 = vperm.xlu0 %1550, %v1405
        %v1552 = vpop.permute.xlu0 %1551
        %1555 = vset.pattern.permute.xlu0 0
        %1556 = vperm.xlu0 %1555, %v1406
        %v1557 = vpop.permute.xlu0 %1556
        %1560 = vset.pattern.permute.xlu0 0
        %1561 = vperm.xlu0 %1560, %v1407
        %v1562 = vpop.permute.xlu0 %1561
        %1565 = vset.pattern.permute.xlu0 0
        %1566 = vperm.xlu0 %1565, %v1408
        %v1567 = vpop.permute.xlu0 %1566
        %1570 = vset.pattern.permute.xlu0 0
        %1571 = vperm.xlu0 %1570, %v1409
        %v1572 = vpop.permute.xlu0 %1571
        %1575 = vset.pattern.permute.xlu0 0
        %1576 = vperm.xlu0 %1575, %v1410
        %v1577 = vpop.permute.xlu0 %1576
        %1580 = vset.pattern.permute.xlu0 0
        %1581 = vperm.xlu0 %1580, %v1411
        %v1582 = vpop.permute.xlu0 %1581
        %1585 = vset.pattern.permute.xlu0 0
        %1586 = vperm.xlu0 %1585, %v1412
        %v1587 = vpop.permute.xlu0 %1586
        %1590 = vset.pattern.permute.xlu0 0
        %1591 = vperm.xlu0 %1590, %v1413
        %v1592 = vpop.permute.xlu0 %1591
        %1595 = vset.pattern.permute.xlu0 0
        %1596 = vperm.xlu0 %1595, %v1414
        %v1597 = vpop.permute.xlu0 %1596
        %1600 = vset.pattern.permute.xlu0 0
        %1601 = vperm.xlu0 %1600, %v1415
        %v1602 = vpop.permute.xlu0 %1601
        %1605 = vset.pattern.permute.xlu0 0
        %1606 = vperm.xlu0 %1605, %v1416
        %v1607 = vpop.permute.xlu0 %1606
        %1610 = vset.pattern.permute.xlu0 0
        %1611 = vperm.xlu0 %1610, %v1417
        %v1612 = vpop.permute.xlu0 %1611
        %1615 = vset.pattern.permute.xlu0 0
        %1616 = vperm.xlu0 %1615, %v1418
        %v1617 = vpop.permute.xlu0 %1616
        %1620 = vset.pattern.permute.xlu0 0
        %1621 = vperm.xlu0 %1620, %v1419
        %v1622 = vpop.permute.xlu0 %1621
        %1625 = vset.pattern.permute.xlu0 0
        %1626 = vperm.xlu0 %1625, %v1420
        %v1627 = vpop.permute.xlu0 %1626
        %1630 = vset.pattern.permute.xlu0 0
        %1631 = vperm.xlu0 %1630, %v1421
        %v1632 = vpop.permute.xlu0 %1631
        %1635 = vset.pattern.permute.xlu0 0
        %1636 = vperm.xlu0 %1635, %v1422
        %v1637 = vpop.permute.xlu0 %1636
        %1640 = vset.pattern.permute.xlu0 0
        %1641 = vperm.xlu0 %1640, %v1423
        %v1642 = vpop.permute.xlu0 %1641
        %1645 = vset.pattern.permute.xlu0 0
        %1646 = vperm.xlu0 %1645, %v1424
        %v1647 = vpop.permute.xlu0 %1646
        %1650 = vset.pattern.permute.xlu0 0
        %1651 = vperm.xlu0 %1650, %v1425
        %v1652 = vpop.permute.xlu0 %1651
        %1655 = vset.pattern.permute.xlu0 0
        %1656 = vperm.xlu0 %1655, %v1426
        %v1657 = vpop.permute.xlu0 %1656
        %1660 = vset.pattern.permute.xlu0 0
        %1661 = vperm.xlu0 %1660, %v1427
        %v1662 = vpop.permute.xlu0 %1661
        %1665 = vset.pattern.permute.xlu0 0
        %1666 = vperm.xlu0 %1665, %v1428
        %v1667 = vpop.permute.xlu0 %1666
        %1670 = vset.pattern.permute.xlu0 0
        %1671 = vperm.xlu0 %1670, %v1429
        %v1672 = vpop.permute.xlu0 %1671
        %1675 = vset.pattern.permute.xlu0 0
        %1676 = vperm.xlu0 %1675, %v1430
        %v1677 = vpop.permute.xlu0 %1676
        %1680 = vset.pattern.permute.xlu0 0
        %1681 = vperm.xlu0 %1680, %v1431
        %v1682 = vpop.permute.xlu0 %1681
        %1685 = vset.pattern.permute.xlu0 0
        %1686 = vperm.xlu0 %1685, %v1432
        %v1687 = vpop.permute.xlu0 %1686
        %1690 = vset.pattern.permute.xlu0 0
        %1691 = vperm.xlu0 %1690, %v1433
        %v1692 = vpop.permute.xlu0 %1691
        %1695 = vset.pattern.permute.xlu0 0
        %1696 = vperm.xlu0 %1695, %v1434
        %v1697 = vpop.permute.xlu0 %1696
        %1700 = vset.pattern.permute.xlu0 0
        %1701 = vperm.xlu0 %1700, %v1435
        %v1702 = vpop.permute.xlu0 %1701
        %1705 = vset.pattern.permute.xlu0 0
        %1706 = vperm.xlu0 %1705, %v1436
        %v1707 = vpop.permute.xlu0 %1706
        %1710 = vset.pattern.permute.xlu0 0
        %1711 = vperm.xlu0 %1710, %v1437
        %v1712 = vpop.permute.xlu0 %1711
        %1715 = vset.pattern.permute.xlu0 0
        %1716 = vperm.xlu0 %1715, %v1438
        %v1717 = vpop.permute.xlu0 %1716
        %1720 = vset.pattern.permute.xlu0 0
        %1721 = vperm.xlu0 %1720, %v1439
        %v1722 = vpop.permute.xlu0 %1721
        %1725 = vset.pattern.permute.xlu0 0
        %1726 = vperm.xlu0 %1725, %v1440
        %v1727 = vpop.permute.xlu0 %1726
        %1730 = vset.pattern.permute.xlu0 0
        %1731 = vperm.xlu0 %1730, %v1441
        %v1732 = vpop.permute.xlu0 %1731
        %1735 = vset.pattern.permute.xlu0 0
        %1736 = vperm.xlu0 %1735, %v1442
        %v1737 = vpop.permute.xlu0 %1736
        %1740 = vset.pattern.permute.xlu0 0
        %1741 = vperm.xlu0 %1740, %v1443
        %v1742 = vpop.permute.xlu0 %1741
        %1745 = vset.pattern.permute.xlu0 0
        %1746 = vperm.xlu0 %1745, %v1444
        %v1747 = vpop.permute.xlu0 %1746
        %1750 = vset.pattern.permute.xlu0 0
        %1751 = vperm.xlu0 %1750, %v1445
        %v1752 = vpop.permute.xlu0 %1751
        %1755 = vset.pattern.permute.xlu0 0
        %1756 = vperm.xlu0 %1755, %v1446
        %v1757 = vpop.permute.xlu0 %1756
        %1760 = vset.pattern.permute.xlu0 0
        %1761 = vperm.xlu0 %1760, %v1447
        %v1762 = vpop.permute.xlu0 %1761
        %1765 = vset.pattern.permute.xlu0 0
        %1766 = vperm.xlu0 %1765, %v1448
        %v1767 = vpop.permute.xlu0 %1766
        %v1833 = vunpack.c.l.b16 %v1321
        %v1834 = vunpack.c.h.b16 %v1321
        %v1835 = vunpack.c.l.b16 %v1322
        %v1836 = vunpack.c.h.b16 %v1322
        %v1837 = vunpack.c.l.b16 %v1323
        %v1838 = vunpack.c.h.b16 %v1323
        %v1839 = vunpack.c.l.b16 %v1324
        %v1840 = vunpack.c.h.b16 %v1324
        %v1841 = vunpack.c.l.b16 %v1325
        %v1842 = vunpack.c.h.b16 %v1325
        %v1843 = vunpack.c.l.b16 %v1326
        %v1844 = vunpack.c.h.b16 %v1326
        %v1845 = vunpack.c.l.b16 %v1327
        %v1846 = vunpack.c.h.b16 %v1327
        %v1847 = vunpack.c.l.b16 %v1328
        %v1848 = vunpack.c.h.b16 %v1328
        %v1849 = vunpack.c.l.b16 %v1329
        %v1850 = vunpack.c.h.b16 %v1329
        %v1851 = vunpack.c.l.b16 %v1330
        %v1852 = vunpack.c.h.b16 %v1330
        %v1853 = vunpack.c.l.b16 %v1331
        %v1854 = vunpack.c.h.b16 %v1331
        %v1855 = vunpack.c.l.b16 %v1332
        %v1856 = vunpack.c.h.b16 %v1332
        %v1857 = vunpack.c.l.b16 %v1333
        %v1858 = vunpack.c.h.b16 %v1333
        %v1859 = vunpack.c.l.b16 %v1334
        %v1860 = vunpack.c.h.b16 %v1334
        %v1861 = vunpack.c.l.b16 %v1335
        %v1862 = vunpack.c.h.b16 %v1335
        %v1863 = vunpack.c.l.b16 %v1336
        %v1864 = vunpack.c.h.b16 %v1336
        %v1865 = vunpack.c.l.b16 %v1337
        %v1866 = vunpack.c.h.b16 %v1337
        %v1867 = vunpack.c.l.b16 %v1338
        %v1868 = vunpack.c.h.b16 %v1338
        %v1869 = vunpack.c.l.b16 %v1339
        %v1870 = vunpack.c.h.b16 %v1339
        %v1871 = vunpack.c.l.b16 %v1340
        %v1872 = vunpack.c.h.b16 %v1340
        %v1873 = vunpack.c.l.b16 %v1341
        %v1874 = vunpack.c.h.b16 %v1341
        %v1875 = vunpack.c.l.b16 %v1342
        %v1876 = vunpack.c.h.b16 %v1342
        %v1877 = vunpack.c.l.b16 %v1343
        %v1878 = vunpack.c.h.b16 %v1343
        %v1879 = vunpack.c.l.b16 %v1344
        %v1880 = vunpack.c.h.b16 %v1344
        %v1881 = vunpack.c.l.b16 %v1345
        %v1882 = vunpack.c.h.b16 %v1345
        %v1883 = vunpack.c.l.b16 %v1346
        %v1884 = vunpack.c.h.b16 %v1346
        %v1885 = vunpack.c.l.b16 %v1347
        %v1886 = vunpack.c.h.b16 %v1347
        %v1887 = vunpack.c.l.b16 %v1348
        %v1888 = vunpack.c.h.b16 %v1348
        %v1889 = vunpack.c.l.b16 %v1349
        %v1890 = vunpack.c.h.b16 %v1349
        %v1891 = vunpack.c.l.b16 %v1350
        %v1892 = vunpack.c.h.b16 %v1350
        %v1893 = vunpack.c.l.b16 %v1351
        %v1894 = vunpack.c.h.b16 %v1351
        %v1895 = vunpack.c.l.b16 %v1352
        %v1896 = vunpack.c.h.b16 %v1352
        %v1897 = vunpack.c.l.b16 %v1353
        %v1898 = vunpack.c.h.b16 %v1353
        %v1899 = vunpack.c.l.b16 %v1354
        %v1900 = vunpack.c.h.b16 %v1354
        %v1901 = vunpack.c.l.b16 %v1355
        %v1902 = vunpack.c.h.b16 %v1355
        %v1903 = vunpack.c.l.b16 %v1356
        %v1904 = vunpack.c.h.b16 %v1356
        %v1905 = vunpack.c.l.b16 %v1357
        %v1906 = vunpack.c.h.b16 %v1357
        %v1907 = vunpack.c.l.b16 %v1358
        %v1908 = vunpack.c.h.b16 %v1358
        %v1909 = vunpack.c.l.b16 %v1359
        %v1910 = vunpack.c.h.b16 %v1359
        %v1911 = vunpack.c.l.b16 %v1360
        %v1912 = vunpack.c.h.b16 %v1360
        %v1913 = vunpack.c.l.b16 %v1361
        %v1914 = vunpack.c.h.b16 %v1361
        %v1915 = vunpack.c.l.b16 %v1362
        %v1916 = vunpack.c.h.b16 %v1362
        %v1917 = vunpack.c.l.b16 %v1363
        %v1918 = vunpack.c.h.b16 %v1363
        %v1919 = vunpack.c.l.b16 %v1364
        %v1920 = vunpack.c.h.b16 %v1364
        %v1921 = vunpack.c.l.b16 %v1365
        %v1922 = vunpack.c.h.b16 %v1365
        %v1923 = vunpack.c.l.b16 %v1366
        %v1924 = vunpack.c.h.b16 %v1366
        %v1925 = vunpack.c.l.b16 %v1367
        %v1926 = vunpack.c.h.b16 %v1367
        %v1927 = vunpack.c.l.b16 %v1368
        %v1928 = vunpack.c.h.b16 %v1368
        %v1929 = vunpack.c.l.b16 %v1369
        %v1930 = vunpack.c.h.b16 %v1369
        %v1931 = vunpack.c.l.b16 %v1370
        %v1932 = vunpack.c.h.b16 %v1370
        %v1933 = vunpack.c.l.b16 %v1371
        %v1934 = vunpack.c.h.b16 %v1371
        %v1935 = vunpack.c.l.b16 %v1372
        %v1936 = vunpack.c.h.b16 %v1372
        %v1937 = vunpack.c.l.b16 %v1373
        %v1938 = vunpack.c.h.b16 %v1373
        %v1939 = vunpack.c.l.b16 %v1374
        %v1940 = vunpack.c.h.b16 %v1374
        %v1941 = vunpack.c.l.b16 %v1375
        %v1942 = vunpack.c.h.b16 %v1375
        %v1943 = vunpack.c.l.b16 %v1376
        %v1944 = vunpack.c.h.b16 %v1376
        %v1945 = vunpack.c.l.b16 %v1377
        %v1946 = vunpack.c.h.b16 %v1377
        %v1947 = vunpack.c.l.b16 %v1378
        %v1948 = vunpack.c.h.b16 %v1378
        %v1949 = vunpack.c.l.b16 %v1379
        %v1950 = vunpack.c.h.b16 %v1379
        %v1951 = vunpack.c.l.b16 %v1380
        %v1952 = vunpack.c.h.b16 %v1380
        %v1953 = vunpack.c.l.b16 %v1381
        %v1954 = vunpack.c.h.b16 %v1381
        %v1955 = vunpack.c.l.b16 %v1382
        %v1956 = vunpack.c.h.b16 %v1382
        %v1957 = vunpack.c.l.b16 %v1383
        %v1958 = vunpack.c.h.b16 %v1383
        %v1959 = vunpack.c.l.b16 %v1384
        %v1960 = vunpack.c.h.b16 %v1384
        %v1961 = vpack.c.b16 %v1835, %v1833
        %v1962 = vpack.c.b16 %v1836, %v1834
        %v1963 = vpack.c.b16 %v1839, %v1837
        %v1964 = vpack.c.b16 %v1840, %v1838
        %v1965 = vpack.c.b16 %v1843, %v1841
        %v1966 = vpack.c.b16 %v1844, %v1842
        %v1967 = vpack.c.b16 %v1847, %v1845
        %v1968 = vpack.c.b16 %v1848, %v1846
        %v1969 = vpack.c.b16 %v1851, %v1849
        %v1970 = vpack.c.b16 %v1852, %v1850
        %v1971 = vpack.c.b16 %v1855, %v1853
        %v1972 = vpack.c.b16 %v1856, %v1854
        %v1973 = vpack.c.b16 %v1859, %v1857
        %v1974 = vpack.c.b16 %v1860, %v1858
        %v1975 = vpack.c.b16 %v1863, %v1861
        %v1976 = vpack.c.b16 %v1864, %v1862
        %v1977 = vpack.c.b16 %v1867, %v1865
        %v1978 = vpack.c.b16 %v1868, %v1866
        %v1979 = vpack.c.b16 %v1871, %v1869
        %v1980 = vpack.c.b16 %v1872, %v1870
        %v1981 = vpack.c.b16 %v1875, %v1873
        %v1982 = vpack.c.b16 %v1876, %v1874
        %v1983 = vpack.c.b16 %v1879, %v1877
        %v1984 = vpack.c.b16 %v1880, %v1878
        %v1985 = vpack.c.b16 %v1883, %v1881
        %v1986 = vpack.c.b16 %v1884, %v1882
        %v1987 = vpack.c.b16 %v1887, %v1885
        %v1988 = vpack.c.b16 %v1888, %v1886
        %v1989 = vpack.c.b16 %v1891, %v1889
        %v1990 = vpack.c.b16 %v1892, %v1890
        %v1991 = vpack.c.b16 %v1895, %v1893
        %v1992 = vpack.c.b16 %v1896, %v1894
        %v1993 = vpack.c.b16 %v1899, %v1897
        %v1994 = vpack.c.b16 %v1900, %v1898
        %v1995 = vpack.c.b16 %v1903, %v1901
        %v1996 = vpack.c.b16 %v1904, %v1902
        %v1997 = vpack.c.b16 %v1907, %v1905
        %v1998 = vpack.c.b16 %v1908, %v1906
        %v1999 = vpack.c.b16 %v1911, %v1909
        %v2000 = vpack.c.b16 %v1912, %v1910
        %v2001 = vpack.c.b16 %v1915, %v1913
        %v2002 = vpack.c.b16 %v1916, %v1914
        %v2003 = vpack.c.b16 %v1919, %v1917
        %v2004 = vpack.c.b16 %v1920, %v1918
        %v2005 = vpack.c.b16 %v1923, %v1921
        %v2006 = vpack.c.b16 %v1924, %v1922
        %v2007 = vpack.c.b16 %v1927, %v1925
        %v2008 = vpack.c.b16 %v1928, %v1926
        %v2009 = vpack.c.b16 %v1931, %v1929
        %v2010 = vpack.c.b16 %v1932, %v1930
        %v2011 = vpack.c.b16 %v1935, %v1933
        %v2012 = vpack.c.b16 %v1936, %v1934
        %v2013 = vpack.c.b16 %v1939, %v1937
        %v2014 = vpack.c.b16 %v1940, %v1938
        %v2015 = vpack.c.b16 %v1943, %v1941
        %v2016 = vpack.c.b16 %v1944, %v1942
        %v2017 = vpack.c.b16 %v1947, %v1945
        %v2018 = vpack.c.b16 %v1948, %v1946
        %v2019 = vpack.c.b16 %v1951, %v1949
        %v2020 = vpack.c.b16 %v1952, %v1950
        %v2021 = vpack.c.b16 %v1955, %v1953
        %v2022 = vpack.c.b16 %v1956, %v1954
        %v2023 = vpack.c.b16 %v1959, %v1957
        %v2024 = vpack.c.b16 %v1960, %v1958
        %2089 = vmatprep.subr.bf16.mxu0 0
        %2090 = vmatpush1.bf16.msra.mxu0 %v1305
        %2091 = vmatprep.subr.bf16.mxu0 0
        %2092 = vmatpush1.bf16.msra.mxu0 %v1306
        %2093 = vmatprep.subr.bf16.mxu0 0
        %2094 = vmatpush1.bf16.msra.mxu0 %v1307
        %2095 = vmatprep.subr.bf16.mxu0 0
        %2096 = vmatpush1.bf16.msra.mxu0 %v1308
        %2097 = vmatprep.subr.bf16.mxu0 0
        %2098 = vmatpush1.bf16.msra.mxu0 %v1309
        %2099 = vmatprep.subr.bf16.mxu0 0
        %2100 = vmatpush1.bf16.msra.mxu0 %v1310
        %2101 = vmatprep.subr.bf16.mxu0 0
        %2102 = vmatpush1.bf16.msra.mxu0 %v1311
        %2103 = vmatprep.subr.bf16.mxu0 0
        %2104 = vmatpush1.bf16.msra.mxu0 %v1312
        %2105 = vmatprep.subr.bf16.mxu0 0
        %2106 = vmatpush1.bf16.msra.mxu0 %v1313
        %2107 = vmatprep.subr.bf16.mxu0 0
        %2108 = vmatpush1.bf16.msra.mxu0 %v1314
        %2109 = vmatprep.subr.bf16.mxu0 0
        %2110 = vmatpush1.bf16.msra.mxu0 %v1315
        %2111 = vmatprep.subr.bf16.mxu0 0
        %2112 = vmatpush1.bf16.msra.mxu0 %v1316
        %2113 = vmatprep.subr.bf16.mxu0 0
        %2114 = vmatpush1.bf16.msra.mxu0 %v1317
        %2115 = vmatprep.subr.bf16.mxu0 0
        %2116 = vmatpush1.bf16.msra.mxu0 %v1318
        %2117 = vmatprep.subr.bf16.mxu0 0
        %2118 = vmatpush1.bf16.msra.mxu0 %v1319
        %2119 = vmatprep.subr.bf16.mxu0 0
        %2120 = vmatpush1.bf16.msra.mxu0 %v1320
        %2121 = vmatprep.mubr.bf16.mxu0 %v1962
        %2122 = vmatmul.mubr.bf16.gmra.mrb[0].mxu0 %v1961
        %v2123 = vpop.f32.mrb[0].mxu0
        %v2124 = vadd.f32 %v1452, %v2123
        %v2125 = vpop.f32.mrb[0].mxu0
        %v2126 = vpop.f32.mrb[0].mxu0
        %v2127 = vadd.f32 %v1457, %v2126
        %v2128 = vpop.f32.mrb[0].mxu0
        %2129 = vmatprep.mubr.bf16.mxu0 %v1964
        %2130 = vmatmul.mubr.bf16.gmra.mrb[0].mxu0 %v1963
        %v2131 = vpop.f32.mrb[0].mxu0
        %v2132 = vadd.f32 %v1462, %v2131
        %v2133 = vpop.f32.mrb[0].mxu0
        %v2134 = vpop.f32.mrb[0].mxu0
        %v2135 = vadd.f32 %v1467, %v2134
        %v2136 = vpop.f32.mrb[0].mxu0
        %2137 = vmatprep.mubr.bf16.mxu0 %v1966
        %2138 = vmatmul.mubr.bf16.gmra.mrb[0].mxu0 %v1965
        %v2139 = vpop.f32.mrb[0].mxu0
        %v2140 = vadd.f32 %v1472, %v2139
        %v2141 = vpop.f32.mrb[0].mxu0
        %v2142 = vpop.f32.mrb[0].mxu0
        %v2143 = vadd.f32 %v1477, %v2142
        %v2144 = vpop.f32.mrb[0].mxu0
        %2145 = vmatprep.mubr.bf16.mxu0 %v1968
        %2146 = vmatmul.mubr.bf16.gmra.mrb[0].mxu0 %v1967
        %v2147 = vpop.f32.mrb[0].mxu0
        %v2148 = vadd.f32 %v1482, %v2147
        %v2149 = vpop.f32.mrb[0].mxu0
        %v2150 = vpop.f32.mrb[0].mxu0
        %v2151 = vadd.f32 %v1487, %v2150
        %v2152 = vpop.f32.mrb[0].mxu0
        %2153 = vmatprep.mubr.bf16.mxu0 %v1970
        %2154 = vmatmul.mubr.bf16.gmra.mrb[0].mxu0 %v1969
        %v2155 = vpop.f32.mrb[0].mxu0
        %v2156 = vadd.f32 %v1492, %v2155
        %v2157 = vpop.f32.mrb[0].mxu0
        %v2158 = vpop.f32.mrb[0].mxu0
        %v2159 = vadd.f32 %v1497, %v2158
        %v2160 = vpop.f32.mrb[0].mxu0
        %2161 = vmatprep.mubr.bf16.mxu0 %v1972
        %2162 = vmatmul.mubr.bf16.gmra.mrb[0].mxu0 %v1971
        %v2163 = vpop.f32.mrb[0].mxu0
        %v2164 = vadd.f32 %v1502, %v2163
        %v2165 = vpop.f32.mrb[0].mxu0
        %v2166 = vpop.f32.mrb[0].mxu0
        %v2167 = vadd.f32 %v1507, %v2166
        %v2168 = vpop.f32.mrb[0].mxu0
        %2169 = vmatprep.mubr.bf16.mxu0 %v1974
        %2170 = vmatmul.mubr.bf16.gmra.mrb[0].mxu0 %v1973
        %v2171 = vpop.f32.mrb[0].mxu0
        %v2172 = vadd.f32 %v1512, %v2171
        %v2173 = vpop.f32.mrb[0].mxu0
        %v2174 = vpop.f32.mrb[0].mxu0
        %v2175 = vadd.f32 %v1517, %v2174
        %v2176 = vpop.f32.mrb[0].mxu0
        %2177 = vmatprep.mubr.bf16.mxu0 %v1976
        %2178 = vmatmul.mubr.bf16.gmra.mrb[0].mxu0 %v1975
        %v2179 = vpop.f32.mrb[0].mxu0
        %v2180 = vadd.f32 %v1522, %v2179
        %v2181 = vpop.f32.mrb[0].mxu0
        %v2182 = vpop.f32.mrb[0].mxu0
        %v2183 = vadd.f32 %v1527, %v2182
        %v2184 = vpop.f32.mrb[0].mxu0
        %2185 = vmatprep.mubr.bf16.mxu0 %v1978
        %2186 = vmatmul.mubr.bf16.gmra.mrb[0].mxu0 %v1977
        %v2187 = vpop.f32.mrb[0].mxu0
        %v2188 = vadd.f32 %v1532, %v2187
        %v2189 = vpop.f32.mrb[0].mxu0
        %v2190 = vpop.f32.mrb[0].mxu0
        %v2191 = vadd.f32 %v1537, %v2190
        %v2192 = vpop.f32.mrb[0].mxu0
        %2193 = vmatprep.mubr.bf16.mxu0 %v1980
        %2194 = vmatmul.mubr.bf16.gmra.mrb[0].mxu0 %v1979
        %v2195 = vpop.f32.mrb[0].mxu0
        %v2196 = vadd.f32 %v1542, %v2195
        %v2197 = vpop.f32.mrb[0].mxu0
        %v2198 = vpop.f32.mrb[0].mxu0
        %v2199 = vadd.f32 %v1547, %v2198
        %v2200 = vpop.f32.mrb[0].mxu0
        %2201 = vmatprep.mubr.bf16.mxu0 %v1982
        %2202 = vmatmul.mubr.bf16.gmra.mrb[0].mxu0 %v1981
        %v2203 = vpop.f32.mrb[0].mxu0
        %v2204 = vadd.f32 %v1552, %v2203
        %v2205 = vpop.f32.mrb[0].mxu0
        %v2206 = vpop.f32.mrb[0].mxu0
        %v2207 = vadd.f32 %v1557, %v2206
        %v2208 = vpop.f32.mrb[0].mxu0
        %2209 = vmatprep.mubr.bf16.mxu0 %v1984
        %2210 = vmatmul.mubr.bf16.gmra.mrb[0].mxu0 %v1983
        %v2211 = vpop.f32.mrb[0].mxu0
        %v2212 = vadd.f32 %v1562, %v2211
        %v2213 = vpop.f32.mrb[0].mxu0
        %v2214 = vpop.f32.mrb[0].mxu0
        %v2215 = vadd.f32 %v1567, %v2214
        %v2216 = vpop.f32.mrb[0].mxu0
        %2217 = vmatprep.mubr.bf16.mxu0 %v1986
        %2218 = vmatmul.mubr.bf16.gmra.mrb[0].mxu0 %v1985
        %v2219 = vpop.f32.mrb[0].mxu0
        %v2220 = vadd.f32 %v1572, %v2219
        %v2221 = vpop.f32.mrb[0].mxu0
        %v2222 = vpop.f32.mrb[0].mxu0
        %v2223 = vadd.f32 %v1577, %v2222
        %v2224 = vpop.f32.mrb[0].mxu0
        %2225 = vmatprep.mubr.bf16.mxu0 %v1988
        %2226 = vmatmul.mubr.bf16.gmra.mrb[0].mxu0 %v1987
        %v2227 = vpop.f32.mrb[0].mxu0
        %v2228 = vadd.f32 %v1582, %v2227
        %v2229 = vpop.f32.mrb[0].mxu0
        %v2230 = vpop.f32.mrb[0].mxu0
        %v2231 = vadd.f32 %v1587, %v2230
        %v2232 = vpop.f32.mrb[0].mxu0
        %2233 = vmatprep.mubr.bf16.mxu0 %v1990
        %2234 = vmatmul.mubr.bf16.gmra.mrb[0].mxu0 %v1989
        %v2235 = vpop.f32.mrb[0].mxu0
        %v2236 = vadd.f32 %v1592, %v2235
        %v2237 = vpop.f32.mrb[0].mxu0
        %v2238 = vpop.f32.mrb[0].mxu0
        %v2239 = vadd.f32 %v1597, %v2238
        %v2240 = vpop.f32.mrb[0].mxu0
        %2241 = vmatprep.mubr.bf16.mxu0 %v1992
        %2242 = vmatmul.mubr.bf16.gmra.mrb[0].mxu0 %v1991
        %v2243 = vpop.f32.mrb[0].mxu0
        %v2244 = vadd.f32 %v1602, %v2243
        %v2245 = vpop.f32.mrb[0].mxu0
        %v2246 = vpop.f32.mrb[0].mxu0
        %v2247 = vadd.f32 %v1607, %v2246
        %v2248 = vpop.f32.mrb[0].mxu0
        %2249 = vmatprep.mubr.bf16.mxu0 %v1994
        %2250 = vmatmul.mubr.bf16.gmra.mrb[0].mxu0 %v1993
        %v2251 = vpop.f32.mrb[0].mxu0
        %v2252 = vadd.f32 %v1612, %v2251
        %v2253 = vpop.f32.mrb[0].mxu0
        %v2254 = vpop.f32.mrb[0].mxu0
        %v2255 = vadd.f32 %v1617, %v2254
        %v2256 = vpop.f32.mrb[0].mxu0
        %2257 = vmatprep.mubr.bf16.mxu0 %v1996
        %2258 = vmatmul.mubr.bf16.gmra.mrb[0].mxu0 %v1995
        %v2259 = vpop.f32.mrb[0].mxu0
        %v2260 = vadd.f32 %v1622, %v2259
        %v2261 = vpop.f32.mrb[0].mxu0
        %v2262 = vpop.f32.mrb[0].mxu0
        %v2263 = vadd.f32 %v1627, %v2262
        %v2264 = vpop.f32.mrb[0].mxu0
        %2265 = vmatprep.mubr.bf16.mxu0 %v1998
        %2266 = vmatmul.mubr.bf16.gmra.mrb[0].mxu0 %v1997
        %v2267 = vpop.f32.mrb[0].mxu0
        %v2268 = vadd.f32 %v1632, %v2267
        %v2269 = vpop.f32.mrb[0].mxu0
        %v2270 = vpop.f32.mrb[0].mxu0
        %v2271 = vadd.f32 %v1637, %v2270
        %v2272 = vpop.f32.mrb[0].mxu0
        %2273 = vmatprep.mubr.bf16.mxu0 %v2000
        %2274 = vmatmul.mubr.bf16.gmra.mrb[0].mxu0 %v1999
        %v2275 = vpop.f32.mrb[0].mxu0
        %v2276 = vadd.f32 %v1642, %v2275
        %v2277 = vpop.f32.mrb[0].mxu0
        %v2278 = vpop.f32.mrb[0].mxu0
        %v2279 = vadd.f32 %v1647, %v2278
        %v2280 = vpop.f32.mrb[0].mxu0
        %2281 = vmatprep.mubr.bf16.mxu0 %v2002
        %2282 = vmatmul.mubr.bf16.gmra.mrb[0].mxu0 %v2001
        %v2283 = vpop.f32.mrb[0].mxu0
        %v2284 = vadd.f32 %v1652, %v2283
        %v2285 = vpop.f32.mrb[0].mxu0
        %v2286 = vpop.f32.mrb[0].mxu0
        %v2287 = vadd.f32 %v1657, %v2286
        %v2288 = vpop.f32.mrb[0].mxu0
        %2289 = vmatprep.mubr.bf16.mxu0 %v2004
        %2290 = vmatmul.mubr.bf16.gmra.mrb[0].mxu0 %v2003
        %v2291 = vpop.f32.mrb[0].mxu0
        %v2292 = vadd.f32 %v1662, %v2291
        %v2293 = vpop.f32.mrb[0].mxu0
        %v2294 = vpop.f32.mrb[0].mxu0
        %v2295 = vadd.f32 %v1667, %v2294
        %v2296 = vpop.f32.mrb[0].mxu0
        %2297 = vmatprep.mubr.bf16.mxu0 %v2006
        %2298 = vmatmul.mubr.bf16.gmra.mrb[0].mxu0 %v2005
        %v2299 = vpop.f32.mrb[0].mxu0
        %v2300 = vadd.f32 %v1672, %v2299
        %v2301 = vpop.f32.mrb[0].mxu0
        %v2302 = vpop.f32.mrb[0].mxu0
        %v2303 = vadd.f32 %v1677, %v2302
        %v2304 = vpop.f32.mrb[0].mxu0
        %2305 = vmatprep.mubr.bf16.mxu0 %v2008
        %2306 = vmatmul.mubr.bf16.gmra.mrb[0].mxu0 %v2007
        %v2307 = vpop.f32.mrb[0].mxu0
        %v2308 = vadd.f32 %v1682, %v2307
        %v2309 = vpop.f32.mrb[0].mxu0
        %v2310 = vpop.f32.mrb[0].mxu0
        %v2311 = vadd.f32 %v1687, %v2310
        %v2312 = vpop.f32.mrb[0].mxu0
        %2313 = vmatprep.mubr.bf16.mxu0 %v2010
        %2314 = vmatmul.mubr.bf16.gmra.mrb[0].mxu0 %v2009
        %v2315 = vpop.f32.mrb[0].mxu0
        %v2316 = vadd.f32 %v1692, %v2315
        %v2317 = vpop.f32.mrb[0].mxu0
        %v2318 = vpop.f32.mrb[0].mxu0
        %v2319 = vadd.f32 %v1697, %v2318
        %v2320 = vpop.f32.mrb[0].mxu0
        %2321 = vmatprep.mubr.bf16.mxu0 %v2012
        %2322 = vmatmul.mubr.bf16.gmra.mrb[0].mxu0 %v2011
        %v2323 = vpop.f32.mrb[0].mxu0
        %v2324 = vadd.f32 %v1702, %v2323
        %v2325 = vpop.f32.mrb[0].mxu0
        %v2326 = vpop.f32.mrb[0].mxu0
        %v2327 = vadd.f32 %v1707, %v2326
        %v2328 = vpop.f32.mrb[0].mxu0
        %2329 = vmatprep.mubr.bf16.mxu0 %v2014
        %2330 = vmatmul.mubr.bf16.gmra.mrb[0].mxu0 %v2013
        %v2331 = vpop.f32.mrb[0].mxu0
        %v2332 = vadd.f32 %v1712, %v2331
        %v2333 = vpop.f32.mrb[0].mxu0
        %v2334 = vpop.f32.mrb[0].mxu0
        %v2335 = vadd.f32 %v1717, %v2334
        %v2336 = vpop.f32.mrb[0].mxu0
        %2337 = vmatprep.mubr.bf16.mxu0 %v2016
        %2338 = vmatmul.mubr.bf16.gmra.mrb[0].mxu0 %v2015
        %v2339 = vpop.f32.mrb[0].mxu0
        %v2340 = vadd.f32 %v1722, %v2339
        %v2341 = vpop.f32.mrb[0].mxu0
        %v2342 = vpop.f32.mrb[0].mxu0
        %v2343 = vadd.f32 %v1727, %v2342
        %v2344 = vpop.f32.mrb[0].mxu0
        %2345 = vmatprep.mubr.bf16.mxu0 %v2018
        %2346 = vmatmul.mubr.bf16.gmra.mrb[0].mxu0 %v2017
        %v2347 = vpop.f32.mrb[0].mxu0
        %v2348 = vadd.f32 %v1732, %v2347
        %v2349 = vpop.f32.mrb[0].mxu0
        %v2350 = vpop.f32.mrb[0].mxu0
        %v2351 = vadd.f32 %v1737, %v2350
        %v2352 = vpop.f32.mrb[0].mxu0
        %2353 = vmatprep.mubr.bf16.mxu0 %v2020
        %2354 = vmatmul.mubr.bf16.gmra.mrb[0].mxu0 %v2019
        %v2355 = vpop.f32.mrb[0].mxu0
        %v2356 = vadd.f32 %v1742, %v2355
        %v2357 = vpop.f32.mrb[0].mxu0
        %v2358 = vpop.f32.mrb[0].mxu0
        %v2359 = vadd.f32 %v1747, %v2358
        %v2360 = vpop.f32.mrb[0].mxu0
        %2361 = vmatprep.mubr.bf16.mxu0 %v2022
        %2362 = vmatmul.mubr.bf16.gmra.mrb[0].mxu0 %v2021
        %v2363 = vpop.f32.mrb[0].mxu0
        %v2364 = vadd.f32 %v1752, %v2363
        %v2365 = vpop.f32.mrb[0].mxu0
        %v2366 = vpop.f32.mrb[0].mxu0
        %v2367 = vadd.f32 %v1757, %v2366
        %v2368 = vpop.f32.mrb[0].mxu0
        %2369 = vmatprep.mubr.bf16.mxu0 %v2024
        %2370 = vmatmul.mubr.bf16.gmra.mrb[0].mxu0 %v2023
        %v2371 = vpop.f32.mrb[0].mxu0
        %v2372 = vadd.f32 %v1762, %v2371
        %v2373 = vpop.f32.mrb[0].mxu0
        %v2374 = vpop.f32.mrb[0].mxu0
        %v2375 = vadd.f32 %v1767, %v2374
        %v2376 = vpop.f32.mrb[0].mxu0
        %2377 = vdwg.mxu0
        %v2378 = vmax.f32 %v2124, 0.0
        %v2379 = vmax.f32 %v2127, 0.0
        %v2380 = vmax.f32 %v2132, 0.0
        %v2381 = vmax.f32 %v2135, 0.0
        %v2382 = vmax.f32 %v2140, 0.0
        %v2383 = vmax.f32 %v2143, 0.0
        %v2384 = vmax.f32 %v2148, 0.0
        %v2385 = vmax.f32 %v2151, 0.0
        %v2386 = vmax.f32 %v2156, 0.0
        %v2387 = vmax.f32 %v2159, 0.0
        %v2388 = vmax.f32 %v2164, 0.0
        %v2389 = vmax.f32 %v2167, 0.0
        %v2390 = vmax.f32 %v2172, 0.0
        %v2391 = vmax.f32 %v2175, 0.0
        %v2392 = vmax.f32 %v2180, 0.0
        %v2393 = vmax.f32 %v2183, 0.0
        %v2394 = vmax.f32 %v2188, 0.0
        %v2395 = vmax.f32 %v2191, 0.0
        %v2396 = vmax.f32 %v2196, 0.0
        %v2397 = vmax.f32 %v2199, 0.0
        %v2398 = vmax.f32 %v2204, 0.0
        %v2399 = vmax.f32 %v2207, 0.0
        %v2400 = vmax.f32 %v2212, 0.0
        %v2401 = vmax.f32 %v2215, 0.0
        %v2402 = vmax.f32 %v2220, 0.0
        %v2403 = vmax.f32 %v2223, 0.0
        %v2404 = vmax.f32 %v2228, 0.0
        %v2405 = vmax.f32 %v2231, 0.0
        %v2406 = vmax.f32 %v2236, 0.0
        %v2407 = vmax.f32 %v2239, 0.0
        %v2408 = vmax.f32 %v2244, 0.0
        %v2409 = vmax.f32 %v2247, 0.0
        %v2410 = vmax.f32 %v2252, 0.0
        %v2411 = vmax.f32 %v2255, 0.0
        %v2412 = vmax.f32 %v2260, 0.0
        %v2413 = vmax.f32 %v2263, 0.0
        %v2414 = vmax.f32 %v2268, 0.0
        %v2415 = vmax.f32 %v2271, 0.0
        %v2416 = vmax.f32 %v2276, 0.0
        %v2417 = vmax.f32 %v2279, 0.0
        %v2418 = vmax.f32 %v2284, 0.0
        %v2419 = vmax.f32 %v2287, 0.0
        %v2420 = vmax.f32 %v2292, 0.0
        %v2421 = vmax.f32 %v2295, 0.0
        %v2422 = vmax.f32 %v2300, 0.0
        %v2423 = vmax.f32 %v2303, 0.0
        %v2424 = vmax.f32 %v2308, 0.0
        %v2425 = vmax.f32 %v2311, 0.0
        %v2426 = vmax.f32 %v2316, 0.0
        %v2427 = vmax.f32 %v2319, 0.0
        %v2428 = vmax.f32 %v2324, 0.0
        %v2429 = vmax.f32 %v2327, 0.0
        %v2430 = vmax.f32 %v2332, 0.0
        %v2431 = vmax.f32 %v2335, 0.0
        %v2432 = vmax.f32 %v2340, 0.0
        %v2433 = vmax.f32 %v2343, 0.0
        %v2434 = vmax.f32 %v2348, 0.0
        %v2435 = vmax.f32 %v2351, 0.0
        %v2436 = vmax.f32 %v2356, 0.0
        %v2437 = vmax.f32 %v2359, 0.0
        %v2438 = vmax.f32 %v2364, 0.0
        %v2439 = vmax.f32 %v2367, 0.0
        %v2440 = vmax.f32 %v2372, 0.0
        %v2441 = vmax.f32 %v2375, 0.0
        %v2442 = vpack.c.bf16 %v2379, %v2378
        %v2443 = vpack.c.bf16 %v2381, %v2380
        %v2444 = vpack.c.bf16 %v2383, %v2382
        %v2445 = vpack.c.bf16 %v2385, %v2384
        %v2446 = vpack.c.bf16 %v2387, %v2386
        %v2447 = vpack.c.bf16 %v2389, %v2388
        %v2448 = vpack.c.bf16 %v2391, %v2390
        %v2449 = vpack.c.bf16 %v2393, %v2392
        %v2450 = vpack.c.bf16 %v2395, %v2394
        %v2451 = vpack.c.bf16 %v2397, %v2396
        %v2452 = vpack.c.bf16 %v2399, %v2398
        %v2453 = vpack.c.bf16 %v2401, %v2400
        %v2454 = vpack.c.bf16 %v2403, %v2402
        %v2455 = vpack.c.bf16 %v2405, %v2404
        %v2456 = vpack.c.bf16 %v2407, %v2406
        %v2457 = vpack.c.bf16 %v2409, %v2408
        %v2458 = vpack.c.bf16 %v2411, %v2410
        %v2459 = vpack.c.bf16 %v2413, %v2412
        %v2460 = vpack.c.bf16 %v2415, %v2414
        %v2461 = vpack.c.bf16 %v2417, %v2416
        %v2462 = vpack.c.bf16 %v2419, %v2418
        %v2463 = vpack.c.bf16 %v2421, %v2420
        %v2464 = vpack.c.bf16 %v2423, %v2422
        %v2465 = vpack.c.bf16 %v2425, %v2424
        %v2466 = vpack.c.bf16 %v2427, %v2426
        %v2467 = vpack.c.bf16 %v2429, %v2428
        %v2468 = vpack.c.bf16 %v2431, %v2430
        %v2469 = vpack.c.bf16 %v2433, %v2432
        %v2470 = vpack.c.bf16 %v2435, %v2434
        %v2471 = vpack.c.bf16 %v2437, %v2436
        %v2472 = vpack.c.bf16 %v2439, %v2438
        %v2473 = vpack.c.bf16 %v2441, %v2440
        %v2474 = vld [vmem:[%s7] sm:$0xff]
        %v2475 = vld [vmem:[%s7 + $0x8] sm:$0xff]
        %v2476 = vld [vmem:[%s7 + $0x10] sm:$0xff]
        %v2477 = vld [vmem:[%s7 + $0x18] sm:$0xff]
        %v2478 = vld [vmem:[%s7 + $0x20] sm:$0xff]
        %v2479 = vld [vmem:[%s7 + $0x28] sm:$0xff]
        %v2480 = vld [vmem:[%s7 + $0x30] sm:$0xff]
        %v2481 = vld [vmem:[%s7 + $0x38] sm:$0xff]
        %v2482 = vld [vmem:[%s7 + $0x40] sm:$0xff]
        %v2483 = vld [vmem:[%s7 + $0x48] sm:$0xff]
        %v2484 = vld [vmem:[%s7 + $0x50] sm:$0xff]
        %v2485 = vld [vmem:[%s7 + $0x58] sm:$0xff]
        %v2486 = vld [vmem:[%s7 + $0x60] sm:$0xff]
        %v2487 = vld [vmem:[%s7 + $0x68] sm:$0xff]
        %v2488 = vld [vmem:[%s7 + $0x70] sm:$0xff]
        %v2489 = vld [vmem:[%s7 + $0x78] sm:$0xff]
        %v2490 = vld [vmem:[%s7 + $0x80] sm:$0xff]
        %v2491 = vld [vmem:[%s7 + $0x88] sm:$0xff]
        %v2492 = vld [vmem:[%s7 + $0x90] sm:$0xff]
        %v2493 = vld [vmem:[%s7 + $0x98] sm:$0xff]
        %v2494 = vld [vmem:[%s7 + $0xa0] sm:$0xff]
        %v2495 = vld [vmem:[%s7 + $0xa8] sm:$0xff]
        %v2496 = vld [vmem:[%s7 + $0xb0] sm:$0xff]
        %v2497 = vld [vmem:[%s7 + $0xb8] sm:$0xff]
        %v2498 = vld [vmem:[%s7 + $0xc0] sm:$0xff]
        %v2499 = vld [vmem:[%s7 + $0xc8] sm:$0xff]
        %v2500 = vld [vmem:[%s7 + $0xd0] sm:$0xff]
        %v2501 = vld [vmem:[%s7 + $0xd8] sm:$0xff]
        %v2502 = vld [vmem:[%s7 + $0xe0] sm:$0xff]
        %v2503 = vld [vmem:[%s7 + $0xe8] sm:$0xff]
        %v2504 = vld [vmem:[%s7 + $0xf0] sm:$0xff]
        %v2505 = vld [vmem:[%s7 + $0xf8] sm:$0xff]
        %v2506 = vld [vmem:[%s7 + $0x100] sm:$0xff]
        %v2507 = vld [vmem:[%s7 + $0x108] sm:$0xff]
        %v2508 = vld [vmem:[%s7 + $0x110] sm:$0xff]
        %v2509 = vld [vmem:[%s7 + $0x118] sm:$0xff]
        %v2510 = vld [vmem:[%s7 + $0x120] sm:$0xff]
        %v2511 = vld [vmem:[%s7 + $0x128] sm:$0xff]
        %v2512 = vld [vmem:[%s7 + $0x130] sm:$0xff]
        %v2513 = vld [vmem:[%s7 + $0x138] sm:$0xff]
        %v2514 = vld [vmem:[%s7 + $0x140] sm:$0xff]
        %v2515 = vld [vmem:[%s7 + $0x148] sm:$0xff]
        %v2516 = vld [vmem:[%s7 + $0x150] sm:$0xff]
        %v2517 = vld [vmem:[%s7 + $0x158] sm:$0xff]
        %v2518 = vld [vmem:[%s7 + $0x160] sm:$0xff]
        %v2519 = vld [vmem:[%s7 + $0x168] sm:$0xff]
        %v2520 = vld [vmem:[%s7 + $0x170] sm:$0xff]
        %v2521 = vld [vmem:[%s7 + $0x178] sm:$0xff]
        %v2522 = vld [vmem:[%s7 + $0x180] sm:$0xff]
        %v2523 = vld [vmem:[%s7 + $0x188] sm:$0xff]
        %v2524 = vld [vmem:[%s7 + $0x190] sm:$0xff]
        %v2525 = vld [vmem:[%s7 + $0x198] sm:$0xff]
        %v2526 = vld [vmem:[%s7 + $0x1a0] sm:$0xff]
        %v2527 = vld [vmem:[%s7 + $0x1a8] sm:$0xff]
        %v2528 = vld [vmem:[%s7 + $0x1b0] sm:$0xff]
        %v2529 = vld [vmem:[%s7 + $0x1b8] sm:$0xff]
        %v2530 = vld [vmem:[%s7 + $0x1c0] sm:$0xff]
        %v2531 = vld [vmem:[%s7 + $0x1c8] sm:$0xff]
        %v2532 = vld [vmem:[%s7 + $0x1d0] sm:$0xff]
        %v2533 = vld [vmem:[%s7 + $0x1d8] sm:$0xff]
        %v2534 = vld [vmem:[%s7 + $0x1e0] sm:$0xff]
        %v2535 = vld [vmem:[%s7 + $0x1e8] sm:$0xff]
        %v2536 = vld [vmem:[%s7 + $0x1f0] sm:$0xff]
        %v2537 = vld [vmem:[%s7 + $0x1f8] sm:$0xff]
        %v2538 = vld [vmem:[%s7 + $0x200] sm:$0xff]
        %v2539 = vld [vmem:[%s7 + $0x208] sm:$0xff]
        %v2540 = vld [vmem:[%s7 + $0x210] sm:$0xff]
        %v2541 = vld [vmem:[%s7 + $0x218] sm:$0xff]
        %v2542 = vld [vmem:[%s7 + $0x220] sm:$0xff]
        %v2543 = vld [vmem:[%s7 + $0x228] sm:$0xff]
        %v2544 = vld [vmem:[%s7 + $0x230] sm:$0xff]
        %v2545 = vld [vmem:[%s7 + $0x238] sm:$0xff]
        %v2546 = vld [vmem:[%s7 + $0x240] sm:$0xff]
        %v2547 = vld [vmem:[%s7 + $0x248] sm:$0xff]
        %v2548 = vld [vmem:[%s7 + $0x250] sm:$0xff]
        %v2549 = vld [vmem:[%s7 + $0x258] sm:$0xff]
        %v2550 = vld [vmem:[%s7 + $0x260] sm:$0xff]
        %v2551 = vld [vmem:[%s7 + $0x268] sm:$0xff]
        %v2552 = vld [vmem:[%s7 + $0x270] sm:$0xff]
        %v2553 = vld [vmem:[%s7 + $0x278] sm:$0xff]
        %v2554 = vld [vmem:[%s7 + $0x280] sm:$0xff]
        %v2555 = vld [vmem:[%s7 + $0x288] sm:$0xff]
        %v2556 = vld [vmem:[%s7 + $0x290] sm:$0xff]
        %v2557 = vld [vmem:[%s7 + $0x298] sm:$0xff]
        %v2558 = vld [vmem:[%s7 + $0x2a0] sm:$0xff]
        %v2559 = vld [vmem:[%s7 + $0x2a8] sm:$0xff]
        %v2560 = vld [vmem:[%s7 + $0x2b0] sm:$0xff]
        %v2561 = vld [vmem:[%s7 + $0x2b8] sm:$0xff]
        %v2562 = vld [vmem:[%s7 + $0x2c0] sm:$0xff]
        %v2563 = vld [vmem:[%s7 + $0x2c8] sm:$0xff]
        %v2564 = vld [vmem:[%s7 + $0x2d0] sm:$0xff]
        %v2565 = vld [vmem:[%s7 + $0x2d8] sm:$0xff]
        %v2566 = vld [vmem:[%s7 + $0x2e0] sm:$0xff]
        %v2567 = vld [vmem:[%s7 + $0x2e8] sm:$0xff]
        %v2568 = vld [vmem:[%s7 + $0x2f0] sm:$0xff]
        %v2569 = vld [vmem:[%s7 + $0x2f8] sm:$0xff]
        %v2570 = vld [vmem:[%s7 + $0x300] sm:$0xff]
        %v2571 = vld [vmem:[%s7 + $0x308] sm:$0xff]
        %v2572 = vld [vmem:[%s7 + $0x310] sm:$0xff]
        %v2573 = vld [vmem:[%s7 + $0x318] sm:$0xff]
        %v2574 = vld [vmem:[%s7 + $0x320] sm:$0xff]
        %v2575 = vld [vmem:[%s7 + $0x328] sm:$0xff]
        %v2576 = vld [vmem:[%s7 + $0x330] sm:$0xff]
        %v2577 = vld [vmem:[%s7 + $0x338] sm:$0xff]
        %v2578 = vld [vmem:[%s7 + $0x340] sm:$0xff]
        %v2579 = vld [vmem:[%s7 + $0x348] sm:$0xff]
        %v2580 = vld [vmem:[%s7 + $0x350] sm:$0xff]
        %v2581 = vld [vmem:[%s7 + $0x358] sm:$0xff]
        %v2582 = vld [vmem:[%s7 + $0x360] sm:$0xff]
        %v2583 = vld [vmem:[%s7 + $0x368] sm:$0xff]
        %v2584 = vld [vmem:[%s7 + $0x370] sm:$0xff]
        %v2585 = vld [vmem:[%s7 + $0x378] sm:$0xff]
        %v2586 = vld [vmem:[%s7 + $0x380] sm:$0xff]
        %v2587 = vld [vmem:[%s7 + $0x388] sm:$0xff]
        %v2588 = vld [vmem:[%s7 + $0x390] sm:$0xff]
        %v2589 = vld [vmem:[%s7 + $0x398] sm:$0xff]
        %v2590 = vld [vmem:[%s7 + $0x3a0] sm:$0xff]
        %v2591 = vld [vmem:[%s7 + $0x3a8] sm:$0xff]
        %v2592 = vld [vmem:[%s7 + $0x3b0] sm:$0xff]
        %v2593 = vld [vmem:[%s7 + $0x3b8] sm:$0xff]
        %v2594 = vld [vmem:[%s7 + $0x3c0] sm:$0xff]
        %v2595 = vld [vmem:[%s7 + $0x3c8] sm:$0xff]
        %v2596 = vld [vmem:[%s7 + $0x3d0] sm:$0xff]
        %v2597 = vld [vmem:[%s7 + $0x3d8] sm:$0xff]
        %v2598 = vld [vmem:[%s7 + $0x3e0] sm:$0xff]
        %v2599 = vld [vmem:[%s7 + $0x3e8] sm:$0xff]
        %v2600 = vld [vmem:[%s7 + $0x3f0] sm:$0xff]
        %v2601 = vld [vmem:[%s7 + $0x3f8] sm:$0xff]
        %v2602 = vld [vmem:[%s7 + $0x400] sm:$0xff]
        %v2603 = vld [vmem:[%s7 + $0x408] sm:$0xff]
        %v2604 = vld [vmem:[%s7 + $0x410] sm:$0xff]
        %v2605 = vld [vmem:[%s7 + $0x418] sm:$0xff]
        %v2606 = vld [vmem:[%s7 + $0x420] sm:$0xff]
        %v2607 = vld [vmem:[%s7 + $0x428] sm:$0xff]
        %v2608 = vld [vmem:[%s7 + $0x430] sm:$0xff]
        %v2609 = vld [vmem:[%s7 + $0x438] sm:$0xff]
        %v2610 = vld [vmem:[%s7 + $0x440] sm:$0xff]
        %v2611 = vld [vmem:[%s7 + $0x448] sm:$0xff]
        %v2612 = vld [vmem:[%s7 + $0x450] sm:$0xff]
        %v2613 = vld [vmem:[%s7 + $0x458] sm:$0xff]
        %v2614 = vld [vmem:[%s7 + $0x460] sm:$0xff]
        %v2615 = vld [vmem:[%s7 + $0x468] sm:$0xff]
        %v2616 = vld [vmem:[%s7 + $0x470] sm:$0xff]
        %v2617 = vld [vmem:[%s7 + $0x478] sm:$0xff]
        %v2618 = vld [vmem:[%s7 + $0x480] sm:$0xff]
        %v2619 = vld [vmem:[%s7 + $0x488] sm:$0xff]
        %v2620 = vld [vmem:[%s7 + $0x490] sm:$0xff]
        %v2621 = vld [vmem:[%s7 + $0x498] sm:$0xff]
        %v2622 = vld [vmem:[%s7 + $0x4a0] sm:$0xff]
        %v2623 = vld [vmem:[%s7 + $0x4a8] sm:$0xff]
        %v2624 = vld [vmem:[%s7 + $0x4b0] sm:$0xff]
        %v2625 = vld [vmem:[%s7 + $0x4b8] sm:$0xff]
        %v2626 = vld [vmem:[%s7 + $0x4c0] sm:$0xff]
        %v2627 = vld [vmem:[%s7 + $0x4c8] sm:$0xff]
        %v2628 = vld [vmem:[%s7 + $0x4d0] sm:$0xff]
        %v2629 = vld [vmem:[%s7 + $0x4d8] sm:$0xff]
        %v2630 = vld [vmem:[%s7 + $0x4e0] sm:$0xff]
        %v2631 = vld [vmem:[%s7 + $0x4e8] sm:$0xff]
        %v2632 = vld [vmem:[%s7 + $0x4f0] sm:$0xff]
        %v2633 = vld [vmem:[%s7 + $0x4f8] sm:$0xff]
        %v2634 = vld [vmem:[%s7 + $0x500] sm:$0xff]
        %v2635 = vld [vmem:[%s7 + $0x508] sm:$0xff]
        %v2636 = vld [vmem:[%s7 + $0x510] sm:$0xff]
        %v2637 = vld [vmem:[%s7 + $0x518] sm:$0xff]
        %v2638 = vld [vmem:[%s7 + $0x520] sm:$0xff]
        %v2639 = vld [vmem:[%s7 + $0x528] sm:$0xff]
        %v2640 = vld [vmem:[%s7 + $0x530] sm:$0xff]
        %v2641 = vld [vmem:[%s7 + $0x538] sm:$0xff]
        %v2642 = vld [vmem:[%s7 + $0x540] sm:$0xff]
        %v2643 = vld [vmem:[%s7 + $0x548] sm:$0xff]
        %v2644 = vld [vmem:[%s7 + $0x550] sm:$0xff]
        %v2645 = vld [vmem:[%s7 + $0x558] sm:$0xff]
        %v2646 = vld [vmem:[%s7 + $0x560] sm:$0xff]
        %v2647 = vld [vmem:[%s7 + $0x568] sm:$0xff]
        %v2648 = vld [vmem:[%s7 + $0x570] sm:$0xff]
        %v2649 = vld [vmem:[%s7 + $0x578] sm:$0xff]
        %v2650 = vld [vmem:[%s7 + $0x580] sm:$0xff]
        %v2651 = vld [vmem:[%s7 + $0x588] sm:$0xff]
        %v2652 = vld [vmem:[%s7 + $0x590] sm:$0xff]
        %v2653 = vld [vmem:[%s7 + $0x598] sm:$0xff]
        %v2654 = vld [vmem:[%s7 + $0x5a0] sm:$0xff]
        %v2655 = vld [vmem:[%s7 + $0x5a8] sm:$0xff]
        %v2656 = vld [vmem:[%s7 + $0x5b0] sm:$0xff]
        %v2657 = vld [vmem:[%s7 + $0x5b8] sm:$0xff]
        %v2658 = vld [vmem:[%s7 + $0x5c0] sm:$0xff]
        %v2659 = vld [vmem:[%s7 + $0x5c8] sm:$0xff]
        %v2660 = vld [vmem:[%s7 + $0x5d0] sm:$0xff]
        %v2661 = vld [vmem:[%s7 + $0x5d8] sm:$0xff]
        %v2662 = vld [vmem:[%s7 + $0x5e0] sm:$0xff]
        %v2663 = vld [vmem:[%s7 + $0x5e8] sm:$0xff]
        %v2664 = vld [vmem:[%s7 + $0x5f0] sm:$0xff]
        %v2665 = vld [vmem:[%s7 + $0x5f8] sm:$0xff]
        %v2666 = vld [vmem:[%s7 + $0x600] sm:$0xff]
        %v2667 = vld [vmem:[%s7 + $0x608] sm:$0xff]
        %v2668 = vld [vmem:[%s7 + $0x610] sm:$0xff]
        %v2669 = vld [vmem:[%s7 + $0x618] sm:$0xff]
        %v2670 = vld [vmem:[%s7 + $0x620] sm:$0xff]
        %v2671 = vld [vmem:[%s7 + $0x628] sm:$0xff]
        %v2672 = vld [vmem:[%s7 + $0x630] sm:$0xff]
        %v2673 = vld [vmem:[%s7 + $0x638] sm:$0xff]
        %v2674 = vld [vmem:[%s7 + $0x640] sm:$0xff]
        %v2675 = vld [vmem:[%s7 + $0x648] sm:$0xff]
        %v2676 = vld [vmem:[%s7 + $0x650] sm:$0xff]
        %v2677 = vld [vmem:[%s7 + $0x658] sm:$0xff]
        %v2678 = vld [vmem:[%s7 + $0x660] sm:$0xff]
        %v2679 = vld [vmem:[%s7 + $0x668] sm:$0xff]
        %v2680 = vld [vmem:[%s7 + $0x670] sm:$0xff]
        %v2681 = vld [vmem:[%s7 + $0x678] sm:$0xff]
        %v2682 = vld [vmem:[%s7 + $0x680] sm:$0xff]
        %v2683 = vld [vmem:[%s7 + $0x688] sm:$0xff]
        %v2684 = vld [vmem:[%s7 + $0x690] sm:$0xff]
        %v2685 = vld [vmem:[%s7 + $0x698] sm:$0xff]
        %v2686 = vld [vmem:[%s7 + $0x6a0] sm:$0xff]
        %v2687 = vld [vmem:[%s7 + $0x6a8] sm:$0xff]
        %v2688 = vld [vmem:[%s7 + $0x6b0] sm:$0xff]
        %v2689 = vld [vmem:[%s7 + $0x6b8] sm:$0xff]
        %v2690 = vld [vmem:[%s7 + $0x6c0] sm:$0xff]
        %v2691 = vld [vmem:[%s7 + $0x6c8] sm:$0xff]
        %v2692 = vld [vmem:[%s7 + $0x6d0] sm:$0xff]
        %v2693 = vld [vmem:[%s7 + $0x6d8] sm:$0xff]
        %v2694 = vld [vmem:[%s7 + $0x6e0] sm:$0xff]
        %v2695 = vld [vmem:[%s7 + $0x6e8] sm:$0xff]
        %v2696 = vld [vmem:[%s7 + $0x6f0] sm:$0xff]
        %v2697 = vld [vmem:[%s7 + $0x6f8] sm:$0xff]
        %v2698 = vld [vmem:[%s7 + $0x700] sm:$0xff]
        %v2699 = vld [vmem:[%s7 + $0x708] sm:$0xff]
        %v2700 = vld [vmem:[%s7 + $0x710] sm:$0xff]
        %v2701 = vld [vmem:[%s7 + $0x718] sm:$0xff]
        %v2702 = vld [vmem:[%s7 + $0x720] sm:$0xff]
        %v2703 = vld [vmem:[%s7 + $0x728] sm:$0xff]
        %v2704 = vld [vmem:[%s7 + $0x730] sm:$0xff]
        %v2705 = vld [vmem:[%s7 + $0x738] sm:$0xff]
        %v2706 = vld [vmem:[%s7 + $0x740] sm:$0xff]
        %v2707 = vld [vmem:[%s7 + $0x748] sm:$0xff]
        %v2708 = vld [vmem:[%s7 + $0x750] sm:$0xff]
        %v2709 = vld [vmem:[%s7 + $0x758] sm:$0xff]
        %v2710 = vld [vmem:[%s7 + $0x760] sm:$0xff]
        %v2711 = vld [vmem:[%s7 + $0x768] sm:$0xff]
        %v2712 = vld [vmem:[%s7 + $0x770] sm:$0xff]
        %v2713 = vld [vmem:[%s7 + $0x778] sm:$0xff]
        %v2714 = vld [vmem:[%s7 + $0x780] sm:$0xff]
        %v2715 = vld [vmem:[%s7 + $0x788] sm:$0xff]
        %v2716 = vld [vmem:[%s7 + $0x790] sm:$0xff]
        %v2717 = vld [vmem:[%s7 + $0x798] sm:$0xff]
        %v2718 = vld [vmem:[%s7 + $0x7a0] sm:$0xff]
        %v2719 = vld [vmem:[%s7 + $0x7a8] sm:$0xff]
        %v2720 = vld [vmem:[%s7 + $0x7b0] sm:$0xff]
        %v2721 = vld [vmem:[%s7 + $0x7b8] sm:$0xff]
        %v2722 = vld [vmem:[%s7 + $0x7c0] sm:$0xff]
        %v2723 = vld [vmem:[%s7 + $0x7c8] sm:$0xff]
        %v2724 = vld [vmem:[%s7 + $0x7d0] sm:$0xff]
        %v2725 = vld [vmem:[%s7 + $0x7d8] sm:$0xff]
        %v2726 = vld [vmem:[%s7 + $0x7e0] sm:$0xff]
        %v2727 = vld [vmem:[%s7 + $0x7e8] sm:$0xff]
        %v2728 = vld [vmem:[%s7 + $0x7f0] sm:$0xff]
        %v2729 = vld [vmem:[%s7 + $0x7f8] sm:$0xff]
        %v2730 = vld [vmem:[%s8] sm:$0xff]
        %v2731 = vld [vmem:[%s8 + $0x8] sm:$0xff]
        %v2732 = vld [vmem:[%s8 + $0x10] sm:$0xff]
        %v2733 = vld [vmem:[%s8 + $0x18] sm:$0xff]
        %v2734 = vld [vmem:[%s8 + $0x20] sm:$0xff]
        %v2735 = vld [vmem:[%s8 + $0x28] sm:$0xff]
        %v2736 = vld [vmem:[%s8 + $0x30] sm:$0xff]
        %v2737 = vld [vmem:[%s8 + $0x38] sm:$0xff]
        %v2738 = vld [vmem:[%s8 + $0x40] sm:$0xff]
        %v2739 = vld [vmem:[%s8 + $0x48] sm:$0xff]
        %v2740 = vld [vmem:[%s8 + $0x50] sm:$0xff]
        %v2741 = vld [vmem:[%s8 + $0x58] sm:$0xff]
        %v2742 = vld [vmem:[%s8 + $0x60] sm:$0xff]
        %v2743 = vld [vmem:[%s8 + $0x68] sm:$0xff]
        %v2744 = vld [vmem:[%s8 + $0x70] sm:$0xff]
        %v2745 = vld [vmem:[%s8 + $0x78] sm:$0xff]
        %v2746 = vld [vmem:[%s8 + $0x80] sm:$0xff]
        %v2747 = vld [vmem:[%s8 + $0x88] sm:$0xff]
        %v2748 = vld [vmem:[%s8 + $0x90] sm:$0xff]
        %v2749 = vld [vmem:[%s8 + $0x98] sm:$0xff]
        %v2750 = vld [vmem:[%s8 + $0xa0] sm:$0xff]
        %v2751 = vld [vmem:[%s8 + $0xa8] sm:$0xff]
        %v2752 = vld [vmem:[%s8 + $0xb0] sm:$0xff]
        %v2753 = vld [vmem:[%s8 + $0xb8] sm:$0xff]
        %v2754 = vld [vmem:[%s8 + $0xc0] sm:$0xff]
        %v2755 = vld [vmem:[%s8 + $0xc8] sm:$0xff]
        %v2756 = vld [vmem:[%s8 + $0xd0] sm:$0xff]
        %v2757 = vld [vmem:[%s8 + $0xd8] sm:$0xff]
        %v2758 = vld [vmem:[%s8 + $0xe0] sm:$0xff]
        %v2759 = vld [vmem:[%s8 + $0xe8] sm:$0xff]
        %v2760 = vld [vmem:[%s8 + $0xf0] sm:$0xff]
        %v2761 = vld [vmem:[%s8 + $0xf8] sm:$0xff]
        %v2762 = vld [vmem:[%s8 + $0x100] sm:$0xff]
        %v2763 = vld [vmem:[%s8 + $0x108] sm:$0xff]
        %v2764 = vld [vmem:[%s8 + $0x110] sm:$0xff]
        %v2765 = vld [vmem:[%s8 + $0x118] sm:$0xff]
        %v2766 = vld [vmem:[%s8 + $0x120] sm:$0xff]
        %v2767 = vld [vmem:[%s8 + $0x128] sm:$0xff]
        %v2768 = vld [vmem:[%s8 + $0x130] sm:$0xff]
        %v2769 = vld [vmem:[%s8 + $0x138] sm:$0xff]
        %v2770 = vld [vmem:[%s8 + $0x140] sm:$0xff]
        %v2771 = vld [vmem:[%s8 + $0x148] sm:$0xff]
        %v2772 = vld [vmem:[%s8 + $0x150] sm:$0xff]
        %v2773 = vld [vmem:[%s8 + $0x158] sm:$0xff]
        %v2774 = vld [vmem:[%s8 + $0x160] sm:$0xff]
        %v2775 = vld [vmem:[%s8 + $0x168] sm:$0xff]
        %v2776 = vld [vmem:[%s8 + $0x170] sm:$0xff]
        %v2777 = vld [vmem:[%s8 + $0x178] sm:$0xff]
        %v2778 = vld [vmem:[%s8 + $0x180] sm:$0xff]
        %v2779 = vld [vmem:[%s8 + $0x188] sm:$0xff]
        %v2780 = vld [vmem:[%s8 + $0x190] sm:$0xff]
        %v2781 = vld [vmem:[%s8 + $0x198] sm:$0xff]
        %v2782 = vld [vmem:[%s8 + $0x1a0] sm:$0xff]
        %v2783 = vld [vmem:[%s8 + $0x1a8] sm:$0xff]
        %v2784 = vld [vmem:[%s8 + $0x1b0] sm:$0xff]
        %v2785 = vld [vmem:[%s8 + $0x1b8] sm:$0xff]
        %v2786 = vld [vmem:[%s8 + $0x1c0] sm:$0xff]
        %v2787 = vld [vmem:[%s8 + $0x1c8] sm:$0xff]
        %v2788 = vld [vmem:[%s8 + $0x1d0] sm:$0xff]
        %v2789 = vld [vmem:[%s8 + $0x1d8] sm:$0xff]
        %v2790 = vld [vmem:[%s8 + $0x1e0] sm:$0xff]
        %v2791 = vld [vmem:[%s8 + $0x1e8] sm:$0xff]
        %v2792 = vld [vmem:[%s8 + $0x1f0] sm:$0xff]
        %v2793 = vld [vmem:[%s8 + $0x1f8] sm:$0xff]
        %v2794 = vld [vmem:[%s8 + $0x200] sm:$0xff]
        %v2795 = vld [vmem:[%s8 + $0x208] sm:$0xff]
        %v2796 = vld [vmem:[%s8 + $0x210] sm:$0xff]
        %v2797 = vld [vmem:[%s8 + $0x218] sm:$0xff]
        %v2798 = vld [vmem:[%s8 + $0x220] sm:$0xff]
        %v2799 = vld [vmem:[%s8 + $0x228] sm:$0xff]
        %v2800 = vld [vmem:[%s8 + $0x230] sm:$0xff]
        %v2801 = vld [vmem:[%s8 + $0x238] sm:$0xff]
        %v2802 = vld [vmem:[%s8 + $0x240] sm:$0xff]
        %v2803 = vld [vmem:[%s8 + $0x248] sm:$0xff]
        %v2804 = vld [vmem:[%s8 + $0x250] sm:$0xff]
        %v2805 = vld [vmem:[%s8 + $0x258] sm:$0xff]
        %v2806 = vld [vmem:[%s8 + $0x260] sm:$0xff]
        %v2807 = vld [vmem:[%s8 + $0x268] sm:$0xff]
        %v2808 = vld [vmem:[%s8 + $0x270] sm:$0xff]
        %v2809 = vld [vmem:[%s8 + $0x278] sm:$0xff]
        %v2810 = vld [vmem:[%s8 + $0x280] sm:$0xff]
        %v2811 = vld [vmem:[%s8 + $0x288] sm:$0xff]
        %v2812 = vld [vmem:[%s8 + $0x290] sm:$0xff]
        %v2813 = vld [vmem:[%s8 + $0x298] sm:$0xff]
        %v2814 = vld [vmem:[%s8 + $0x2a0] sm:$0xff]
        %v2815 = vld [vmem:[%s8 + $0x2a8] sm:$0xff]
        %v2816 = vld [vmem:[%s8 + $0x2b0] sm:$0xff]
        %v2817 = vld [vmem:[%s8 + $0x2b8] sm:$0xff]
        %v2818 = vld [vmem:[%s8 + $0x2c0] sm:$0xff]
        %v2819 = vld [vmem:[%s8 + $0x2c8] sm:$0xff]
        %v2820 = vld [vmem:[%s8 + $0x2d0] sm:$0xff]
        %v2821 = vld [vmem:[%s8 + $0x2d8] sm:$0xff]
        %v2822 = vld [vmem:[%s8 + $0x2e0] sm:$0xff]
        %v2823 = vld [vmem:[%s8 + $0x2e8] sm:$0xff]
        %v2824 = vld [vmem:[%s8 + $0x2f0] sm:$0xff]
        %v2825 = vld [vmem:[%s8 + $0x2f8] sm:$0xff]
        %v2826 = vld [vmem:[%s8 + $0x300] sm:$0xff]
        %v2827 = vld [vmem:[%s8 + $0x308] sm:$0xff]
        %v2828 = vld [vmem:[%s8 + $0x310] sm:$0xff]
        %v2829 = vld [vmem:[%s8 + $0x318] sm:$0xff]
        %v2830 = vld [vmem:[%s8 + $0x320] sm:$0xff]
        %v2831 = vld [vmem:[%s8 + $0x328] sm:$0xff]
        %v2832 = vld [vmem:[%s8 + $0x330] sm:$0xff]
        %v2833 = vld [vmem:[%s8 + $0x338] sm:$0xff]
        %v2834 = vld [vmem:[%s8 + $0x340] sm:$0xff]
        %v2835 = vld [vmem:[%s8 + $0x348] sm:$0xff]
        %v2836 = vld [vmem:[%s8 + $0x350] sm:$0xff]
        %v2837 = vld [vmem:[%s8 + $0x358] sm:$0xff]
        %v2838 = vld [vmem:[%s8 + $0x360] sm:$0xff]
        %v2839 = vld [vmem:[%s8 + $0x368] sm:$0xff]
        %v2840 = vld [vmem:[%s8 + $0x370] sm:$0xff]
        %v2841 = vld [vmem:[%s8 + $0x378] sm:$0xff]
        %v2842 = vld [vmem:[%s8 + $0x380] sm:$0xff]
        %v2843 = vld [vmem:[%s8 + $0x388] sm:$0xff]
        %v2844 = vld [vmem:[%s8 + $0x390] sm:$0xff]
        %v2845 = vld [vmem:[%s8 + $0x398] sm:$0xff]
        %v2846 = vld [vmem:[%s8 + $0x3a0] sm:$0xff]
        %v2847 = vld [vmem:[%s8 + $0x3a8] sm:$0xff]
        %v2848 = vld [vmem:[%s8 + $0x3b0] sm:$0xff]
        %v2849 = vld [vmem:[%s8 + $0x3b8] sm:$0xff]
        %v2850 = vld [vmem:[%s8 + $0x3c0] sm:$0xff]
        %v2851 = vld [vmem:[%s8 + $0x3c8] sm:$0xff]
        %v2852 = vld [vmem:[%s8 + $0x3d0] sm:$0xff]
        %v2853 = vld [vmem:[%s8 + $0x3d8] sm:$0xff]
        %v2854 = vld [vmem:[%s8 + $0x3e0] sm:$0xff]
        %v2855 = vld [vmem:[%s8 + $0x3e8] sm:$0xff]
        %v2856 = vld [vmem:[%s8 + $0x3f0] sm:$0xff]
        %v2857 = vld [vmem:[%s8 + $0x3f8] sm:$0xff]
        %2859 = vset.pattern.permute.xlu0 0
        %2860 = vperm.xlu0 %2859, %v2730
        %v2861 = vpop.permute.xlu0 %2860
        %2864 = vset.pattern.permute.xlu0 0
        %2865 = vperm.xlu0 %2864, %v2731
        %v2866 = vpop.permute.xlu0 %2865
        %2869 = vset.pattern.permute.xlu0 0
        %2870 = vperm.xlu0 %2869, %v2732
        %v2871 = vpop.permute.xlu0 %2870
        %2874 = vset.pattern.permute.xlu0 0
        %2875 = vperm.xlu0 %2874, %v2733
        %v2876 = vpop.permute.xlu0 %2875
        %2879 = vset.pattern.permute.xlu0 0
        %2880 = vperm.xlu0 %2879, %v2734
        %v2881 = vpop.permute.xlu0 %2880
        %2884 = vset.pattern.permute.xlu0 0
        %2885 = vperm.xlu0 %2884, %v2735
        %v2886 = vpop.permute.xlu0 %2885
        %2889 = vset.pattern.permute.xlu0 0
        %2890 = vperm.xlu0 %2889, %v2736
        %v2891 = vpop.permute.xlu0 %2890
        %2894 = vset.pattern.permute.xlu0 0
        %2895 = vperm.xlu0 %2894, %v2737
        %v2896 = vpop.permute.xlu0 %2895
        %2899 = vset.pattern.permute.xlu0 0
        %2900 = vperm.xlu0 %2899, %v2738
        %v2901 = vpop.permute.xlu0 %2900
        %2904 = vset.pattern.permute.xlu0 0
        %2905 = vperm.xlu0 %2904, %v2739
        %v2906 = vpop.permute.xlu0 %2905
        %2909 = vset.pattern.permute.xlu0 0
        %2910 = vperm.xlu0 %2909, %v2740
        %v2911 = vpop.permute.xlu0 %2910
        %2914 = vset.pattern.permute.xlu0 0
        %2915 = vperm.xlu0 %2914, %v2741
        %v2916 = vpop.permute.xlu0 %2915
        %2919 = vset.pattern.permute.xlu0 0
        %2920 = vperm.xlu0 %2919, %v2742
        %v2921 = vpop.permute.xlu0 %2920
        %2924 = vset.pattern.permute.xlu0 0
        %2925 = vperm.xlu0 %2924, %v2743
        %v2926 = vpop.permute.xlu0 %2925
        %2929 = vset.pattern.permute.xlu0 0
        %2930 = vperm.xlu0 %2929, %v2744
        %v2931 = vpop.permute.xlu0 %2930
        %2934 = vset.pattern.permute.xlu0 0
        %2935 = vperm.xlu0 %2934, %v2745
        %v2936 = vpop.permute.xlu0 %2935
        %2939 = vset.pattern.permute.xlu0 0
        %2940 = vperm.xlu0 %2939, %v2746
        %v2941 = vpop.permute.xlu0 %2940
        %2944 = vset.pattern.permute.xlu0 0
        %2945 = vperm.xlu0 %2944, %v2747
        %v2946 = vpop.permute.xlu0 %2945
        %2949 = vset.pattern.permute.xlu0 0
        %2950 = vperm.xlu0 %2949, %v2748
        %v2951 = vpop.permute.xlu0 %2950
        %2954 = vset.pattern.permute.xlu0 0
        %2955 = vperm.xlu0 %2954, %v2749
        %v2956 = vpop.permute.xlu0 %2955
        %2959 = vset.pattern.permute.xlu0 0
        %2960 = vperm.xlu0 %2959, %v2750
        %v2961 = vpop.permute.xlu0 %2960
        %2964 = vset.pattern.permute.xlu0 0
        %2965 = vperm.xlu0 %2964, %v2751
        %v2966 = vpop.permute.xlu0 %2965
        %2969 = vset.pattern.permute.xlu0 0
        %2970 = vperm.xlu0 %2969, %v2752
        %v2971 = vpop.permute.xlu0 %2970
        %2974 = vset.pattern.permute.xlu0 0
        %2975 = vperm.xlu0 %2974, %v2753
        %v2976 = vpop.permute.xlu0 %2975
        %2979 = vset.pattern.permute.xlu0 0
        %2980 = vperm.xlu0 %2979, %v2754
        %v2981 = vpop.permute.xlu0 %2980
        %2984 = vset.pattern.permute.xlu0 0
        %2985 = vperm.xlu0 %2984, %v2755
        %v2986 = vpop.permute.xlu0 %2985
        %2989 = vset.pattern.permute.xlu0 0
        %2990 = vperm.xlu0 %2989, %v2756
        %v2991 = vpop.permute.xlu0 %2990
        %2994 = vset.pattern.permute.xlu0 0
        %2995 = vperm.xlu0 %2994, %v2757
        %v2996 = vpop.permute.xlu0 %2995
        %2999 = vset.pattern.permute.xlu0 0
        %3000 = vperm.xlu0 %2999, %v2758
        %v3001 = vpop.permute.xlu0 %3000
        %3004 = vset.pattern.permute.xlu0 0
        %3005 = vperm.xlu0 %3004, %v2759
        %v3006 = vpop.permute.xlu0 %3005
        %3009 = vset.pattern.permute.xlu0 0
        %3010 = vperm.xlu0 %3009, %v2760
        %v3011 = vpop.permute.xlu0 %3010
        %3014 = vset.pattern.permute.xlu0 0
        %3015 = vperm.xlu0 %3014, %v2761
        %v3016 = vpop.permute.xlu0 %3015
        %3019 = vset.pattern.permute.xlu0 0
        %3020 = vperm.xlu0 %3019, %v2762
        %v3021 = vpop.permute.xlu0 %3020
        %3024 = vset.pattern.permute.xlu0 0
        %3025 = vperm.xlu0 %3024, %v2763
        %v3026 = vpop.permute.xlu0 %3025
        %3029 = vset.pattern.permute.xlu0 0
        %3030 = vperm.xlu0 %3029, %v2764
        %v3031 = vpop.permute.xlu0 %3030
        %3034 = vset.pattern.permute.xlu0 0
        %3035 = vperm.xlu0 %3034, %v2765
        %v3036 = vpop.permute.xlu0 %3035
        %3039 = vset.pattern.permute.xlu0 0
        %3040 = vperm.xlu0 %3039, %v2766
        %v3041 = vpop.permute.xlu0 %3040
        %3044 = vset.pattern.permute.xlu0 0
        %3045 = vperm.xlu0 %3044, %v2767
        %v3046 = vpop.permute.xlu0 %3045
        %3049 = vset.pattern.permute.xlu0 0
        %3050 = vperm.xlu0 %3049, %v2768
        %v3051 = vpop.permute.xlu0 %3050
        %3054 = vset.pattern.permute.xlu0 0
        %3055 = vperm.xlu0 %3054, %v2769
        %v3056 = vpop.permute.xlu0 %3055
        %3059 = vset.pattern.permute.xlu0 0
        %3060 = vperm.xlu0 %3059, %v2770
        %v3061 = vpop.permute.xlu0 %3060
        %3064 = vset.pattern.permute.xlu0 0
        %3065 = vperm.xlu0 %3064, %v2771
        %v3066 = vpop.permute.xlu0 %3065
        %3069 = vset.pattern.permute.xlu0 0
        %3070 = vperm.xlu0 %3069, %v2772
        %v3071 = vpop.permute.xlu0 %3070
        %3074 = vset.pattern.permute.xlu0 0
        %3075 = vperm.xlu0 %3074, %v2773
        %v3076 = vpop.permute.xlu0 %3075
        %3079 = vset.pattern.permute.xlu0 0
        %3080 = vperm.xlu0 %3079, %v2774
        %v3081 = vpop.permute.xlu0 %3080
        %3084 = vset.pattern.permute.xlu0 0
        %3085 = vperm.xlu0 %3084, %v2775
        %v3086 = vpop.permute.xlu0 %3085
        %3089 = vset.pattern.permute.xlu0 0
        %3090 = vperm.xlu0 %3089, %v2776
        %v3091 = vpop.permute.xlu0 %3090
        %3094 = vset.pattern.permute.xlu0 0
        %3095 = vperm.xlu0 %3094, %v2777
        %v3096 = vpop.permute.xlu0 %3095
        %3099 = vset.pattern.permute.xlu0 0
        %3100 = vperm.xlu0 %3099, %v2778
        %v3101 = vpop.permute.xlu0 %3100
        %3104 = vset.pattern.permute.xlu0 0
        %3105 = vperm.xlu0 %3104, %v2779
        %v3106 = vpop.permute.xlu0 %3105
        %3109 = vset.pattern.permute.xlu0 0
        %3110 = vperm.xlu0 %3109, %v2780
        %v3111 = vpop.permute.xlu0 %3110
        %3114 = vset.pattern.permute.xlu0 0
        %3115 = vperm.xlu0 %3114, %v2781
        %v3116 = vpop.permute.xlu0 %3115
        %3119 = vset.pattern.permute.xlu0 0
        %3120 = vperm.xlu0 %3119, %v2782
        %v3121 = vpop.permute.xlu0 %3120
        %3124 = vset.pattern.permute.xlu0 0
        %3125 = vperm.xlu0 %3124, %v2783
        %v3126 = vpop.permute.xlu0 %3125
        %3129 = vset.pattern.permute.xlu0 0
        %3130 = vperm.xlu0 %3129, %v2784
        %v3131 = vpop.permute.xlu0 %3130
        %3134 = vset.pattern.permute.xlu0 0
        %3135 = vperm.xlu0 %3134, %v2785
        %v3136 = vpop.permute.xlu0 %3135
        %3139 = vset.pattern.permute.xlu0 0
        %3140 = vperm.xlu0 %3139, %v2786
        %v3141 = vpop.permute.xlu0 %3140
        %3144 = vset.pattern.permute.xlu0 0
        %3145 = vperm.xlu0 %3144, %v2787
        %v3146 = vpop.permute.xlu0 %3145
        %3149 = vset.pattern.permute.xlu0 0
        %3150 = vperm.xlu0 %3149, %v2788
        %v3151 = vpop.permute.xlu0 %3150
        %3154 = vset.pattern.permute.xlu0 0
        %3155 = vperm.xlu0 %3154, %v2789
        %v3156 = vpop.permute.xlu0 %3155
        %3159 = vset.pattern.permute.xlu0 0
        %3160 = vperm.xlu0 %3159, %v2790
        %v3161 = vpop.permute.xlu0 %3160
        %3164 = vset.pattern.permute.xlu0 0
        %3165 = vperm.xlu0 %3164, %v2791
        %v3166 = vpop.permute.xlu0 %3165
        %3169 = vset.pattern.permute.xlu0 0
        %3170 = vperm.xlu0 %3169, %v2792
        %v3171 = vpop.permute.xlu0 %3170
        %3174 = vset.pattern.permute.xlu0 0
        %3175 = vperm.xlu0 %3174, %v2793
        %v3176 = vpop.permute.xlu0 %3175
        %3179 = vset.pattern.permute.xlu0 0
        %3180 = vperm.xlu0 %3179, %v2794
        %v3181 = vpop.permute.xlu0 %3180
        %3184 = vset.pattern.permute.xlu0 0
        %3185 = vperm.xlu0 %3184, %v2795
        %v3186 = vpop.permute.xlu0 %3185
        %3189 = vset.pattern.permute.xlu0 0
        %3190 = vperm.xlu0 %3189, %v2796
        %v3191 = vpop.permute.xlu0 %3190
        %3194 = vset.pattern.permute.xlu0 0
        %3195 = vperm.xlu0 %3194, %v2797
        %v3196 = vpop.permute.xlu0 %3195
        %3199 = vset.pattern.permute.xlu0 0
        %3200 = vperm.xlu0 %3199, %v2798
        %v3201 = vpop.permute.xlu0 %3200
        %3204 = vset.pattern.permute.xlu0 0
        %3205 = vperm.xlu0 %3204, %v2799
        %v3206 = vpop.permute.xlu0 %3205
        %3209 = vset.pattern.permute.xlu0 0
        %3210 = vperm.xlu0 %3209, %v2800
        %v3211 = vpop.permute.xlu0 %3210
        %3214 = vset.pattern.permute.xlu0 0
        %3215 = vperm.xlu0 %3214, %v2801
        %v3216 = vpop.permute.xlu0 %3215
        %3219 = vset.pattern.permute.xlu0 0
        %3220 = vperm.xlu0 %3219, %v2802
        %v3221 = vpop.permute.xlu0 %3220
        %3224 = vset.pattern.permute.xlu0 0
        %3225 = vperm.xlu0 %3224, %v2803
        %v3226 = vpop.permute.xlu0 %3225
        %3229 = vset.pattern.permute.xlu0 0
        %3230 = vperm.xlu0 %3229, %v2804
        %v3231 = vpop.permute.xlu0 %3230
        %3234 = vset.pattern.permute.xlu0 0
        %3235 = vperm.xlu0 %3234, %v2805
        %v3236 = vpop.permute.xlu0 %3235
        %3239 = vset.pattern.permute.xlu0 0
        %3240 = vperm.xlu0 %3239, %v2806
        %v3241 = vpop.permute.xlu0 %3240
        %3244 = vset.pattern.permute.xlu0 0
        %3245 = vperm.xlu0 %3244, %v2807
        %v3246 = vpop.permute.xlu0 %3245
        %3249 = vset.pattern.permute.xlu0 0
        %3250 = vperm.xlu0 %3249, %v2808
        %v3251 = vpop.permute.xlu0 %3250
        %3254 = vset.pattern.permute.xlu0 0
        %3255 = vperm.xlu0 %3254, %v2809
        %v3256 = vpop.permute.xlu0 %3255
        %3259 = vset.pattern.permute.xlu0 0
        %3260 = vperm.xlu0 %3259, %v2810
        %v3261 = vpop.permute.xlu0 %3260
        %3264 = vset.pattern.permute.xlu0 0
        %3265 = vperm.xlu0 %3264, %v2811
        %v3266 = vpop.permute.xlu0 %3265
        %3269 = vset.pattern.permute.xlu0 0
        %3270 = vperm.xlu0 %3269, %v2812
        %v3271 = vpop.permute.xlu0 %3270
        %3274 = vset.pattern.permute.xlu0 0
        %3275 = vperm.xlu0 %3274, %v2813
        %v3276 = vpop.permute.xlu0 %3275
        %3279 = vset.pattern.permute.xlu0 0
        %3280 = vperm.xlu0 %3279, %v2814
        %v3281 = vpop.permute.xlu0 %3280
        %3284 = vset.pattern.permute.xlu0 0
        %3285 = vperm.xlu0 %3284, %v2815
        %v3286 = vpop.permute.xlu0 %3285
        %3289 = vset.pattern.permute.xlu0 0
        %3290 = vperm.xlu0 %3289, %v2816
        %v3291 = vpop.permute.xlu0 %3290
        %3294 = vset.pattern.permute.xlu0 0
        %3295 = vperm.xlu0 %3294, %v2817
        %v3296 = vpop.permute.xlu0 %3295
        %3299 = vset.pattern.permute.xlu0 0
        %3300 = vperm.xlu0 %3299, %v2818
        %v3301 = vpop.permute.xlu0 %3300
        %3304 = vset.pattern.permute.xlu0 0
        %3305 = vperm.xlu0 %3304, %v2819
        %v3306 = vpop.permute.xlu0 %3305
        %3309 = vset.pattern.permute.xlu0 0
        %3310 = vperm.xlu0 %3309, %v2820
        %v3311 = vpop.permute.xlu0 %3310
        %3314 = vset.pattern.permute.xlu0 0
        %3315 = vperm.xlu0 %3314, %v2821
        %v3316 = vpop.permute.xlu0 %3315
        %3319 = vset.pattern.permute.xlu0 0
        %3320 = vperm.xlu0 %3319, %v2822
        %v3321 = vpop.permute.xlu0 %3320
        %3324 = vset.pattern.permute.xlu0 0
        %3325 = vperm.xlu0 %3324, %v2823
        %v3326 = vpop.permute.xlu0 %3325
        %3329 = vset.pattern.permute.xlu0 0
        %3330 = vperm.xlu0 %3329, %v2824
        %v3331 = vpop.permute.xlu0 %3330
        %3334 = vset.pattern.permute.xlu0 0
        %3335 = vperm.xlu0 %3334, %v2825
        %v3336 = vpop.permute.xlu0 %3335
        %3339 = vset.pattern.permute.xlu0 0
        %3340 = vperm.xlu0 %3339, %v2826
        %v3341 = vpop.permute.xlu0 %3340
        %3344 = vset.pattern.permute.xlu0 0
        %3345 = vperm.xlu0 %3344, %v2827
        %v3346 = vpop.permute.xlu0 %3345
        %3349 = vset.pattern.permute.xlu0 0
        %3350 = vperm.xlu0 %3349, %v2828
        %v3351 = vpop.permute.xlu0 %3350
        %3354 = vset.pattern.permute.xlu0 0
        %3355 = vperm.xlu0 %3354, %v2829
        %v3356 = vpop.permute.xlu0 %3355
        %3359 = vset.pattern.permute.xlu0 0
        %3360 = vperm.xlu0 %3359, %v2830
        %v3361 = vpop.permute.xlu0 %3360
        %3364 = vset.pattern.permute.xlu0 0
        %3365 = vperm.xlu0 %3364, %v2831
        %v3366 = vpop.permute.xlu0 %3365
        %3369 = vset.pattern.permute.xlu0 0
        %3370 = vperm.xlu0 %3369, %v2832
        %v3371 = vpop.permute.xlu0 %3370
        %3374 = vset.pattern.permute.xlu0 0
        %3375 = vperm.xlu0 %3374, %v2833
        %v3376 = vpop.permute.xlu0 %3375
        %3379 = vset.pattern.permute.xlu0 0
        %3380 = vperm.xlu0 %3379, %v2834
        %v3381 = vpop.permute.xlu0 %3380
        %3384 = vset.pattern.permute.xlu0 0
        %3385 = vperm.xlu0 %3384, %v2835
        %v3386 = vpop.permute.xlu0 %3385
        %3389 = vset.pattern.permute.xlu0 0
        %3390 = vperm.xlu0 %3389, %v2836
        %v3391 = vpop.permute.xlu0 %3390
        %3394 = vset.pattern.permute.xlu0 0
        %3395 = vperm.xlu0 %3394, %v2837
        %v3396 = vpop.permute.xlu0 %3395
        %3399 = vset.pattern.permute.xlu0 0
        %3400 = vperm.xlu0 %3399, %v2838
        %v3401 = vpop.permute.xlu0 %3400
        %3404 = vset.pattern.permute.xlu0 0
        %3405 = vperm.xlu0 %3404, %v2839
        %v3406 = vpop.permute.xlu0 %3405
        %3409 = vset.pattern.permute.xlu0 0
        %3410 = vperm.xlu0 %3409, %v2840
        %v3411 = vpop.permute.xlu0 %3410
        %3414 = vset.pattern.permute.xlu0 0
        %3415 = vperm.xlu0 %3414, %v2841
        %v3416 = vpop.permute.xlu0 %3415
        %3419 = vset.pattern.permute.xlu0 0
        %3420 = vperm.xlu0 %3419, %v2842
        %v3421 = vpop.permute.xlu0 %3420
        %3424 = vset.pattern.permute.xlu0 0
        %3425 = vperm.xlu0 %3424, %v2843
        %v3426 = vpop.permute.xlu0 %3425
        %3429 = vset.pattern.permute.xlu0 0
        %3430 = vperm.xlu0 %3429, %v2844
        %v3431 = vpop.permute.xlu0 %3430
        %3434 = vset.pattern.permute.xlu0 0
        %3435 = vperm.xlu0 %3434, %v2845
        %v3436 = vpop.permute.xlu0 %3435
        %3439 = vset.pattern.permute.xlu0 0
        %3440 = vperm.xlu0 %3439, %v2846
        %v3441 = vpop.permute.xlu0 %3440
        %3444 = vset.pattern.permute.xlu0 0
        %3445 = vperm.xlu0 %3444, %v2847
        %v3446 = vpop.permute.xlu0 %3445
        %3449 = vset.pattern.permute.xlu0 0
        %3450 = vperm.xlu0 %3449, %v2848
        %v3451 = vpop.permute.xlu0 %3450
        %3454 = vset.pattern.permute.xlu0 0
        %3455 = vperm.xlu0 %3454, %v2849
        %v3456 = vpop.permute.xlu0 %3455
        %3459 = vset.pattern.permute.xlu0 0
        %3460 = vperm.xlu0 %3459, %v2850
        %v3461 = vpop.permute.xlu0 %3460
        %3464 = vset.pattern.permute.xlu0 0
        %3465 = vperm.xlu0 %3464, %v2851
        %v3466 = vpop.permute.xlu0 %3465
        %3469 = vset.pattern.permute.xlu0 0
        %3470 = vperm.xlu0 %3469, %v2852
        %v3471 = vpop.permute.xlu0 %3470
        %3474 = vset.pattern.permute.xlu0 0
        %3475 = vperm.xlu0 %3474, %v2853
        %v3476 = vpop.permute.xlu0 %3475
        %3479 = vset.pattern.permute.xlu0 0
        %3480 = vperm.xlu0 %3479, %v2854
        %v3481 = vpop.permute.xlu0 %3480
        %3484 = vset.pattern.permute.xlu0 0
        %3485 = vperm.xlu0 %3484, %v2855
        %v3486 = vpop.permute.xlu0 %3485
        %3489 = vset.pattern.permute.xlu0 0
        %3490 = vperm.xlu0 %3489, %v2856
        %v3491 = vpop.permute.xlu0 %3490
        %3494 = vset.pattern.permute.xlu0 0
        %3495 = vperm.xlu0 %3494, %v2857
        %v3496 = vpop.permute.xlu0 %3495
        %v3754 = vunpack.c.l.b16 %v2474
        %v3755 = vunpack.c.h.b16 %v2474
        %v3756 = vunpack.c.l.b16 %v2475
        %v3757 = vunpack.c.h.b16 %v2475
        %v3758 = vunpack.c.l.b16 %v2476
        %v3759 = vunpack.c.h.b16 %v2476
        %v3760 = vunpack.c.l.b16 %v2477
        %v3761 = vunpack.c.h.b16 %v2477
        %v3762 = vunpack.c.l.b16 %v2478
        %v3763 = vunpack.c.h.b16 %v2478
        %v3764 = vunpack.c.l.b16 %v2479
        %v3765 = vunpack.c.h.b16 %v2479
        %v3766 = vunpack.c.l.b16 %v2480
        %v3767 = vunpack.c.h.b16 %v2480
        %v3768 = vunpack.c.l.b16 %v2481
        %v3769 = vunpack.c.h.b16 %v2481
        %v3770 = vunpack.c.l.b16 %v2482
        %v3771 = vunpack.c.h.b16 %v2482
        %v3772 = vunpack.c.l.b16 %v2483
        %v3773 = vunpack.c.h.b16 %v2483
        %v3774 = vunpack.c.l.b16 %v2484
        %v3775 = vunpack.c.h.b16 %v2484
        %v3776 = vunpack.c.l.b16 %v2485
        %v3777 = vunpack.c.h.b16 %v2485
        %v3778 = vunpack.c.l.b16 %v2486
        %v3779 = vunpack.c.h.b16 %v2486
        %v3780 = vunpack.c.l.b16 %v2487
        %v3781 = vunpack.c.h.b16 %v2487
        %v3782 = vunpack.c.l.b16 %v2488
        %v3783 = vunpack.c.h.b16 %v2488
        %v3784 = vunpack.c.l.b16 %v2489
        %v3785 = vunpack.c.h.b16 %v2489
        %v3786 = vunpack.c.l.b16 %v2490
        %v3787 = vunpack.c.h.b16 %v2490
        %v3788 = vunpack.c.l.b16 %v2491
        %v3789 = vunpack.c.h.b16 %v2491
        %v3790 = vunpack.c.l.b16 %v2492
        %v3791 = vunpack.c.h.b16 %v2492
        %v3792 = vunpack.c.l.b16 %v2493
        %v3793 = vunpack.c.h.b16 %v2493
        %v3794 = vunpack.c.l.b16 %v2494
        %v3795 = vunpack.c.h.b16 %v2494
        %v3796 = vunpack.c.l.b16 %v2495
        %v3797 = vunpack.c.h.b16 %v2495
        %v3798 = vunpack.c.l.b16 %v2496
        %v3799 = vunpack.c.h.b16 %v2496
        %v3800 = vunpack.c.l.b16 %v2497
        %v3801 = vunpack.c.h.b16 %v2497
        %v3802 = vunpack.c.l.b16 %v2498
        %v3803 = vunpack.c.h.b16 %v2498
        %v3804 = vunpack.c.l.b16 %v2499
        %v3805 = vunpack.c.h.b16 %v2499
        %v3806 = vunpack.c.l.b16 %v2500
        %v3807 = vunpack.c.h.b16 %v2500
        %v3808 = vunpack.c.l.b16 %v2501
        %v3809 = vunpack.c.h.b16 %v2501
        %v3810 = vunpack.c.l.b16 %v2502
        %v3811 = vunpack.c.h.b16 %v2502
        %v3812 = vunpack.c.l.b16 %v2503
        %v3813 = vunpack.c.h.b16 %v2503
        %v3814 = vunpack.c.l.b16 %v2504
        %v3815 = vunpack.c.h.b16 %v2504
        %v3816 = vunpack.c.l.b16 %v2505
        %v3817 = vunpack.c.h.b16 %v2505
        %v3818 = vunpack.c.l.b16 %v2506
        %v3819 = vunpack.c.h.b16 %v2506
        %v3820 = vunpack.c.l.b16 %v2507
        %v3821 = vunpack.c.h.b16 %v2507
        %v3822 = vunpack.c.l.b16 %v2508
        %v3823 = vunpack.c.h.b16 %v2508
        %v3824 = vunpack.c.l.b16 %v2509
        %v3825 = vunpack.c.h.b16 %v2509
        %v3826 = vunpack.c.l.b16 %v2510
        %v3827 = vunpack.c.h.b16 %v2510
        %v3828 = vunpack.c.l.b16 %v2511
        %v3829 = vunpack.c.h.b16 %v2511
        %v3830 = vunpack.c.l.b16 %v2512
        %v3831 = vunpack.c.h.b16 %v2512
        %v3832 = vunpack.c.l.b16 %v2513
        %v3833 = vunpack.c.h.b16 %v2513
        %v3834 = vunpack.c.l.b16 %v2514
        %v3835 = vunpack.c.h.b16 %v2514
        %v3836 = vunpack.c.l.b16 %v2515
        %v3837 = vunpack.c.h.b16 %v2515
        %v3838 = vunpack.c.l.b16 %v2516
        %v3839 = vunpack.c.h.b16 %v2516
        %v3840 = vunpack.c.l.b16 %v2517
        %v3841 = vunpack.c.h.b16 %v2517
        %v3842 = vunpack.c.l.b16 %v2518
        %v3843 = vunpack.c.h.b16 %v2518
        %v3844 = vunpack.c.l.b16 %v2519
        %v3845 = vunpack.c.h.b16 %v2519
        %v3846 = vunpack.c.l.b16 %v2520
        %v3847 = vunpack.c.h.b16 %v2520
        %v3848 = vunpack.c.l.b16 %v2521
        %v3849 = vunpack.c.h.b16 %v2521
        %v3850 = vunpack.c.l.b16 %v2522
        %v3851 = vunpack.c.h.b16 %v2522
        %v3852 = vunpack.c.l.b16 %v2523
        %v3853 = vunpack.c.h.b16 %v2523
        %v3854 = vunpack.c.l.b16 %v2524
        %v3855 = vunpack.c.h.b16 %v2524
        %v3856 = vunpack.c.l.b16 %v2525
        %v3857 = vunpack.c.h.b16 %v2525
        %v3858 = vunpack.c.l.b16 %v2526
        %v3859 = vunpack.c.h.b16 %v2526
        %v3860 = vunpack.c.l.b16 %v2527
        %v3861 = vunpack.c.h.b16 %v2527
        %v3862 = vunpack.c.l.b16 %v2528
        %v3863 = vunpack.c.h.b16 %v2528
        %v3864 = vunpack.c.l.b16 %v2529
        %v3865 = vunpack.c.h.b16 %v2529
        %v3866 = vunpack.c.l.b16 %v2530
        %v3867 = vunpack.c.h.b16 %v2530
        %v3868 = vunpack.c.l.b16 %v2531
        %v3869 = vunpack.c.h.b16 %v2531
        %v3870 = vunpack.c.l.b16 %v2532
        %v3871 = vunpack.c.h.b16 %v2532
        %v3872 = vunpack.c.l.b16 %v2533
        %v3873 = vunpack.c.h.b16 %v2533
        %v3874 = vunpack.c.l.b16 %v2534
        %v3875 = vunpack.c.h.b16 %v2534
        %v3876 = vunpack.c.l.b16 %v2535
        %v3877 = vunpack.c.h.b16 %v2535
        %v3878 = vunpack.c.l.b16 %v2536
        %v3879 = vunpack.c.h.b16 %v2536
        %v3880 = vunpack.c.l.b16 %v2537
        %v3881 = vunpack.c.h.b16 %v2537
        %v3882 = vunpack.c.l.b16 %v2538
        %v3883 = vunpack.c.h.b16 %v2538
        %v3884 = vunpack.c.l.b16 %v2539
        %v3885 = vunpack.c.h.b16 %v2539
        %v3886 = vunpack.c.l.b16 %v2540
        %v3887 = vunpack.c.h.b16 %v2540
        %v3888 = vunpack.c.l.b16 %v2541
        %v3889 = vunpack.c.h.b16 %v2541
        %v3890 = vunpack.c.l.b16 %v2542
        %v3891 = vunpack.c.h.b16 %v2542
        %v3892 = vunpack.c.l.b16 %v2543
        %v3893 = vunpack.c.h.b16 %v2543
        %v3894 = vunpack.c.l.b16 %v2544
        %v3895 = vunpack.c.h.b16 %v2544
        %v3896 = vunpack.c.l.b16 %v2545
        %v3897 = vunpack.c.h.b16 %v2545
        %v3898 = vunpack.c.l.b16 %v2546
        %v3899 = vunpack.c.h.b16 %v2546
        %v3900 = vunpack.c.l.b16 %v2547
        %v3901 = vunpack.c.h.b16 %v2547
        %v3902 = vunpack.c.l.b16 %v2548
        %v3903 = vunpack.c.h.b16 %v2548
        %v3904 = vunpack.c.l.b16 %v2549
        %v3905 = vunpack.c.h.b16 %v2549
        %v3906 = vunpack.c.l.b16 %v2550
        %v3907 = vunpack.c.h.b16 %v2550
        %v3908 = vunpack.c.l.b16 %v2551
        %v3909 = vunpack.c.h.b16 %v2551
        %v3910 = vunpack.c.l.b16 %v2552
        %v3911 = vunpack.c.h.b16 %v2552
        %v3912 = vunpack.c.l.b16 %v2553
        %v3913 = vunpack.c.h.b16 %v2553
        %v3914 = vunpack.c.l.b16 %v2554
        %v3915 = vunpack.c.h.b16 %v2554
        %v3916 = vunpack.c.l.b16 %v2555
        %v3917 = vunpack.c.h.b16 %v2555
        %v3918 = vunpack.c.l.b16 %v2556
        %v3919 = vunpack.c.h.b16 %v2556
        %v3920 = vunpack.c.l.b16 %v2557
        %v3921 = vunpack.c.h.b16 %v2557
        %v3922 = vunpack.c.l.b16 %v2558
        %v3923 = vunpack.c.h.b16 %v2558
        %v3924 = vunpack.c.l.b16 %v2559
        %v3925 = vunpack.c.h.b16 %v2559
        %v3926 = vunpack.c.l.b16 %v2560
        %v3927 = vunpack.c.h.b16 %v2560
        %v3928 = vunpack.c.l.b16 %v2561
        %v3929 = vunpack.c.h.b16 %v2561
        %v3930 = vunpack.c.l.b16 %v2562
        %v3931 = vunpack.c.h.b16 %v2562
        %v3932 = vunpack.c.l.b16 %v2563
        %v3933 = vunpack.c.h.b16 %v2563
        %v3934 = vunpack.c.l.b16 %v2564
        %v3935 = vunpack.c.h.b16 %v2564
        %v3936 = vunpack.c.l.b16 %v2565
        %v3937 = vunpack.c.h.b16 %v2565
        %v3938 = vunpack.c.l.b16 %v2566
        %v3939 = vunpack.c.h.b16 %v2566
        %v3940 = vunpack.c.l.b16 %v2567
        %v3941 = vunpack.c.h.b16 %v2567
        %v3942 = vunpack.c.l.b16 %v2568
        %v3943 = vunpack.c.h.b16 %v2568
        %v3944 = vunpack.c.l.b16 %v2569
        %v3945 = vunpack.c.h.b16 %v2569
        %v3946 = vunpack.c.l.b16 %v2570
        %v3947 = vunpack.c.h.b16 %v2570
        %v3948 = vunpack.c.l.b16 %v2571
        %v3949 = vunpack.c.h.b16 %v2571
        %v3950 = vunpack.c.l.b16 %v2572
        %v3951 = vunpack.c.h.b16 %v2572
        %v3952 = vunpack.c.l.b16 %v2573
        %v3953 = vunpack.c.h.b16 %v2573
        %v3954 = vunpack.c.l.b16 %v2574
        %v3955 = vunpack.c.h.b16 %v2574
        %v3956 = vunpack.c.l.b16 %v2575
        %v3957 = vunpack.c.h.b16 %v2575
        %v3958 = vunpack.c.l.b16 %v2576
        %v3959 = vunpack.c.h.b16 %v2576
        %v3960 = vunpack.c.l.b16 %v2577
        %v3961 = vunpack.c.h.b16 %v2577
        %v3962 = vunpack.c.l.b16 %v2578
        %v3963 = vunpack.c.h.b16 %v2578
        %v3964 = vunpack.c.l.b16 %v2579
        %v3965 = vunpack.c.h.b16 %v2579
        %v3966 = vunpack.c.l.b16 %v2580
        %v3967 = vunpack.c.h.b16 %v2580
        %v3968 = vunpack.c.l.b16 %v2581
        %v3969 = vunpack.c.h.b16 %v2581
        %v3970 = vunpack.c.l.b16 %v2582
        %v3971 = vunpack.c.h.b16 %v2582
        %v3972 = vunpack.c.l.b16 %v2583
        %v3973 = vunpack.c.h.b16 %v2583
        %v3974 = vunpack.c.l.b16 %v2584
        %v3975 = vunpack.c.h.b16 %v2584
        %v3976 = vunpack.c.l.b16 %v2585
        %v3977 = vunpack.c.h.b16 %v2585
        %v3978 = vunpack.c.l.b16 %v2586
        %v3979 = vunpack.c.h.b16 %v2586
        %v3980 = vunpack.c.l.b16 %v2587
        %v3981 = vunpack.c.h.b16 %v2587
        %v3982 = vunpack.c.l.b16 %v2588
        %v3983 = vunpack.c.h.b16 %v2588
        %v3984 = vunpack.c.l.b16 %v2589
        %v3985 = vunpack.c.h.b16 %v2589
        %v3986 = vunpack.c.l.b16 %v2590
        %v3987 = vunpack.c.h.b16 %v2590
        %v3988 = vunpack.c.l.b16 %v2591
        %v3989 = vunpack.c.h.b16 %v2591
        %v3990 = vunpack.c.l.b16 %v2592
        %v3991 = vunpack.c.h.b16 %v2592
        %v3992 = vunpack.c.l.b16 %v2593
        %v3993 = vunpack.c.h.b16 %v2593
        %v3994 = vunpack.c.l.b16 %v2594
        %v3995 = vunpack.c.h.b16 %v2594
        %v3996 = vunpack.c.l.b16 %v2595
        %v3997 = vunpack.c.h.b16 %v2595
        %v3998 = vunpack.c.l.b16 %v2596
        %v3999 = vunpack.c.h.b16 %v2596
        %v4000 = vunpack.c.l.b16 %v2597
        %v4001 = vunpack.c.h.b16 %v2597
        %v4002 = vunpack.c.l.b16 %v2598
        %v4003 = vunpack.c.h.b16 %v2598
        %v4004 = vunpack.c.l.b16 %v2599
        %v4005 = vunpack.c.h.b16 %v2599
        %v4006 = vunpack.c.l.b16 %v2600
        %v4007 = vunpack.c.h.b16 %v2600
        %v4008 = vunpack.c.l.b16 %v2601
        %v4009 = vunpack.c.h.b16 %v2601
        %v4010 = vunpack.c.l.b16 %v2602
        %v4011 = vunpack.c.h.b16 %v2602
        %v4012 = vunpack.c.l.b16 %v2603
        %v4013 = vunpack.c.h.b16 %v2603
        %v4014 = vunpack.c.l.b16 %v2604
        %v4015 = vunpack.c.h.b16 %v2604
        %v4016 = vunpack.c.l.b16 %v2605
        %v4017 = vunpack.c.h.b16 %v2605
        %v4018 = vunpack.c.l.b16 %v2606
        %v4019 = vunpack.c.h.b16 %v2606
        %v4020 = vunpack.c.l.b16 %v2607
        %v4021 = vunpack.c.h.b16 %v2607
        %v4022 = vunpack.c.l.b16 %v2608
        %v4023 = vunpack.c.h.b16 %v2608
        %v4024 = vunpack.c.l.b16 %v2609
        %v4025 = vunpack.c.h.b16 %v2609
        %v4026 = vunpack.c.l.b16 %v2610
        %v4027 = vunpack.c.h.b16 %v2610
        %v4028 = vunpack.c.l.b16 %v2611
        %v4029 = vunpack.c.h.b16 %v2611
        %v4030 = vunpack.c.l.b16 %v2612
        %v4031 = vunpack.c.h.b16 %v2612
        %v4032 = vunpack.c.l.b16 %v2613
        %v4033 = vunpack.c.h.b16 %v2613
        %v4034 = vunpack.c.l.b16 %v2614
        %v4035 = vunpack.c.h.b16 %v2614
        %v4036 = vunpack.c.l.b16 %v2615
        %v4037 = vunpack.c.h.b16 %v2615
        %v4038 = vunpack.c.l.b16 %v2616
        %v4039 = vunpack.c.h.b16 %v2616
        %v4040 = vunpack.c.l.b16 %v2617
        %v4041 = vunpack.c.h.b16 %v2617
        %v4042 = vunpack.c.l.b16 %v2618
        %v4043 = vunpack.c.h.b16 %v2618
        %v4044 = vunpack.c.l.b16 %v2619
        %v4045 = vunpack.c.h.b16 %v2619
        %v4046 = vunpack.c.l.b16 %v2620
        %v4047 = vunpack.c.h.b16 %v2620
        %v4048 = vunpack.c.l.b16 %v2621
        %v4049 = vunpack.c.h.b16 %v2621
        %v4050 = vunpack.c.l.b16 %v2622
        %v4051 = vunpack.c.h.b16 %v2622
        %v4052 = vunpack.c.l.b16 %v2623
        %v4053 = vunpack.c.h.b16 %v2623
        %v4054 = vunpack.c.l.b16 %v2624
        %v4055 = vunpack.c.h.b16 %v2624
        %v4056 = vunpack.c.l.b16 %v2625
        %v4057 = vunpack.c.h.b16 %v2625
        %v4058 = vunpack.c.l.b16 %v2626
        %v4059 = vunpack.c.h.b16 %v2626
        %v4060 = vunpack.c.l.b16 %v2627
        %v4061 = vunpack.c.h.b16 %v2627
        %v4062 = vunpack.c.l.b16 %v2628
        %v4063 = vunpack.c.h.b16 %v2628
        %v4064 = vunpack.c.l.b16 %v2629
        %v4065 = vunpack.c.h.b16 %v2629
        %v4066 = vunpack.c.l.b16 %v2630
        %v4067 = vunpack.c.h.b16 %v2630
        %v4068 = vunpack.c.l.b16 %v2631
        %v4069 = vunpack.c.h.b16 %v2631
        %v4070 = vunpack.c.l.b16 %v2632
        %v4071 = vunpack.c.h.b16 %v2632
        %v4072 = vunpack.c.l.b16 %v2633
        %v4073 = vunpack.c.h.b16 %v2633
        %v4074 = vunpack.c.l.b16 %v2634
        %v4075 = vunpack.c.h.b16 %v2634
        %v4076 = vunpack.c.l.b16 %v2635
        %v4077 = vunpack.c.h.b16 %v2635
        %v4078 = vunpack.c.l.b16 %v2636
        %v4079 = vunpack.c.h.b16 %v2636
        %v4080 = vunpack.c.l.b16 %v2637
        %v4081 = vunpack.c.h.b16 %v2637
        %v4082 = vunpack.c.l.b16 %v2638
        %v4083 = vunpack.c.h.b16 %v2638
        %v4084 = vunpack.c.l.b16 %v2639
        %v4085 = vunpack.c.h.b16 %v2639
        %v4086 = vunpack.c.l.b16 %v2640
        %v4087 = vunpack.c.h.b16 %v2640
        %v4088 = vunpack.c.l.b16 %v2641
        %v4089 = vunpack.c.h.b16 %v2641
        %v4090 = vunpack.c.l.b16 %v2642
        %v4091 = vunpack.c.h.b16 %v2642
        %v4092 = vunpack.c.l.b16 %v2643
        %v4093 = vunpack.c.h.b16 %v2643
        %v4094 = vunpack.c.l.b16 %v2644
        %v4095 = vunpack.c.h.b16 %v2644
        %v4096 = vunpack.c.l.b16 %v2645
        %v4097 = vunpack.c.h.b16 %v2645
        %v4098 = vunpack.c.l.b16 %v2646
        %v4099 = vunpack.c.h.b16 %v2646
        %v4100 = vunpack.c.l.b16 %v2647
        %v4101 = vunpack.c.h.b16 %v2647
        %v4102 = vunpack.c.l.b16 %v2648
        %v4103 = vunpack.c.h.b16 %v2648
        %v4104 = vunpack.c.l.b16 %v2649
        %v4105 = vunpack.c.h.b16 %v2649
        %v4106 = vunpack.c.l.b16 %v2650
        %v4107 = vunpack.c.h.b16 %v2650
        %v4108 = vunpack.c.l.b16 %v2651
        %v4109 = vunpack.c.h.b16 %v2651
        %v4110 = vunpack.c.l.b16 %v2652
        %v4111 = vunpack.c.h.b16 %v2652
        %v4112 = vunpack.c.l.b16 %v2653
        %v4113 = vunpack.c.h.b16 %v2653
        %v4114 = vunpack.c.l.b16 %v2654
        %v4115 = vunpack.c.h.b16 %v2654
        %v4116 = vunpack.c.l.b16 %v2655
        %v4117 = vunpack.c.h.b16 %v2655
        %v4118 = vunpack.c.l.b16 %v2656
        %v4119 = vunpack.c.h.b16 %v2656
        %v4120 = vunpack.c.l.b16 %v2657
        %v4121 = vunpack.c.h.b16 %v2657
        %v4122 = vunpack.c.l.b16 %v2658
        %v4123 = vunpack.c.h.b16 %v2658
        %v4124 = vunpack.c.l.b16 %v2659
        %v4125 = vunpack.c.h.b16 %v2659
        %v4126 = vunpack.c.l.b16 %v2660
        %v4127 = vunpack.c.h.b16 %v2660
        %v4128 = vunpack.c.l.b16 %v2661
        %v4129 = vunpack.c.h.b16 %v2661
        %v4130 = vunpack.c.l.b16 %v2662
        %v4131 = vunpack.c.h.b16 %v2662
        %v4132 = vunpack.c.l.b16 %v2663
        %v4133 = vunpack.c.h.b16 %v2663
        %v4134 = vunpack.c.l.b16 %v2664
        %v4135 = vunpack.c.h.b16 %v2664
        %v4136 = vunpack.c.l.b16 %v2665
        %v4137 = vunpack.c.h.b16 %v2665
        %v4138 = vunpack.c.l.b16 %v2666
        %v4139 = vunpack.c.h.b16 %v2666
        %v4140 = vunpack.c.l.b16 %v2667
        %v4141 = vunpack.c.h.b16 %v2667
        %v4142 = vunpack.c.l.b16 %v2668
        %v4143 = vunpack.c.h.b16 %v2668
        %v4144 = vunpack.c.l.b16 %v2669
        %v4145 = vunpack.c.h.b16 %v2669
        %v4146 = vunpack.c.l.b16 %v2670
        %v4147 = vunpack.c.h.b16 %v2670
        %v4148 = vunpack.c.l.b16 %v2671
        %v4149 = vunpack.c.h.b16 %v2671
        %v4150 = vunpack.c.l.b16 %v2672
        %v4151 = vunpack.c.h.b16 %v2672
        %v4152 = vunpack.c.l.b16 %v2673
        %v4153 = vunpack.c.h.b16 %v2673
        %v4154 = vunpack.c.l.b16 %v2674
        %v4155 = vunpack.c.h.b16 %v2674
        %v4156 = vunpack.c.l.b16 %v2675
        %v4157 = vunpack.c.h.b16 %v2675
        %v4158 = vunpack.c.l.b16 %v2676
        %v4159 = vunpack.c.h.b16 %v2676
        %v4160 = vunpack.c.l.b16 %v2677
        %v4161 = vunpack.c.h.b16 %v2677
        %v4162 = vunpack.c.l.b16 %v2678
        %v4163 = vunpack.c.h.b16 %v2678
        %v4164 = vunpack.c.l.b16 %v2679
        %v4165 = vunpack.c.h.b16 %v2679
        %v4166 = vunpack.c.l.b16 %v2680
        %v4167 = vunpack.c.h.b16 %v2680
        %v4168 = vunpack.c.l.b16 %v2681
        %v4169 = vunpack.c.h.b16 %v2681
        %v4170 = vunpack.c.l.b16 %v2682
        %v4171 = vunpack.c.h.b16 %v2682
        %v4172 = vunpack.c.l.b16 %v2683
        %v4173 = vunpack.c.h.b16 %v2683
        %v4174 = vunpack.c.l.b16 %v2684
        %v4175 = vunpack.c.h.b16 %v2684
        %v4176 = vunpack.c.l.b16 %v2685
        %v4177 = vunpack.c.h.b16 %v2685
        %v4178 = vunpack.c.l.b16 %v2686
        %v4179 = vunpack.c.h.b16 %v2686
        %v4180 = vunpack.c.l.b16 %v2687
        %v4181 = vunpack.c.h.b16 %v2687
        %v4182 = vunpack.c.l.b16 %v2688
        %v4183 = vunpack.c.h.b16 %v2688
        %v4184 = vunpack.c.l.b16 %v2689
        %v4185 = vunpack.c.h.b16 %v2689
        %v4186 = vunpack.c.l.b16 %v2690
        %v4187 = vunpack.c.h.b16 %v2690
        %v4188 = vunpack.c.l.b16 %v2691
        %v4189 = vunpack.c.h.b16 %v2691
        %v4190 = vunpack.c.l.b16 %v2692
        %v4191 = vunpack.c.h.b16 %v2692
        %v4192 = vunpack.c.l.b16 %v2693
        %v4193 = vunpack.c.h.b16 %v2693
        %v4194 = vunpack.c.l.b16 %v2694
        %v4195 = vunpack.c.h.b16 %v2694
        %v4196 = vunpack.c.l.b16 %v2695
        %v4197 = vunpack.c.h.b16 %v2695
        %v4198 = vunpack.c.l.b16 %v2696
        %v4199 = vunpack.c.h.b16 %v2696
        %v4200 = vunpack.c.l.b16 %v2697
        %v4201 = vunpack.c.h.b16 %v2697
        %v4202 = vunpack.c.l.b16 %v2698
        %v4203 = vunpack.c.h.b16 %v2698
        %v4204 = vunpack.c.l.b16 %v2699
        %v4205 = vunpack.c.h.b16 %v2699
        %v4206 = vunpack.c.l.b16 %v2700
        %v4207 = vunpack.c.h.b16 %v2700
        %v4208 = vunpack.c.l.b16 %v2701
        %v4209 = vunpack.c.h.b16 %v2701
        %v4210 = vunpack.c.l.b16 %v2702
        %v4211 = vunpack.c.h.b16 %v2702
        %v4212 = vunpack.c.l.b16 %v2703
        %v4213 = vunpack.c.h.b16 %v2703
        %v4214 = vunpack.c.l.b16 %v2704
        %v4215 = vunpack.c.h.b16 %v2704
        %v4216 = vunpack.c.l.b16 %v2705
        %v4217 = vunpack.c.h.b16 %v2705
        %v4218 = vunpack.c.l.b16 %v2706
        %v4219 = vunpack.c.h.b16 %v2706
        %v4220 = vunpack.c.l.b16 %v2707
        %v4221 = vunpack.c.h.b16 %v2707
        %v4222 = vunpack.c.l.b16 %v2708
        %v4223 = vunpack.c.h.b16 %v2708
        %v4224 = vunpack.c.l.b16 %v2709
        %v4225 = vunpack.c.h.b16 %v2709
        %v4226 = vunpack.c.l.b16 %v2710
        %v4227 = vunpack.c.h.b16 %v2710
        %v4228 = vunpack.c.l.b16 %v2711
        %v4229 = vunpack.c.h.b16 %v2711
        %v4230 = vunpack.c.l.b16 %v2712
        %v4231 = vunpack.c.h.b16 %v2712
        %v4232 = vunpack.c.l.b16 %v2713
        %v4233 = vunpack.c.h.b16 %v2713
        %v4234 = vunpack.c.l.b16 %v2714
        %v4235 = vunpack.c.h.b16 %v2714
        %v4236 = vunpack.c.l.b16 %v2715
        %v4237 = vunpack.c.h.b16 %v2715
        %v4238 = vunpack.c.l.b16 %v2716
        %v4239 = vunpack.c.h.b16 %v2716
        %v4240 = vunpack.c.l.b16 %v2717
        %v4241 = vunpack.c.h.b16 %v2717
        %v4242 = vunpack.c.l.b16 %v2718
        %v4243 = vunpack.c.h.b16 %v2718
        %v4244 = vunpack.c.l.b16 %v2719
        %v4245 = vunpack.c.h.b16 %v2719
        %v4246 = vunpack.c.l.b16 %v2720
        %v4247 = vunpack.c.h.b16 %v2720
        %v4248 = vunpack.c.l.b16 %v2721
        %v4249 = vunpack.c.h.b16 %v2721
        %v4250 = vunpack.c.l.b16 %v2722
        %v4251 = vunpack.c.h.b16 %v2722
        %v4252 = vunpack.c.l.b16 %v2723
        %v4253 = vunpack.c.h.b16 %v2723
        %v4254 = vunpack.c.l.b16 %v2724
        %v4255 = vunpack.c.h.b16 %v2724
        %v4256 = vunpack.c.l.b16 %v2725
        %v4257 = vunpack.c.h.b16 %v2725
        %v4258 = vunpack.c.l.b16 %v2726
        %v4259 = vunpack.c.h.b16 %v2726
        %v4260 = vunpack.c.l.b16 %v2727
        %v4261 = vunpack.c.h.b16 %v2727
        %v4262 = vunpack.c.l.b16 %v2728
        %v4263 = vunpack.c.h.b16 %v2728
        %v4264 = vunpack.c.l.b16 %v2729
        %v4265 = vunpack.c.h.b16 %v2729
        %v4266 = vpack.c.b16 %v3758, %v3754
        %v4267 = vpack.c.b16 %v3759, %v3755
        %v4268 = vpack.c.b16 %v3760, %v3756
        %v4269 = vpack.c.b16 %v3761, %v3757
        %v4270 = vpack.c.b16 %v3766, %v3762
        %v4271 = vpack.c.b16 %v3767, %v3763
        %v4272 = vpack.c.b16 %v3768, %v3764
        %v4273 = vpack.c.b16 %v3769, %v3765
        %v4274 = vpack.c.b16 %v3774, %v3770
        %v4275 = vpack.c.b16 %v3775, %v3771
        %v4276 = vpack.c.b16 %v3776, %v3772
        %v4277 = vpack.c.b16 %v3777, %v3773
        %v4278 = vpack.c.b16 %v3782, %v3778
        %v4279 = vpack.c.b16 %v3783, %v3779
        %v4280 = vpack.c.b16 %v3784, %v3780
        %v4281 = vpack.c.b16 %v3785, %v3781
        %v4282 = vpack.c.b16 %v3790, %v3786
        %v4283 = vpack.c.b16 %v3791, %v3787
        %v4284 = vpack.c.b16 %v3792, %v3788
        %v4285 = vpack.c.b16 %v3793, %v3789
        %v4286 = vpack.c.b16 %v3798, %v3794
        %v4287 = vpack.c.b16 %v3799, %v3795
        %v4288 = vpack.c.b16 %v3800, %v3796
        %v4289 = vpack.c.b16 %v3801, %v3797
        %v4290 = vpack.c.b16 %v3806, %v3802
        %v4291 = vpack.c.b16 %v3807, %v3803
        %v4292 = vpack.c.b16 %v3808, %v3804
        %v4293 = vpack.c.b16 %v3809, %v3805
        %v4294 = vpack.c.b16 %v3814, %v3810
        %v4295 = vpack.c.b16 %v3815, %v3811
        %v4296 = vpack.c.b16 %v3816, %v3812
        %v4297 = vpack.c.b16 %v3817, %v3813
        %v4298 = vpack.c.b16 %v3822, %v3818
        %v4299 = vpack.c.b16 %v3823, %v3819
        %v4300 = vpack.c.b16 %v3824, %v3820
        %v4301 = vpack.c.b16 %v3825, %v3821
        %v4302 = vpack.c.b16 %v3830, %v3826
        %v4303 = vpack.c.b16 %v3831, %v3827
        %v4304 = vpack.c.b16 %v3832, %v3828
        %v4305 = vpack.c.b16 %v3833, %v3829
        %v4306 = vpack.c.b16 %v3838, %v3834
        %v4307 = vpack.c.b16 %v3839, %v3835
        %v4308 = vpack.c.b16 %v3840, %v3836
        %v4309 = vpack.c.b16 %v3841, %v3837
        %v4310 = vpack.c.b16 %v3846, %v3842
        %v4311 = vpack.c.b16 %v3847, %v3843
        %v4312 = vpack.c.b16 %v3848, %v3844
        %v4313 = vpack.c.b16 %v3849, %v3845
        %v4314 = vpack.c.b16 %v3854, %v3850
        %v4315 = vpack.c.b16 %v3855, %v3851
        %v4316 = vpack.c.b16 %v3856, %v3852
        %v4317 = vpack.c.b16 %v3857, %v3853
        %v4318 = vpack.c.b16 %v3862, %v3858
        %v4319 = vpack.c.b16 %v3863, %v3859
        %v4320 = vpack.c.b16 %v3864, %v3860
        %v4321 = vpack.c.b16 %v3865, %v3861
        %v4322 = vpack.c.b16 %v3870, %v3866
        %v4323 = vpack.c.b16 %v3871, %v3867
        %v4324 = vpack.c.b16 %v3872, %v3868
        %v4325 = vpack.c.b16 %v3873, %v3869
        %v4326 = vpack.c.b16 %v3878, %v3874
        %v4327 = vpack.c.b16 %v3879, %v3875
        %v4328 = vpack.c.b16 %v3880, %v3876
        %v4329 = vpack.c.b16 %v3881, %v3877
        %v4330 = vpack.c.b16 %v3886, %v3882
        %v4331 = vpack.c.b16 %v3887, %v3883
        %v4332 = vpack.c.b16 %v3888, %v3884
        %v4333 = vpack.c.b16 %v3889, %v3885
        %v4334 = vpack.c.b16 %v3894, %v3890
        %v4335 = vpack.c.b16 %v3895, %v3891
        %v4336 = vpack.c.b16 %v3896, %v3892
        %v4337 = vpack.c.b16 %v3897, %v3893
        %v4338 = vpack.c.b16 %v3902, %v3898
        %v4339 = vpack.c.b16 %v3903, %v3899
        %v4340 = vpack.c.b16 %v3904, %v3900
        %v4341 = vpack.c.b16 %v3905, %v3901
        %v4342 = vpack.c.b16 %v3910, %v3906
        %v4343 = vpack.c.b16 %v3911, %v3907
        %v4344 = vpack.c.b16 %v3912, %v3908
        %v4345 = vpack.c.b16 %v3913, %v3909
        %v4346 = vpack.c.b16 %v3918, %v3914
        %v4347 = vpack.c.b16 %v3919, %v3915
        %v4348 = vpack.c.b16 %v3920, %v3916
        %v4349 = vpack.c.b16 %v3921, %v3917
        %v4350 = vpack.c.b16 %v3926, %v3922
        %v4351 = vpack.c.b16 %v3927, %v3923
        %v4352 = vpack.c.b16 %v3928, %v3924
        %v4353 = vpack.c.b16 %v3929, %v3925
        %v4354 = vpack.c.b16 %v3934, %v3930
        %v4355 = vpack.c.b16 %v3935, %v3931
        %v4356 = vpack.c.b16 %v3936, %v3932
        %v4357 = vpack.c.b16 %v3937, %v3933
        %v4358 = vpack.c.b16 %v3942, %v3938
        %v4359 = vpack.c.b16 %v3943, %v3939
        %v4360 = vpack.c.b16 %v3944, %v3940
        %v4361 = vpack.c.b16 %v3945, %v3941
        %v4362 = vpack.c.b16 %v3950, %v3946
        %v4363 = vpack.c.b16 %v3951, %v3947
        %v4364 = vpack.c.b16 %v3952, %v3948
        %v4365 = vpack.c.b16 %v3953, %v3949
        %v4366 = vpack.c.b16 %v3958, %v3954
        %v4367 = vpack.c.b16 %v3959, %v3955
        %v4368 = vpack.c.b16 %v3960, %v3956
        %v4369 = vpack.c.b16 %v3961, %v3957
        %v4370 = vpack.c.b16 %v3966, %v3962
        %v4371 = vpack.c.b16 %v3967, %v3963
        %v4372 = vpack.c.b16 %v3968, %v3964
        %v4373 = vpack.c.b16 %v3969, %v3965
        %v4374 = vpack.c.b16 %v3974, %v3970
        %v4375 = vpack.c.b16 %v3975, %v3971
        %v4376 = vpack.c.b16 %v3976, %v3972
        %v4377 = vpack.c.b16 %v3977, %v3973
        %v4378 = vpack.c.b16 %v3982, %v3978
        %v4379 = vpack.c.b16 %v3983, %v3979
        %v4380 = vpack.c.b16 %v3984, %v3980
        %v4381 = vpack.c.b16 %v3985, %v3981
        %v4382 = vpack.c.b16 %v3990, %v3986
        %v4383 = vpack.c.b16 %v3991, %v3987
        %v4384 = vpack.c.b16 %v3992, %v3988
        %v4385 = vpack.c.b16 %v3993, %v3989
        %v4386 = vpack.c.b16 %v3998, %v3994
        %v4387 = vpack.c.b16 %v3999, %v3995
        %v4388 = vpack.c.b16 %v4000, %v3996
        %v4389 = vpack.c.b16 %v4001, %v3997
        %v4390 = vpack.c.b16 %v4006, %v4002
        %v4391 = vpack.c.b16 %v4007, %v4003
        %v4392 = vpack.c.b16 %v4008, %v4004
        %v4393 = vpack.c.b16 %v4009, %v4005
        %v4394 = vpack.c.b16 %v4014, %v4010
        %v4395 = vpack.c.b16 %v4015, %v4011
        %v4396 = vpack.c.b16 %v4016, %v4012
        %v4397 = vpack.c.b16 %v4017, %v4013
        %v4398 = vpack.c.b16 %v4022, %v4018
        %v4399 = vpack.c.b16 %v4023, %v4019
        %v4400 = vpack.c.b16 %v4024, %v4020
        %v4401 = vpack.c.b16 %v4025, %v4021
        %v4402 = vpack.c.b16 %v4030, %v4026
        %v4403 = vpack.c.b16 %v4031, %v4027
        %v4404 = vpack.c.b16 %v4032, %v4028
        %v4405 = vpack.c.b16 %v4033, %v4029
        %v4406 = vpack.c.b16 %v4038, %v4034
        %v4407 = vpack.c.b16 %v4039, %v4035
        %v4408 = vpack.c.b16 %v4040, %v4036
        %v4409 = vpack.c.b16 %v4041, %v4037
        %v4410 = vpack.c.b16 %v4046, %v4042
        %v4411 = vpack.c.b16 %v4047, %v4043
        %v4412 = vpack.c.b16 %v4048, %v4044
        %v4413 = vpack.c.b16 %v4049, %v4045
        %v4414 = vpack.c.b16 %v4054, %v4050
        %v4415 = vpack.c.b16 %v4055, %v4051
        %v4416 = vpack.c.b16 %v4056, %v4052
        %v4417 = vpack.c.b16 %v4057, %v4053
        %v4418 = vpack.c.b16 %v4062, %v4058
        %v4419 = vpack.c.b16 %v4063, %v4059
        %v4420 = vpack.c.b16 %v4064, %v4060
        %v4421 = vpack.c.b16 %v4065, %v4061
        %v4422 = vpack.c.b16 %v4070, %v4066
        %v4423 = vpack.c.b16 %v4071, %v4067
        %v4424 = vpack.c.b16 %v4072, %v4068
        %v4425 = vpack.c.b16 %v4073, %v4069
        %v4426 = vpack.c.b16 %v4078, %v4074
        %v4427 = vpack.c.b16 %v4079, %v4075
        %v4428 = vpack.c.b16 %v4080, %v4076
        %v4429 = vpack.c.b16 %v4081, %v4077
        %v4430 = vpack.c.b16 %v4086, %v4082
        %v4431 = vpack.c.b16 %v4087, %v4083
        %v4432 = vpack.c.b16 %v4088, %v4084
        %v4433 = vpack.c.b16 %v4089, %v4085
        %v4434 = vpack.c.b16 %v4094, %v4090
        %v4435 = vpack.c.b16 %v4095, %v4091
        %v4436 = vpack.c.b16 %v4096, %v4092
        %v4437 = vpack.c.b16 %v4097, %v4093
        %v4438 = vpack.c.b16 %v4102, %v4098
        %v4439 = vpack.c.b16 %v4103, %v4099
        %v4440 = vpack.c.b16 %v4104, %v4100
        %v4441 = vpack.c.b16 %v4105, %v4101
        %v4442 = vpack.c.b16 %v4110, %v4106
        %v4443 = vpack.c.b16 %v4111, %v4107
        %v4444 = vpack.c.b16 %v4112, %v4108
        %v4445 = vpack.c.b16 %v4113, %v4109
        %v4446 = vpack.c.b16 %v4118, %v4114
        %v4447 = vpack.c.b16 %v4119, %v4115
        %v4448 = vpack.c.b16 %v4120, %v4116
        %v4449 = vpack.c.b16 %v4121, %v4117
        %v4450 = vpack.c.b16 %v4126, %v4122
        %v4451 = vpack.c.b16 %v4127, %v4123
        %v4452 = vpack.c.b16 %v4128, %v4124
        %v4453 = vpack.c.b16 %v4129, %v4125
        %v4454 = vpack.c.b16 %v4134, %v4130
        %v4455 = vpack.c.b16 %v4135, %v4131
        %v4456 = vpack.c.b16 %v4136, %v4132
        %v4457 = vpack.c.b16 %v4137, %v4133
        %v4458 = vpack.c.b16 %v4142, %v4138
        %v4459 = vpack.c.b16 %v4143, %v4139
        %v4460 = vpack.c.b16 %v4144, %v4140
        %v4461 = vpack.c.b16 %v4145, %v4141
        %v4462 = vpack.c.b16 %v4150, %v4146
        %v4463 = vpack.c.b16 %v4151, %v4147
        %v4464 = vpack.c.b16 %v4152, %v4148
        %v4465 = vpack.c.b16 %v4153, %v4149
        %v4466 = vpack.c.b16 %v4158, %v4154
        %v4467 = vpack.c.b16 %v4159, %v4155
        %v4468 = vpack.c.b16 %v4160, %v4156
        %v4469 = vpack.c.b16 %v4161, %v4157
        %v4470 = vpack.c.b16 %v4166, %v4162
        %v4471 = vpack.c.b16 %v4167, %v4163
        %v4472 = vpack.c.b16 %v4168, %v4164
        %v4473 = vpack.c.b16 %v4169, %v4165
        %v4474 = vpack.c.b16 %v4174, %v4170
        %v4475 = vpack.c.b16 %v4175, %v4171
        %v4476 = vpack.c.b16 %v4176, %v4172
        %v4477 = vpack.c.b16 %v4177, %v4173
        %v4478 = vpack.c.b16 %v4182, %v4178
        %v4479 = vpack.c.b16 %v4183, %v4179
        %v4480 = vpack.c.b16 %v4184, %v4180
        %v4481 = vpack.c.b16 %v4185, %v4181
        %v4482 = vpack.c.b16 %v4190, %v4186
        %v4483 = vpack.c.b16 %v4191, %v4187
        %v4484 = vpack.c.b16 %v4192, %v4188
        %v4485 = vpack.c.b16 %v4193, %v4189
        %v4486 = vpack.c.b16 %v4198, %v4194
        %v4487 = vpack.c.b16 %v4199, %v4195
        %v4488 = vpack.c.b16 %v4200, %v4196
        %v4489 = vpack.c.b16 %v4201, %v4197
        %v4490 = vpack.c.b16 %v4206, %v4202
        %v4491 = vpack.c.b16 %v4207, %v4203
        %v4492 = vpack.c.b16 %v4208, %v4204
        %v4493 = vpack.c.b16 %v4209, %v4205
        %v4494 = vpack.c.b16 %v4214, %v4210
        %v4495 = vpack.c.b16 %v4215, %v4211
        %v4496 = vpack.c.b16 %v4216, %v4212
        %v4497 = vpack.c.b16 %v4217, %v4213
        %v4498 = vpack.c.b16 %v4222, %v4218
        %v4499 = vpack.c.b16 %v4223, %v4219
        %v4500 = vpack.c.b16 %v4224, %v4220
        %v4501 = vpack.c.b16 %v4225, %v4221
        %v4502 = vpack.c.b16 %v4230, %v4226
        %v4503 = vpack.c.b16 %v4231, %v4227
        %v4504 = vpack.c.b16 %v4232, %v4228
        %v4505 = vpack.c.b16 %v4233, %v4229
        %v4506 = vpack.c.b16 %v4238, %v4234
        %v4507 = vpack.c.b16 %v4239, %v4235
        %v4508 = vpack.c.b16 %v4240, %v4236
        %v4509 = vpack.c.b16 %v4241, %v4237
        %v4510 = vpack.c.b16 %v4246, %v4242
        %v4511 = vpack.c.b16 %v4247, %v4243
        %v4512 = vpack.c.b16 %v4248, %v4244
        %v4513 = vpack.c.b16 %v4249, %v4245
        %v4514 = vpack.c.b16 %v4254, %v4250
        %v4515 = vpack.c.b16 %v4255, %v4251
        %v4516 = vpack.c.b16 %v4256, %v4252
        %v4517 = vpack.c.b16 %v4257, %v4253
        %v4518 = vpack.c.b16 %v4262, %v4258
        %v4519 = vpack.c.b16 %v4263, %v4259
        %v4520 = vpack.c.b16 %v4264, %v4260
        %v4521 = vpack.c.b16 %v4265, %v4261
        %4778 = vmatprep.subr.bf16.mxu0 0
        %4779 = vmatpush1.bf16.msra.mxu0 %v2442
        %4780 = vmatprep.subr.bf16.mxu0 0
        %4781 = vmatpush1.bf16.msra.mxu0 %v2443
        %4782 = vmatprep.subr.bf16.mxu0 0
        %4783 = vmatpush1.bf16.msra.mxu0 %v2444
        %4784 = vmatprep.subr.bf16.mxu0 0
        %4785 = vmatpush1.bf16.msra.mxu0 %v2445
        %4786 = vmatprep.subr.bf16.mxu0 0
        %4787 = vmatpush1.bf16.msra.mxu0 %v2446
        %4788 = vmatprep.subr.bf16.mxu0 0
        %4789 = vmatpush1.bf16.msra.mxu0 %v2447
        %4790 = vmatprep.subr.bf16.mxu0 0
        %4791 = vmatpush1.bf16.msra.mxu0 %v2448
        %4792 = vmatprep.subr.bf16.mxu0 0
        %4793 = vmatpush1.bf16.msra.mxu0 %v2449
        %4794 = vmatprep.subr.bf16.mxu0 0
        %4795 = vmatpush1.bf16.msra.mxu0 %v2450
        %4796 = vmatprep.subr.bf16.mxu0 0
        %4797 = vmatpush1.bf16.msra.mxu0 %v2451
        %4798 = vmatprep.subr.bf16.mxu0 0
        %4799 = vmatpush1.bf16.msra.mxu0 %v2452
        %4800 = vmatprep.subr.bf16.mxu0 0
        %4801 = vmatpush1.bf16.msra.mxu0 %v2453
        %4802 = vmatprep.subr.bf16.mxu0 0
        %4803 = vmatpush1.bf16.msra.mxu0 %v2454
        %4804 = vmatprep.subr.bf16.mxu0 0
        %4805 = vmatpush1.bf16.msra.mxu0 %v2455
        %4806 = vmatprep.subr.bf16.mxu0 0
        %4807 = vmatpush1.bf16.msra.mxu0 %v2456
        %4808 = vmatprep.subr.bf16.mxu0 0
        %4809 = vmatpush1.bf16.msra.mxu0 %v2457
        %4810 = vmatprep.mubr.bf16.mxu0 %v4267
        %4811 = vmatmul.mubr.bf16.gmra.mrb[0].mxu0 %v4266
        %v4812 = vpop.f32.mrb[0].mxu0
        %v4813 = vadd.f32 %v2861, %v4812
        %v4814 = vpop.f32.mrb[0].mxu0
        %v4815 = vpop.f32.mrb[0].mxu0
        %v4816 = vadd.f32 %v2866, %v4815
        %v4817 = vpop.f32.mrb[0].mxu0
        %4818 = vmatprep.mubr.bf16.mxu0 %v4271
        %4819 = vmatmul.mubr.bf16.gmra.mrb[0].mxu0 %v4270
        %v4820 = vpop.f32.mrb[0].mxu0
        %v4821 = vadd.f32 %v2871, %v4820
        %v4822 = vpop.f32.mrb[0].mxu0
        %v4823 = vpop.f32.mrb[0].mxu0
        %v4824 = vadd.f32 %v2876, %v4823
        %v4825 = vpop.f32.mrb[0].mxu0
        %4826 = vmatprep.mubr.bf16.mxu0 %v4275
        %4827 = vmatmul.mubr.bf16.gmra.mrb[0].mxu0 %v4274
        %v4828 = vpop.f32.mrb[0].mxu0
        %v4829 = vadd.f32 %v2881, %v4828
        %v4830 = vpop.f32.mrb[0].mxu0
        %v4831 = vpop.f32.mrb[0].mxu0
        %v4832 = vadd.f32 %v2886, %v4831
        %v4833 = vpop.f32.mrb[0].mxu0
        %4834 = vmatprep.mubr.bf16.mxu0 %v4279
        %4835 = vmatmul.mubr.bf16.gmra.mrb[0].mxu0 %v4278
        %v4836 = vpop.f32.mrb[0].mxu0
        %v4837 = vadd.f32 %v2891, %v4836
        %v4838 = vpop.f32.mrb[0].mxu0
        %v4839 = vpop.f32.mrb[0].mxu0
        %v4840 = vadd.f32 %v2896, %v4839
        %v4841 = vpop.f32.mrb[0].mxu0
        %4842 = vmatprep.mubr.bf16.mxu0 %v4283
        %4843 = vmatmul.mubr.bf16.gmra.mrb[0].mxu0 %v4282
        %v4844 = vpop.f32.mrb[0].mxu0
        %v4845 = vadd.f32 %v2901, %v4844
        %v4846 = vpop.f32.mrb[0].mxu0
        %v4847 = vpop.f32.mrb[0].mxu0
        %v4848 = vadd.f32 %v2906, %v4847
        %v4849 = vpop.f32.mrb[0].mxu0
        %4850 = vmatprep.mubr.bf16.mxu0 %v4287
        %4851 = vmatmul.mubr.bf16.gmra.mrb[0].mxu0 %v4286
        %v4852 = vpop.f32.mrb[0].mxu0
        %v4853 = vadd.f32 %v2911, %v4852
        %v4854 = vpop.f32.mrb[0].mxu0
        %v4855 = vpop.f32.mrb[0].mxu0
        %v4856 = vadd.f32 %v2916, %v4855
        %v4857 = vpop.f32.mrb[0].mxu0
        %4858 = vmatprep.mubr.bf16.mxu0 %v4291
        %4859 = vmatmul.mubr.bf16.gmra.mrb[0].mxu0 %v4290
        %v4860 = vpop.f32.mrb[0].mxu0
        %v4861 = vadd.f32 %v2921, %v4860
        %v4862 = vpop.f32.mrb[0].mxu0
        %v4863 = vpop.f32.mrb[0].mxu0
        %v4864 = vadd.f32 %v2926, %v4863
        %v4865 = vpop.f32.mrb[0].mxu0
        %4866 = vmatprep.mubr.bf16.mxu0 %v4295
        %4867 = vmatmul.mubr.bf16.gmra.mrb[0].mxu0 %v4294
        %v4868 = vpop.f32.mrb[0].mxu0
        %v4869 = vadd.f32 %v2931, %v4868
        %v4870 = vpop.f32.mrb[0].mxu0
        %v4871 = vpop.f32.mrb[0].mxu0
        %v4872 = vadd.f32 %v2936, %v4871
        %v4873 = vpop.f32.mrb[0].mxu0
        %4874 = vmatprep.mubr.bf16.mxu0 %v4299
        %4875 = vmatmul.mubr.bf16.gmra.mrb[0].mxu0 %v4298
        %v4876 = vpop.f32.mrb[0].mxu0
        %v4877 = vadd.f32 %v2941, %v4876
        %v4878 = vpop.f32.mrb[0].mxu0
        %v4879 = vpop.f32.mrb[0].mxu0
        %v4880 = vadd.f32 %v2946, %v4879
        %v4881 = vpop.f32.mrb[0].mxu0
        %4882 = vmatprep.mubr.bf16.mxu0 %v4303
        %4883 = vmatmul.mubr.bf16.gmra.mrb[0].mxu0 %v4302
        %v4884 = vpop.f32.mrb[0].mxu0
        %v4885 = vadd.f32 %v2951, %v4884
        %v4886 = vpop.f32.mrb[0].mxu0
        %v4887 = vpop.f32.mrb[0].mxu0
        %v4888 = vadd.f32 %v2956, %v4887
        %v4889 = vpop.f32.mrb[0].mxu0
        %4890 = vmatprep.mubr.bf16.mxu0 %v4307
        %4891 = vmatmul.mubr.bf16.gmra.mrb[0].mxu0 %v4306
        %v4892 = vpop.f32.mrb[0].mxu0
        %v4893 = vadd.f32 %v2961, %v4892
        %v4894 = vpop.f32.mrb[0].mxu0
        %v4895 = vpop.f32.mrb[0].mxu0
        %v4896 = vadd.f32 %v2966, %v4895
        %v4897 = vpop.f32.mrb[0].mxu0
        %4898 = vmatprep.mubr.bf16.mxu0 %v4311
        %4899 = vmatmul.mubr.bf16.gmra.mrb[0].mxu0 %v4310
        %v4900 = vpop.f32.mrb[0].mxu0
        %v4901 = vadd.f32 %v2971, %v4900
        %v4902 = vpop.f32.mrb[0].mxu0
        %v4903 = vpop.f32.mrb[0].mxu0
        %v4904 = vadd.f32 %v2976, %v4903
        %v4905 = vpop.f32.mrb[0].mxu0
        %4906 = vmatprep.mubr.bf16.mxu0 %v4315
        %4907 = vmatmul.mubr.bf16.gmra.mrb[0].mxu0 %v4314
        %v4908 = vpop.f32.mrb[0].mxu0
        %v4909 = vadd.f32 %v2981, %v4908
        %v4910 = vpop.f32.mrb[0].mxu0
        %v4911 = vpop.f32.mrb[0].mxu0
        %v4912 = vadd.f32 %v2986, %v4911
        %v4913 = vpop.f32.mrb[0].mxu0
        %4914 = vmatprep.mubr.bf16.mxu0 %v4319
        %4915 = vmatmul.mubr.bf16.gmra.mrb[0].mxu0 %v4318
        %v4916 = vpop.f32.mrb[0].mxu0
        %v4917 = vadd.f32 %v2991, %v4916
        %v4918 = vpop.f32.mrb[0].mxu0
        %v4919 = vpop.f32.mrb[0].mxu0
        %v4920 = vadd.f32 %v2996, %v4919
        %v4921 = vpop.f32.mrb[0].mxu0
        %4922 = vmatprep.mubr.bf16.mxu0 %v4323
        %4923 = vmatmul.mubr.bf16.gmra.mrb[0].mxu0 %v4322
        %v4924 = vpop.f32.mrb[0].mxu0
        %v4925 = vadd.f32 %v3001, %v4924
        %v4926 = vpop.f32.mrb[0].mxu0
        %v4927 = vpop.f32.mrb[0].mxu0
        %v4928 = vadd.f32 %v3006, %v4927
        %v4929 = vpop.f32.mrb[0].mxu0
        %4930 = vmatprep.mubr.bf16.mxu0 %v4327
        %4931 = vmatmul.mubr.bf16.gmra.mrb[0].mxu0 %v4326
        %v4932 = vpop.f32.mrb[0].mxu0
        %v4933 = vadd.f32 %v3011, %v4932
        %v4934 = vpop.f32.mrb[0].mxu0
        %v4935 = vpop.f32.mrb[0].mxu0
        %v4936 = vadd.f32 %v3016, %v4935
        %v4937 = vpop.f32.mrb[0].mxu0
        %4938 = vmatprep.mubr.bf16.mxu0 %v4331
        %4939 = vmatmul.mubr.bf16.gmra.mrb[0].mxu0 %v4330
        %v4940 = vpop.f32.mrb[0].mxu0
        %v4941 = vadd.f32 %v3021, %v4940
        %v4942 = vpop.f32.mrb[0].mxu0
        %v4943 = vpop.f32.mrb[0].mxu0
        %v4944 = vadd.f32 %v3026, %v4943
        %v4945 = vpop.f32.mrb[0].mxu0
        %4946 = vmatprep.mubr.bf16.mxu0 %v4335
        %4947 = vmatmul.mubr.bf16.gmra.mrb[0].mxu0 %v4334
        %v4948 = vpop.f32.mrb[0].mxu0
        %v4949 = vadd.f32 %v3031, %v4948
        %v4950 = vpop.f32.mrb[0].mxu0
        %v4951 = vpop.f32.mrb[0].mxu0
        %v4952 = vadd.f32 %v3036, %v4951
        %v4953 = vpop.f32.mrb[0].mxu0
        %4954 = vmatprep.mubr.bf16.mxu0 %v4339
        %4955 = vmatmul.mubr.bf16.gmra.mrb[0].mxu0 %v4338
        %v4956 = vpop.f32.mrb[0].mxu0
        %v4957 = vadd.f32 %v3041, %v4956
        %v4958 = vpop.f32.mrb[0].mxu0
        %v4959 = vpop.f32.mrb[0].mxu0
        %v4960 = vadd.f32 %v3046, %v4959
        %v4961 = vpop.f32.mrb[0].mxu0
        %4962 = vmatprep.mubr.bf16.mxu0 %v4343
        %4963 = vmatmul.mubr.bf16.gmra.mrb[0].mxu0 %v4342
        %v4964 = vpop.f32.mrb[0].mxu0
        %v4965 = vadd.f32 %v3051, %v4964
        %v4966 = vpop.f32.mrb[0].mxu0
        %v4967 = vpop.f32.mrb[0].mxu0
        %v4968 = vadd.f32 %v3056, %v4967
        %v4969 = vpop.f32.mrb[0].mxu0
        %4970 = vmatprep.mubr.bf16.mxu0 %v4347
        %4971 = vmatmul.mubr.bf16.gmra.mrb[0].mxu0 %v4346
        %v4972 = vpop.f32.mrb[0].mxu0
        %v4973 = vadd.f32 %v3061, %v4972
        %v4974 = vpop.f32.mrb[0].mxu0
        %v4975 = vpop.f32.mrb[0].mxu0
        %v4976 = vadd.f32 %v3066, %v4975
        %v4977 = vpop.f32.mrb[0].mxu0
        %4978 = vmatprep.mubr.bf16.mxu0 %v4351
        %4979 = vmatmul.mubr.bf16.gmra.mrb[0].mxu0 %v4350
        %v4980 = vpop.f32.mrb[0].mxu0
        %v4981 = vadd.f32 %v3071, %v4980
        %v4982 = vpop.f32.mrb[0].mxu0
        %v4983 = vpop.f32.mrb[0].mxu0
        %v4984 = vadd.f32 %v3076, %v4983
        %v4985 = vpop.f32.mrb[0].mxu0
        %4986 = vmatprep.mubr.bf16.mxu0 %v4355
        %4987 = vmatmul.mubr.bf16.gmra.mrb[0].mxu0 %v4354
        %v4988 = vpop.f32.mrb[0].mxu0
        %v4989 = vadd.f32 %v3081, %v4988
        %v4990 = vpop.f32.mrb[0].mxu0
        %v4991 = vpop.f32.mrb[0].mxu0
        %v4992 = vadd.f32 %v3086, %v4991
        %v4993 = vpop.f32.mrb[0].mxu0
        %4994 = vmatprep.mubr.bf16.mxu0 %v4359
        %4995 = vmatmul.mubr.bf16.gmra.mrb[0].mxu0 %v4358
        %v4996 = vpop.f32.mrb[0].mxu0
        %v4997 = vadd.f32 %v3091, %v4996
        %v4998 = vpop.f32.mrb[0].mxu0
        %v4999 = vpop.f32.mrb[0].mxu0
        %v5000 = vadd.f32 %v3096, %v4999
        %v5001 = vpop.f32.mrb[0].mxu0
        %5002 = vmatprep.mubr.bf16.mxu0 %v4363
        %5003 = vmatmul.mubr.bf16.gmra.mrb[0].mxu0 %v4362
        %v5004 = vpop.f32.mrb[0].mxu0
        %v5005 = vadd.f32 %v3101, %v5004
        %v5006 = vpop.f32.mrb[0].mxu0
        %v5007 = vpop.f32.mrb[0].mxu0
        %v5008 = vadd.f32 %v3106, %v5007
        %v5009 = vpop.f32.mrb[0].mxu0
        %5010 = vmatprep.mubr.bf16.mxu0 %v4367
        %5011 = vmatmul.mubr.bf16.gmra.mrb[0].mxu0 %v4366
        %v5012 = vpop.f32.mrb[0].mxu0
        %v5013 = vadd.f32 %v3111, %v5012
        %v5014 = vpop.f32.mrb[0].mxu0
        %v5015 = vpop.f32.mrb[0].mxu0
        %v5016 = vadd.f32 %v3116, %v5015
        %v5017 = vpop.f32.mrb[0].mxu0
        %5018 = vmatprep.mubr.bf16.mxu0 %v4371
        %5019 = vmatmul.mubr.bf16.gmra.mrb[0].mxu0 %v4370
        %v5020 = vpop.f32.mrb[0].mxu0
        %v5021 = vadd.f32 %v3121, %v5020
        %v5022 = vpop.f32.mrb[0].mxu0
        %v5023 = vpop.f32.mrb[0].mxu0
        %v5024 = vadd.f32 %v3126, %v5023
        %v5025 = vpop.f32.mrb[0].mxu0
        %5026 = vmatprep.mubr.bf16.mxu0 %v4375
        %5027 = vmatmul.mubr.bf16.gmra.mrb[0].mxu0 %v4374
        %v5028 = vpop.f32.mrb[0].mxu0
        %v5029 = vadd.f32 %v3131, %v5028
        %v5030 = vpop.f32.mrb[0].mxu0
        %v5031 = vpop.f32.mrb[0].mxu0
        %v5032 = vadd.f32 %v3136, %v5031
        %v5033 = vpop.f32.mrb[0].mxu0
        %5034 = vmatprep.mubr.bf16.mxu0 %v4379
        %5035 = vmatmul.mubr.bf16.gmra.mrb[0].mxu0 %v4378
        %v5036 = vpop.f32.mrb[0].mxu0
        %v5037 = vadd.f32 %v3141, %v5036
        %v5038 = vpop.f32.mrb[0].mxu0
        %v5039 = vpop.f32.mrb[0].mxu0
        %v5040 = vadd.f32 %v3146, %v5039
        %v5041 = vpop.f32.mrb[0].mxu0
        %5042 = vmatprep.mubr.bf16.mxu0 %v4383
        %5043 = vmatmul.mubr.bf16.gmra.mrb[0].mxu0 %v4382
        %v5044 = vpop.f32.mrb[0].mxu0
        %v5045 = vadd.f32 %v3151, %v5044
        %v5046 = vpop.f32.mrb[0].mxu0
        %v5047 = vpop.f32.mrb[0].mxu0
        %v5048 = vadd.f32 %v3156, %v5047
        %v5049 = vpop.f32.mrb[0].mxu0
        %5050 = vmatprep.mubr.bf16.mxu0 %v4387
        %5051 = vmatmul.mubr.bf16.gmra.mrb[0].mxu0 %v4386
        %v5052 = vpop.f32.mrb[0].mxu0
        %v5053 = vadd.f32 %v3161, %v5052
        %v5054 = vpop.f32.mrb[0].mxu0
        %v5055 = vpop.f32.mrb[0].mxu0
        %v5056 = vadd.f32 %v3166, %v5055
        %v5057 = vpop.f32.mrb[0].mxu0
        %5058 = vmatprep.mubr.bf16.mxu0 %v4391
        %5059 = vmatmul.mubr.bf16.gmra.mrb[0].mxu0 %v4390
        %v5060 = vpop.f32.mrb[0].mxu0
        %v5061 = vadd.f32 %v3171, %v5060
        %v5062 = vpop.f32.mrb[0].mxu0
        %v5063 = vpop.f32.mrb[0].mxu0
        %v5064 = vadd.f32 %v3176, %v5063
        %v5065 = vpop.f32.mrb[0].mxu0
        %5066 = vmatprep.mubr.bf16.mxu0 %v4395
        %5067 = vmatmul.mubr.bf16.gmra.mrb[0].mxu0 %v4394
        %v5068 = vpop.f32.mrb[0].mxu0
        %v5069 = vadd.f32 %v3181, %v5068
        %v5070 = vpop.f32.mrb[0].mxu0
        %v5071 = vpop.f32.mrb[0].mxu0
        %v5072 = vadd.f32 %v3186, %v5071
        %v5073 = vpop.f32.mrb[0].mxu0
        %5074 = vmatprep.mubr.bf16.mxu0 %v4399
        %5075 = vmatmul.mubr.bf16.gmra.mrb[0].mxu0 %v4398
        %v5076 = vpop.f32.mrb[0].mxu0
        %v5077 = vadd.f32 %v3191, %v5076
        %v5078 = vpop.f32.mrb[0].mxu0
        %v5079 = vpop.f32.mrb[0].mxu0
        %v5080 = vadd.f32 %v3196, %v5079
        %v5081 = vpop.f32.mrb[0].mxu0
        %5082 = vmatprep.mubr.bf16.mxu0 %v4403
        %5083 = vmatmul.mubr.bf16.gmra.mrb[0].mxu0 %v4402
        %v5084 = vpop.f32.mrb[0].mxu0
        %v5085 = vadd.f32 %v3201, %v5084
        %v5086 = vpop.f32.mrb[0].mxu0
        %v5087 = vpop.f32.mrb[0].mxu0
        %v5088 = vadd.f32 %v3206, %v5087
        %v5089 = vpop.f32.mrb[0].mxu0
        %5090 = vmatprep.mubr.bf16.mxu0 %v4407
        %5091 = vmatmul.mubr.bf16.gmra.mrb[0].mxu0 %v4406
        %v5092 = vpop.f32.mrb[0].mxu0
        %v5093 = vadd.f32 %v3211, %v5092
        %v5094 = vpop.f32.mrb[0].mxu0
        %v5095 = vpop.f32.mrb[0].mxu0
        %v5096 = vadd.f32 %v3216, %v5095
        %v5097 = vpop.f32.mrb[0].mxu0
        %5098 = vmatprep.mubr.bf16.mxu0 %v4411
        %5099 = vmatmul.mubr.bf16.gmra.mrb[0].mxu0 %v4410
        %v5100 = vpop.f32.mrb[0].mxu0
        %v5101 = vadd.f32 %v3221, %v5100
        %v5102 = vpop.f32.mrb[0].mxu0
        %v5103 = vpop.f32.mrb[0].mxu0
        %v5104 = vadd.f32 %v3226, %v5103
        %v5105 = vpop.f32.mrb[0].mxu0
        %5106 = vmatprep.mubr.bf16.mxu0 %v4415
        %5107 = vmatmul.mubr.bf16.gmra.mrb[0].mxu0 %v4414
        %v5108 = vpop.f32.mrb[0].mxu0
        %v5109 = vadd.f32 %v3231, %v5108
        %v5110 = vpop.f32.mrb[0].mxu0
        %v5111 = vpop.f32.mrb[0].mxu0
        %v5112 = vadd.f32 %v3236, %v5111
        %v5113 = vpop.f32.mrb[0].mxu0
        %5114 = vmatprep.mubr.bf16.mxu0 %v4419
        %5115 = vmatmul.mubr.bf16.gmra.mrb[0].mxu0 %v4418
        %v5116 = vpop.f32.mrb[0].mxu0
        %v5117 = vadd.f32 %v3241, %v5116
        %v5118 = vpop.f32.mrb[0].mxu0
        %v5119 = vpop.f32.mrb[0].mxu0
        %v5120 = vadd.f32 %v3246, %v5119
        %v5121 = vpop.f32.mrb[0].mxu0
        %5122 = vmatprep.mubr.bf16.mxu0 %v4423
        %5123 = vmatmul.mubr.bf16.gmra.mrb[0].mxu0 %v4422
        %v5124 = vpop.f32.mrb[0].mxu0
        %v5125 = vadd.f32 %v3251, %v5124
        %v5126 = vpop.f32.mrb[0].mxu0
        %v5127 = vpop.f32.mrb[0].mxu0
        %v5128 = vadd.f32 %v3256, %v5127
        %v5129 = vpop.f32.mrb[0].mxu0
        %5130 = vmatprep.mubr.bf16.mxu0 %v4427
        %5131 = vmatmul.mubr.bf16.gmra.mrb[0].mxu0 %v4426
        %v5132 = vpop.f32.mrb[0].mxu0
        %v5133 = vadd.f32 %v3261, %v5132
        %v5134 = vpop.f32.mrb[0].mxu0
        %v5135 = vpop.f32.mrb[0].mxu0
        %v5136 = vadd.f32 %v3266, %v5135
        %v5137 = vpop.f32.mrb[0].mxu0
        %5138 = vmatprep.mubr.bf16.mxu0 %v4431
        %5139 = vmatmul.mubr.bf16.gmra.mrb[0].mxu0 %v4430
        %v5140 = vpop.f32.mrb[0].mxu0
        %v5141 = vadd.f32 %v3271, %v5140
        %v5142 = vpop.f32.mrb[0].mxu0
        %v5143 = vpop.f32.mrb[0].mxu0
        %v5144 = vadd.f32 %v3276, %v5143
        %v5145 = vpop.f32.mrb[0].mxu0
        %5146 = vmatprep.mubr.bf16.mxu0 %v4435
        %5147 = vmatmul.mubr.bf16.gmra.mrb[0].mxu0 %v4434
        %v5148 = vpop.f32.mrb[0].mxu0
        %v5149 = vadd.f32 %v3281, %v5148
        %v5150 = vpop.f32.mrb[0].mxu0
        %v5151 = vpop.f32.mrb[0].mxu0
        %v5152 = vadd.f32 %v3286, %v5151
        %v5153 = vpop.f32.mrb[0].mxu0
        %5154 = vmatprep.mubr.bf16.mxu0 %v4439
        %5155 = vmatmul.mubr.bf16.gmra.mrb[0].mxu0 %v4438
        %v5156 = vpop.f32.mrb[0].mxu0
        %v5157 = vadd.f32 %v3291, %v5156
        %v5158 = vpop.f32.mrb[0].mxu0
        %v5159 = vpop.f32.mrb[0].mxu0
        %v5160 = vadd.f32 %v3296, %v5159
        %v5161 = vpop.f32.mrb[0].mxu0
        %5162 = vmatprep.mubr.bf16.mxu0 %v4443
        %5163 = vmatmul.mubr.bf16.gmra.mrb[0].mxu0 %v4442
        %v5164 = vpop.f32.mrb[0].mxu0
        %v5165 = vadd.f32 %v3301, %v5164
        %v5166 = vpop.f32.mrb[0].mxu0
        %v5167 = vpop.f32.mrb[0].mxu0
        %v5168 = vadd.f32 %v3306, %v5167
        %v5169 = vpop.f32.mrb[0].mxu0
        %5170 = vmatprep.mubr.bf16.mxu0 %v4447
        %5171 = vmatmul.mubr.bf16.gmra.mrb[0].mxu0 %v4446
        %v5172 = vpop.f32.mrb[0].mxu0
        %v5173 = vadd.f32 %v3311, %v5172
        %v5174 = vpop.f32.mrb[0].mxu0
        %v5175 = vpop.f32.mrb[0].mxu0
        %v5176 = vadd.f32 %v3316, %v5175
        %v5177 = vpop.f32.mrb[0].mxu0
        %5178 = vmatprep.mubr.bf16.mxu0 %v4451
        %5179 = vmatmul.mubr.bf16.gmra.mrb[0].mxu0 %v4450
        %v5180 = vpop.f32.mrb[0].mxu0
        %v5181 = vadd.f32 %v3321, %v5180
        %v5182 = vpop.f32.mrb[0].mxu0
        %v5183 = vpop.f32.mrb[0].mxu0
        %v5184 = vadd.f32 %v3326, %v5183
        %v5185 = vpop.f32.mrb[0].mxu0
        %5186 = vmatprep.mubr.bf16.mxu0 %v4455
        %5187 = vmatmul.mubr.bf16.gmra.mrb[0].mxu0 %v4454
        %v5188 = vpop.f32.mrb[0].mxu0
        %v5189 = vadd.f32 %v3331, %v5188
        %v5190 = vpop.f32.mrb[0].mxu0
        %v5191 = vpop.f32.mrb[0].mxu0
        %v5192 = vadd.f32 %v3336, %v5191
        %v5193 = vpop.f32.mrb[0].mxu0
        %5194 = vmatprep.mubr.bf16.mxu0 %v4459
        %5195 = vmatmul.mubr.bf16.gmra.mrb[0].mxu0 %v4458
        %v5196 = vpop.f32.mrb[0].mxu0
        %v5197 = vadd.f32 %v3341, %v5196
        %v5198 = vpop.f32.mrb[0].mxu0
        %v5199 = vpop.f32.mrb[0].mxu0
        %v5200 = vadd.f32 %v3346, %v5199
        %v5201 = vpop.f32.mrb[0].mxu0
        %5202 = vmatprep.mubr.bf16.mxu0 %v4463
        %5203 = vmatmul.mubr.bf16.gmra.mrb[0].mxu0 %v4462
        %v5204 = vpop.f32.mrb[0].mxu0
        %v5205 = vadd.f32 %v3351, %v5204
        %v5206 = vpop.f32.mrb[0].mxu0
        %v5207 = vpop.f32.mrb[0].mxu0
        %v5208 = vadd.f32 %v3356, %v5207
        %v5209 = vpop.f32.mrb[0].mxu0
        %5210 = vmatprep.mubr.bf16.mxu0 %v4467
        %5211 = vmatmul.mubr.bf16.gmra.mrb[0].mxu0 %v4466
        %v5212 = vpop.f32.mrb[0].mxu0
        %v5213 = vadd.f32 %v3361, %v5212
        %v5214 = vpop.f32.mrb[0].mxu0
        %v5215 = vpop.f32.mrb[0].mxu0
        %v5216 = vadd.f32 %v3366, %v5215
        %v5217 = vpop.f32.mrb[0].mxu0
        %5218 = vmatprep.mubr.bf16.mxu0 %v4471
        %5219 = vmatmul.mubr.bf16.gmra.mrb[0].mxu0 %v4470
        %v5220 = vpop.f32.mrb[0].mxu0
        %v5221 = vadd.f32 %v3371, %v5220
        %v5222 = vpop.f32.mrb[0].mxu0
        %v5223 = vpop.f32.mrb[0].mxu0
        %v5224 = vadd.f32 %v3376, %v5223
        %v5225 = vpop.f32.mrb[0].mxu0
        %5226 = vmatprep.mubr.bf16.mxu0 %v4475
        %5227 = vmatmul.mubr.bf16.gmra.mrb[0].mxu0 %v4474
        %v5228 = vpop.f32.mrb[0].mxu0
        %v5229 = vadd.f32 %v3381, %v5228
        %v5230 = vpop.f32.mrb[0].mxu0
        %v5231 = vpop.f32.mrb[0].mxu0
        %v5232 = vadd.f32 %v3386, %v5231
        %v5233 = vpop.f32.mrb[0].mxu0
        %5234 = vmatprep.mubr.bf16.mxu0 %v4479
        %5235 = vmatmul.mubr.bf16.gmra.mrb[0].mxu0 %v4478
        %v5236 = vpop.f32.mrb[0].mxu0
        %v5237 = vadd.f32 %v3391, %v5236
        %v5238 = vpop.f32.mrb[0].mxu0
        %v5239 = vpop.f32.mrb[0].mxu0
        %v5240 = vadd.f32 %v3396, %v5239
        %v5241 = vpop.f32.mrb[0].mxu0
        %5242 = vmatprep.mubr.bf16.mxu0 %v4483
        %5243 = vmatmul.mubr.bf16.gmra.mrb[0].mxu0 %v4482
        %v5244 = vpop.f32.mrb[0].mxu0
        %v5245 = vadd.f32 %v3401, %v5244
        %v5246 = vpop.f32.mrb[0].mxu0
        %v5247 = vpop.f32.mrb[0].mxu0
        %v5248 = vadd.f32 %v3406, %v5247
        %v5249 = vpop.f32.mrb[0].mxu0
        %5250 = vmatprep.mubr.bf16.mxu0 %v4487
        %5251 = vmatmul.mubr.bf16.gmra.mrb[0].mxu0 %v4486
        %v5252 = vpop.f32.mrb[0].mxu0
        %v5253 = vadd.f32 %v3411, %v5252
        %v5254 = vpop.f32.mrb[0].mxu0
        %v5255 = vpop.f32.mrb[0].mxu0
        %v5256 = vadd.f32 %v3416, %v5255
        %v5257 = vpop.f32.mrb[0].mxu0
        %5258 = vmatprep.mubr.bf16.mxu0 %v4491
        %5259 = vmatmul.mubr.bf16.gmra.mrb[0].mxu0 %v4490
        %v5260 = vpop.f32.mrb[0].mxu0
        %v5261 = vadd.f32 %v3421, %v5260
        %v5262 = vpop.f32.mrb[0].mxu0
        %v5263 = vpop.f32.mrb[0].mxu0
        %v5264 = vadd.f32 %v3426, %v5263
        %v5265 = vpop.f32.mrb[0].mxu0
        %5266 = vmatprep.mubr.bf16.mxu0 %v4495
        %5267 = vmatmul.mubr.bf16.gmra.mrb[0].mxu0 %v4494
        %v5268 = vpop.f32.mrb[0].mxu0
        %v5269 = vadd.f32 %v3431, %v5268
        %v5270 = vpop.f32.mrb[0].mxu0
        %v5271 = vpop.f32.mrb[0].mxu0
        %v5272 = vadd.f32 %v3436, %v5271
        %v5273 = vpop.f32.mrb[0].mxu0
        %5274 = vmatprep.mubr.bf16.mxu0 %v4499
        %5275 = vmatmul.mubr.bf16.gmra.mrb[0].mxu0 %v4498
        %v5276 = vpop.f32.mrb[0].mxu0
        %v5277 = vadd.f32 %v3441, %v5276
        %v5278 = vpop.f32.mrb[0].mxu0
        %v5279 = vpop.f32.mrb[0].mxu0
        %v5280 = vadd.f32 %v3446, %v5279
        %v5281 = vpop.f32.mrb[0].mxu0
        %5282 = vmatprep.mubr.bf16.mxu0 %v4503
        %5283 = vmatmul.mubr.bf16.gmra.mrb[0].mxu0 %v4502
        %v5284 = vpop.f32.mrb[0].mxu0
        %v5285 = vadd.f32 %v3451, %v5284
        %v5286 = vpop.f32.mrb[0].mxu0
        %v5287 = vpop.f32.mrb[0].mxu0
        %v5288 = vadd.f32 %v3456, %v5287
        %v5289 = vpop.f32.mrb[0].mxu0
        %5290 = vmatprep.mubr.bf16.mxu0 %v4507
        %5291 = vmatmul.mubr.bf16.gmra.mrb[0].mxu0 %v4506
        %v5292 = vpop.f32.mrb[0].mxu0
        %v5293 = vadd.f32 %v3461, %v5292
        %v5294 = vpop.f32.mrb[0].mxu0
        %v5295 = vpop.f32.mrb[0].mxu0
        %v5296 = vadd.f32 %v3466, %v5295
        %v5297 = vpop.f32.mrb[0].mxu0
        %5298 = vmatprep.mubr.bf16.mxu0 %v4511
        %5299 = vmatmul.mubr.bf16.gmra.mrb[0].mxu0 %v4510
        %v5300 = vpop.f32.mrb[0].mxu0
        %v5301 = vadd.f32 %v3471, %v5300
        %v5302 = vpop.f32.mrb[0].mxu0
        %v5303 = vpop.f32.mrb[0].mxu0
        %v5304 = vadd.f32 %v3476, %v5303
        %v5305 = vpop.f32.mrb[0].mxu0
        %5306 = vmatprep.mubr.bf16.mxu0 %v4515
        %5307 = vmatmul.mubr.bf16.gmra.mrb[0].mxu0 %v4514
        %v5308 = vpop.f32.mrb[0].mxu0
        %v5309 = vadd.f32 %v3481, %v5308
        %v5310 = vpop.f32.mrb[0].mxu0
        %v5311 = vpop.f32.mrb[0].mxu0
        %v5312 = vadd.f32 %v3486, %v5311
        %v5313 = vpop.f32.mrb[0].mxu0
        %5314 = vmatprep.mubr.bf16.mxu0 %v4519
        %5315 = vmatmul.mubr.bf16.gmra.mrb[0].mxu0 %v4518
        %v5316 = vpop.f32.mrb[0].mxu0
        %v5317 = vadd.f32 %v3491, %v5316
        %v5318 = vpop.f32.mrb[0].mxu0
        %v5319 = vpop.f32.mrb[0].mxu0
        %v5320 = vadd.f32 %v3496, %v5319
        %v5321 = vpop.f32.mrb[0].mxu0
        %5322 = vdwg.mxu0
        %5323 = vmatprep.subr.bf16.mxu0 0
        %5324 = vmatpush1.bf16.msra.mxu0 %v2458
        %5325 = vmatprep.subr.bf16.mxu0 0
        %5326 = vmatpush1.bf16.msra.mxu0 %v2459
        %5327 = vmatprep.subr.bf16.mxu0 0
        %5328 = vmatpush1.bf16.msra.mxu0 %v2460
        %5329 = vmatprep.subr.bf16.mxu0 0
        %5330 = vmatpush1.bf16.msra.mxu0 %v2461
        %5331 = vmatprep.subr.bf16.mxu0 0
        %5332 = vmatpush1.bf16.msra.mxu0 %v2462
        %5333 = vmatprep.subr.bf16.mxu0 0
        %5334 = vmatpush1.bf16.msra.mxu0 %v2463
        %5335 = vmatprep.subr.bf16.mxu0 0
        %5336 = vmatpush1.bf16.msra.mxu0 %v2464
        %5337 = vmatprep.subr.bf16.mxu0 0
        %5338 = vmatpush1.bf16.msra.mxu0 %v2465
        %5339 = vmatprep.subr.bf16.mxu0 0
        %5340 = vmatpush1.bf16.msra.mxu0 %v2466
        %5341 = vmatprep.subr.bf16.mxu0 0
        %5342 = vmatpush1.bf16.msra.mxu0 %v2467
        %5343 = vmatprep.subr.bf16.mxu0 0
        %5344 = vmatpush1.bf16.msra.mxu0 %v2468
        %5345 = vmatprep.subr.bf16.mxu0 0
        %5346 = vmatpush1.bf16.msra.mxu0 %v2469
        %5347 = vmatprep.subr.bf16.mxu0 0
        %5348 = vmatpush1.bf16.msra.mxu0 %v2470
        %5349 = vmatprep.subr.bf16.mxu0 0
        %5350 = vmatpush1.bf16.msra.mxu0 %v2471
        %5351 = vmatprep.subr.bf16.mxu0 0
        %5352 = vmatpush1.bf16.msra.mxu0 %v2472
        %5353 = vmatprep.subr.bf16.mxu0 0
        %5354 = vmatpush1.bf16.msra.mxu0 %v2473
        %5355 = vmatprep.mubr.bf16.mxu0 %v4269
        %5356 = vmatmul.mubr.bf16.gmra.mrb[0].mxu0 %v4268
        %v5357 = vpop.f32.mrb[0].mxu0
        %v5358 = vadd.f32 %v4813, %v5357
        %v5359 = vpop.f32.mrb[0].mxu0
        %v5360 = vpop.f32.mrb[0].mxu0
        %v5361 = vadd.f32 %v4816, %v5360
        %v5362 = vpop.f32.mrb[0].mxu0
        %5363 = vmatprep.mubr.bf16.mxu0 %v4273
        %5364 = vmatmul.mubr.bf16.gmra.mrb[0].mxu0 %v4272
        %v5365 = vpop.f32.mrb[0].mxu0
        %v5366 = vadd.f32 %v4821, %v5365
        %v5367 = vpop.f32.mrb[0].mxu0
        %v5368 = vpop.f32.mrb[0].mxu0
        %v5369 = vadd.f32 %v4824, %v5368
        %v5370 = vpop.f32.mrb[0].mxu0
        %5371 = vmatprep.mubr.bf16.mxu0 %v4277
        %5372 = vmatmul.mubr.bf16.gmra.mrb[0].mxu0 %v4276
        %v5373 = vpop.f32.mrb[0].mxu0
        %v5374 = vadd.f32 %v4829, %v5373
        %v5375 = vpop.f32.mrb[0].mxu0
        %v5376 = vpop.f32.mrb[0].mxu0
        %v5377 = vadd.f32 %v4832, %v5376
        %v5378 = vpop.f32.mrb[0].mxu0
        %5379 = vmatprep.mubr.bf16.mxu0 %v4281
        %5380 = vmatmul.mubr.bf16.gmra.mrb[0].mxu0 %v4280
        %v5381 = vpop.f32.mrb[0].mxu0
        %v5382 = vadd.f32 %v4837, %v5381
        %v5383 = vpop.f32.mrb[0].mxu0
        %v5384 = vpop.f32.mrb[0].mxu0
        %v5385 = vadd.f32 %v4840, %v5384
        %v5386 = vpop.f32.mrb[0].mxu0
        %5387 = vmatprep.mubr.bf16.mxu0 %v4285
        %5388 = vmatmul.mubr.bf16.gmra.mrb[0].mxu0 %v4284
        %v5389 = vpop.f32.mrb[0].mxu0
        %v5390 = vadd.f32 %v4845, %v5389
        %v5391 = vpop.f32.mrb[0].mxu0
        %v5392 = vpop.f32.mrb[0].mxu0
        %v5393 = vadd.f32 %v4848, %v5392
        %v5394 = vpop.f32.mrb[0].mxu0
        %5395 = vmatprep.mubr.bf16.mxu0 %v4289
        %5396 = vmatmul.mubr.bf16.gmra.mrb[0].mxu0 %v4288
        %v5397 = vpop.f32.mrb[0].mxu0
        %v5398 = vadd.f32 %v4853, %v5397
        %v5399 = vpop.f32.mrb[0].mxu0
        %v5400 = vpop.f32.mrb[0].mxu0
        %v5401 = vadd.f32 %v4856, %v5400
        %v5402 = vpop.f32.mrb[0].mxu0
        %5403 = vmatprep.mubr.bf16.mxu0 %v4293
        %5404 = vmatmul.mubr.bf16.gmra.mrb[0].mxu0 %v4292
        %v5405 = vpop.f32.mrb[0].mxu0
        %v5406 = vadd.f32 %v4861, %v5405
        %v5407 = vpop.f32.mrb[0].mxu0
        %v5408 = vpop.f32.mrb[0].mxu0
        %v5409 = vadd.f32 %v4864, %v5408
        %v5410 = vpop.f32.mrb[0].mxu0
        %5411 = vmatprep.mubr.bf16.mxu0 %v4297
        %5412 = vmatmul.mubr.bf16.gmra.mrb[0].mxu0 %v4296
        %v5413 = vpop.f32.mrb[0].mxu0
        %v5414 = vadd.f32 %v4869, %v5413
        %v5415 = vpop.f32.mrb[0].mxu0
        %v5416 = vpop.f32.mrb[0].mxu0
        %v5417 = vadd.f32 %v4872, %v5416
        %v5418 = vpop.f32.mrb[0].mxu0
        %5419 = vmatprep.mubr.bf16.mxu0 %v4301
        %5420 = vmatmul.mubr.bf16.gmra.mrb[0].mxu0 %v4300
        %v5421 = vpop.f32.mrb[0].mxu0
        %v5422 = vadd.f32 %v4877, %v5421
        %v5423 = vpop.f32.mrb[0].mxu0
        %v5424 = vpop.f32.mrb[0].mxu0
        %v5425 = vadd.f32 %v4880, %v5424
        %v5426 = vpop.f32.mrb[0].mxu0
        %5427 = vmatprep.mubr.bf16.mxu0 %v4305
        %5428 = vmatmul.mubr.bf16.gmra.mrb[0].mxu0 %v4304
        %v5429 = vpop.f32.mrb[0].mxu0
        %v5430 = vadd.f32 %v4885, %v5429
        %v5431 = vpop.f32.mrb[0].mxu0
        %v5432 = vpop.f32.mrb[0].mxu0
        %v5433 = vadd.f32 %v4888, %v5432
        %v5434 = vpop.f32.mrb[0].mxu0
        %5435 = vmatprep.mubr.bf16.mxu0 %v4309
        %5436 = vmatmul.mubr.bf16.gmra.mrb[0].mxu0 %v4308
        %v5437 = vpop.f32.mrb[0].mxu0
        %v5438 = vadd.f32 %v4893, %v5437
        %v5439 = vpop.f32.mrb[0].mxu0
        %v5440 = vpop.f32.mrb[0].mxu0
        %v5441 = vadd.f32 %v4896, %v5440
        %v5442 = vpop.f32.mrb[0].mxu0
        %5443 = vmatprep.mubr.bf16.mxu0 %v4313
        %5444 = vmatmul.mubr.bf16.gmra.mrb[0].mxu0 %v4312
        %v5445 = vpop.f32.mrb[0].mxu0
        %v5446 = vadd.f32 %v4901, %v5445
        %v5447 = vpop.f32.mrb[0].mxu0
        %v5448 = vpop.f32.mrb[0].mxu0
        %v5449 = vadd.f32 %v4904, %v5448
        %v5450 = vpop.f32.mrb[0].mxu0
        %5451 = vmatprep.mubr.bf16.mxu0 %v4317
        %5452 = vmatmul.mubr.bf16.gmra.mrb[0].mxu0 %v4316
        %v5453 = vpop.f32.mrb[0].mxu0
        %v5454 = vadd.f32 %v4909, %v5453
        %v5455 = vpop.f32.mrb[0].mxu0
        %v5456 = vpop.f32.mrb[0].mxu0
        %v5457 = vadd.f32 %v4912, %v5456
        %v5458 = vpop.f32.mrb[0].mxu0
        %5459 = vmatprep.mubr.bf16.mxu0 %v4321
        %5460 = vmatmul.mubr.bf16.gmra.mrb[0].mxu0 %v4320
        %v5461 = vpop.f32.mrb[0].mxu0
        %v5462 = vadd.f32 %v4917, %v5461
        %v5463 = vpop.f32.mrb[0].mxu0
        %v5464 = vpop.f32.mrb[0].mxu0
        %v5465 = vadd.f32 %v4920, %v5464
        %v5466 = vpop.f32.mrb[0].mxu0
        %5467 = vmatprep.mubr.bf16.mxu0 %v4325
        %5468 = vmatmul.mubr.bf16.gmra.mrb[0].mxu0 %v4324
        %v5469 = vpop.f32.mrb[0].mxu0
        %v5470 = vadd.f32 %v4925, %v5469
        %v5471 = vpop.f32.mrb[0].mxu0
        %v5472 = vpop.f32.mrb[0].mxu0
        %v5473 = vadd.f32 %v4928, %v5472
        %v5474 = vpop.f32.mrb[0].mxu0
        %5475 = vmatprep.mubr.bf16.mxu0 %v4329
        %5476 = vmatmul.mubr.bf16.gmra.mrb[0].mxu0 %v4328
        %v5477 = vpop.f32.mrb[0].mxu0
        %v5478 = vadd.f32 %v4933, %v5477
        %v5479 = vpop.f32.mrb[0].mxu0
        %v5480 = vpop.f32.mrb[0].mxu0
        %v5481 = vadd.f32 %v4936, %v5480
        %v5482 = vpop.f32.mrb[0].mxu0
        %5483 = vmatprep.mubr.bf16.mxu0 %v4333
        %5484 = vmatmul.mubr.bf16.gmra.mrb[0].mxu0 %v4332
        %v5485 = vpop.f32.mrb[0].mxu0
        %v5486 = vadd.f32 %v4941, %v5485
        %v5487 = vpop.f32.mrb[0].mxu0
        %v5488 = vpop.f32.mrb[0].mxu0
        %v5489 = vadd.f32 %v4944, %v5488
        %v5490 = vpop.f32.mrb[0].mxu0
        %5491 = vmatprep.mubr.bf16.mxu0 %v4337
        %5492 = vmatmul.mubr.bf16.gmra.mrb[0].mxu0 %v4336
        %v5493 = vpop.f32.mrb[0].mxu0
        %v5494 = vadd.f32 %v4949, %v5493
        %v5495 = vpop.f32.mrb[0].mxu0
        %v5496 = vpop.f32.mrb[0].mxu0
        %v5497 = vadd.f32 %v4952, %v5496
        %v5498 = vpop.f32.mrb[0].mxu0
        %5499 = vmatprep.mubr.bf16.mxu0 %v4341
        %5500 = vmatmul.mubr.bf16.gmra.mrb[0].mxu0 %v4340
        %v5501 = vpop.f32.mrb[0].mxu0
        %v5502 = vadd.f32 %v4957, %v5501
        %v5503 = vpop.f32.mrb[0].mxu0
        %v5504 = vpop.f32.mrb[0].mxu0
        %v5505 = vadd.f32 %v4960, %v5504
        %v5506 = vpop.f32.mrb[0].mxu0
        %5507 = vmatprep.mubr.bf16.mxu0 %v4345
        %5508 = vmatmul.mubr.bf16.gmra.mrb[0].mxu0 %v4344
        %v5509 = vpop.f32.mrb[0].mxu0
        %v5510 = vadd.f32 %v4965, %v5509
        %v5511 = vpop.f32.mrb[0].mxu0
        %v5512 = vpop.f32.mrb[0].mxu0
        %v5513 = vadd.f32 %v4968, %v5512
        %v5514 = vpop.f32.mrb[0].mxu0
        %5515 = vmatprep.mubr.bf16.mxu0 %v4349
        %5516 = vmatmul.mubr.bf16.gmra.mrb[0].mxu0 %v4348
        %v5517 = vpop.f32.mrb[0].mxu0
        %v5518 = vadd.f32 %v4973, %v5517
        %v5519 = vpop.f32.mrb[0].mxu0
        %v5520 = vpop.f32.mrb[0].mxu0
        %v5521 = vadd.f32 %v4976, %v5520
        %v5522 = vpop.f32.mrb[0].mxu0
        %5523 = vmatprep.mubr.bf16.mxu0 %v4353
        %5524 = vmatmul.mubr.bf16.gmra.mrb[0].mxu0 %v4352
        %v5525 = vpop.f32.mrb[0].mxu0
        %v5526 = vadd.f32 %v4981, %v5525
        %v5527 = vpop.f32.mrb[0].mxu0
        %v5528 = vpop.f32.mrb[0].mxu0
        %v5529 = vadd.f32 %v4984, %v5528
        %v5530 = vpop.f32.mrb[0].mxu0
        %5531 = vmatprep.mubr.bf16.mxu0 %v4357
        %5532 = vmatmul.mubr.bf16.gmra.mrb[0].mxu0 %v4356
        %v5533 = vpop.f32.mrb[0].mxu0
        %v5534 = vadd.f32 %v4989, %v5533
        %v5535 = vpop.f32.mrb[0].mxu0
        %v5536 = vpop.f32.mrb[0].mxu0
        %v5537 = vadd.f32 %v4992, %v5536
        %v5538 = vpop.f32.mrb[0].mxu0
        %5539 = vmatprep.mubr.bf16.mxu0 %v4361
        %5540 = vmatmul.mubr.bf16.gmra.mrb[0].mxu0 %v4360
        %v5541 = vpop.f32.mrb[0].mxu0
        %v5542 = vadd.f32 %v4997, %v5541
        %v5543 = vpop.f32.mrb[0].mxu0
        %v5544 = vpop.f32.mrb[0].mxu0
        %v5545 = vadd.f32 %v5000, %v5544
        %v5546 = vpop.f32.mrb[0].mxu0
        %5547 = vmatprep.mubr.bf16.mxu0 %v4365
        %5548 = vmatmul.mubr.bf16.gmra.mrb[0].mxu0 %v4364
        %v5549 = vpop.f32.mrb[0].mxu0
        %v5550 = vadd.f32 %v5005, %v5549
        %v5551 = vpop.f32.mrb[0].mxu0
        %v5552 = vpop.f32.mrb[0].mxu0
        %v5553 = vadd.f32 %v5008, %v5552
        %v5554 = vpop.f32.mrb[0].mxu0
        %5555 = vmatprep.mubr.bf16.mxu0 %v4369
        %5556 = vmatmul.mubr.bf16.gmra.mrb[0].mxu0 %v4368
        %v5557 = vpop.f32.mrb[0].mxu0
        %v5558 = vadd.f32 %v5013, %v5557
        %v5559 = vpop.f32.mrb[0].mxu0
        %v5560 = vpop.f32.mrb[0].mxu0
        %v5561 = vadd.f32 %v5016, %v5560
        %v5562 = vpop.f32.mrb[0].mxu0
        %5563 = vmatprep.mubr.bf16.mxu0 %v4373
        %5564 = vmatmul.mubr.bf16.gmra.mrb[0].mxu0 %v4372
        %v5565 = vpop.f32.mrb[0].mxu0
        %v5566 = vadd.f32 %v5021, %v5565
        %v5567 = vpop.f32.mrb[0].mxu0
        %v5568 = vpop.f32.mrb[0].mxu0
        %v5569 = vadd.f32 %v5024, %v5568
        %v5570 = vpop.f32.mrb[0].mxu0
        %5571 = vmatprep.mubr.bf16.mxu0 %v4377
        %5572 = vmatmul.mubr.bf16.gmra.mrb[0].mxu0 %v4376
        %v5573 = vpop.f32.mrb[0].mxu0
        %v5574 = vadd.f32 %v5029, %v5573
        %v5575 = vpop.f32.mrb[0].mxu0
        %v5576 = vpop.f32.mrb[0].mxu0
        %v5577 = vadd.f32 %v5032, %v5576
        %v5578 = vpop.f32.mrb[0].mxu0
        %5579 = vmatprep.mubr.bf16.mxu0 %v4381
        %5580 = vmatmul.mubr.bf16.gmra.mrb[0].mxu0 %v4380
        %v5581 = vpop.f32.mrb[0].mxu0
        %v5582 = vadd.f32 %v5037, %v5581
        %v5583 = vpop.f32.mrb[0].mxu0
        %v5584 = vpop.f32.mrb[0].mxu0
        %v5585 = vadd.f32 %v5040, %v5584
        %v5586 = vpop.f32.mrb[0].mxu0
        %5587 = vmatprep.mubr.bf16.mxu0 %v4385
        %5588 = vmatmul.mubr.bf16.gmra.mrb[0].mxu0 %v4384
        %v5589 = vpop.f32.mrb[0].mxu0
        %v5590 = vadd.f32 %v5045, %v5589
        %v5591 = vpop.f32.mrb[0].mxu0
        %v5592 = vpop.f32.mrb[0].mxu0
        %v5593 = vadd.f32 %v5048, %v5592
        %v5594 = vpop.f32.mrb[0].mxu0
        %5595 = vmatprep.mubr.bf16.mxu0 %v4389
        %5596 = vmatmul.mubr.bf16.gmra.mrb[0].mxu0 %v4388
        %v5597 = vpop.f32.mrb[0].mxu0
        %v5598 = vadd.f32 %v5053, %v5597
        %v5599 = vpop.f32.mrb[0].mxu0
        %v5600 = vpop.f32.mrb[0].mxu0
        %v5601 = vadd.f32 %v5056, %v5600
        %v5602 = vpop.f32.mrb[0].mxu0
        %5603 = vmatprep.mubr.bf16.mxu0 %v4393
        %5604 = vmatmul.mubr.bf16.gmra.mrb[0].mxu0 %v4392
        %v5605 = vpop.f32.mrb[0].mxu0
        %v5606 = vadd.f32 %v5061, %v5605
        %v5607 = vpop.f32.mrb[0].mxu0
        %v5608 = vpop.f32.mrb[0].mxu0
        %v5609 = vadd.f32 %v5064, %v5608
        %v5610 = vpop.f32.mrb[0].mxu0
        %5611 = vmatprep.mubr.bf16.mxu0 %v4397
        %5612 = vmatmul.mubr.bf16.gmra.mrb[0].mxu0 %v4396
        %v5613 = vpop.f32.mrb[0].mxu0
        %v5614 = vadd.f32 %v5069, %v5613
        %v5615 = vpop.f32.mrb[0].mxu0
        %v5616 = vpop.f32.mrb[0].mxu0
        %v5617 = vadd.f32 %v5072, %v5616
        %v5618 = vpop.f32.mrb[0].mxu0
        %5619 = vmatprep.mubr.bf16.mxu0 %v4401
        %5620 = vmatmul.mubr.bf16.gmra.mrb[0].mxu0 %v4400
        %v5621 = vpop.f32.mrb[0].mxu0
        %v5622 = vadd.f32 %v5077, %v5621
        %v5623 = vpop.f32.mrb[0].mxu0
        %v5624 = vpop.f32.mrb[0].mxu0
        %v5625 = vadd.f32 %v5080, %v5624
        %v5626 = vpop.f32.mrb[0].mxu0
        %5627 = vmatprep.mubr.bf16.mxu0 %v4405
        %5628 = vmatmul.mubr.bf16.gmra.mrb[0].mxu0 %v4404
        %v5629 = vpop.f32.mrb[0].mxu0
        %v5630 = vadd.f32 %v5085, %v5629
        %v5631 = vpop.f32.mrb[0].mxu0
        %v5632 = vpop.f32.mrb[0].mxu0
        %v5633 = vadd.f32 %v5088, %v5632
        %v5634 = vpop.f32.mrb[0].mxu0
        %5635 = vmatprep.mubr.bf16.mxu0 %v4409
        %5636 = vmatmul.mubr.bf16.gmra.mrb[0].mxu0 %v4408
        %v5637 = vpop.f32.mrb[0].mxu0
        %v5638 = vadd.f32 %v5093, %v5637
        %v5639 = vpop.f32.mrb[0].mxu0
        %v5640 = vpop.f32.mrb[0].mxu0
        %v5641 = vadd.f32 %v5096, %v5640
        %v5642 = vpop.f32.mrb[0].mxu0
        %5643 = vmatprep.mubr.bf16.mxu0 %v4413
        %5644 = vmatmul.mubr.bf16.gmra.mrb[0].mxu0 %v4412
        %v5645 = vpop.f32.mrb[0].mxu0
        %v5646 = vadd.f32 %v5101, %v5645
        %v5647 = vpop.f32.mrb[0].mxu0
        %v5648 = vpop.f32.mrb[0].mxu0
        %v5649 = vadd.f32 %v5104, %v5648
        %v5650 = vpop.f32.mrb[0].mxu0
        %5651 = vmatprep.mubr.bf16.mxu0 %v4417
        %5652 = vmatmul.mubr.bf16.gmra.mrb[0].mxu0 %v4416
        %v5653 = vpop.f32.mrb[0].mxu0
        %v5654 = vadd.f32 %v5109, %v5653
        %v5655 = vpop.f32.mrb[0].mxu0
        %v5656 = vpop.f32.mrb[0].mxu0
        %v5657 = vadd.f32 %v5112, %v5656
        %v5658 = vpop.f32.mrb[0].mxu0
        %5659 = vmatprep.mubr.bf16.mxu0 %v4421
        %5660 = vmatmul.mubr.bf16.gmra.mrb[0].mxu0 %v4420
        %v5661 = vpop.f32.mrb[0].mxu0
        %v5662 = vadd.f32 %v5117, %v5661
        %v5663 = vpop.f32.mrb[0].mxu0
        %v5664 = vpop.f32.mrb[0].mxu0
        %v5665 = vadd.f32 %v5120, %v5664
        %v5666 = vpop.f32.mrb[0].mxu0
        %5667 = vmatprep.mubr.bf16.mxu0 %v4425
        %5668 = vmatmul.mubr.bf16.gmra.mrb[0].mxu0 %v4424
        %v5669 = vpop.f32.mrb[0].mxu0
        %v5670 = vadd.f32 %v5125, %v5669
        %v5671 = vpop.f32.mrb[0].mxu0
        %v5672 = vpop.f32.mrb[0].mxu0
        %v5673 = vadd.f32 %v5128, %v5672
        %v5674 = vpop.f32.mrb[0].mxu0
        %5675 = vmatprep.mubr.bf16.mxu0 %v4429
        %5676 = vmatmul.mubr.bf16.gmra.mrb[0].mxu0 %v4428
        %v5677 = vpop.f32.mrb[0].mxu0
        %v5678 = vadd.f32 %v5133, %v5677
        %v5679 = vpop.f32.mrb[0].mxu0
        %v5680 = vpop.f32.mrb[0].mxu0
        %v5681 = vadd.f32 %v5136, %v5680
        %v5682 = vpop.f32.mrb[0].mxu0
        %5683 = vmatprep.mubr.bf16.mxu0 %v4433
        %5684 = vmatmul.mubr.bf16.gmra.mrb[0].mxu0 %v4432
        %v5685 = vpop.f32.mrb[0].mxu0
        %v5686 = vadd.f32 %v5141, %v5685
        %v5687 = vpop.f32.mrb[0].mxu0
        %v5688 = vpop.f32.mrb[0].mxu0
        %v5689 = vadd.f32 %v5144, %v5688
        %v5690 = vpop.f32.mrb[0].mxu0
        %5691 = vmatprep.mubr.bf16.mxu0 %v4437
        %5692 = vmatmul.mubr.bf16.gmra.mrb[0].mxu0 %v4436
        %v5693 = vpop.f32.mrb[0].mxu0
        %v5694 = vadd.f32 %v5149, %v5693
        %v5695 = vpop.f32.mrb[0].mxu0
        %v5696 = vpop.f32.mrb[0].mxu0
        %v5697 = vadd.f32 %v5152, %v5696
        %v5698 = vpop.f32.mrb[0].mxu0
        %5699 = vmatprep.mubr.bf16.mxu0 %v4441
        %5700 = vmatmul.mubr.bf16.gmra.mrb[0].mxu0 %v4440
        %v5701 = vpop.f32.mrb[0].mxu0
        %v5702 = vadd.f32 %v5157, %v5701
        %v5703 = vpop.f32.mrb[0].mxu0
        %v5704 = vpop.f32.mrb[0].mxu0
        %v5705 = vadd.f32 %v5160, %v5704
        %v5706 = vpop.f32.mrb[0].mxu0
        %5707 = vmatprep.mubr.bf16.mxu0 %v4445
        %5708 = vmatmul.mubr.bf16.gmra.mrb[0].mxu0 %v4444
        %v5709 = vpop.f32.mrb[0].mxu0
        %v5710 = vadd.f32 %v5165, %v5709
        %v5711 = vpop.f32.mrb[0].mxu0
        %v5712 = vpop.f32.mrb[0].mxu0
        %v5713 = vadd.f32 %v5168, %v5712
        %v5714 = vpop.f32.mrb[0].mxu0
        %5715 = vmatprep.mubr.bf16.mxu0 %v4449
        %5716 = vmatmul.mubr.bf16.gmra.mrb[0].mxu0 %v4448
        %v5717 = vpop.f32.mrb[0].mxu0
        %v5718 = vadd.f32 %v5173, %v5717
        %v5719 = vpop.f32.mrb[0].mxu0
        %v5720 = vpop.f32.mrb[0].mxu0
        %v5721 = vadd.f32 %v5176, %v5720
        %v5722 = vpop.f32.mrb[0].mxu0
        %5723 = vmatprep.mubr.bf16.mxu0 %v4453
        %5724 = vmatmul.mubr.bf16.gmra.mrb[0].mxu0 %v4452
        %v5725 = vpop.f32.mrb[0].mxu0
        %v5726 = vadd.f32 %v5181, %v5725
        %v5727 = vpop.f32.mrb[0].mxu0
        %v5728 = vpop.f32.mrb[0].mxu0
        %v5729 = vadd.f32 %v5184, %v5728
        %v5730 = vpop.f32.mrb[0].mxu0
        %5731 = vmatprep.mubr.bf16.mxu0 %v4457
        %5732 = vmatmul.mubr.bf16.gmra.mrb[0].mxu0 %v4456
        %v5733 = vpop.f32.mrb[0].mxu0
        %v5734 = vadd.f32 %v5189, %v5733
        %v5735 = vpop.f32.mrb[0].mxu0
        %v5736 = vpop.f32.mrb[0].mxu0
        %v5737 = vadd.f32 %v5192, %v5736
        %v5738 = vpop.f32.mrb[0].mxu0
        %5739 = vmatprep.mubr.bf16.mxu0 %v4461
        %5740 = vmatmul.mubr.bf16.gmra.mrb[0].mxu0 %v4460
        %v5741 = vpop.f32.mrb[0].mxu0
        %v5742 = vadd.f32 %v5197, %v5741
        %v5743 = vpop.f32.mrb[0].mxu0
        %v5744 = vpop.f32.mrb[0].mxu0
        %v5745 = vadd.f32 %v5200, %v5744
        %v5746 = vpop.f32.mrb[0].mxu0
        %5747 = vmatprep.mubr.bf16.mxu0 %v4465
        %5748 = vmatmul.mubr.bf16.gmra.mrb[0].mxu0 %v4464
        %v5749 = vpop.f32.mrb[0].mxu0
        %v5750 = vadd.f32 %v5205, %v5749
        %v5751 = vpop.f32.mrb[0].mxu0
        %v5752 = vpop.f32.mrb[0].mxu0
        %v5753 = vadd.f32 %v5208, %v5752
        %v5754 = vpop.f32.mrb[0].mxu0
        %5755 = vmatprep.mubr.bf16.mxu0 %v4469
        %5756 = vmatmul.mubr.bf16.gmra.mrb[0].mxu0 %v4468
        %v5757 = vpop.f32.mrb[0].mxu0
        %v5758 = vadd.f32 %v5213, %v5757
        %v5759 = vpop.f32.mrb[0].mxu0
        %v5760 = vpop.f32.mrb[0].mxu0
        %v5761 = vadd.f32 %v5216, %v5760
        %v5762 = vpop.f32.mrb[0].mxu0
        %5763 = vmatprep.mubr.bf16.mxu0 %v4473
        %5764 = vmatmul.mubr.bf16.gmra.mrb[0].mxu0 %v4472
        %v5765 = vpop.f32.mrb[0].mxu0
        %v5766 = vadd.f32 %v5221, %v5765
        %v5767 = vpop.f32.mrb[0].mxu0
        %v5768 = vpop.f32.mrb[0].mxu0
        %v5769 = vadd.f32 %v5224, %v5768
        %v5770 = vpop.f32.mrb[0].mxu0
        %5771 = vmatprep.mubr.bf16.mxu0 %v4477
        %5772 = vmatmul.mubr.bf16.gmra.mrb[0].mxu0 %v4476
        %v5773 = vpop.f32.mrb[0].mxu0
        %v5774 = vadd.f32 %v5229, %v5773
        %v5775 = vpop.f32.mrb[0].mxu0
        %v5776 = vpop.f32.mrb[0].mxu0
        %v5777 = vadd.f32 %v5232, %v5776
        %v5778 = vpop.f32.mrb[0].mxu0
        %5779 = vmatprep.mubr.bf16.mxu0 %v4481
        %5780 = vmatmul.mubr.bf16.gmra.mrb[0].mxu0 %v4480
        %v5781 = vpop.f32.mrb[0].mxu0
        %v5782 = vadd.f32 %v5237, %v5781
        %v5783 = vpop.f32.mrb[0].mxu0
        %v5784 = vpop.f32.mrb[0].mxu0
        %v5785 = vadd.f32 %v5240, %v5784
        %v5786 = vpop.f32.mrb[0].mxu0
        %5787 = vmatprep.mubr.bf16.mxu0 %v4485
        %5788 = vmatmul.mubr.bf16.gmra.mrb[0].mxu0 %v4484
        %v5789 = vpop.f32.mrb[0].mxu0
        %v5790 = vadd.f32 %v5245, %v5789
        %v5791 = vpop.f32.mrb[0].mxu0
        %v5792 = vpop.f32.mrb[0].mxu0
        %v5793 = vadd.f32 %v5248, %v5792
        %v5794 = vpop.f32.mrb[0].mxu0
        %5795 = vmatprep.mubr.bf16.mxu0 %v4489
        %5796 = vmatmul.mubr.bf16.gmra.mrb[0].mxu0 %v4488
        %v5797 = vpop.f32.mrb[0].mxu0
        %v5798 = vadd.f32 %v5253, %v5797
        %v5799 = vpop.f32.mrb[0].mxu0
        %v5800 = vpop.f32.mrb[0].mxu0
        %v5801 = vadd.f32 %v5256, %v5800
        %v5802 = vpop.f32.mrb[0].mxu0
        %5803 = vmatprep.mubr.bf16.mxu0 %v4493
        %5804 = vmatmul.mubr.bf16.gmra.mrb[0].mxu0 %v4492
        %v5805 = vpop.f32.mrb[0].mxu0
        %v5806 = vadd.f32 %v5261, %v5805
        %v5807 = vpop.f32.mrb[0].mxu0
        %v5808 = vpop.f32.mrb[0].mxu0
        %v5809 = vadd.f32 %v5264, %v5808
        %v5810 = vpop.f32.mrb[0].mxu0
        %5811 = vmatprep.mubr.bf16.mxu0 %v4497
        %5812 = vmatmul.mubr.bf16.gmra.mrb[0].mxu0 %v4496
        %v5813 = vpop.f32.mrb[0].mxu0
        %v5814 = vadd.f32 %v5269, %v5813
        %v5815 = vpop.f32.mrb[0].mxu0
        %v5816 = vpop.f32.mrb[0].mxu0
        %v5817 = vadd.f32 %v5272, %v5816
        %v5818 = vpop.f32.mrb[0].mxu0
        %5819 = vmatprep.mubr.bf16.mxu0 %v4501
        %5820 = vmatmul.mubr.bf16.gmra.mrb[0].mxu0 %v4500
        %v5821 = vpop.f32.mrb[0].mxu0
        %v5822 = vadd.f32 %v5277, %v5821
        %v5823 = vpop.f32.mrb[0].mxu0
        %v5824 = vpop.f32.mrb[0].mxu0
        %v5825 = vadd.f32 %v5280, %v5824
        %v5826 = vpop.f32.mrb[0].mxu0
        %5827 = vmatprep.mubr.bf16.mxu0 %v4505
        %5828 = vmatmul.mubr.bf16.gmra.mrb[0].mxu0 %v4504
        %v5829 = vpop.f32.mrb[0].mxu0
        %v5830 = vadd.f32 %v5285, %v5829
        %v5831 = vpop.f32.mrb[0].mxu0
        %v5832 = vpop.f32.mrb[0].mxu0
        %v5833 = vadd.f32 %v5288, %v5832
        %v5834 = vpop.f32.mrb[0].mxu0
        %5835 = vmatprep.mubr.bf16.mxu0 %v4509
        %5836 = vmatmul.mubr.bf16.gmra.mrb[0].mxu0 %v4508
        %v5837 = vpop.f32.mrb[0].mxu0
        %v5838 = vadd.f32 %v5293, %v5837
        %v5839 = vpop.f32.mrb[0].mxu0
        %v5840 = vpop.f32.mrb[0].mxu0
        %v5841 = vadd.f32 %v5296, %v5840
        %v5842 = vpop.f32.mrb[0].mxu0
        %5843 = vmatprep.mubr.bf16.mxu0 %v4513
        %5844 = vmatmul.mubr.bf16.gmra.mrb[0].mxu0 %v4512
        %v5845 = vpop.f32.mrb[0].mxu0
        %v5846 = vadd.f32 %v5301, %v5845
        %v5847 = vpop.f32.mrb[0].mxu0
        %v5848 = vpop.f32.mrb[0].mxu0
        %v5849 = vadd.f32 %v5304, %v5848
        %v5850 = vpop.f32.mrb[0].mxu0
        %5851 = vmatprep.mubr.bf16.mxu0 %v4517
        %5852 = vmatmul.mubr.bf16.gmra.mrb[0].mxu0 %v4516
        %v5853 = vpop.f32.mrb[0].mxu0
        %v5854 = vadd.f32 %v5309, %v5853
        %v5855 = vpop.f32.mrb[0].mxu0
        %v5856 = vpop.f32.mrb[0].mxu0
        %v5857 = vadd.f32 %v5312, %v5856
        %v5858 = vpop.f32.mrb[0].mxu0
        %5859 = vmatprep.mubr.bf16.mxu0 %v4521
        %5860 = vmatmul.mubr.bf16.gmra.mrb[0].mxu0 %v4520
        %v5861 = vpop.f32.mrb[0].mxu0
        %v5862 = vadd.f32 %v5317, %v5861
        %v5863 = vpop.f32.mrb[0].mxu0
        %v5864 = vpop.f32.mrb[0].mxu0
        %v5865 = vadd.f32 %v5320, %v5864
        %v5866 = vpop.f32.mrb[0].mxu0
        %5867 = vdwg.mxu0
        %v5868 = vmax.f32 %v5358, 0.0
        %v5869 = vmax.f32 %v5361, 0.0
        %v5870 = vmax.f32 %v5366, 0.0
        %v5871 = vmax.f32 %v5369, 0.0
        %v5872 = vmax.f32 %v5374, 0.0
        %v5873 = vmax.f32 %v5377, 0.0
        %v5874 = vmax.f32 %v5382, 0.0
        %v5875 = vmax.f32 %v5385, 0.0
        %v5876 = vmax.f32 %v5390, 0.0
        %v5877 = vmax.f32 %v5393, 0.0
        %v5878 = vmax.f32 %v5398, 0.0
        %v5879 = vmax.f32 %v5401, 0.0
        %v5880 = vmax.f32 %v5406, 0.0
        %v5881 = vmax.f32 %v5409, 0.0
        %v5882 = vmax.f32 %v5414, 0.0
        %v5883 = vmax.f32 %v5417, 0.0
        %v5884 = vmax.f32 %v5422, 0.0
        %v5885 = vmax.f32 %v5425, 0.0
        %v5886 = vmax.f32 %v5430, 0.0
        %v5887 = vmax.f32 %v5433, 0.0
        %v5888 = vmax.f32 %v5438, 0.0
        %v5889 = vmax.f32 %v5441, 0.0
        %v5890 = vmax.f32 %v5446, 0.0
        %v5891 = vmax.f32 %v5449, 0.0
        %v5892 = vmax.f32 %v5454, 0.0
        %v5893 = vmax.f32 %v5457, 0.0
        %v5894 = vmax.f32 %v5462, 0.0
        %v5895 = vmax.f32 %v5465, 0.0
        %v5896 = vmax.f32 %v5470, 0.0
        %v5897 = vmax.f32 %v5473, 0.0
        %v5898 = vmax.f32 %v5478, 0.0
        %v5899 = vmax.f32 %v5481, 0.0
        %v5900 = vmax.f32 %v5486, 0.0
        %v5901 = vmax.f32 %v5489, 0.0
        %v5902 = vmax.f32 %v5494, 0.0
        %v5903 = vmax.f32 %v5497, 0.0
        %v5904 = vmax.f32 %v5502, 0.0
        %v5905 = vmax.f32 %v5505, 0.0
        %v5906 = vmax.f32 %v5510, 0.0
        %v5907 = vmax.f32 %v5513, 0.0
        %v5908 = vmax.f32 %v5518, 0.0
        %v5909 = vmax.f32 %v5521, 0.0
        %v5910 = vmax.f32 %v5526, 0.0
        %v5911 = vmax.f32 %v5529, 0.0
        %v5912 = vmax.f32 %v5534, 0.0
        %v5913 = vmax.f32 %v5537, 0.0
        %v5914 = vmax.f32 %v5542, 0.0
        %v5915 = vmax.f32 %v5545, 0.0
        %v5916 = vmax.f32 %v5550, 0.0
        %v5917 = vmax.f32 %v5553, 0.0
        %v5918 = vmax.f32 %v5558, 0.0
        %v5919 = vmax.f32 %v5561, 0.0
        %v5920 = vmax.f32 %v5566, 0.0
        %v5921 = vmax.f32 %v5569, 0.0
        %v5922 = vmax.f32 %v5574, 0.0
        %v5923 = vmax.f32 %v5577, 0.0
        %v5924 = vmax.f32 %v5582, 0.0
        %v5925 = vmax.f32 %v5585, 0.0
        %v5926 = vmax.f32 %v5590, 0.0
        %v5927 = vmax.f32 %v5593, 0.0
        %v5928 = vmax.f32 %v5598, 0.0
        %v5929 = vmax.f32 %v5601, 0.0
        %v5930 = vmax.f32 %v5606, 0.0
        %v5931 = vmax.f32 %v5609, 0.0
        %v5932 = vmax.f32 %v5614, 0.0
        %v5933 = vmax.f32 %v5617, 0.0
        %v5934 = vmax.f32 %v5622, 0.0
        %v5935 = vmax.f32 %v5625, 0.0
        %v5936 = vmax.f32 %v5630, 0.0
        %v5937 = vmax.f32 %v5633, 0.0
        %v5938 = vmax.f32 %v5638, 0.0
        %v5939 = vmax.f32 %v5641, 0.0
        %v5940 = vmax.f32 %v5646, 0.0
        %v5941 = vmax.f32 %v5649, 0.0
        %v5942 = vmax.f32 %v5654, 0.0
        %v5943 = vmax.f32 %v5657, 0.0
        %v5944 = vmax.f32 %v5662, 0.0
        %v5945 = vmax.f32 %v5665, 0.0
        %v5946 = vmax.f32 %v5670, 0.0
        %v5947 = vmax.f32 %v5673, 0.0
        %v5948 = vmax.f32 %v5678, 0.0
        %v5949 = vmax.f32 %v5681, 0.0
        %v5950 = vmax.f32 %v5686, 0.0
        %v5951 = vmax.f32 %v5689, 0.0
        %v5952 = vmax.f32 %v5694, 0.0
        %v5953 = vmax.f32 %v5697, 0.0
        %v5954 = vmax.f32 %v5702, 0.0
        %v5955 = vmax.f32 %v5705, 0.0
        %v5956 = vmax.f32 %v5710, 0.0
        %v5957 = vmax.f32 %v5713, 0.0
        %v5958 = vmax.f32 %v5718, 0.0
        %v5959 = vmax.f32 %v5721, 0.0
        %v5960 = vmax.f32 %v5726, 0.0
        %v5961 = vmax.f32 %v5729, 0.0
        %v5962 = vmax.f32 %v5734, 0.0
        %v5963 = vmax.f32 %v5737, 0.0
        %v5964 = vmax.f32 %v5742, 0.0
        %v5965 = vmax.f32 %v5745, 0.0
        %v5966 = vmax.f32 %v5750, 0.0
        %v5967 = vmax.f32 %v5753, 0.0
        %v5968 = vmax.f32 %v5758, 0.0
        %v5969 = vmax.f32 %v5761, 0.0
        %v5970 = vmax.f32 %v5766, 0.0
        %v5971 = vmax.f32 %v5769, 0.0
        %v5972 = vmax.f32 %v5774, 0.0
        %v5973 = vmax.f32 %v5777, 0.0
        %v5974 = vmax.f32 %v5782, 0.0
        %v5975 = vmax.f32 %v5785, 0.0
        %v5976 = vmax.f32 %v5790, 0.0
        %v5977 = vmax.f32 %v5793, 0.0
        %v5978 = vmax.f32 %v5798, 0.0
        %v5979 = vmax.f32 %v5801, 0.0
        %v5980 = vmax.f32 %v5806, 0.0
        %v5981 = vmax.f32 %v5809, 0.0
        %v5982 = vmax.f32 %v5814, 0.0
        %v5983 = vmax.f32 %v5817, 0.0
        %v5984 = vmax.f32 %v5822, 0.0
        %v5985 = vmax.f32 %v5825, 0.0
        %v5986 = vmax.f32 %v5830, 0.0
        %v5987 = vmax.f32 %v5833, 0.0
        %v5988 = vmax.f32 %v5838, 0.0
        %v5989 = vmax.f32 %v5841, 0.0
        %v5990 = vmax.f32 %v5846, 0.0
        %v5991 = vmax.f32 %v5849, 0.0
        %v5992 = vmax.f32 %v5854, 0.0
        %v5993 = vmax.f32 %v5857, 0.0
        %v5994 = vmax.f32 %v5862, 0.0
        %v5995 = vmax.f32 %v5865, 0.0
        %5996 = vst [vmem:[%s443] sm:$0xff] %v768
        %5997 = vst [vmem:[%s443 + $0x8] sm:$0xff] %v769
        %5998 = vst [vmem:[%s443 + $0x10] sm:$0xff] %v770
        %5999 = vst [vmem:[%s443 + $0x18] sm:$0xff] %v771
        %6000 = vst [vmem:[%s443 + $0x20] sm:$0xff] %v772
        %6001 = vst [vmem:[%s443 + $0x28] sm:$0xff] %v773
        %6002 = vst [vmem:[%s443 + $0x30] sm:$0xff] %v774
        %6003 = vst [vmem:[%s443 + $0x38] sm:$0xff] %v775
        %6004 = vst [vmem:[%s443 + $0x40] sm:$0xff] %v776
        %6005 = vst [vmem:[%s443 + $0x48] sm:$0xff] %v777
        %6006 = vst [vmem:[%s443 + $0x50] sm:$0xff] %v778
        %6007 = vst [vmem:[%s443 + $0x58] sm:$0xff] %v779
        %6008 = vst [vmem:[%s443 + $0x60] sm:$0xff] %v780
        %6009 = vst [vmem:[%s443 + $0x68] sm:$0xff] %v781
        %6010 = vst [vmem:[%s443 + $0x70] sm:$0xff] %v782
        %6011 = vst [vmem:[%s443 + $0x78] sm:$0xff] %v783
        %6012 = vst [vmem:[%s443 + $0x80] sm:$0xff] %v1273
        %6013 = vst [vmem:[%s443 + $0x88] sm:$0xff] %v1274
        %6014 = vst [vmem:[%s443 + $0x90] sm:$0xff] %v1275
        %6015 = vst [vmem:[%s443 + $0x98] sm:$0xff] %v1276
        %6016 = vst [vmem:[%s443 + $0xa0] sm:$0xff] %v1277
        %6017 = vst [vmem:[%s443 + $0xa8] sm:$0xff] %v1278
        %6018 = vst [vmem:[%s443 + $0xb0] sm:$0xff] %v1279
        %6019 = vst [vmem:[%s443 + $0xb8] sm:$0xff] %v1280
        %6020 = vst [vmem:[%s443 + $0xc0] sm:$0xff] %v1281
        %6021 = vst [vmem:[%s443 + $0xc8] sm:$0xff] %v1282
        %6022 = vst [vmem:[%s443 + $0xd0] sm:$0xff] %v1283
        %6023 = vst [vmem:[%s443 + $0xd8] sm:$0xff] %v1284
        %6024 = vst [vmem:[%s443 + $0xe0] sm:$0xff] %v1285
        %6025 = vst [vmem:[%s443 + $0xe8] sm:$0xff] %v1286
        %6026 = vst [vmem:[%s443 + $0xf0] sm:$0xff] %v1287
        %6027 = vst [vmem:[%s443 + $0xf8] sm:$0xff] %v1288
        %6028 = vst [vmem:[%s443 + $0x100] sm:$0xff] %v1289
        %6029 = vst [vmem:[%s443 + $0x108] sm:$0xff] %v1290
        %6030 = vst [vmem:[%s443 + $0x110] sm:$0xff] %v1291
        %6031 = vst [vmem:[%s443 + $0x118] sm:$0xff] %v1292
        %6032 = vst [vmem:[%s443 + $0x120] sm:$0xff] %v1293
        %6033 = vst [vmem:[%s443 + $0x128] sm:$0xff] %v1294
        %6034 = vst [vmem:[%s443 + $0x130] sm:$0xff] %v1295
        %6035 = vst [vmem:[%s443 + $0x138] sm:$0xff] %v1296
        %6036 = vst [vmem:[%s443 + $0x140] sm:$0xff] %v1297
        %6037 = vst [vmem:[%s443 + $0x148] sm:$0xff] %v1298
        %6038 = vst [vmem:[%s443 + $0x150] sm:$0xff] %v1299
        %6039 = vst [vmem:[%s443 + $0x158] sm:$0xff] %v1300
        %6040 = vst [vmem:[%s443 + $0x160] sm:$0xff] %v1301
        %6041 = vst [vmem:[%s443 + $0x168] sm:$0xff] %v1302
        %6042 = vst [vmem:[%s443 + $0x170] sm:$0xff] %v1303
        %6043 = vst [vmem:[%s443 + $0x178] sm:$0xff] %v1304
        %p6044 = scmp.eq.s32.totalorder %s29, 0
        // Predicated region
        $region98: #{posenet_feat.2} parent=92 // pred_check
          %p6045 = pneg %p6044
        $region99: #{posenet_feat.2} parent=92 // pred_check_branch
          %6047 = sbr.rel (%p6045) target = $region101
        $region100: #{posenet_feat.2} parent=92 // pred_region
          %6048 = vst [vmem:[#allocation2] sm:$0xff] 0.0
          %6049 = vst [vmem:[#allocation2 + $0x8] sm:$0xff] 0.0
          %6050 = vst [vmem:[#allocation2 + $0x10] sm:$0xff] 0.0
          %6051 = vst [vmem:[#allocation2 + $0x18] sm:$0xff] 0.0
          %6052 = vst [vmem:[#allocation2 + $0x20] sm:$0xff] 0.0
          %6053 = vst [vmem:[#allocation2 + $0x28] sm:$0xff] 0.0
          %6054 = vst [vmem:[#allocation2 + $0x30] sm:$0xff] 0.0
          %6055 = vst [vmem:[#allocation2 + $0x38] sm:$0xff] 0.0
          %6056 = vst [vmem:[#allocation2 + $0x40] sm:$0xff] 0.0
          %6057 = vst [vmem:[#allocation2 + $0x48] sm:$0xff] 0.0
          %6058 = vst [vmem:[#allocation2 + $0x50] sm:$0xff] 0.0
          %6059 = vst [vmem:[#allocation2 + $0x58] sm:$0xff] 0.0
          %6060 = vst [vmem:[#allocation2 + $0x60] sm:$0xff] 0.0
          %6061 = vst [vmem:[#allocation2 + $0x68] sm:$0xff] 0.0
          %6062 = vst [vmem:[#allocation2 + $0x70] sm:$0xff] 0.0
          %6063 = vst [vmem:[#allocation2 + $0x78] sm:$0xff] 0.0
          %6064 = vst [vmem:[#allocation2 + $0x80] sm:$0xff] 0.0
          %6065 = vst [vmem:[#allocation2 + $0x88] sm:$0xff] 0.0
          %6066 = vst [vmem:[#allocation2 + $0x90] sm:$0xff] 0.0
          %6067 = vst [vmem:[#allocation2 + $0x98] sm:$0xff] 0.0
          %6068 = vst [vmem:[#allocation2 + $0xa0] sm:$0xff] 0.0
          %6069 = vst [vmem:[#allocation2 + $0xa8] sm:$0xff] 0.0
          %6070 = vst [vmem:[#allocation2 + $0xb0] sm:$0xff] 0.0
          %6071 = vst [vmem:[#allocation2 + $0xb8] sm:$0xff] 0.0
          %6072 = vst [vmem:[#allocation2 + $0xc0] sm:$0xff] 0.0
          %6073 = vst [vmem:[#allocation2 + $0xc8] sm:$0xff] 0.0
          %6074 = vst [vmem:[#allocation2 + $0xd0] sm:$0xff] 0.0
          %6075 = vst [vmem:[#allocation2 + $0xd8] sm:$0xff] 0.0
          %6076 = vst [vmem:[#allocation2 + $0xe0] sm:$0xff] 0.0
          %6077 = vst [vmem:[#allocation2 + $0xe8] sm:$0xff] 0.0
          %6078 = vst [vmem:[#allocation2 + $0xf0] sm:$0xff] 0.0
          %6079 = vst [vmem:[#allocation2 + $0xf8] sm:$0xff] 0.0
          %6080 = vst [vmem:[#allocation2 + $0x100] sm:$0xff] 0.0
          %6081 = vst [vmem:[#allocation2 + $0x108] sm:$0xff] 0.0
          %6082 = vst [vmem:[#allocation2 + $0x110] sm:$0xff] 0.0
          %6083 = vst [vmem:[#allocation2 + $0x118] sm:$0xff] 0.0
          %6084 = vst [vmem:[#allocation2 + $0x120] sm:$0xff] 0.0
          %6085 = vst [vmem:[#allocation2 + $0x128] sm:$0xff] 0.0
          %6086 = vst [vmem:[#allocation2 + $0x130] sm:$0xff] 0.0
          %6087 = vst [vmem:[#allocation2 + $0x138] sm:$0xff] 0.0
          %6088 = vst [vmem:[#allocation2 + $0x140] sm:$0xff] 0.0
          %6089 = vst [vmem:[#allocation2 + $0x148] sm:$0xff] 0.0
          %6090 = vst [vmem:[#allocation2 + $0x150] sm:$0xff] 0.0
          %6091 = vst [vmem:[#allocation2 + $0x158] sm:$0xff] 0.0
          %6092 = vst [vmem:[#allocation2 + $0x160] sm:$0xff] 0.0
          %6093 = vst [vmem:[#allocation2 + $0x168] sm:$0xff] 0.0
          %6094 = vst [vmem:[#allocation2 + $0x170] sm:$0xff] 0.0
          %6095 = vst [vmem:[#allocation2 + $0x178] sm:$0xff] 0.0
          %6096 = vst [vmem:[#allocation2 + $0x180] sm:$0xff] 0.0
          %6097 = vst [vmem:[#allocation2 + $0x188] sm:$0xff] 0.0
          %6098 = vst [vmem:[#allocation2 + $0x190] sm:$0xff] 0.0
          %6099 = vst [vmem:[#allocation2 + $0x198] sm:$0xff] 0.0
          %6100 = vst [vmem:[#allocation2 + $0x1a0] sm:$0xff] 0.0
          %6101 = vst [vmem:[#allocation2 + $0x1a8] sm:$0xff] 0.0
          %6102 = vst [vmem:[#allocation2 + $0x1b0] sm:$0xff] 0.0
          %6103 = vst [vmem:[#allocation2 + $0x1b8] sm:$0xff] 0.0
          %6104 = vst [vmem:[#allocation2 + $0x1c0] sm:$0xff] 0.0
          %6105 = vst [vmem:[#allocation2 + $0x1c8] sm:$0xff] 0.0
          %6106 = vst [vmem:[#allocation2 + $0x1d0] sm:$0xff] 0.0
          %6107 = vst [vmem:[#allocation2 + $0x1d8] sm:$0xff] 0.0
          %6108 = vst [vmem:[#allocation2 + $0x1e0] sm:$0xff] 0.0
          %6109 = vst [vmem:[#allocation2 + $0x1e8] sm:$0xff] 0.0
          %6110 = vst [vmem:[#allocation2 + $0x1f0] sm:$0xff] 0.0
          %6111 = vst [vmem:[#allocation2 + $0x1f8] sm:$0xff] 0.0
          %6112 = vst [vmem:[#allocation2 + $0x200] sm:$0xff] 0.0
          %6113 = vst [vmem:[#allocation2 + $0x208] sm:$0xff] 0.0
          %6114 = vst [vmem:[#allocation2 + $0x210] sm:$0xff] 0.0
          %6115 = vst [vmem:[#allocation2 + $0x218] sm:$0xff] 0.0
          %6116 = vst [vmem:[#allocation2 + $0x220] sm:$0xff] 0.0
          %6117 = vst [vmem:[#allocation2 + $0x228] sm:$0xff] 0.0
          %6118 = vst [vmem:[#allocation2 + $0x230] sm:$0xff] 0.0
          %6119 = vst [vmem:[#allocation2 + $0x238] sm:$0xff] 0.0
          %6120 = vst [vmem:[#allocation2 + $0x240] sm:$0xff] 0.0
          %6121 = vst [vmem:[#allocation2 + $0x248] sm:$0xff] 0.0
          %6122 = vst [vmem:[#allocation2 + $0x250] sm:$0xff] 0.0
          %6123 = vst [vmem:[#allocation2 + $0x258] sm:$0xff] 0.0
          %6124 = vst [vmem:[#allocation2 + $0x260] sm:$0xff] 0.0
          %6125 = vst [vmem:[#allocation2 + $0x268] sm:$0xff] 0.0
          %6126 = vst [vmem:[#allocation2 + $0x270] sm:$0xff] 0.0
          %6127 = vst [vmem:[#allocation2 + $0x278] sm:$0xff] 0.0
          %6128 = vst [vmem:[#allocation2 + $0x280] sm:$0xff] 0.0
          %6129 = vst [vmem:[#allocation2 + $0x288] sm:$0xff] 0.0
          %6130 = vst [vmem:[#allocation2 + $0x290] sm:$0xff] 0.0
          %6131 = vst [vmem:[#allocation2 + $0x298] sm:$0xff] 0.0
          %6132 = vst [vmem:[#allocation2 + $0x2a0] sm:$0xff] 0.0
          %6133 = vst [vmem:[#allocation2 + $0x2a8] sm:$0xff] 0.0
          %6134 = vst [vmem:[#allocation2 + $0x2b0] sm:$0xff] 0.0
          %6135 = vst [vmem:[#allocation2 + $0x2b8] sm:$0xff] 0.0
          %6136 = vst [vmem:[#allocation2 + $0x2c0] sm:$0xff] 0.0
          %6137 = vst [vmem:[#allocation2 + $0x2c8] sm:$0xff] 0.0
          %6138 = vst [vmem:[#allocation2 + $0x2d0] sm:$0xff] 0.0
          %6139 = vst [vmem:[#allocation2 + $0x2d8] sm:$0xff] 0.0
          %6140 = vst [vmem:[#allocation2 + $0x2e0] sm:$0xff] 0.0
          %6141 = vst [vmem:[#allocation2 + $0x2e8] sm:$0xff] 0.0
          %6142 = vst [vmem:[#allocation2 + $0x2f0] sm:$0xff] 0.0
          %6143 = vst [vmem:[#allocation2 + $0x2f8] sm:$0xff] 0.0
          %6144 = vst [vmem:[#allocation2 + $0x300] sm:$0xff] 0.0
          %6145 = vst [vmem:[#allocation2 + $0x308] sm:$0xff] 0.0
          %6146 = vst [vmem:[#allocation2 + $0x310] sm:$0xff] 0.0
          %6147 = vst [vmem:[#allocation2 + $0x318] sm:$0xff] 0.0
          %6148 = vst [vmem:[#allocation2 + $0x320] sm:$0xff] 0.0
          %6149 = vst [vmem:[#allocation2 + $0x328] sm:$0xff] 0.0
          %6150 = vst [vmem:[#allocation2 + $0x330] sm:$0xff] 0.0
          %6151 = vst [vmem:[#allocation2 + $0x338] sm:$0xff] 0.0
          %6152 = vst [vmem:[#allocation2 + $0x340] sm:$0xff] 0.0
          %6153 = vst [vmem:[#allocation2 + $0x348] sm:$0xff] 0.0
          %6154 = vst [vmem:[#allocation2 + $0x350] sm:$0xff] 0.0
          %6155 = vst [vmem:[#allocation2 + $0x358] sm:$0xff] 0.0
          %6156 = vst [vmem:[#allocation2 + $0x360] sm:$0xff] 0.0
          %6157 = vst [vmem:[#allocation2 + $0x368] sm:$0xff] 0.0
          %6158 = vst [vmem:[#allocation2 + $0x370] sm:$0xff] 0.0
          %6159 = vst [vmem:[#allocation2 + $0x378] sm:$0xff] 0.0
          %6160 = vst [vmem:[#allocation2 + $0x380] sm:$0xff] 0.0
          %6161 = vst [vmem:[#allocation2 + $0x388] sm:$0xff] 0.0
          %6162 = vst [vmem:[#allocation2 + $0x390] sm:$0xff] 0.0
          %6163 = vst [vmem:[#allocation2 + $0x398] sm:$0xff] 0.0
          %6164 = vst [vmem:[#allocation2 + $0x3a0] sm:$0xff] 0.0
          %6165 = vst [vmem:[#allocation2 + $0x3a8] sm:$0xff] 0.0
          %6166 = vst [vmem:[#allocation2 + $0x3b0] sm:$0xff] 0.0
          %6167 = vst [vmem:[#allocation2 + $0x3b8] sm:$0xff] 0.0
          %6168 = vst [vmem:[#allocation2 + $0x3c0] sm:$0xff] 0.0
          %6169 = vst [vmem:[#allocation2 + $0x3c8] sm:$0xff] 0.0
          %6170 = vst [vmem:[#allocation2 + $0x3d0] sm:$0xff] 0.0
          %6171 = vst [vmem:[#allocation2 + $0x3d8] sm:$0xff] 0.0
          %6172 = vst [vmem:[#allocation2 + $0x3e0] sm:$0xff] 0.0
          %6173 = vst [vmem:[#allocation2 + $0x3e8] sm:$0xff] 0.0
          %6174 = vst [vmem:[#allocation2 + $0x3f0] sm:$0xff] 0.0
          %6175 = vst [vmem:[#allocation2 + $0x3f8] sm:$0xff] 0.0
        $region101: #{posenet_feat.2} parent=92 // pred_fallthru
          _
        %s6176 = sadd.s32 %s28, %s29
        %v6177 = vlaneseq
        %v6178 = vand.u32 %v6177, 127
        %s6179 = smul.u32 %s6176, 128
        %v6180 = vstv %s6179
        %v6181 = vadd.s32 %v6180, %v6178
        %vm6182 = vcmp.lt.s32.totalorder %v6181, 200
        %v6183 = vsel %vm6182, 1, 0
        %vm6184 = vcmp.eq.s32.totalorder %v6183, 1
        %v6185 = vsel %vm6184, %v5868, 0.0
        %v6186 = vsel %vm6184, %v5869, 0.0
        %v6187 = vsel %vm6184, %v5870, 0.0
        %v6188 = vsel %vm6184, %v5871, 0.0
        %v6189 = vsel %vm6184, %v5872, 0.0
        %v6190 = vsel %vm6184, %v5873, 0.0
        %v6191 = vsel %vm6184, %v5874, 0.0
        %v6192 = vsel %vm6184, %v5875, 0.0
        %v6193 = vsel %vm6184, %v5876, 0.0
        %v6194 = vsel %vm6184, %v5877, 0.0
        %v6195 = vsel %vm6184, %v5878, 0.0
        %v6196 = vsel %vm6184, %v5879, 0.0
        %v6197 = vsel %vm6184, %v5880, 0.0
        %v6198 = vsel %vm6184, %v5881, 0.0
        %v6199 = vsel %vm6184, %v5882, 0.0
        %v6200 = vsel %vm6184, %v5883, 0.0
        %v6201 = vsel %vm6184, %v5884, 0.0
        %v6202 = vsel %vm6184, %v5885, 0.0
        %v6203 = vsel %vm6184, %v5886, 0.0
        %v6204 = vsel %vm6184, %v5887, 0.0
        %v6205 = vsel %vm6184, %v5888, 0.0
        %v6206 = vsel %vm6184, %v5889, 0.0
        %v6207 = vsel %vm6184, %v5890, 0.0
        %v6208 = vsel %vm6184, %v5891, 0.0
        %v6209 = vsel %vm6184, %v5892, 0.0
        %v6210 = vsel %vm6184, %v5893, 0.0
        %v6211 = vsel %vm6184, %v5894, 0.0
        %v6212 = vsel %vm6184, %v5895, 0.0
        %v6213 = vsel %vm6184, %v5896, 0.0
        %v6214 = vsel %vm6184, %v5897, 0.0
        %v6215 = vsel %vm6184, %v5898, 0.0
        %v6216 = vsel %vm6184, %v5899, 0.0
        %v6217 = vsel %vm6184, %v5900, 0.0
        %v6218 = vsel %vm6184, %v5901, 0.0
        %v6219 = vsel %vm6184, %v5902, 0.0
        %v6220 = vsel %vm6184, %v5903, 0.0
        %v6221 = vsel %vm6184, %v5904, 0.0
        %v6222 = vsel %vm6184, %v5905, 0.0
        %v6223 = vsel %vm6184, %v5906, 0.0
        %v6224 = vsel %vm6184, %v5907, 0.0
        %v6225 = vsel %vm6184, %v5908, 0.0
        %v6226 = vsel %vm6184, %v5909, 0.0
        %v6227 = vsel %vm6184, %v5910, 0.0
        %v6228 = vsel %vm6184, %v5911, 0.0
        %v6229 = vsel %vm6184, %v5912, 0.0
        %v6230 = vsel %vm6184, %v5913, 0.0
        %v6231 = vsel %vm6184, %v5914, 0.0
        %v6232 = vsel %vm6184, %v5915, 0.0
        %v6233 = vsel %vm6184, %v5916, 0.0
        %v6234 = vsel %vm6184, %v5917, 0.0
        %v6235 = vsel %vm6184, %v5918, 0.0
        %v6236 = vsel %vm6184, %v5919, 0.0
        %v6237 = vsel %vm6184, %v5920, 0.0
        %v6238 = vsel %vm6184, %v5921, 0.0
        %v6239 = vsel %vm6184, %v5922, 0.0
        %v6240 = vsel %vm6184, %v5923, 0.0
        %v6241 = vsel %vm6184, %v5924, 0.0
        %v6242 = vsel %vm6184, %v5925, 0.0
        %v6243 = vsel %vm6184, %v5926, 0.0
        %v6244 = vsel %vm6184, %v5927, 0.0
        %v6245 = vsel %vm6184, %v5928, 0.0
        %v6246 = vsel %vm6184, %v5929, 0.0
        %v6247 = vsel %vm6184, %v5930, 0.0
        %v6248 = vsel %vm6184, %v5931, 0.0
        %v6249 = vsel %vm6184, %v5932, 0.0
        %v6250 = vsel %vm6184, %v5933, 0.0
        %v6251 = vsel %vm6184, %v5934, 0.0
        %v6252 = vsel %vm6184, %v5935, 0.0
        %v6253 = vsel %vm6184, %v5936, 0.0
        %v6254 = vsel %vm6184, %v5937, 0.0
        %v6255 = vsel %vm6184, %v5938, 0.0
        %v6256 = vsel %vm6184, %v5939, 0.0
        %v6257 = vsel %vm6184, %v5940, 0.0
        %v6258 = vsel %vm6184, %v5941, 0.0
        %v6259 = vsel %vm6184, %v5942, 0.0
        %v6260 = vsel %vm6184, %v5943, 0.0
        %v6261 = vsel %vm6184, %v5944, 0.0
        %v6262 = vsel %vm6184, %v5945, 0.0
        %v6263 = vsel %vm6184, %v5946, 0.0
        %v6264 = vsel %vm6184, %v5947, 0.0
        %v6265 = vsel %vm6184, %v5948, 0.0
        %v6266 = vsel %vm6184, %v5949, 0.0
        %v6267 = vsel %vm6184, %v5950, 0.0
        %v6268 = vsel %vm6184, %v5951, 0.0
        %v6269 = vsel %vm6184, %v5952, 0.0
        %v6270 = vsel %vm6184, %v5953, 0.0
        %v6271 = vsel %vm6184, %v5954, 0.0
        %v6272 = vsel %vm6184, %v5955, 0.0
        %v6273 = vsel %vm6184, %v5956, 0.0
        %v6274 = vsel %vm6184, %v5957, 0.0
        %v6275 = vsel %vm6184, %v5958, 0.0
        %v6276 = vsel %vm6184, %v5959, 0.0
        %v6277 = vsel %vm6184, %v5960, 0.0
        %v6278 = vsel %vm6184, %v5961, 0.0
        %v6279 = vsel %vm6184, %v5962, 0.0
        %v6280 = vsel %vm6184, %v5963, 0.0
        %v6281 = vsel %vm6184, %v5964, 0.0
        %v6282 = vsel %vm6184, %v5965, 0.0
        %v6283 = vsel %vm6184, %v5966, 0.0
        %v6284 = vsel %vm6184, %v5967, 0.0
        %v6285 = vsel %vm6184, %v5968, 0.0
        %v6286 = vsel %vm6184, %v5969, 0.0
        %v6287 = vsel %vm6184, %v5970, 0.0
        %v6288 = vsel %vm6184, %v5971, 0.0
        %v6289 = vsel %vm6184, %v5972, 0.0
        %v6290 = vsel %vm6184, %v5973, 0.0
        %v6291 = vsel %vm6184, %v5974, 0.0
        %v6292 = vsel %vm6184, %v5975, 0.0
        %v6293 = vsel %vm6184, %v5976, 0.0
        %v6294 = vsel %vm6184, %v5977, 0.0
        %v6295 = vsel %vm6184, %v5978, 0.0
        %v6296 = vsel %vm6184, %v5979, 0.0
        %v6297 = vsel %vm6184, %v5980, 0.0
        %v6298 = vsel %vm6184, %v5981, 0.0
        %v6299 = vsel %vm6184, %v5982, 0.0
        %v6300 = vsel %vm6184, %v5983, 0.0
        %v6301 = vsel %vm6184, %v5984, 0.0
        %v6302 = vsel %vm6184, %v5985, 0.0
        %v6303 = vsel %vm6184, %v5986, 0.0
        %v6304 = vsel %vm6184, %v5987, 0.0
        %v6305 = vsel %vm6184, %v5988, 0.0
        %v6306 = vsel %vm6184, %v5989, 0.0
        %v6307 = vsel %vm6184, %v5990, 0.0
        %v6308 = vsel %vm6184, %v5991, 0.0
        %v6309 = vsel %vm6184, %v5992, 0.0
        %v6310 = vsel %vm6184, %v5993, 0.0
        %v6311 = vsel %vm6184, %v5994, 0.0
        %v6312 = vsel %vm6184, %v5995, 0.0
        %v6313 = vld [vmem:[#allocation2] sm:$0xff]
        %v6314 = vld [vmem:[#allocation2 + $0x8] sm:$0xff]
        %v6315 = vld [vmem:[#allocation2 + $0x10] sm:$0xff]
        %v6316 = vld [vmem:[#allocation2 + $0x18] sm:$0xff]
        %v6317 = vld [vmem:[#allocation2 + $0x20] sm:$0xff]
        %v6318 = vld [vmem:[#allocation2 + $0x28] sm:$0xff]
        %v6319 = vld [vmem:[#allocation2 + $0x30] sm:$0xff]
        %v6320 = vld [vmem:[#allocation2 + $0x38] sm:$0xff]
        %v6321 = vld [vmem:[#allocation2 + $0x40] sm:$0xff]
        %v6322 = vld [vmem:[#allocation2 + $0x48] sm:$0xff]
        %v6323 = vld [vmem:[#allocation2 + $0x50] sm:$0xff]
        %v6324 = vld [vmem:[#allocation2 + $0x58] sm:$0xff]
        %v6325 = vld [vmem:[#allocation2 + $0x60] sm:$0xff]
        %v6326 = vld [vmem:[#allocation2 + $0x68] sm:$0xff]
        %v6327 = vld [vmem:[#allocation2 + $0x70] sm:$0xff]
        %v6328 = vld [vmem:[#allocation2 + $0x78] sm:$0xff]
        %v6329 = vld [vmem:[#allocation2 + $0x80] sm:$0xff]
        %v6330 = vld [vmem:[#allocation2 + $0x88] sm:$0xff]
        %v6331 = vld [vmem:[#allocation2 + $0x90] sm:$0xff]
        %v6332 = vld [vmem:[#allocation2 + $0x98] sm:$0xff]
        %v6333 = vld [vmem:[#allocation2 + $0xa0] sm:$0xff]
        %v6334 = vld [vmem:[#allocation2 + $0xa8] sm:$0xff]
        %v6335 = vld [vmem:[#allocation2 + $0xb0] sm:$0xff]
        %v6336 = vld [vmem:[#allocation2 + $0xb8] sm:$0xff]
        %v6337 = vld [vmem:[#allocation2 + $0xc0] sm:$0xff]
        %v6338 = vld [vmem:[#allocation2 + $0xc8] sm:$0xff]
        %v6339 = vld [vmem:[#allocation2 + $0xd0] sm:$0xff]
        %v6340 = vld [vmem:[#allocation2 + $0xd8] sm:$0xff]
        %v6341 = vld [vmem:[#allocation2 + $0xe0] sm:$0xff]
        %v6342 = vld [vmem:[#allocation2 + $0xe8] sm:$0xff]
        %v6343 = vld [vmem:[#allocation2 + $0xf0] sm:$0xff]
        %v6344 = vld [vmem:[#allocation2 + $0xf8] sm:$0xff]
        %v6345 = vld [vmem:[#allocation2 + $0x100] sm:$0xff]
        %v6346 = vld [vmem:[#allocation2 + $0x108] sm:$0xff]
        %v6347 = vld [vmem:[#allocation2 + $0x110] sm:$0xff]
        %v6348 = vld [vmem:[#allocation2 + $0x118] sm:$0xff]
        %v6349 = vld [vmem:[#allocation2 + $0x120] sm:$0xff]
        %v6350 = vld [vmem:[#allocation2 + $0x128] sm:$0xff]
        %v6351 = vld [vmem:[#allocation2 + $0x130] sm:$0xff]
        %v6352 = vld [vmem:[#allocation2 + $0x138] sm:$0xff]
        %v6353 = vld [vmem:[#allocation2 + $0x140] sm:$0xff]
        %v6354 = vld [vmem:[#allocation2 + $0x148] sm:$0xff]
        %v6355 = vld [vmem:[#allocation2 + $0x150] sm:$0xff]
        %v6356 = vld [vmem:[#allocation2 + $0x158] sm:$0xff]
        %v6357 = vld [vmem:[#allocation2 + $0x160] sm:$0xff]
        %v6358 = vld [vmem:[#allocation2 + $0x168] sm:$0xff]
        %v6359 = vld [vmem:[#allocation2 + $0x170] sm:$0xff]
        %v6360 = vld [vmem:[#allocation2 + $0x178] sm:$0xff]
        %v6361 = vld [vmem:[#allocation2 + $0x180] sm:$0xff]
        %v6362 = vld [vmem:[#allocation2 + $0x188] sm:$0xff]
        %v6363 = vld [vmem:[#allocation2 + $0x190] sm:$0xff]
        %v6364 = vld [vmem:[#allocation2 + $0x198] sm:$0xff]
        %v6365 = vld [vmem:[#allocation2 + $0x1a0] sm:$0xff]
        %v6366 = vld [vmem:[#allocation2 + $0x1a8] sm:$0xff]
        %v6367 = vld [vmem:[#allocation2 + $0x1b0] sm:$0xff]
        %v6368 = vld [vmem:[#allocation2 + $0x1b8] sm:$0xff]
        %v6369 = vld [vmem:[#allocation2 + $0x1c0] sm:$0xff]
        %v6370 = vld [vmem:[#allocation2 + $0x1c8] sm:$0xff]
        %v6371 = vld [vmem:[#allocation2 + $0x1d0] sm:$0xff]
        %v6372 = vld [vmem:[#allocation2 + $0x1d8] sm:$0xff]
        %v6373 = vld [vmem:[#allocation2 + $0x1e0] sm:$0xff]
        %v6374 = vld [vmem:[#allocation2 + $0x1e8] sm:$0xff]
        %v6375 = vld [vmem:[#allocation2 + $0x1f0] sm:$0xff]
        %v6376 = vld [vmem:[#allocation2 + $0x1f8] sm:$0xff]
        %v6377 = vld [vmem:[#allocation2 + $0x200] sm:$0xff]
        %v6378 = vld [vmem:[#allocation2 + $0x208] sm:$0xff]
        %v6379 = vld [vmem:[#allocation2 + $0x210] sm:$0xff]
        %v6380 = vld [vmem:[#allocation2 + $0x218] sm:$0xff]
        %v6381 = vld [vmem:[#allocation2 + $0x220] sm:$0xff]
        %v6382 = vld [vmem:[#allocation2 + $0x228] sm:$0xff]
        %v6383 = vld [vmem:[#allocation2 + $0x230] sm:$0xff]
        %v6384 = vld [vmem:[#allocation2 + $0x238] sm:$0xff]
        %v6385 = vld [vmem:[#allocation2 + $0x240] sm:$0xff]
        %v6386 = vld [vmem:[#allocation2 + $0x248] sm:$0xff]
        %v6387 = vld [vmem:[#allocation2 + $0x250] sm:$0xff]
        %v6388 = vld [vmem:[#allocation2 + $0x258] sm:$0xff]
        %v6389 = vld [vmem:[#allocation2 + $0x260] sm:$0xff]
        %v6390 = vld [vmem:[#allocation2 + $0x268] sm:$0xff]
        %v6391 = vld [vmem:[#allocation2 + $0x270] sm:$0xff]
        %v6392 = vld [vmem:[#allocation2 + $0x278] sm:$0xff]
        %v6393 = vld [vmem:[#allocation2 + $0x280] sm:$0xff]
        %v6394 = vld [vmem:[#allocation2 + $0x288] sm:$0xff]
        %v6395 = vld [vmem:[#allocation2 + $0x290] sm:$0xff]
        %v6396 = vld [vmem:[#allocation2 + $0x298] sm:$0xff]
        %v6397 = vld [vmem:[#allocation2 + $0x2a0] sm:$0xff]
        %v6398 = vld [vmem:[#allocation2 + $0x2a8] sm:$0xff]
        %v6399 = vld [vmem:[#allocation2 + $0x2b0] sm:$0xff]
        %v6400 = vld [vmem:[#allocation2 + $0x2b8] sm:$0xff]
        %v6401 = vld [vmem:[#allocation2 + $0x2c0] sm:$0xff]
        %v6402 = vld [vmem:[#allocation2 + $0x2c8] sm:$0xff]
        %v6403 = vld [vmem:[#allocation2 + $0x2d0] sm:$0xff]
        %v6404 = vld [vmem:[#allocation2 + $0x2d8] sm:$0xff]
        %v6405 = vld [vmem:[#allocation2 + $0x2e0] sm:$0xff]
        %v6406 = vld [vmem:[#allocation2 + $0x2e8] sm:$0xff]
        %v6407 = vld [vmem:[#allocation2 + $0x2f0] sm:$0xff]
        %v6408 = vld [vmem:[#allocation2 + $0x2f8] sm:$0xff]
        %v6409 = vld [vmem:[#allocation2 + $0x300] sm:$0xff]
        %v6410 = vld [vmem:[#allocation2 + $0x308] sm:$0xff]
        %v6411 = vld [vmem:[#allocation2 + $0x310] sm:$0xff]
        %v6412 = vld [vmem:[#allocation2 + $0x318] sm:$0xff]
        %v6413 = vld [vmem:[#allocation2 + $0x320] sm:$0xff]
        %v6414 = vld [vmem:[#allocation2 + $0x328] sm:$0xff]
        %v6415 = vld [vmem:[#allocation2 + $0x330] sm:$0xff]
        %v6416 = vld [vmem:[#allocation2 + $0x338] sm:$0xff]
        %v6417 = vld [vmem:[#allocation2 + $0x340] sm:$0xff]
        %v6418 = vld [vmem:[#allocation2 + $0x348] sm:$0xff]
        %v6419 = vld [vmem:[#allocation2 + $0x350] sm:$0xff]
        %v6420 = vld [vmem:[#allocation2 + $0x358] sm:$0xff]
        %v6421 = vld [vmem:[#allocation2 + $0x360] sm:$0xff]
        %v6422 = vld [vmem:[#allocation2 + $0x368] sm:$0xff]
        %v6423 = vld [vmem:[#allocation2 + $0x370] sm:$0xff]
        %v6424 = vld [vmem:[#allocation2 + $0x378] sm:$0xff]
        %v6425 = vld [vmem:[#allocation2 + $0x380] sm:$0xff]
        %v6426 = vld [vmem:[#allocation2 + $0x388] sm:$0xff]
        %v6427 = vld [vmem:[#allocation2 + $0x390] sm:$0xff]
        %v6428 = vld [vmem:[#allocation2 + $0x398] sm:$0xff]
        %v6429 = vld [vmem:[#allocation2 + $0x3a0] sm:$0xff]
        %v6430 = vld [vmem:[#allocation2 + $0x3a8] sm:$0xff]
        %v6431 = vld [vmem:[#allocation2 + $0x3b0] sm:$0xff]
        %v6432 = vld [vmem:[#allocation2 + $0x3b8] sm:$0xff]
        %v6433 = vld [vmem:[#allocation2 + $0x3c0] sm:$0xff]
        %v6434 = vld [vmem:[#allocation2 + $0x3c8] sm:$0xff]
        %v6435 = vld [vmem:[#allocation2 + $0x3d0] sm:$0xff]
        %v6436 = vld [vmem:[#allocation2 + $0x3d8] sm:$0xff]
        %v6437 = vld [vmem:[#allocation2 + $0x3e0] sm:$0xff]
        %v6438 = vld [vmem:[#allocation2 + $0x3e8] sm:$0xff]
        %v6439 = vld [vmem:[#allocation2 + $0x3f0] sm:$0xff]
        %v6440 = vld [vmem:[#allocation2 + $0x3f8] sm:$0xff]
        %v6441 = vadd.f32 %v6313, %v6185
        %v6442 = vadd.f32 %v6314, %v6186
        %v6443 = vadd.f32 %v6315, %v6187
        %v6444 = vadd.f32 %v6316, %v6188
        %v6445 = vadd.f32 %v6317, %v6189
        %v6446 = vadd.f32 %v6318, %v6190
        %v6447 = vadd.f32 %v6319, %v6191
        %v6448 = vadd.f32 %v6320, %v6192
        %v6449 = vadd.f32 %v6321, %v6193
        %v6450 = vadd.f32 %v6322, %v6194
        %v6451 = vadd.f32 %v6323, %v6195
        %v6452 = vadd.f32 %v6324, %v6196
        %v6453 = vadd.f32 %v6325, %v6197
        %v6454 = vadd.f32 %v6326, %v6198
        %v6455 = vadd.f32 %v6327, %v6199
        %v6456 = vadd.f32 %v6328, %v6200
        %v6457 = vadd.f32 %v6329, %v6201
        %v6458 = vadd.f32 %v6330, %v6202
        %v6459 = vadd.f32 %v6331, %v6203
        %v6460 = vadd.f32 %v6332, %v6204
        %v6461 = vadd.f32 %v6333, %v6205
        %v6462 = vadd.f32 %v6334, %v6206
        %v6463 = vadd.f32 %v6335, %v6207
        %v6464 = vadd.f32 %v6336, %v6208
        %v6465 = vadd.f32 %v6337, %v6209
        %v6466 = vadd.f32 %v6338, %v6210
        %v6467 = vadd.f32 %v6339, %v6211
        %v6468 = vadd.f32 %v6340, %v6212
        %v6469 = vadd.f32 %v6341, %v6213
        %v6470 = vadd.f32 %v6342, %v6214
        %v6471 = vadd.f32 %v6343, %v6215
        %v6472 = vadd.f32 %v6344, %v6216
        %v6473 = vadd.f32 %v6345, %v6217
        %v6474 = vadd.f32 %v6346, %v6218
        %v6475 = vadd.f32 %v6347, %v6219
        %v6476 = vadd.f32 %v6348, %v6220
        %v6477 = vadd.f32 %v6349, %v6221
        %v6478 = vadd.f32 %v6350, %v6222
        %v6479 = vadd.f32 %v6351, %v6223
        %v6480 = vadd.f32 %v6352, %v6224
        %v6481 = vadd.f32 %v6353, %v6225
        %v6482 = vadd.f32 %v6354, %v6226
        %v6483 = vadd.f32 %v6355, %v6227
        %v6484 = vadd.f32 %v6356, %v6228
        %v6485 = vadd.f32 %v6357, %v6229
        %v6486 = vadd.f32 %v6358, %v6230
        %v6487 = vadd.f32 %v6359, %v6231
        %v6488 = vadd.f32 %v6360, %v6232
        %v6489 = vadd.f32 %v6361, %v6233
        %v6490 = vadd.f32 %v6362, %v6234
        %v6491 = vadd.f32 %v6363, %v6235
        %v6492 = vadd.f32 %v6364, %v6236
        %v6493 = vadd.f32 %v6365, %v6237
        %v6494 = vadd.f32 %v6366, %v6238
        %v6495 = vadd.f32 %v6367, %v6239
        %v6496 = vadd.f32 %v6368, %v6240
        %v6497 = vadd.f32 %v6369, %v6241
        %v6498 = vadd.f32 %v6370, %v6242
        %v6499 = vadd.f32 %v6371, %v6243
        %v6500 = vadd.f32 %v6372, %v6244
        %v6501 = vadd.f32 %v6373, %v6245
        %v6502 = vadd.f32 %v6374, %v6246
        %v6503 = vadd.f32 %v6375, %v6247
        %v6504 = vadd.f32 %v6376, %v6248
        %v6505 = vadd.f32 %v6377, %v6249
        %v6506 = vadd.f32 %v6378, %v6250
        %v6507 = vadd.f32 %v6379, %v6251
        %v6508 = vadd.f32 %v6380, %v6252
        %v6509 = vadd.f32 %v6381, %v6253
        %v6510 = vadd.f32 %v6382, %v6254
        %v6511 = vadd.f32 %v6383, %v6255
        %v6512 = vadd.f32 %v6384, %v6256
        %v6513 = vadd.f32 %v6385, %v6257
        %v6514 = vadd.f32 %v6386, %v6258
        %v6515 = vadd.f32 %v6387, %v6259
        %v6516 = vadd.f32 %v6388, %v6260
        %v6517 = vadd.f32 %v6389, %v6261
        %v6518 = vadd.f32 %v6390, %v6262
        %v6519 = vadd.f32 %v6391, %v6263
        %v6520 = vadd.f32 %v6392, %v6264
        %v6521 = vadd.f32 %v6393, %v6265
        %v6522 = vadd.f32 %v6394, %v6266
        %v6523 = vadd.f32 %v6395, %v6267
        %v6524 = vadd.f32 %v6396, %v6268
        %v6525 = vadd.f32 %v6397, %v6269
        %v6526 = vadd.f32 %v6398, %v6270
        %v6527 = vadd.f32 %v6399, %v6271
        %v6528 = vadd.f32 %v6400, %v6272
        %v6529 = vadd.f32 %v6401, %v6273
        %v6530 = vadd.f32 %v6402, %v6274
        %v6531 = vadd.f32 %v6403, %v6275
        %v6532 = vadd.f32 %v6404, %v6276
        %v6533 = vadd.f32 %v6405, %v6277
        %v6534 = vadd.f32 %v6406, %v6278
        %v6535 = vadd.f32 %v6407, %v6279
        %v6536 = vadd.f32 %v6408, %v6280
        %v6537 = vadd.f32 %v6409, %v6281
        %v6538 = vadd.f32 %v6410, %v6282
        %v6539 = vadd.f32 %v6411, %v6283
        %v6540 = vadd.f32 %v6412, %v6284
        %v6541 = vadd.f32 %v6413, %v6285
        %v6542 = vadd.f32 %v6414, %v6286
        %v6543 = vadd.f32 %v6415, %v6287
        %v6544 = vadd.f32 %v6416, %v6288
        %v6545 = vadd.f32 %v6417, %v6289
        %v6546 = vadd.f32 %v6418, %v6290
        %v6547 = vadd.f32 %v6419, %v6291
        %v6548 = vadd.f32 %v6420, %v6292
        %v6549 = vadd.f32 %v6421, %v6293
        %v6550 = vadd.f32 %v6422, %v6294
        %v6551 = vadd.f32 %v6423, %v6295
        %v6552 = vadd.f32 %v6424, %v6296
        %v6553 = vadd.f32 %v6425, %v6297
        %v6554 = vadd.f32 %v6426, %v6298
        %v6555 = vadd.f32 %v6427, %v6299
        %v6556 = vadd.f32 %v6428, %v6300
        %v6557 = vadd.f32 %v6429, %v6301
        %v6558 = vadd.f32 %v6430, %v6302
        %v6559 = vadd.f32 %v6431, %v6303
        %v6560 = vadd.f32 %v6432, %v6304
        %v6561 = vadd.f32 %v6433, %v6305
        %v6562 = vadd.f32 %v6434, %v6306
        %v6563 = vadd.f32 %v6435, %v6307
        %v6564 = vadd.f32 %v6436, %v6308
        %v6565 = vadd.f32 %v6437, %v6309
        %v6566 = vadd.f32 %v6438, %v6310
        %v6567 = vadd.f32 %v6439, %v6311
        %v6568 = vadd.f32 %v6440, %v6312
        %6569 = vst [vmem:[#allocation2] sm:$0xff] %v6441
        %6570 = vst [vmem:[#allocation2 + $0x8] sm:$0xff] %v6442
        %6571 = vst [vmem:[#allocation2 + $0x10] sm:$0xff] %v6443
        %6572 = vst [vmem:[#allocation2 + $0x18] sm:$0xff] %v6444
        %6573 = vst [vmem:[#allocation2 + $0x20] sm:$0xff] %v6445
        %6574 = vst [vmem:[#allocation2 + $0x28] sm:$0xff] %v6446
        %6575 = vst [vmem:[#allocation2 + $0x30] sm:$0xff] %v6447
        %6576 = vst [vmem:[#allocation2 + $0x38] sm:$0xff] %v6448
        %6577 = vst [vmem:[#allocation2 + $0x40] sm:$0xff] %v6449
        %6578 = vst [vmem:[#allocation2 + $0x48] sm:$0xff] %v6450
        %6579 = vst [vmem:[#allocation2 + $0x50] sm:$0xff] %v6451
        %6580 = vst [vmem:[#allocation2 + $0x58] sm:$0xff] %v6452
        %6581 = vst [vmem:[#allocation2 + $0x60] sm:$0xff] %v6453
        %6582 = vst [vmem:[#allocation2 + $0x68] sm:$0xff] %v6454
        %6583 = vst [vmem:[#allocation2 + $0x70] sm:$0xff] %v6455
        %6584 = vst [vmem:[#allocation2 + $0x78] sm:$0xff] %v6456
        %6585 = vst [vmem:[#allocation2 + $0x80] sm:$0xff] %v6457
        %6586 = vst [vmem:[#allocation2 + $0x88] sm:$0xff] %v6458
        %6587 = vst [vmem:[#allocation2 + $0x90] sm:$0xff] %v6459
        %6588 = vst [vmem:[#allocation2 + $0x98] sm:$0xff] %v6460
        %6589 = vst [vmem:[#allocation2 + $0xa0] sm:$0xff] %v6461
        %6590 = vst [vmem:[#allocation2 + $0xa8] sm:$0xff] %v6462
        %6591 = vst [vmem:[#allocation2 + $0xb0] sm:$0xff] %v6463
        %6592 = vst [vmem:[#allocation2 + $0xb8] sm:$0xff] %v6464
        %6593 = vst [vmem:[#allocation2 + $0xc0] sm:$0xff] %v6465
        %6594 = vst [vmem:[#allocation2 + $0xc8] sm:$0xff] %v6466
        %6595 = vst [vmem:[#allocation2 + $0xd0] sm:$0xff] %v6467
        %6596 = vst [vmem:[#allocation2 + $0xd8] sm:$0xff] %v6468
        %6597 = vst [vmem:[#allocation2 + $0xe0] sm:$0xff] %v6469
        %6598 = vst [vmem:[#allocation2 + $0xe8] sm:$0xff] %v6470
        %6599 = vst [vmem:[#allocation2 + $0xf0] sm:$0xff] %v6471
        %6600 = vst [vmem:[#allocation2 + $0xf8] sm:$0xff] %v6472
        %6601 = vst [vmem:[#allocation2 + $0x100] sm:$0xff] %v6473
        %6602 = vst [vmem:[#allocation2 + $0x108] sm:$0xff] %v6474
        %6603 = vst [vmem:[#allocation2 + $0x110] sm:$0xff] %v6475
        %6604 = vst [vmem:[#allocation2 + $0x118] sm:$0xff] %v6476
        %6605 = vst [vmem:[#allocation2 + $0x120] sm:$0xff] %v6477
        %6606 = vst [vmem:[#allocation2 + $0x128] sm:$0xff] %v6478
        %6607 = vst [vmem:[#allocation2 + $0x130] sm:$0xff] %v6479
        %6608 = vst [vmem:[#allocation2 + $0x138] sm:$0xff] %v6480
        %6609 = vst [vmem:[#allocation2 + $0x140] sm:$0xff] %v6481
        %6610 = vst [vmem:[#allocation2 + $0x148] sm:$0xff] %v6482
        %6611 = vst [vmem:[#allocation2 + $0x150] sm:$0xff] %v6483
        %6612 = vst [vmem:[#allocation2 + $0x158] sm:$0xff] %v6484
        %6613 = vst [vmem:[#allocation2 + $0x160] sm:$0xff] %v6485
        %6614 = vst [vmem:[#allocation2 + $0x168] sm:$0xff] %v6486
        %6615 = vst [vmem:[#allocation2 + $0x170] sm:$0xff] %v6487
        %6616 = vst [vmem:[#allocation2 + $0x178] sm:$0xff] %v6488
        %6617 = vst [vmem:[#allocation2 + $0x180] sm:$0xff] %v6489
        %6618 = vst [vmem:[#allocation2 + $0x188] sm:$0xff] %v6490
        %6619 = vst [vmem:[#allocation2 + $0x190] sm:$0xff] %v6491
        %6620 = vst [vmem:[#allocation2 + $0x198] sm:$0xff] %v6492
        %6621 = vst [vmem:[#allocation2 + $0x1a0] sm:$0xff] %v6493
        %6622 = vst [vmem:[#allocation2 + $0x1a8] sm:$0xff] %v6494
        %6623 = vst [vmem:[#allocation2 + $0x1b0] sm:$0xff] %v6495
        %6624 = vst [vmem:[#allocation2 + $0x1b8] sm:$0xff] %v6496
        %6625 = vst [vmem:[#allocation2 + $0x1c0] sm:$0xff] %v6497
        %6626 = vst [vmem:[#allocation2 + $0x1c8] sm:$0xff] %v6498
        %6627 = vst [vmem:[#allocation2 + $0x1d0] sm:$0xff] %v6499
        %6628 = vst [vmem:[#allocation2 + $0x1d8] sm:$0xff] %v6500
        %6629 = vst [vmem:[#allocation2 + $0x1e0] sm:$0xff] %v6501
        %6630 = vst [vmem:[#allocation2 + $0x1e8] sm:$0xff] %v6502
        %6631 = vst [vmem:[#allocation2 + $0x1f0] sm:$0xff] %v6503
        %6632 = vst [vmem:[#allocation2 + $0x1f8] sm:$0xff] %v6504
        %6633 = vst [vmem:[#allocation2 + $0x200] sm:$0xff] %v6505
        %6634 = vst [vmem:[#allocation2 + $0x208] sm:$0xff] %v6506
        %6635 = vst [vmem:[#allocation2 + $0x210] sm:$0xff] %v6507
        %6636 = vst [vmem:[#allocation2 + $0x218] sm:$0xff] %v6508
        %6637 = vst [vmem:[#allocation2 + $0x220] sm:$0xff] %v6509
        %6638 = vst [vmem:[#allocation2 + $0x228] sm:$0xff] %v6510
        %6639 = vst [vmem:[#allocation2 + $0x230] sm:$0xff] %v6511
        %6640 = vst [vmem:[#allocation2 + $0x238] sm:$0xff] %v6512
        %6641 = vst [vmem:[#allocation2 + $0x240] sm:$0xff] %v6513
        %6642 = vst [vmem:[#allocation2 + $0x248] sm:$0xff] %v6514
        %6643 = vst [vmem:[#allocation2 + $0x250] sm:$0xff] %v6515
        %6644 = vst [vmem:[#allocation2 + $0x258] sm:$0xff] %v6516
        %6645 = vst [vmem:[#allocation2 + $0x260] sm:$0xff] %v6517
        %6646 = vst [vmem:[#allocation2 + $0x268] sm:$0xff] %v6518
        %6647 = vst [vmem:[#allocation2 + $0x270] sm:$0xff] %v6519
        %6648 = vst [vmem:[#allocation2 + $0x278] sm:$0xff] %v6520
        %6649 = vst [vmem:[#allocation2 + $0x280] sm:$0xff] %v6521
        %6650 = vst [vmem:[#allocation2 + $0x288] sm:$0xff] %v6522
        %6651 = vst [vmem:[#allocation2 + $0x290] sm:$0xff] %v6523
        %6652 = vst [vmem:[#allocation2 + $0x298] sm:$0xff] %v6524
        %6653 = vst [vmem:[#allocation2 + $0x2a0] sm:$0xff] %v6525
        %6654 = vst [vmem:[#allocation2 + $0x2a8] sm:$0xff] %v6526
        %6655 = vst [vmem:[#allocation2 + $0x2b0] sm:$0xff] %v6527
        %6656 = vst [vmem:[#allocation2 + $0x2b8] sm:$0xff] %v6528
        %6657 = vst [vmem:[#allocation2 + $0x2c0] sm:$0xff] %v6529
        %6658 = vst [vmem:[#allocation2 + $0x2c8] sm:$0xff] %v6530
        %6659 = vst [vmem:[#allocation2 + $0x2d0] sm:$0xff] %v6531
        %6660 = vst [vmem:[#allocation2 + $0x2d8] sm:$0xff] %v6532
        %6661 = vst [vmem:[#allocation2 + $0x2e0] sm:$0xff] %v6533
        %6662 = vst [vmem:[#allocation2 + $0x2e8] sm:$0xff] %v6534
        %6663 = vst [vmem:[#allocation2 + $0x2f0] sm:$0xff] %v6535
        %6664 = vst [vmem:[#allocation2 + $0x2f8] sm:$0xff] %v6536
        %6665 = vst [vmem:[#allocation2 + $0x300] sm:$0xff] %v6537
        %6666 = vst [vmem:[#allocation2 + $0x308] sm:$0xff] %v6538
        %6667 = vst [vmem:[#allocation2 + $0x310] sm:$0xff] %v6539
        %6668 = vst [vmem:[#allocation2 + $0x318] sm:$0xff] %v6540
        %6669 = vst [vmem:[#allocation2 + $0x320] sm:$0xff] %v6541
        %6670 = vst [vmem:[#allocation2 + $0x328] sm:$0xff] %v6542
        %6671 = vst [vmem:[#allocation2 + $0x330] sm:$0xff] %v6543
        %6672 = vst [vmem:[#allocation2 + $0x338] sm:$0xff] %v6544
        %6673 = vst [vmem:[#allocation2 + $0x340] sm:$0xff] %v6545
        %6674 = vst [vmem:[#allocation2 + $0x348] sm:$0xff] %v6546
        %6675 = vst [vmem:[#allocation2 + $0x350] sm:$0xff] %v6547
        %6676 = vst [vmem:[#allocation2 + $0x358] sm:$0xff] %v6548
        %6677 = vst [vmem:[#allocation2 + $0x360] sm:$0xff] %v6549
        %6678 = vst [vmem:[#allocation2 + $0x368] sm:$0xff] %v6550
        %6679 = vst [vmem:[#allocation2 + $0x370] sm:$0xff] %v6551
        %6680 = vst [vmem:[#allocation2 + $0x378] sm:$0xff] %v6552
        %6681 = vst [vmem:[#allocation2 + $0x380] sm:$0xff] %v6553
        %6682 = vst [vmem:[#allocation2 + $0x388] sm:$0xff] %v6554
        %6683 = vst [vmem:[#allocation2 + $0x390] sm:$0xff] %v6555
        %6684 = vst [vmem:[#allocation2 + $0x398] sm:$0xff] %v6556
        %6685 = vst [vmem:[#allocation2 + $0x3a0] sm:$0xff] %v6557
        %6686 = vst [vmem:[#allocation2 + $0x3a8] sm:$0xff] %v6558
        %6687 = vst [vmem:[#allocation2 + $0x3b0] sm:$0xff] %v6559
        %6688 = vst [vmem:[#allocation2 + $0x3b8] sm:$0xff] %v6560
        %6689 = vst [vmem:[#allocation2 + $0x3c0] sm:$0xff] %v6561
        %6690 = vst [vmem:[#allocation2 + $0x3c8] sm:$0xff] %v6562
        %6691 = vst [vmem:[#allocation2 + $0x3d0] sm:$0xff] %v6563
        %6692 = vst [vmem:[#allocation2 + $0x3d8] sm:$0xff] %v6564
        %6693 = vst [vmem:[#allocation2 + $0x3e0] sm:$0xff] %v6565
        %6694 = vst [vmem:[#allocation2 + $0x3e8] sm:$0xff] %v6566
        %6695 = vst [vmem:[#allocation2 + $0x3f0] sm:$0xff] %v6567
        %6696 = vst [vmem:[#allocation2 + $0x3f8] sm:$0xff] %v6568
        // Predicated region
        $region102: #{posenet_feat.2} parent=92 // pred_check
          %p6697 = pneg %p6044
        $region103: #{posenet_feat.2} parent=92 // pred_check_branch
          %6699 = sbr.rel (%p6697) target = $region105
        $region104: #{posenet_feat.2} parent=92 // pred_region
          %v6700 = vld [vmem:[#allocation2] sm:$0xff]
          %v6701 = vld [vmem:[#allocation2 + $0x8] sm:$0xff]
          %v6702 = vld [vmem:[#allocation2 + $0x10] sm:$0xff]
          %v6703 = vld [vmem:[#allocation2 + $0x18] sm:$0xff]
          %v6704 = vld [vmem:[#allocation2 + $0x20] sm:$0xff]
          %v6705 = vld [vmem:[#allocation2 + $0x28] sm:$0xff]
          %v6706 = vld [vmem:[#allocation2 + $0x30] sm:$0xff]
          %v6707 = vld [vmem:[#allocation2 + $0x38] sm:$0xff]
          %v6708 = vld [vmem:[#allocation2 + $0x40] sm:$0xff]
          %v6709 = vld [vmem:[#allocation2 + $0x48] sm:$0xff]
          %v6710 = vld [vmem:[#allocation2 + $0x50] sm:$0xff]
          %v6711 = vld [vmem:[#allocation2 + $0x58] sm:$0xff]
          %v6712 = vld [vmem:[#allocation2 + $0x60] sm:$0xff]
          %v6713 = vld [vmem:[#allocation2 + $0x68] sm:$0xff]
          %v6714 = vld [vmem:[#allocation2 + $0x70] sm:$0xff]
          %v6715 = vld [vmem:[#allocation2 + $0x78] sm:$0xff]
          %v6716 = vld [vmem:[#allocation2 + $0x80] sm:$0xff]
          %v6717 = vld [vmem:[#allocation2 + $0x88] sm:$0xff]
          %v6718 = vld [vmem:[#allocation2 + $0x90] sm:$0xff]
          %v6719 = vld [vmem:[#allocation2 + $0x98] sm:$0xff]
          %v6720 = vld [vmem:[#allocation2 + $0xa0] sm:$0xff]
          %v6721 = vld [vmem:[#allocation2 + $0xa8] sm:$0xff]
          %v6722 = vld [vmem:[#allocation2 + $0xb0] sm:$0xff]
          %v6723 = vld [vmem:[#allocation2 + $0xb8] sm:$0xff]
          %v6724 = vld [vmem:[#allocation2 + $0xc0] sm:$0xff]
          %v6725 = vld [vmem:[#allocation2 + $0xc8] sm:$0xff]
          %v6726 = vld [vmem:[#allocation2 + $0xd0] sm:$0xff]
          %v6727 = vld [vmem:[#allocation2 + $0xd8] sm:$0xff]
          %v6728 = vld [vmem:[#allocation2 + $0xe0] sm:$0xff]
          %v6729 = vld [vmem:[#allocation2 + $0xe8] sm:$0xff]
          %v6730 = vld [vmem:[#allocation2 + $0xf0] sm:$0xff]
          %v6731 = vld [vmem:[#allocation2 + $0xf8] sm:$0xff]
          %v6732 = vld [vmem:[#allocation2 + $0x100] sm:$0xff]
          %v6733 = vld [vmem:[#allocation2 + $0x108] sm:$0xff]
          %v6734 = vld [vmem:[#allocation2 + $0x110] sm:$0xff]
          %v6735 = vld [vmem:[#allocation2 + $0x118] sm:$0xff]
          %v6736 = vld [vmem:[#allocation2 + $0x120] sm:$0xff]
          %v6737 = vld [vmem:[#allocation2 + $0x128] sm:$0xff]
          %v6738 = vld [vmem:[#allocation2 + $0x130] sm:$0xff]
          %v6739 = vld [vmem:[#allocation2 + $0x138] sm:$0xff]
          %v6740 = vld [vmem:[#allocation2 + $0x140] sm:$0xff]
          %v6741 = vld [vmem:[#allocation2 + $0x148] sm:$0xff]
          %v6742 = vld [vmem:[#allocation2 + $0x150] sm:$0xff]
          %v6743 = vld [vmem:[#allocation2 + $0x158] sm:$0xff]
          %v6744 = vld [vmem:[#allocation2 + $0x160] sm:$0xff]
          %v6745 = vld [vmem:[#allocation2 + $0x168] sm:$0xff]
          %v6746 = vld [vmem:[#allocation2 + $0x170] sm:$0xff]
          %v6747 = vld [vmem:[#allocation2 + $0x178] sm:$0xff]
          %v6748 = vld [vmem:[#allocation2 + $0x180] sm:$0xff]
          %v6749 = vld [vmem:[#allocation2 + $0x188] sm:$0xff]
          %v6750 = vld [vmem:[#allocation2 + $0x190] sm:$0xff]
          %v6751 = vld [vmem:[#allocation2 + $0x198] sm:$0xff]
          %v6752 = vld [vmem:[#allocation2 + $0x1a0] sm:$0xff]
          %v6753 = vld [vmem:[#allocation2 + $0x1a8] sm:$0xff]
          %v6754 = vld [vmem:[#allocation2 + $0x1b0] sm:$0xff]
          %v6755 = vld [vmem:[#allocation2 + $0x1b8] sm:$0xff]
          %v6756 = vld [vmem:[#allocation2 + $0x1c0] sm:$0xff]
          %v6757 = vld [vmem:[#allocation2 + $0x1c8] sm:$0xff]
          %v6758 = vld [vmem:[#allocation2 + $0x1d0] sm:$0xff]
          %v6759 = vld [vmem:[#allocation2 + $0x1d8] sm:$0xff]
          %v6760 = vld [vmem:[#allocation2 + $0x1e0] sm:$0xff]
          %v6761 = vld [vmem:[#allocation2 + $0x1e8] sm:$0xff]
          %v6762 = vld [vmem:[#allocation2 + $0x1f0] sm:$0xff]
          %v6763 = vld [vmem:[#allocation2 + $0x1f8] sm:$0xff]
          %v6764 = vld [vmem:[#allocation2 + $0x200] sm:$0xff]
          %v6765 = vld [vmem:[#allocation2 + $0x208] sm:$0xff]
          %v6766 = vld [vmem:[#allocation2 + $0x210] sm:$0xff]
          %v6767 = vld [vmem:[#allocation2 + $0x218] sm:$0xff]
          %v6768 = vld [vmem:[#allocation2 + $0x220] sm:$0xff]
          %v6769 = vld [vmem:[#allocation2 + $0x228] sm:$0xff]
          %v6770 = vld [vmem:[#allocation2 + $0x230] sm:$0xff]
          %v6771 = vld [vmem:[#allocation2 + $0x238] sm:$0xff]
          %v6772 = vld [vmem:[#allocation2 + $0x240] sm:$0xff]
          %v6773 = vld [vmem:[#allocation2 + $0x248] sm:$0xff]
          %v6774 = vld [vmem:[#allocation2 + $0x250] sm:$0xff]
          %v6775 = vld [vmem:[#allocation2 + $0x258] sm:$0xff]
          %v6776 = vld [vmem:[#allocation2 + $0x260] sm:$0xff]
          %v6777 = vld [vmem:[#allocation2 + $0x268] sm:$0xff]
          %v6778 = vld [vmem:[#allocation2 + $0x270] sm:$0xff]
          %v6779 = vld [vmem:[#allocation2 + $0x278] sm:$0xff]
          %v6780 = vld [vmem:[#allocation2 + $0x280] sm:$0xff]
          %v6781 = vld [vmem:[#allocation2 + $0x288] sm:$0xff]
          %v6782 = vld [vmem:[#allocation2 + $0x290] sm:$0xff]
          %v6783 = vld [vmem:[#allocation2 + $0x298] sm:$0xff]
          %v6784 = vld [vmem:[#allocation2 + $0x2a0] sm:$0xff]
          %v6785 = vld [vmem:[#allocation2 + $0x2a8] sm:$0xff]
          %v6786 = vld [vmem:[#allocation2 + $0x2b0] sm:$0xff]
          %v6787 = vld [vmem:[#allocation2 + $0x2b8] sm:$0xff]
          %v6788 = vld [vmem:[#allocation2 + $0x2c0] sm:$0xff]
          %v6789 = vld [vmem:[#allocation2 + $0x2c8] sm:$0xff]
          %v6790 = vld [vmem:[#allocation2 + $0x2d0] sm:$0xff]
          %v6791 = vld [vmem:[#allocation2 + $0x2d8] sm:$0xff]
          %v6792 = vld [vmem:[#allocation2 + $0x2e0] sm:$0xff]
          %v6793 = vld [vmem:[#allocation2 + $0x2e8] sm:$0xff]
          %v6794 = vld [vmem:[#allocation2 + $0x2f0] sm:$0xff]
          %v6795 = vld [vmem:[#allocation2 + $0x2f8] sm:$0xff]
          %v6796 = vld [vmem:[#allocation2 + $0x300] sm:$0xff]
          %v6797 = vld [vmem:[#allocation2 + $0x308] sm:$0xff]
          %v6798 = vld [vmem:[#allocation2 + $0x310] sm:$0xff]
          %v6799 = vld [vmem:[#allocation2 + $0x318] sm:$0xff]
          %v6800 = vld [vmem:[#allocation2 + $0x320] sm:$0xff]
          %v6801 = vld [vmem:[#allocation2 + $0x328] sm:$0xff]
          %v6802 = vld [vmem:[#allocation2 + $0x330] sm:$0xff]
          %v6803 = vld [vmem:[#allocation2 + $0x338] sm:$0xff]
          %v6804 = vld [vmem:[#allocation2 + $0x340] sm:$0xff]
          %v6805 = vld [vmem:[#allocation2 + $0x348] sm:$0xff]
          %v6806 = vld [vmem:[#allocation2 + $0x350] sm:$0xff]
          %v6807 = vld [vmem:[#allocation2 + $0x358] sm:$0xff]
          %v6808 = vld [vmem:[#allocation2 + $0x360] sm:$0xff]
          %v6809 = vld [vmem:[#allocation2 + $0x368] sm:$0xff]
          %v6810 = vld [vmem:[#allocation2 + $0x370] sm:$0xff]
          %v6811 = vld [vmem:[#allocation2 + $0x378] sm:$0xff]
          %v6812 = vld [vmem:[#allocation2 + $0x380] sm:$0xff]
          %v6813 = vld [vmem:[#allocation2 + $0x388] sm:$0xff]
          %v6814 = vld [vmem:[#allocation2 + $0x390] sm:$0xff]
          %v6815 = vld [vmem:[#allocation2 + $0x398] sm:$0xff]
          %v6816 = vld [vmem:[#allocation2 + $0x3a0] sm:$0xff]
          %v6817 = vld [vmem:[#allocation2 + $0x3a8] sm:$0xff]
          %v6818 = vld [vmem:[#allocation2 + $0x3b0] sm:$0xff]
          %v6819 = vld [vmem:[#allocation2 + $0x3b8] sm:$0xff]
          %v6820 = vld [vmem:[#allocation2 + $0x3c0] sm:$0xff]
          %v6821 = vld [vmem:[#allocation2 + $0x3c8] sm:$0xff]
          %v6822 = vld [vmem:[#allocation2 + $0x3d0] sm:$0xff]
          %v6823 = vld [vmem:[#allocation2 + $0x3d8] sm:$0xff]
          %v6824 = vld [vmem:[#allocation2 + $0x3e0] sm:$0xff]
          %v6825 = vld [vmem:[#allocation2 + $0x3e8] sm:$0xff]
          %v6826 = vld [vmem:[#allocation2 + $0x3f0] sm:$0xff]
          %v6827 = vld [vmem:[#allocation2 + $0x3f8] sm:$0xff]
          %6828 = vadd.xlane.f32.xlu0 %v6700
          %v6829 = vpop.xlane.xlu0 %6828
          %6830 = vadd.xlane.f32.xlu0 %v6701
          %v6831 = vpop.xlane.xlu0 %6830
          %6832 = vadd.xlane.f32.xlu0 %v6702
          %v6833 = vpop.xlane.xlu0 %6832
          %6834 = vadd.xlane.f32.xlu0 %v6703
          %v6835 = vpop.xlane.xlu0 %6834
          %6836 = vadd.xlane.f32.xlu0 %v6704
          %v6837 = vpop.xlane.xlu0 %6836
          %6838 = vadd.xlane.f32.xlu0 %v6705
          %v6839 = vpop.xlane.xlu0 %6838
          %6840 = vadd.xlane.f32.xlu0 %v6706
          %v6841 = vpop.xlane.xlu0 %6840
          %6842 = vadd.xlane.f32.xlu0 %v6707
          %v6843 = vpop.xlane.xlu0 %6842
          %6844 = vadd.xlane.f32.xlu0 %v6708
          %v6845 = vpop.xlane.xlu0 %6844
          %6846 = vadd.xlane.f32.xlu0 %v6709
          %v6847 = vpop.xlane.xlu0 %6846
          %6848 = vadd.xlane.f32.xlu0 %v6710
          %v6849 = vpop.xlane.xlu0 %6848
          %6850 = vadd.xlane.f32.xlu0 %v6711
          %v6851 = vpop.xlane.xlu0 %6850
          %6852 = vadd.xlane.f32.xlu0 %v6712
          %v6853 = vpop.xlane.xlu0 %6852
          %6854 = vadd.xlane.f32.xlu0 %v6713
          %v6855 = vpop.xlane.xlu0 %6854
          %6856 = vadd.xlane.f32.xlu0 %v6714
          %v6857 = vpop.xlane.xlu0 %6856
          %6858 = vadd.xlane.f32.xlu0 %v6715
          %v6859 = vpop.xlane.xlu0 %6858
          %6860 = vadd.xlane.f32.xlu0 %v6716
          %v6861 = vpop.xlane.xlu0 %6860
          %6862 = vadd.xlane.f32.xlu0 %v6717
          %v6863 = vpop.xlane.xlu0 %6862
          %6864 = vadd.xlane.f32.xlu0 %v6718
          %v6865 = vpop.xlane.xlu0 %6864
          %6866 = vadd.xlane.f32.xlu0 %v6719
          %v6867 = vpop.xlane.xlu0 %6866
          %6868 = vadd.xlane.f32.xlu0 %v6720
          %v6869 = vpop.xlane.xlu0 %6868
          %6870 = vadd.xlane.f32.xlu0 %v6721
          %v6871 = vpop.xlane.xlu0 %6870
          %6872 = vadd.xlane.f32.xlu0 %v6722
          %v6873 = vpop.xlane.xlu0 %6872
          %6874 = vadd.xlane.f32.xlu0 %v6723
          %v6875 = vpop.xlane.xlu0 %6874
          %6876 = vadd.xlane.f32.xlu0 %v6724
          %v6877 = vpop.xlane.xlu0 %6876
          %6878 = vadd.xlane.f32.xlu0 %v6725
          %v6879 = vpop.xlane.xlu0 %6878
          %6880 = vadd.xlane.f32.xlu0 %v6726
          %v6881 = vpop.xlane.xlu0 %6880
          %6882 = vadd.xlane.f32.xlu0 %v6727
          %v6883 = vpop.xlane.xlu0 %6882
          %6884 = vadd.xlane.f32.xlu0 %v6728
          %v6885 = vpop.xlane.xlu0 %6884
          %6886 = vadd.xlane.f32.xlu0 %v6729
          %v6887 = vpop.xlane.xlu0 %6886
          %6888 = vadd.xlane.f32.xlu0 %v6730
          %v6889 = vpop.xlane.xlu0 %6888
          %6890 = vadd.xlane.f32.xlu0 %v6731
          %v6891 = vpop.xlane.xlu0 %6890
          %6892 = vadd.xlane.f32.xlu0 %v6732
          %v6893 = vpop.xlane.xlu0 %6892
          %6894 = vadd.xlane.f32.xlu0 %v6733
          %v6895 = vpop.xlane.xlu0 %6894
          %6896 = vadd.xlane.f32.xlu0 %v6734
          %v6897 = vpop.xlane.xlu0 %6896
          %6898 = vadd.xlane.f32.xlu0 %v6735
          %v6899 = vpop.xlane.xlu0 %6898
          %6900 = vadd.xlane.f32.xlu0 %v6736
          %v6901 = vpop.xlane.xlu0 %6900
          %6902 = vadd.xlane.f32.xlu0 %v6737
          %v6903 = vpop.xlane.xlu0 %6902
          %6904 = vadd.xlane.f32.xlu0 %v6738
          %v6905 = vpop.xlane.xlu0 %6904
          %6906 = vadd.xlane.f32.xlu0 %v6739
          %v6907 = vpop.xlane.xlu0 %6906
          %6908 = vadd.xlane.f32.xlu0 %v6740
          %v6909 = vpop.xlane.xlu0 %6908
          %6910 = vadd.xlane.f32.xlu0 %v6741
          %v6911 = vpop.xlane.xlu0 %6910
          %6912 = vadd.xlane.f32.xlu0 %v6742
          %v6913 = vpop.xlane.xlu0 %6912
          %6914 = vadd.xlane.f32.xlu0 %v6743
          %v6915 = vpop.xlane.xlu0 %6914
          %6916 = vadd.xlane.f32.xlu0 %v6744
          %v6917 = vpop.xlane.xlu0 %6916
          %6918 = vadd.xlane.f32.xlu0 %v6745
          %v6919 = vpop.xlane.xlu0 %6918
          %6920 = vadd.xlane.f32.xlu0 %v6746
          %v6921 = vpop.xlane.xlu0 %6920
          %6922 = vadd.xlane.f32.xlu0 %v6747
          %v6923 = vpop.xlane.xlu0 %6922
          %6924 = vadd.xlane.f32.xlu0 %v6748
          %v6925 = vpop.xlane.xlu0 %6924
          %6926 = vadd.xlane.f32.xlu0 %v6749
          %v6927 = vpop.xlane.xlu0 %6926
          %6928 = vadd.xlane.f32.xlu0 %v6750
          %v6929 = vpop.xlane.xlu0 %6928
          %6930 = vadd.xlane.f32.xlu0 %v6751
          %v6931 = vpop.xlane.xlu0 %6930
          %6932 = vadd.xlane.f32.xlu0 %v6752
          %v6933 = vpop.xlane.xlu0 %6932
          %6934 = vadd.xlane.f32.xlu0 %v6753
          %v6935 = vpop.xlane.xlu0 %6934
          %6936 = vadd.xlane.f32.xlu0 %v6754
          %v6937 = vpop.xlane.xlu0 %6936
          %6938 = vadd.xlane.f32.xlu0 %v6755
          %v6939 = vpop.xlane.xlu0 %6938
          %6940 = vadd.xlane.f32.xlu0 %v6756
          %v6941 = vpop.xlane.xlu0 %6940
          %6942 = vadd.xlane.f32.xlu0 %v6757
          %v6943 = vpop.xlane.xlu0 %6942
          %6944 = vadd.xlane.f32.xlu0 %v6758
          %v6945 = vpop.xlane.xlu0 %6944
          %6946 = vadd.xlane.f32.xlu0 %v6759
          %v6947 = vpop.xlane.xlu0 %6946
          %6948 = vadd.xlane.f32.xlu0 %v6760
          %v6949 = vpop.xlane.xlu0 %6948
          %6950 = vadd.xlane.f32.xlu0 %v6761
          %v6951 = vpop.xlane.xlu0 %6950
          %6952 = vadd.xlane.f32.xlu0 %v6762
          %v6953 = vpop.xlane.xlu0 %6952
          %6954 = vadd.xlane.f32.xlu0 %v6763
          %v6955 = vpop.xlane.xlu0 %6954
          %6956 = vadd.xlane.f32.xlu0 %v6764
          %v6957 = vpop.xlane.xlu0 %6956
          %6958 = vadd.xlane.f32.xlu0 %v6765
          %v6959 = vpop.xlane.xlu0 %6958
          %6960 = vadd.xlane.f32.xlu0 %v6766
          %v6961 = vpop.xlane.xlu0 %6960
          %6962 = vadd.xlane.f32.xlu0 %v6767
          %v6963 = vpop.xlane.xlu0 %6962
          %6964 = vadd.xlane.f32.xlu0 %v6768
          %v6965 = vpop.xlane.xlu0 %6964
          %6966 = vadd.xlane.f32.xlu0 %v6769
          %v6967 = vpop.xlane.xlu0 %6966
          %6968 = vadd.xlane.f32.xlu0 %v6770
          %v6969 = vpop.xlane.xlu0 %6968
          %6970 = vadd.xlane.f32.xlu0 %v6771
          %v6971 = vpop.xlane.xlu0 %6970
          %6972 = vadd.xlane.f32.xlu0 %v6772
          %v6973 = vpop.xlane.xlu0 %6972
          %6974 = vadd.xlane.f32.xlu0 %v6773
          %v6975 = vpop.xlane.xlu0 %6974
          %6976 = vadd.xlane.f32.xlu0 %v6774
          %v6977 = vpop.xlane.xlu0 %6976
          %6978 = vadd.xlane.f32.xlu0 %v6775
          %v6979 = vpop.xlane.xlu0 %6978
          %6980 = vadd.xlane.f32.xlu0 %v6776
          %v6981 = vpop.xlane.xlu0 %6980
          %6982 = vadd.xlane.f32.xlu0 %v6777
          %v6983 = vpop.xlane.xlu0 %6982
          %6984 = vadd.xlane.f32.xlu0 %v6778
          %v6985 = vpop.xlane.xlu0 %6984
          %6986 = vadd.xlane.f32.xlu0 %v6779
          %v6987 = vpop.xlane.xlu0 %6986
          %6988 = vadd.xlane.f32.xlu0 %v6780
          %v6989 = vpop.xlane.xlu0 %6988
          %6990 = vadd.xlane.f32.xlu0 %v6781
          %v6991 = vpop.xlane.xlu0 %6990
          %6992 = vadd.xlane.f32.xlu0 %v6782
          %v6993 = vpop.xlane.xlu0 %6992
          %6994 = vadd.xlane.f32.xlu0 %v6783
          %v6995 = vpop.xlane.xlu0 %6994
          %6996 = vadd.xlane.f32.xlu0 %v6784
          %v6997 = vpop.xlane.xlu0 %6996
          %6998 = vadd.xlane.f32.xlu0 %v6785
          %v6999 = vpop.xlane.xlu0 %6998
          %7000 = vadd.xlane.f32.xlu0 %v6786
          %v7001 = vpop.xlane.xlu0 %7000
          %7002 = vadd.xlane.f32.xlu0 %v6787
          %v7003 = vpop.xlane.xlu0 %7002
          %7004 = vadd.xlane.f32.xlu0 %v6788
          %v7005 = vpop.xlane.xlu0 %7004
          %7006 = vadd.xlane.f32.xlu0 %v6789
          %v7007 = vpop.xlane.xlu0 %7006
          %7008 = vadd.xlane.f32.xlu0 %v6790
          %v7009 = vpop.xlane.xlu0 %7008
          %7010 = vadd.xlane.f32.xlu0 %v6791
          %v7011 = vpop.xlane.xlu0 %7010
          %7012 = vadd.xlane.f32.xlu0 %v6792
          %v7013 = vpop.xlane.xlu0 %7012
          %7014 = vadd.xlane.f32.xlu0 %v6793
          %v7015 = vpop.xlane.xlu0 %7014
          %7016 = vadd.xlane.f32.xlu0 %v6794
          %v7017 = vpop.xlane.xlu0 %7016
          %7018 = vadd.xlane.f32.xlu0 %v6795
          %v7019 = vpop.xlane.xlu0 %7018
          %7020 = vadd.xlane.f32.xlu0 %v6796
          %v7021 = vpop.xlane.xlu0 %7020
          %7022 = vadd.xlane.f32.xlu0 %v6797
          %v7023 = vpop.xlane.xlu0 %7022
          %7024 = vadd.xlane.f32.xlu0 %v6798
          %v7025 = vpop.xlane.xlu0 %7024
          %7026 = vadd.xlane.f32.xlu0 %v6799
          %v7027 = vpop.xlane.xlu0 %7026
          %7028 = vadd.xlane.f32.xlu0 %v6800
          %v7029 = vpop.xlane.xlu0 %7028
          %7030 = vadd.xlane.f32.xlu0 %v6801
          %v7031 = vpop.xlane.xlu0 %7030
          %7032 = vadd.xlane.f32.xlu0 %v6802
          %v7033 = vpop.xlane.xlu0 %7032
          %7034 = vadd.xlane.f32.xlu0 %v6803
          %v7035 = vpop.xlane.xlu0 %7034
          %7036 = vadd.xlane.f32.xlu0 %v6804
          %v7037 = vpop.xlane.xlu0 %7036
          %7038 = vadd.xlane.f32.xlu0 %v6805
          %v7039 = vpop.xlane.xlu0 %7038
          %7040 = vadd.xlane.f32.xlu0 %v6806
          %v7041 = vpop.xlane.xlu0 %7040
          %7042 = vadd.xlane.f32.xlu0 %v6807
          %v7043 = vpop.xlane.xlu0 %7042
          %7044 = vadd.xlane.f32.xlu0 %v6808
          %v7045 = vpop.xlane.xlu0 %7044
          %7046 = vadd.xlane.f32.xlu0 %v6809
          %v7047 = vpop.xlane.xlu0 %7046
          %7048 = vadd.xlane.f32.xlu0 %v6810
          %v7049 = vpop.xlane.xlu0 %7048
          %7050 = vadd.xlane.f32.xlu0 %v6811
          %v7051 = vpop.xlane.xlu0 %7050
          %7052 = vadd.xlane.f32.xlu0 %v6812
          %v7053 = vpop.xlane.xlu0 %7052
          %7054 = vadd.xlane.f32.xlu0 %v6813
          %v7055 = vpop.xlane.xlu0 %7054
          %7056 = vadd.xlane.f32.xlu0 %v6814
          %v7057 = vpop.xlane.xlu0 %7056
          %7058 = vadd.xlane.f32.xlu0 %v6815
          %v7059 = vpop.xlane.xlu0 %7058
          %7060 = vadd.xlane.f32.xlu0 %v6816
          %v7061 = vpop.xlane.xlu0 %7060
          %7062 = vadd.xlane.f32.xlu0 %v6817
          %v7063 = vpop.xlane.xlu0 %7062
          %7064 = vadd.xlane.f32.xlu0 %v6818
          %v7065 = vpop.xlane.xlu0 %7064
          %7066 = vadd.xlane.f32.xlu0 %v6819
          %v7067 = vpop.xlane.xlu0 %7066
          %7068 = vadd.xlane.f32.xlu0 %v6820
          %v7069 = vpop.xlane.xlu0 %7068
          %7070 = vadd.xlane.f32.xlu0 %v6821
          %v7071 = vpop.xlane.xlu0 %7070
          %7072 = vadd.xlane.f32.xlu0 %v6822
          %v7073 = vpop.xlane.xlu0 %7072
          %7074 = vadd.xlane.f32.xlu0 %v6823
          %v7075 = vpop.xlane.xlu0 %7074
          %7076 = vadd.xlane.f32.xlu0 %v6824
          %v7077 = vpop.xlane.xlu0 %7076
          %7078 = vadd.xlane.f32.xlu0 %v6825
          %v7079 = vpop.xlane.xlu0 %7078
          %7080 = vadd.xlane.f32.xlu0 %v6826
          %v7081 = vpop.xlane.xlu0 %7080
          %7082 = vadd.xlane.f32.xlu0 %v6827
          %v7083 = vpop.xlane.xlu0 %7082
          %vm7084 = vcmask 7168
          %7085 = vst.msk [vmem:[%s465] sm:$0xff] %vm7084, %v6829
          %7086 = vst.msk [vmem:[%s465 + $0x8] sm:$0xff] %vm7084, %v6831
          %7087 = vst.msk [vmem:[%s465 + $0x10] sm:$0xff] %vm7084, %v6833
          %7088 = vst.msk [vmem:[%s465 + $0x18] sm:$0xff] %vm7084, %v6835
          %7089 = vst.msk [vmem:[%s465 + $0x20] sm:$0xff] %vm7084, %v6837
          %7090 = vst.msk [vmem:[%s465 + $0x28] sm:$0xff] %vm7084, %v6839
          %7091 = vst.msk [vmem:[%s465 + $0x30] sm:$0xff] %vm7084, %v6841
          %7092 = vst.msk [vmem:[%s465 + $0x38] sm:$0xff] %vm7084, %v6843
          %7093 = vst.msk [vmem:[%s465 + $0x40] sm:$0xff] %vm7084, %v6845
          %7094 = vst.msk [vmem:[%s465 + $0x48] sm:$0xff] %vm7084, %v6847
          %7095 = vst.msk [vmem:[%s465 + $0x50] sm:$0xff] %vm7084, %v6849
          %7096 = vst.msk [vmem:[%s465 + $0x58] sm:$0xff] %vm7084, %v6851
          %7097 = vst.msk [vmem:[%s465 + $0x60] sm:$0xff] %vm7084, %v6853
          %7098 = vst.msk [vmem:[%s465 + $0x68] sm:$0xff] %vm7084, %v6855
          %7099 = vst.msk [vmem:[%s465 + $0x70] sm:$0xff] %vm7084, %v6857
          %7100 = vst.msk [vmem:[%s465 + $0x78] sm:$0xff] %vm7084, %v6859
          %7101 = vst.msk [vmem:[%s465 + $0x80] sm:$0xff] %vm7084, %v6861
          %7102 = vst.msk [vmem:[%s465 + $0x88] sm:$0xff] %vm7084, %v6863
          %7103 = vst.msk [vmem:[%s465 + $0x90] sm:$0xff] %vm7084, %v6865
          %7104 = vst.msk [vmem:[%s465 + $0x98] sm:$0xff] %vm7084, %v6867
          %7105 = vst.msk [vmem:[%s465 + $0xa0] sm:$0xff] %vm7084, %v6869
          %7106 = vst.msk [vmem:[%s465 + $0xa8] sm:$0xff] %vm7084, %v6871
          %7107 = vst.msk [vmem:[%s465 + $0xb0] sm:$0xff] %vm7084, %v6873
          %7108 = vst.msk [vmem:[%s465 + $0xb8] sm:$0xff] %vm7084, %v6875
          %7109 = vst.msk [vmem:[%s465 + $0xc0] sm:$0xff] %vm7084, %v6877
          %7110 = vst.msk [vmem:[%s465 + $0xc8] sm:$0xff] %vm7084, %v6879
          %7111 = vst.msk [vmem:[%s465 + $0xd0] sm:$0xff] %vm7084, %v6881
          %7112 = vst.msk [vmem:[%s465 + $0xd8] sm:$0xff] %vm7084, %v6883
          %7113 = vst.msk [vmem:[%s465 + $0xe0] sm:$0xff] %vm7084, %v6885
          %7114 = vst.msk [vmem:[%s465 + $0xe8] sm:$0xff] %vm7084, %v6887
          %7115 = vst.msk [vmem:[%s465 + $0xf0] sm:$0xff] %vm7084, %v6889
          %7116 = vst.msk [vmem:[%s465 + $0xf8] sm:$0xff] %vm7084, %v6891
          %7117 = vst.msk [vmem:[%s465 + $0x100] sm:$0xff] %vm7084, %v6893
          %7118 = vst.msk [vmem:[%s465 + $0x108] sm:$0xff] %vm7084, %v6895
          %7119 = vst.msk [vmem:[%s465 + $0x110] sm:$0xff] %vm7084, %v6897
          %7120 = vst.msk [vmem:[%s465 + $0x118] sm:$0xff] %vm7084, %v6899
          %7121 = vst.msk [vmem:[%s465 + $0x120] sm:$0xff] %vm7084, %v6901
          %7122 = vst.msk [vmem:[%s465 + $0x128] sm:$0xff] %vm7084, %v6903
          %7123 = vst.msk [vmem:[%s465 + $0x130] sm:$0xff] %vm7084, %v6905
          %7124 = vst.msk [vmem:[%s465 + $0x138] sm:$0xff] %vm7084, %v6907
          %7125 = vst.msk [vmem:[%s465 + $0x140] sm:$0xff] %vm7084, %v6909
          %7126 = vst.msk [vmem:[%s465 + $0x148] sm:$0xff] %vm7084, %v6911
          %7127 = vst.msk [vmem:[%s465 + $0x150] sm:$0xff] %vm7084, %v6913
          %7128 = vst.msk [vmem:[%s465 + $0x158] sm:$0xff] %vm7084, %v6915
          %7129 = vst.msk [vmem:[%s465 + $0x160] sm:$0xff] %vm7084, %v6917
          %7130 = vst.msk [vmem:[%s465 + $0x168] sm:$0xff] %vm7084, %v6919
          %7131 = vst.msk [vmem:[%s465 + $0x170] sm:$0xff] %vm7084, %v6921
          %7132 = vst.msk [vmem:[%s465 + $0x178] sm:$0xff] %vm7084, %v6923
          %7133 = vst.msk [vmem:[%s465 + $0x180] sm:$0xff] %vm7084, %v6925
          %7134 = vst.msk [vmem:[%s465 + $0x188] sm:$0xff] %vm7084, %v6927
          %7135 = vst.msk [vmem:[%s465 + $0x190] sm:$0xff] %vm7084, %v6929
          %7136 = vst.msk [vmem:[%s465 + $0x198] sm:$0xff] %vm7084, %v6931
          %7137 = vst.msk [vmem:[%s465 + $0x1a0] sm:$0xff] %vm7084, %v6933
          %7138 = vst.msk [vmem:[%s465 + $0x1a8] sm:$0xff] %vm7084, %v6935
          %7139 = vst.msk [vmem:[%s465 + $0x1b0] sm:$0xff] %vm7084, %v6937
          %7140 = vst.msk [vmem:[%s465 + $0x1b8] sm:$0xff] %vm7084, %v6939
          %7141 = vst.msk [vmem:[%s465 + $0x1c0] sm:$0xff] %vm7084, %v6941
          %7142 = vst.msk [vmem:[%s465 + $0x1c8] sm:$0xff] %vm7084, %v6943
          %7143 = vst.msk [vmem:[%s465 + $0x1d0] sm:$0xff] %vm7084, %v6945
          %7144 = vst.msk [vmem:[%s465 + $0x1d8] sm:$0xff] %vm7084, %v6947
          %7145 = vst.msk [vmem:[%s465 + $0x1e0] sm:$0xff] %vm7084, %v6949
          %7146 = vst.msk [vmem:[%s465 + $0x1e8] sm:$0xff] %vm7084, %v6951
          %7147 = vst.msk [vmem:[%s465 + $0x1f0] sm:$0xff] %vm7084, %v6953
          %7148 = vst.msk [vmem:[%s465 + $0x1f8] sm:$0xff] %vm7084, %v6955
          %7149 = vst.msk [vmem:[%s465 + $0x200] sm:$0xff] %vm7084, %v6957
          %7150 = vst.msk [vmem:[%s465 + $0x208] sm:$0xff] %vm7084, %v6959
          %7151 = vst.msk [vmem:[%s465 + $0x210] sm:$0xff] %vm7084, %v6961
          %7152 = vst.msk [vmem:[%s465 + $0x218] sm:$0xff] %vm7084, %v6963
          %7153 = vst.msk [vmem:[%s465 + $0x220] sm:$0xff] %vm7084, %v6965
          %7154 = vst.msk [vmem:[%s465 + $0x228] sm:$0xff] %vm7084, %v6967
          %7155 = vst.msk [vmem:[%s465 + $0x230] sm:$0xff] %vm7084, %v6969
          %7156 = vst.msk [vmem:[%s465 + $0x238] sm:$0xff] %vm7084, %v6971
          %7157 = vst.msk [vmem:[%s465 + $0x240] sm:$0xff] %vm7084, %v6973
          %7158 = vst.msk [vmem:[%s465 + $0x248] sm:$0xff] %vm7084, %v6975
          %7159 = vst.msk [vmem:[%s465 + $0x250] sm:$0xff] %vm7084, %v6977
          %7160 = vst.msk [vmem:[%s465 + $0x258] sm:$0xff] %vm7084, %v6979
          %7161 = vst.msk [vmem:[%s465 + $0x260] sm:$0xff] %vm7084, %v6981
          %7162 = vst.msk [vmem:[%s465 + $0x268] sm:$0xff] %vm7084, %v6983
          %7163 = vst.msk [vmem:[%s465 + $0x270] sm:$0xff] %vm7084, %v6985
          %7164 = vst.msk [vmem:[%s465 + $0x278] sm:$0xff] %vm7084, %v6987
          %7165 = vst.msk [vmem:[%s465 + $0x280] sm:$0xff] %vm7084, %v6989
          %7166 = vst.msk [vmem:[%s465 + $0x288] sm:$0xff] %vm7084, %v6991
          %7167 = vst.msk [vmem:[%s465 + $0x290] sm:$0xff] %vm7084, %v6993
          %7168 = vst.msk [vmem:[%s465 + $0x298] sm:$0xff] %vm7084, %v6995
          %7169 = vst.msk [vmem:[%s465 + $0x2a0] sm:$0xff] %vm7084, %v6997
          %7170 = vst.msk [vmem:[%s465 + $0x2a8] sm:$0xff] %vm7084, %v6999
          %7171 = vst.msk [vmem:[%s465 + $0x2b0] sm:$0xff] %vm7084, %v7001
          %7172 = vst.msk [vmem:[%s465 + $0x2b8] sm:$0xff] %vm7084, %v7003
          %7173 = vst.msk [vmem:[%s465 + $0x2c0] sm:$0xff] %vm7084, %v7005
          %7174 = vst.msk [vmem:[%s465 + $0x2c8] sm:$0xff] %vm7084, %v7007
          %7175 = vst.msk [vmem:[%s465 + $0x2d0] sm:$0xff] %vm7084, %v7009
          %7176 = vst.msk [vmem:[%s465 + $0x2d8] sm:$0xff] %vm7084, %v7011
          %7177 = vst.msk [vmem:[%s465 + $0x2e0] sm:$0xff] %vm7084, %v7013
          %7178 = vst.msk [vmem:[%s465 + $0x2e8] sm:$0xff] %vm7084, %v7015
          %7179 = vst.msk [vmem:[%s465 + $0x2f0] sm:$0xff] %vm7084, %v7017
          %7180 = vst.msk [vmem:[%s465 + $0x2f8] sm:$0xff] %vm7084, %v7019
          %7181 = vst.msk [vmem:[%s465 + $0x300] sm:$0xff] %vm7084, %v7021
          %7182 = vst.msk [vmem:[%s465 + $0x308] sm:$0xff] %vm7084, %v7023
          %7183 = vst.msk [vmem:[%s465 + $0x310] sm:$0xff] %vm7084, %v7025
          %7184 = vst.msk [vmem:[%s465 + $0x318] sm:$0xff] %vm7084, %v7027
          %7185 = vst.msk [vmem:[%s465 + $0x320] sm:$0xff] %vm7084, %v7029
          %7186 = vst.msk [vmem:[%s465 + $0x328] sm:$0xff] %vm7084, %v7031
          %7187 = vst.msk [vmem:[%s465 + $0x330] sm:$0xff] %vm7084, %v7033
          %7188 = vst.msk [vmem:[%s465 + $0x338] sm:$0xff] %vm7084, %v7035
          %7189 = vst.msk [vmem:[%s465 + $0x340] sm:$0xff] %vm7084, %v7037
          %7190 = vst.msk [vmem:[%s465 + $0x348] sm:$0xff] %vm7084, %v7039
          %7191 = vst.msk [vmem:[%s465 + $0x350] sm:$0xff] %vm7084, %v7041
          %7192 = vst.msk [vmem:[%s465 + $0x358] sm:$0xff] %vm7084, %v7043
          %7193 = vst.msk [vmem:[%s465 + $0x360] sm:$0xff] %vm7084, %v7045
          %7194 = vst.msk [vmem:[%s465 + $0x368] sm:$0xff] %vm7084, %v7047
          %7195 = vst.msk [vmem:[%s465 + $0x370] sm:$0xff] %vm7084, %v7049
          %7196 = vst.msk [vmem:[%s465 + $0x378] sm:$0xff] %vm7084, %v7051
          %7197 = vst.msk [vmem:[%s465 + $0x380] sm:$0xff] %vm7084, %v7053
          %7198 = vst.msk [vmem:[%s465 + $0x388] sm:$0xff] %vm7084, %v7055
          %7199 = vst.msk [vmem:[%s465 + $0x390] sm:$0xff] %vm7084, %v7057
          %7200 = vst.msk [vmem:[%s465 + $0x398] sm:$0xff] %vm7084, %v7059
          %7201 = vst.msk [vmem:[%s465 + $0x3a0] sm:$0xff] %vm7084, %v7061
          %7202 = vst.msk [vmem:[%s465 + $0x3a8] sm:$0xff] %vm7084, %v7063
          %7203 = vst.msk [vmem:[%s465 + $0x3b0] sm:$0xff] %vm7084, %v7065
          %7204 = vst.msk [vmem:[%s465 + $0x3b8] sm:$0xff] %vm7084, %v7067
          %7205 = vst.msk [vmem:[%s465 + $0x3c0] sm:$0xff] %vm7084, %v7069
          %7206 = vst.msk [vmem:[%s465 + $0x3c8] sm:$0xff] %vm7084, %v7071
          %7207 = vst.msk [vmem:[%s465 + $0x3d0] sm:$0xff] %vm7084, %v7073
          %7208 = vst.msk [vmem:[%s465 + $0x3d8] sm:$0xff] %vm7084, %v7075
          %7209 = vst.msk [vmem:[%s465 + $0x3e0] sm:$0xff] %vm7084, %v7077
          %7210 = vst.msk [vmem:[%s465 + $0x3e8] sm:$0xff] %vm7084, %v7079
          %7211 = vst.msk [vmem:[%s465 + $0x3f0] sm:$0xff] %vm7084, %v7081
          %7212 = vst.msk [vmem:[%s465 + $0x3f8] sm:$0xff] %vm7084, %v7083
        $region105: #{posenet_feat.2} parent=92 // pred_fallthru
          _
        %s7213 = sand.u32 %s251, 1
        %s7214 = sand.u32 %s251, 1
        %s7215 = smul.addr %s7214, 384
        %s7216 = scalar_lea.vmem [#allocation4], %s7215
        %p7217 = scmp.lt.s32.totalorder %s27, 1
        %s7218 = scalar_select %p7217, %s27, 1
        %p7219 = scmp.lt.s32.totalorder %s28, 1
        %s7220 = scalar_select %p7219, %s28, 1
        %s7221 = smul.addr %s7220, 128
        %s7222 = smul.addr %s7218, 256
        %s7223 = sadd.s32 %s7221, %s7222
        %s7224 = smul.addr %s7223, 8
        %s7225 = scalar_lea.vmem %s10, %s7224
        // Predicated region
        $region106: #{posenet_feat.2} parent=92 // pred_check
          %p7226 = pneg %p261
        $region107: #{posenet_feat.2} parent=92 // pred_check_branch
          %7228 = sbr.rel (%p7226) target = $region109
        $region108: #{posenet_feat.2} parent=92 // pred_region
          %s7229 = sadd.s32 %s28, %s29
          %s7230 = smul.addr %s27, 352
          %s7231 = sadd.s32 %s7229, %s7230
          %s7232 = smul.addr %s7231, 8
          %s7233 = scalar_lea.vmem %s9, %s7232
          // Predicated region
          $region110: #{posenet_feat.2} parent=108 // pred_check
            _
          $region111: #{posenet_feat.2} parent=108 // pred_check_branch
            %7235 = sbr.rel (0) target = $region113
          $region112: #{posenet_feat.2} parent=108 // pred_region
            // Predicated region
            $region114: #{posenet_feat.2} parent=112 // pred_check
              _
            $region115: #{posenet_feat.2} parent=112 // pred_check_branch
              %7237 = sbr.rel (0) target = $region117
            $region116: #{posenet_feat.2} parent=112 // pred_region
              // Predicated region
              $region129: #{posenet_feat.2} parent=116 // pred_check
                _
              $region130: #{posenet_feat.2} parent=116 // pred_check_branch
                %7346 = sbr.rel (0) target = $region132
              $region131: #{posenet_feat.2} parent=116 // pred_region
                loop: start=0, step=1, limit=1
                $region133: #{posenet_feat.2} parent=131 // loop_pre_header
                  _
                $region134: #{posenet_feat.2} parent=131 // loop_header
                  %s7348 = sphi 0, %s7352
                  %p7349 = scmp.ge.s32.totalorder %s7348, 1
                  %s7353 = sphi %s7216, %s7216
                  %s7354 = sphi %s7233, %s7233
                $region135: #{posenet_feat.2} parent=131 // loop_header_branch
                  %7351 = sbr.rel (%p7349) target = $region139
                $region136: #{posenet_feat.2} parent=131 // loop_body
                  %v7355 = vld [vmem:[%s7353] sm:$0xff]
                  %7356 = vst [vmem:[%s7354] sm:$0xff] %v7355
                  %v7357 = vld [vmem:[%s7353 + $0x8] sm:$0xff]
                  %7358 = vst [vmem:[%s7354 + $0x10] sm:$0xff] %v7357
                  %v7359 = vld [vmem:[%s7353 + $0x10] sm:$0xff]
                  %7360 = vst [vmem:[%s7354 + $0x20] sm:$0xff] %v7359
                  %v7361 = vld [vmem:[%s7353 + $0x18] sm:$0xff]
                  %7362 = vst [vmem:[%s7354 + $0x30] sm:$0xff] %v7361
                  %v7363 = vld [vmem:[%s7353 + $0x20] sm:$0xff]
                  %7364 = vst [vmem:[%s7354 + $0x40] sm:$0xff] %v7363
                  %v7365 = vld [vmem:[%s7353 + $0x28] sm:$0xff]
                  %7366 = vst [vmem:[%s7354 + $0x50] sm:$0xff] %v7365
                  %v7367 = vld [vmem:[%s7353 + $0x30] sm:$0xff]
                  %7368 = vst [vmem:[%s7354 + $0x60] sm:$0xff] %v7367
                  %v7369 = vld [vmem:[%s7353 + $0x38] sm:$0xff]
                  %7370 = vst [vmem:[%s7354 + $0x70] sm:$0xff] %v7369
                  %v7371 = vld [vmem:[%s7353 + $0x40] sm:$0xff]
                  %7372 = vst [vmem:[%s7354 + $0x80] sm:$0xff] %v7371
                  %v7373 = vld [vmem:[%s7353 + $0x48] sm:$0xff]
                  %7374 = vst [vmem:[%s7354 + $0x90] sm:$0xff] %v7373
                  %v7375 = vld [vmem:[%s7353 + $0x50] sm:$0xff]
                  %7376 = vst [vmem:[%s7354 + $0xa0] sm:$0xff] %v7375
                  %v7377 = vld [vmem:[%s7353 + $0x58] sm:$0xff]
                  %7378 = vst [vmem:[%s7354 + $0xb0] sm:$0xff] %v7377
                  %v7379 = vld [vmem:[%s7353 + $0x60] sm:$0xff]
                  %7380 = vst [vmem:[%s7354 + $0xc0] sm:$0xff] %v7379
                  %v7381 = vld [vmem:[%s7353 + $0x68] sm:$0xff]
                  %7382 = vst [vmem:[%s7354 + $0xd0] sm:$0xff] %v7381
                  %v7383 = vld [vmem:[%s7353 + $0x70] sm:$0xff]
                  %7384 = vst [vmem:[%s7354 + $0xe0] sm:$0xff] %v7383
                  %v7385 = vld [vmem:[%s7353 + $0x78] sm:$0xff]
                  %7386 = vst [vmem:[%s7354 + $0xf0] sm:$0xff] %v7385
                  %v7387 = vld [vmem:[%s7353 + $0x80] sm:$0xff]
                  %7388 = vst [vmem:[%s7354 + $0x100] sm:$0xff] %v7387
                  %v7389 = vld [vmem:[%s7353 + $0x88] sm:$0xff]
                  %7390 = vst [vmem:[%s7354 + $0x110] sm:$0xff] %v7389
                  %v7391 = vld [vmem:[%s7353 + $0x90] sm:$0xff]
                  %7392 = vst [vmem:[%s7354 + $0x120] sm:$0xff] %v7391
                  %v7393 = vld [vmem:[%s7353 + $0x98] sm:$0xff]
                  %7394 = vst [vmem:[%s7354 + $0x130] sm:$0xff] %v7393
                  %v7395 = vld [vmem:[%s7353 + $0xa0] sm:$0xff]
                  %7396 = vst [vmem:[%s7354 + $0x140] sm:$0xff] %v7395
                  %v7397 = vld [vmem:[%s7353 + $0xa8] sm:$0xff]
                  %7398 = vst [vmem:[%s7354 + $0x150] sm:$0xff] %v7397
                  %v7399 = vld [vmem:[%s7353 + $0xb0] sm:$0xff]
                  %7400 = vst [vmem:[%s7354 + $0x160] sm:$0xff] %v7399
                  %v7401 = vld [vmem:[%s7353 + $0xb8] sm:$0xff]
                  %7402 = vst [vmem:[%s7354 + $0x170] sm:$0xff] %v7401
                  %v7403 = vld [vmem:[%s7353 + $0xc0] sm:$0xff]
                  %7404 = vst [vmem:[%s7354 + $0x180] sm:$0xff] %v7403
                  %v7405 = vld [vmem:[%s7353 + $0xc8] sm:$0xff]
                  %7406 = vst [vmem:[%s7354 + $0x190] sm:$0xff] %v7405
                  %v7407 = vld [vmem:[%s7353 + $0xd0] sm:$0xff]
                  %7408 = vst [vmem:[%s7354 + $0x1a0] sm:$0xff] %v7407
                  %v7409 = vld [vmem:[%s7353 + $0xd8] sm:$0xff]
                  %7410 = vst [vmem:[%s7354 + $0x1b0] sm:$0xff] %v7409
                  %v7411 = vld [vmem:[%s7353 + $0xe0] sm:$0xff]
                  %7412 = vst [vmem:[%s7354 + $0x1c0] sm:$0xff] %v7411
                  %v7413 = vld [vmem:[%s7353 + $0xe8] sm:$0xff]
                  %7414 = vst [vmem:[%s7354 + $0x1d0] sm:$0xff] %v7413
                  %v7415 = vld [vmem:[%s7353 + $0xf0] sm:$0xff]
                  %7416 = vst [vmem:[%s7354 + $0x1e0] sm:$0xff] %v7415
                  %v7417 = vld [vmem:[%s7353 + $0xf8] sm:$0xff]
                  %7418 = vst [vmem:[%s7354 + $0x1f0] sm:$0xff] %v7417
                  %v7419 = vld [vmem:[%s7353 + $0x100] sm:$0xff]
                  %7420 = vst [vmem:[%s7354 + $0x200] sm:$0xff] %v7419
                  %v7421 = vld [vmem:[%s7353 + $0x108] sm:$0xff]
                  %7422 = vst [vmem:[%s7354 + $0x210] sm:$0xff] %v7421
                  %v7423 = vld [vmem:[%s7353 + $0x110] sm:$0xff]
                  %7424 = vst [vmem:[%s7354 + $0x220] sm:$0xff] %v7423
                  %v7425 = vld [vmem:[%s7353 + $0x118] sm:$0xff]
                  %7426 = vst [vmem:[%s7354 + $0x230] sm:$0xff] %v7425
                  %v7427 = vld [vmem:[%s7353 + $0x120] sm:$0xff]
                  %7428 = vst [vmem:[%s7354 + $0x240] sm:$0xff] %v7427
                  %v7429 = vld [vmem:[%s7353 + $0x128] sm:$0xff]
                  %7430 = vst [vmem:[%s7354 + $0x250] sm:$0xff] %v7429
                  %v7431 = vld [vmem:[%s7353 + $0x130] sm:$0xff]
                  %7432 = vst [vmem:[%s7354 + $0x260] sm:$0xff] %v7431
                  %v7433 = vld [vmem:[%s7353 + $0x138] sm:$0xff]
                  %7434 = vst [vmem:[%s7354 + $0x270] sm:$0xff] %v7433
                  %v7435 = vld [vmem:[%s7353 + $0x140] sm:$0xff]
                  %7436 = vst [vmem:[%s7354 + $0x280] sm:$0xff] %v7435
                  %v7437 = vld [vmem:[%s7353 + $0x148] sm:$0xff]
                  %7438 = vst [vmem:[%s7354 + $0x290] sm:$0xff] %v7437
                  %v7439 = vld [vmem:[%s7353 + $0x150] sm:$0xff]
                  %7440 = vst [vmem:[%s7354 + $0x2a0] sm:$0xff] %v7439
                  %v7441 = vld [vmem:[%s7353 + $0x158] sm:$0xff]
                  %7442 = vst [vmem:[%s7354 + $0x2b0] sm:$0xff] %v7441
                  %v7443 = vld [vmem:[%s7353 + $0x160] sm:$0xff]
                  %7444 = vst [vmem:[%s7354 + $0x2c0] sm:$0xff] %v7443
                  %v7445 = vld [vmem:[%s7353 + $0x168] sm:$0xff]
                  %7446 = vst [vmem:[%s7354 + $0x2d0] sm:$0xff] %v7445
                  %v7447 = vld [vmem:[%s7353 + $0x170] sm:$0xff]
                  %7448 = vst [vmem:[%s7354 + $0x2e0] sm:$0xff] %v7447
                  %v7449 = vld [vmem:[%s7353 + $0x178] sm:$0xff]
                  %7450 = vst [vmem:[%s7354 + $0x2f0] sm:$0xff] %v7449
                $region137: #{posenet_feat.2} parent=131 // loop_footer
                  %s7352 = sadd.s32 1, %s7348
                $region138: #{posenet_feat.2} parent=131 // loop_footer_branch
                  %7347 = sbr.rel target = $region134
                $region139: #{posenet_feat.2} parent=131 // loop_exit
                  _
              $region132: #{posenet_feat.2} parent=116 // pred_fallthru
                _
              // Predicated region
              $region140: #{posenet_feat.2} parent=116 // pred_check
                _
              $region141: #{posenet_feat.2} parent=116 // pred_check_branch
                %7452 = sbr.rel target = $region143
              $region142: #{posenet_feat.2} parent=116 // pred_region
                _
              $region143: #{posenet_feat.2} parent=116 // pred_fallthru
                _
            $region117: #{posenet_feat.2} parent=112 // pred_fallthru
              _
            // Predicated region
            $region118: #{posenet_feat.2} parent=112 // pred_check
              _
            $region119: #{posenet_feat.2} parent=112 // pred_check_branch
              %7239 = sbr.rel target = $region121
            $region120: #{posenet_feat.2} parent=112 // pred_region
              loop: start=0, step=1, limit=1
              $region122: #{posenet_feat.2} parent=120 // loop_pre_header
                _
              $region123: #{posenet_feat.2} parent=120 // loop_header
                %s7242 = sphi 0, %s7246
                %p7243 = scmp.ge.s32.totalorder %s7242, 1
                %s7247 = sphi %s7216, %s7216
                %s7248 = sphi %s7233, %s7233
              $region124: #{posenet_feat.2} parent=120 // loop_header_branch
                %7245 = sbr.rel (%p7243) target = $region128
              $region125: #{posenet_feat.2} parent=120 // loop_body
                %v7249 = vld [vmem:[%s7247] sm:$0xff]
                %7250 = vst [vmem:[%s7248] sm:$0xff] %v7249
                %v7251 = vld [vmem:[%s7247 + $0x8] sm:$0xff]
                %7252 = vst [vmem:[%s7248 + $0x10] sm:$0xff] %v7251
                %v7253 = vld [vmem:[%s7247 + $0x10] sm:$0xff]
                %7254 = vst [vmem:[%s7248 + $0x20] sm:$0xff] %v7253
                %v7255 = vld [vmem:[%s7247 + $0x18] sm:$0xff]
                %7256 = vst [vmem:[%s7248 + $0x30] sm:$0xff] %v7255
                %v7257 = vld [vmem:[%s7247 + $0x20] sm:$0xff]
                %7258 = vst [vmem:[%s7248 + $0x40] sm:$0xff] %v7257
                %v7259 = vld [vmem:[%s7247 + $0x28] sm:$0xff]
                %7260 = vst [vmem:[%s7248 + $0x50] sm:$0xff] %v7259
                %v7261 = vld [vmem:[%s7247 + $0x30] sm:$0xff]
                %7262 = vst [vmem:[%s7248 + $0x60] sm:$0xff] %v7261
                %v7263 = vld [vmem:[%s7247 + $0x38] sm:$0xff]
                %7264 = vst [vmem:[%s7248 + $0x70] sm:$0xff] %v7263
                %v7265 = vld [vmem:[%s7247 + $0x40] sm:$0xff]
                %7266 = vst [vmem:[%s7248 + $0x80] sm:$0xff] %v7265
                %v7267 = vld [vmem:[%s7247 + $0x48] sm:$0xff]
                %7268 = vst [vmem:[%s7248 + $0x90] sm:$0xff] %v7267
                %v7269 = vld [vmem:[%s7247 + $0x50] sm:$0xff]
                %7270 = vst [vmem:[%s7248 + $0xa0] sm:$0xff] %v7269
                %v7271 = vld [vmem:[%s7247 + $0x58] sm:$0xff]
                %7272 = vst [vmem:[%s7248 + $0xb0] sm:$0xff] %v7271
                %v7273 = vld [vmem:[%s7247 + $0x60] sm:$0xff]
                %7274 = vst [vmem:[%s7248 + $0xc0] sm:$0xff] %v7273
                %v7275 = vld [vmem:[%s7247 + $0x68] sm:$0xff]
                %7276 = vst [vmem:[%s7248 + $0xd0] sm:$0xff] %v7275
                %v7277 = vld [vmem:[%s7247 + $0x70] sm:$0xff]
                %7278 = vst [vmem:[%s7248 + $0xe0] sm:$0xff] %v7277
                %v7279 = vld [vmem:[%s7247 + $0x78] sm:$0xff]
                %7280 = vst [vmem:[%s7248 + $0xf0] sm:$0xff] %v7279
                %v7281 = vld [vmem:[%s7247 + $0x80] sm:$0xff]
                %7282 = vst [vmem:[%s7248 + $0x100] sm:$0xff] %v7281
                %v7283 = vld [vmem:[%s7247 + $0x88] sm:$0xff]
                %7284 = vst [vmem:[%s7248 + $0x110] sm:$0xff] %v7283
                %v7285 = vld [vmem:[%s7247 + $0x90] sm:$0xff]
                %7286 = vst [vmem:[%s7248 + $0x120] sm:$0xff] %v7285
                %v7287 = vld [vmem:[%s7247 + $0x98] sm:$0xff]
                %7288 = vst [vmem:[%s7248 + $0x130] sm:$0xff] %v7287
                %v7289 = vld [vmem:[%s7247 + $0xa0] sm:$0xff]
                %7290 = vst [vmem:[%s7248 + $0x140] sm:$0xff] %v7289
                %v7291 = vld [vmem:[%s7247 + $0xa8] sm:$0xff]
                %7292 = vst [vmem:[%s7248 + $0x150] sm:$0xff] %v7291
                %v7293 = vld [vmem:[%s7247 + $0xb0] sm:$0xff]
                %7294 = vst [vmem:[%s7248 + $0x160] sm:$0xff] %v7293
                %v7295 = vld [vmem:[%s7247 + $0xb8] sm:$0xff]
                %7296 = vst [vmem:[%s7248 + $0x170] sm:$0xff] %v7295
                %v7297 = vld [vmem:[%s7247 + $0xc0] sm:$0xff]
                %7298 = vst [vmem:[%s7248 + $0x180] sm:$0xff] %v7297
                %v7299 = vld [vmem:[%s7247 + $0xc8] sm:$0xff]
                %7300 = vst [vmem:[%s7248 + $0x190] sm:$0xff] %v7299
                %v7301 = vld [vmem:[%s7247 + $0xd0] sm:$0xff]
                %7302 = vst [vmem:[%s7248 + $0x1a0] sm:$0xff] %v7301
                %v7303 = vld [vmem:[%s7247 + $0xd8] sm:$0xff]
                %7304 = vst [vmem:[%s7248 + $0x1b0] sm:$0xff] %v7303
                %v7305 = vld [vmem:[%s7247 + $0xe0] sm:$0xff]
                %7306 = vst [vmem:[%s7248 + $0x1c0] sm:$0xff] %v7305
                %v7307 = vld [vmem:[%s7247 + $0xe8] sm:$0xff]
                %7308 = vst [vmem:[%s7248 + $0x1d0] sm:$0xff] %v7307
                %v7309 = vld [vmem:[%s7247 + $0xf0] sm:$0xff]
                %7310 = vst [vmem:[%s7248 + $0x1e0] sm:$0xff] %v7309
                %v7311 = vld [vmem:[%s7247 + $0xf8] sm:$0xff]
                %7312 = vst [vmem:[%s7248 + $0x1f0] sm:$0xff] %v7311
                %v7313 = vld [vmem:[%s7247 + $0x100] sm:$0xff]
                %7314 = vst [vmem:[%s7248 + $0x200] sm:$0xff] %v7313
                %v7315 = vld [vmem:[%s7247 + $0x108] sm:$0xff]
                %7316 = vst [vmem:[%s7248 + $0x210] sm:$0xff] %v7315
                %v7317 = vld [vmem:[%s7247 + $0x110] sm:$0xff]
                %7318 = vst [vmem:[%s7248 + $0x220] sm:$0xff] %v7317
                %v7319 = vld [vmem:[%s7247 + $0x118] sm:$0xff]
                %7320 = vst [vmem:[%s7248 + $0x230] sm:$0xff] %v7319
                %v7321 = vld [vmem:[%s7247 + $0x120] sm:$0xff]
                %7322 = vst [vmem:[%s7248 + $0x240] sm:$0xff] %v7321
                %v7323 = vld [vmem:[%s7247 + $0x128] sm:$0xff]
                %7324 = vst [vmem:[%s7248 + $0x250] sm:$0xff] %v7323
                %v7325 = vld [vmem:[%s7247 + $0x130] sm:$0xff]
                %7326 = vst [vmem:[%s7248 + $0x260] sm:$0xff] %v7325
                %v7327 = vld [vmem:[%s7247 + $0x138] sm:$0xff]
                %7328 = vst [vmem:[%s7248 + $0x270] sm:$0xff] %v7327
                %v7329 = vld [vmem:[%s7247 + $0x140] sm:$0xff]
                %7330 = vst [vmem:[%s7248 + $0x280] sm:$0xff] %v7329
                %v7331 = vld [vmem:[%s7247 + $0x148] sm:$0xff]
                %7332 = vst [vmem:[%s7248 + $0x290] sm:$0xff] %v7331
                %v7333 = vld [vmem:[%s7247 + $0x150] sm:$0xff]
                %7334 = vst [vmem:[%s7248 + $0x2a0] sm:$0xff] %v7333
                %v7335 = vld [vmem:[%s7247 + $0x158] sm:$0xff]
                %7336 = vst [vmem:[%s7248 + $0x2b0] sm:$0xff] %v7335
                %v7337 = vld [vmem:[%s7247 + $0x160] sm:$0xff]
                %7338 = vst [vmem:[%s7248 + $0x2c0] sm:$0xff] %v7337
                %v7339 = vld [vmem:[%s7247 + $0x168] sm:$0xff]
                %7340 = vst [vmem:[%s7248 + $0x2d0] sm:$0xff] %v7339
                %v7341 = vld [vmem:[%s7247 + $0x170] sm:$0xff]
                %7342 = vst [vmem:[%s7248 + $0x2e0] sm:$0xff] %v7341
                %v7343 = vld [vmem:[%s7247 + $0x178] sm:$0xff]
                %7344 = vst [vmem:[%s7248 + $0x2f0] sm:$0xff] %v7343
              $region126: #{posenet_feat.2} parent=120 // loop_footer
                %s7246 = sadd.s32 1, %s7242
              $region127: #{posenet_feat.2} parent=120 // loop_footer_branch
                %7241 = sbr.rel target = $region123
              $region128: #{posenet_feat.2} parent=120 // loop_exit
                _
            $region121: #{posenet_feat.2} parent=112 // pred_fallthru
              _
          $region113: #{posenet_feat.2} parent=108 // pred_fallthru
            _
          %7453 = vnop
        $region109: #{posenet_feat.2} parent=92 // pred_fallthru
          _
        // Predicated region
        $region144: #{posenet_feat.2} parent=92 // pred_check
          %p7454 = pneg %p289
        $region145: #{posenet_feat.2} parent=92 // pred_check_branch
          %7456 = sbr.rel (%p7454) target = $region147
        $region146: #{posenet_feat.2} parent=92 // pred_region
          _
        $region147: #{posenet_feat.2} parent=92 // pred_fallthru
          _
      $region93: #{posenet_feat.2} parent=5 // pred_fallthru
        _
      %p7457 = scmp.le.s32.totalorder 2, %s17
      // Predicated region
      $region148: #{posenet_feat.2} parent=5 // pred_check
        %p7458 = pneg %p7457
      $region149: #{posenet_feat.2} parent=5 // pred_check_branch
        %7460 = sbr.rel (%p7458) target = $region151
      $region150: #{posenet_feat.2} parent=5 // pred_region
        %s7461 = ssub.s32 %s17, 2
        // Predicated region
        $region152: #{posenet_feat.2} parent=150 // pred_check
          %p7462 = pneg %p267
        $region153: #{posenet_feat.2} parent=150 // pred_check_branch
          %7464 = sbr.rel (%p7462) target = $region155
        $region154: #{posenet_feat.2} parent=150 // pred_region
          %s7465 = sand.u32 %s252, 1
          %s7466 = sand.u32 %s252, 1
          %s7467 = smul.addr %s7466, 384
          %s7468 = scalar_lea.vmem [#allocation4], %s7467
        $region155: #{posenet_feat.2} parent=150 // pred_fallthru
          _
        // Predicated region
        $region156: #{posenet_feat.2} parent=150 // pred_check
          %p7469 = pneg %p295
        $region157: #{posenet_feat.2} parent=150 // pred_check_branch
          %7471 = sbr.rel (%p7469) target = $region159
        $region158: #{posenet_feat.2} parent=150 // pred_region
          %p7472 = scmp.lt.s32.totalorder %s30, 1
          %s7473 = scalar_select %p7472, %s30, 1
          %p7474 = scmp.lt.s32.totalorder %s31, 1
          %s7475 = scalar_select %p7474, %s31, 1
          %s7476 = smul.addr %s7475, 128
          %s7477 = smul.addr %s7473, 256
          %s7478 = sadd.s32 %s7476, %s7477
          %s7479 = smul.addr %s7478, 8
          %s7480 = scalar_lea.vmem %s10, %s7479
        $region159: #{posenet_feat.2} parent=150 // pred_fallthru
          _
      $region151: #{posenet_feat.2} parent=5 // pred_fallthru
        _
    $region6: #{posenet_feat.2} parent=1 // loop_footer
      %s21 = sadd.s32 1, %s17
    $region7: #{posenet_feat.2} parent=1 // loop_footer_branch
      %16 = sbr.rel target = $region3
    $region8: #{posenet_feat.2} parent=1 // loop_exit
      _

</llo_original>
